<compile_context>
chip_gen: v7x
topology: tpu7x:2x2x1
jax: 0.10.0
libtpu: 0.0.40
codegen_flags: <defaults>
</compile_context>

<pallas_src>
import functools

import jax
import jax.numpy as jnp
import numpy as np
from jax.experimental import pallas as pl
from jax.experimental.pallas import tpu as pltpu


_VMEM_SPEC = pl.BlockSpec(memory_space=pltpu.MemorySpace.VMEM)


# ----------------------------------------------------------------------------
# Fused Pallas kernel: 5 x (dense-matmul conv + bias + ReLU) + score reduction
# ----------------------------------------------------------------------------
def _semiadnet_fused_kernel(z_ref,
                            w1_ref, b1_ref, w2_ref, b2_ref, w3_ref, b3_ref,
                            w4_ref, b4_ref, w5_ref, b5_ref,
                            o_ref, *, k, use_topk, n_chunk=256):
    """z:(B, 1024) f32 NHWC-flat latent.  wN:(K,N) conv-as-matmul matrices
    (bf16 or f32), bN:(1,N) f32.  o:(B,1) f32 anomaly score."""
    x = z_ref[...]  # (B, in_feat) f32

    layers = ((w1_ref, b1_ref), (w2_ref, b2_ref), (w3_ref, b3_ref),
              (w4_ref, b4_ref), (w5_ref, b5_ref))
    for w_ref, b_ref in layers:
        n = w_ref.shape[1]
        xo = x.astype(w_ref.dtype)          # narrow MXU operand when w is bf16
        chunks = []
        for c0 in range(0, n, n_chunk):     # static lane-chunks of the weight ref
            c1 = min(c0 + n_chunk, n)
            acc = jnp.dot(xo, w_ref[:, c0:c1],
                          preferred_element_type=jnp.float32)
            chunks.append(jnp.maximum(acc + b_ref[:, c0:c1], 0.0))   # f32 epilogue
        x = chunks[0] if len(chunks) == 1 else jnp.concatenate(chunks, axis=-1)

    # x: (B, n_final) -- final conv has Cout == 1, so NHWC flatten == NCHW flatten.
    if use_topk:
        a = jnp.abs(x.astype(jnp.float32))
        bsz, n = a.shape
        col = jax.lax.broadcasted_iota(jnp.int32, (bsz, n), 1)
        total = jnp.zeros((bsz, 1), jnp.float32)
        for _ in range(k):                  # k is small & static (k=1 here)
            m = jnp.max(a, axis=1, keepdims=True)
            total = total + m
            # first occurrence of the current max, then mask exactly one element
            pos = jnp.min(jnp.where(a >= m, col, n), axis=1, keepdims=True)
            a = jnp.where(col == pos, -jnp.inf, a)
        o_ref[...] = total / float(k)
    else:
        o_ref[...] = jnp.mean(x.astype(jnp.float32), axis=1, keepdims=True)


# ----------------------------------------------------------------------------
# Conv2d -> dense-matmul lowering (done once, at init time, on host)
# ----------------------------------------------------------------------------
def _conv_to_dense(w, b, H, W, stride, pad):
    """Lower a Conv2d (torch OIHW weight) acting on an (H, W) NHWC map into a
    dense (H*W*Cin, Ho*Wo*Cout) matrix for flattened activations, plus the
    per-output-column bias row.  Zero padding is folded in (missing taps stay 0)."""
    Cout, Cin, KH, KW = w.shape
    Ho = (H + 2 * pad - KH) // stride + 1
    Wo = (W + 2 * pad - KW) // stride + 1
    mat = np.zeros((H * W * Cin, Ho * Wo * Cout), np.float32)
    wt = np.transpose(w, (2, 3, 1, 0))          # (KH, KW, Cin, Cout)
    for ho in range(Ho):
        for wo in range(Wo):
            c0 = (ho * Wo + wo) * Cout
            for kh in range(KH):
                hi = ho * stride + kh - pad
                if hi < 0 or hi >= H:
                    continue
                for kw in range(KW):
                    wi = wo * stride + kw - pad
                    if wi < 0 or wi >= W:
                        continue
                    r0 = (hi * W + wi) * Cin
                    mat[r0:r0 + Cin, c0:c0 + Cout] = wt[kh, kw]
    brow = np.tile(np.asarray(b, np.float32), Ho * Wo).reshape(1, Ho * Wo * Cout)
    return mat, brow, Ho, Wo


# ----------------------------------------------------------------------------
# Module wrapper
# ----------------------------------------------------------------------------
class SemiADNetPallas:
    """Pallas re-implementation of SemiADNet.forward (conv head + scoring)."""

    # (cin, cout, kernel, stride, padding) -- matches the nn.Sequential
    _CONV_SPECS = (
        (4, 16, 4, 2, 1),
        (16, 16, 3, 1, 1),
        (16, 4, 4, 2, 1),
        (4, 4, 3, 1, 1),
        (4, 1, 3, 1, 1),
    )
    _LATENT_HW = 16                      # spatial size of the VAE latent z
    _BF16_THRESHOLD = 1 << 19            # store matrices >= 512K elements as bf16

    def __init__(self, n_scales=1, topk=0.1, key=None):
        self.n_scales = n_scales
        self.topk = topk
        key = jax.random.PRNGKey(42) if key is None else key

        self.params = []        # torch-layout (w, b, stride, pad) for the reference
        self.dense_params = []  # pre-lowered (Wmat, bias_row) matmul form (init-time)
        H = W = self._LATENT_HW
        for (cin, cout, ksz, s, p) in self._CONV_SPECS:
            key, wk, bk = jax.random.split(key, 3)
            fan_in = cin * ksz * ksz
            bound = 1.0 / np.sqrt(fan_in)            # PyTorch default uniform bound
            w = jax.random.uniform(wk, (cout, cin, ksz, ksz), jnp.float32, -bound, bound)
            b = jax.random.uniform(bk, (cout,), jnp.float32, -bound, bound)
            self.params.append((w, b, s, p))

            mat, brow, Ho, Wo = _conv_to_dense(np.asarray(w), np.asarray(b), H, W, s, p)
            mat_dtype = jnp.bfloat16 if mat.size >= self._BF16_THRESHOLD else jnp.float32
            self.dense_params.append((jnp.asarray(mat, dtype=mat_dtype),
                                      jnp.asarray(brow, dtype=jnp.float32)))
            H, W = Ho, Wo

        n_final = H * W * self._CONV_SPECS[-1][1]    # 4*4*1 = 16
        self.n_final = n_final
        self.k = max(int(n_final * topk), 1) if topk > 0 else 0

    def forward(self, z_nchw):
        if self.n_scales == 0:
            raise ValueError
        B = z_nchw.shape[0]
        # NCHW -> flattened NHWC rows (h, w, c): layout glue only, no arithmetic.
        x = jnp.transpose(z_nchw.astype(jnp.float32), (0, 2, 3, 1)).reshape(B, -1)

        args = [x]
        for (mat, brow) in self.dense_params:
            args.extend((mat, brow))

        kernel = functools.partial(_semiadnet_fused_kernel,
                                   k=self.k, use_topk=self.topk > 0)
        scores = pl.pallas_call(
            kernel,
            out_shape=jax.ShapeDtypeStruct((B, 1), jnp.float32),
            in_specs=[_VMEM_SPEC] * len(args),
            out_specs=_VMEM_SPEC,
            compiler_params=pltpu.CompilerParams(
                vmem_limit_bytes=32 * 1024 * 1024),
        )(*args)
        # torch: score = mean(scores, dim=1).view(-1, 1)  (identity on (B, 1))
        return scores


# ----------------------------------------------------------------------------
# Pure-JAX reference for correctness checking
# ----------------------------------------------------------------------------
def _reference_forward(z_nchw, params, topk):
    x = z_nchw.astype(jnp.float32)
    for (w, b, s, p) in params:
        x = jax.lax.conv_general_dilated(
            x, w, (s, s), [(p, p), (p, p)],
            dimension_numbers=("NCHW", "OIHW", "NCHW"),
            precision=jax.lax.Precision.HIGHEST)
        x = jax.nn.relu(x + b.reshape(1, -1, 1, 1))
    B = x.shape[0]
    flat = x.reshape(B, -1)
    if topk > 0:
        k = max(int(flat.shape[1] * topk), 1)
        vals, _ = jax.lax.top_k(jnp.abs(flat), k)
        s_ = jnp.mean(vals, axis=1, keepdims=True)
    else:
        s_ = jnp.mean(flat, axis=1, keepdims=True)
    return jnp.mean(s_, axis=1).reshape(-1, 1)


# ----------------------------------------------------------------------------
if __name__ == "__main__":
    key = jax.random.PRNGKey(0)
    # latent z (what the frozen AE encoder would produce): [B, 4, 16, 16]
    z = jax.random.normal(key, (2, 4, 16, 16), dtype=jnp.float32)

    model = SemiADNetPallas(n_scales=1, topk=0.1)

    out = jax.block_until_ready(model.forward(z))
    assert out.shape == (2, 1), out.shape

    ref = jax.block_until_ready(_reference_forward(z, model.params, model.topk))
    # bf16 MXU operands on the two big layers => allow bf16-class error.
    np.testing.assert_allclose(np.asarray(out), np.asarray(ref), rtol=2e-2, atol=1e-2)

    print("KERNEL_OK")
</pallas_src>

<mosaic_0001>
module attributes {stable_mosaic.version = 11 : i64} {
  func.func @_semiadnet_fused_kernel(%arg0: memref<2x1024xf32, #tpu.memory_space<vmem>>, %arg1: memref<1024x1024xbf16, #tpu.memory_space<vmem>>, %arg2: memref<1x1024xf32, #tpu.memory_space<vmem>>, %arg3: memref<1024x1024xbf16, #tpu.memory_space<vmem>>, %arg4: memref<1x1024xf32, #tpu.memory_space<vmem>>, %arg5: memref<1024x64xf32, #tpu.memory_space<vmem>>, %arg6: memref<1x64xf32, #tpu.memory_space<vmem>>, %arg7: memref<64x64xf32, #tpu.memory_space<vmem>>, %arg8: memref<1x64xf32, #tpu.memory_space<vmem>>, %arg9: memref<64x16xf32, #tpu.memory_space<vmem>>, %arg10: memref<1x16xf32, #tpu.memory_space<vmem>>, %arg11: memref<2x1xf32, #tpu.memory_space<vmem>>) attributes {dimension_semantics = [], scalar_prefetch = 0 : i64, scratch_operands = 0 : i64, tpu.core_type = #tpu.core_type<tc>} {
    %c0 = arith.constant 0 : index
    %c0_0 = arith.constant 0 : index
    %0 = vector.load %arg0[%c0, %c0_0] : memref<2x1024xf32, #tpu.memory_space<vmem>>, vector<2x1024xf32>
    %1 = arith.truncf %0 : vector<2x1024xf32> to vector<2x1024xbf16>
    %c0_1 = arith.constant 0 : index
    %c0_2 = arith.constant 0 : index
    %2 = vector.load %arg1[%c0_1, %c0_2] : memref<1024x1024xbf16, #tpu.memory_space<vmem>>, vector<1024x256xbf16>
    %cst = arith.constant dense<0.000000e+00> : vector<2x256xf32>
    %3 = tpu.matmul %1, %2, %cst {dimension_numbers = #tpu.dot_dimension_numbers<[1], [0], [0], [1], [0, 0, 1, 1], [], []>} : vector<2x1024xbf16>, vector<1024x256xbf16>, vector<2x256xf32> -> vector<2x256xf32>
    %c0_3 = arith.constant 0 : index
    %c0_4 = arith.constant 0 : index
    %4 = vector.load %arg2[%c0_3, %c0_4] : memref<1x1024xf32, #tpu.memory_space<vmem>>, vector<1x256xf32>
    %5 = vector.broadcast %4 : vector<1x256xf32> to vector<2x256xf32>
    %6 = arith.addf %3, %5 : vector<2x256xf32>
    %cst_5 = arith.constant 0.000000e+00 : f32
    %7 = vector.broadcast %cst_5 : f32 to vector<2x256xf32>
    %8 = arith.maximumf %6, %7 : vector<2x256xf32>
    %c0_6 = arith.constant 0 : index
    %c256 = arith.constant 256 : index
    %9 = vector.load %arg1[%c0_6, %c256] : memref<1024x1024xbf16, #tpu.memory_space<vmem>>, vector<1024x256xbf16>
    %cst_7 = arith.constant dense<0.000000e+00> : vector<2x256xf32>
    %10 = tpu.matmul %1, %9, %cst_7 {dimension_numbers = #tpu.dot_dimension_numbers<[1], [0], [0], [1], [0, 0, 1, 1], [], []>} : vector<2x1024xbf16>, vector<1024x256xbf16>, vector<2x256xf32> -> vector<2x256xf32>
    %c0_8 = arith.constant 0 : index
    %c256_9 = arith.constant 256 : index
    %11 = vector.load %arg2[%c0_8, %c256_9] : memref<1x1024xf32, #tpu.memory_space<vmem>>, vector<1x256xf32>
    %12 = vector.broadcast %11 : vector<1x256xf32> to vector<2x256xf32>
    %13 = arith.addf %10, %12 : vector<2x256xf32>
    %cst_10 = arith.constant 0.000000e+00 : f32
    %14 = vector.broadcast %cst_10 : f32 to vector<2x256xf32>
    %15 = arith.maximumf %13, %14 : vector<2x256xf32>
    %c0_11 = arith.constant 0 : index
    %c512 = arith.constant 512 : index
    %16 = vector.load %arg1[%c0_11, %c512] : memref<1024x1024xbf16, #tpu.memory_space<vmem>>, vector<1024x256xbf16>
    %cst_12 = arith.constant dense<0.000000e+00> : vector<2x256xf32>
    %17 = tpu.matmul %1, %16, %cst_12 {dimension_numbers = #tpu.dot_dimension_numbers<[1], [0], [0], [1], [0, 0, 1, 1], [], []>} : vector<2x1024xbf16>, vector<1024x256xbf16>, vector<2x256xf32> -> vector<2x256xf32>
    %c0_13 = arith.constant 0 : index
    %c512_14 = arith.constant 512 : index
    %18 = vector.load %arg2[%c0_13, %c512_14] : memref<1x1024xf32, #tpu.memory_space<vmem>>, vector<1x256xf32>
    %19 = vector.broadcast %18 : vector<1x256xf32> to vector<2x256xf32>
    %20 = arith.addf %17, %19 : vector<2x256xf32>
    %cst_15 = arith.constant 0.000000e+00 : f32
    %21 = vector.broadcast %cst_15 : f32 to vector<2x256xf32>
    %22 = arith.maximumf %20, %21 : vector<2x256xf32>
    %c0_16 = arith.constant 0 : index
    %c768 = arith.constant 768 : index
    %23 = vector.load %arg1[%c0_16, %c768] : memref<1024x1024xbf16, #tpu.memory_space<vmem>>, vector<1024x256xbf16>
    %cst_17 = arith.constant dense<0.000000e+00> : vector<2x256xf32>
    %24 = tpu.matmul %1, %23, %cst_17 {dimension_numbers = #tpu.dot_dimension_numbers<[1], [0], [0], [1], [0, 0, 1, 1], [], []>} : vector<2x1024xbf16>, vector<1024x256xbf16>, vector<2x256xf32> -> vector<2x256xf32>
    %c0_18 = arith.constant 0 : index
    %c768_19 = arith.constant 768 : index
    %25 = vector.load %arg2[%c0_18, %c768_19] : memref<1x1024xf32, #tpu.memory_space<vmem>>, vector<1x256xf32>
    %26 = vector.broadcast %25 : vector<1x256xf32> to vector<2x256xf32>
    %27 = arith.addf %24, %26 : vector<2x256xf32>
    %cst_20 = arith.constant 0.000000e+00 : f32
    %28 = vector.broadcast %cst_20 : f32 to vector<2x256xf32>
    %29 = arith.maximumf %27, %28 : vector<2x256xf32>
    %30 = tpu.concatenate %8, %15, %22, %29 in 1 : vector<2x256xf32>, vector<2x256xf32>, vector<2x256xf32>, vector<2x256xf32> -> vector<2x1024xf32>
    %31 = arith.truncf %30 : vector<2x1024xf32> to vector<2x1024xbf16>
    %c0_21 = arith.constant 0 : index
    %c0_22 = arith.constant 0 : index
    %32 = vector.load %arg3[%c0_21, %c0_22] : memref<1024x1024xbf16, #tpu.memory_space<vmem>>, vector<1024x256xbf16>
    %cst_23 = arith.constant dense<0.000000e+00> : vector<2x256xf32>
    %33 = tpu.matmul %31, %32, %cst_23 {dimension_numbers = #tpu.dot_dimension_numbers<[1], [0], [0], [1], [0, 0, 1, 1], [], []>} : vector<2x1024xbf16>, vector<1024x256xbf16>, vector<2x256xf32> -> vector<2x256xf32>
    %c0_24 = arith.constant 0 : index
    %c0_25 = arith.constant 0 : index
    %34 = vector.load %arg4[%c0_24, %c0_25] : memref<1x1024xf32, #tpu.memory_space<vmem>>, vector<1x256xf32>
    %35 = vector.broadcast %34 : vector<1x256xf32> to vector<2x256xf32>
    %36 = arith.addf %33, %35 : vector<2x256xf32>
    %cst_26 = arith.constant 0.000000e+00 : f32
    %37 = vector.broadcast %cst_26 : f32 to vector<2x256xf32>
    %38 = arith.maximumf %36, %37 : vector<2x256xf32>
    %c0_27 = arith.constant 0 : index
    %c256_28 = arith.constant 256 : index
    %39 = vector.load %arg3[%c0_27, %c256_28] : memref<1024x1024xbf16, #tpu.memory_space<vmem>>, vector<1024x256xbf16>
    %cst_29 = arith.constant dense<0.000000e+00> : vector<2x256xf32>
    %40 = tpu.matmul %31, %39, %cst_29 {dimension_numbers = #tpu.dot_dimension_numbers<[1], [0], [0], [1], [0, 0, 1, 1], [], []>} : vector<2x1024xbf16>, vector<1024x256xbf16>, vector<2x256xf32> -> vector<2x256xf32>
    %c0_30 = arith.constant 0 : index
    %c256_31 = arith.constant 256 : index
    %41 = vector.load %arg4[%c0_30, %c256_31] : memref<1x1024xf32, #tpu.memory_space<vmem>>, vector<1x256xf32>
    %42 = vector.broadcast %41 : vector<1x256xf32> to vector<2x256xf32>
    %43 = arith.addf %40, %42 : vector<2x256xf32>
    %cst_32 = arith.constant 0.000000e+00 : f32
    %44 = vector.broadcast %cst_32 : f32 to vector<2x256xf32>
    %45 = arith.maximumf %43, %44 : vector<2x256xf32>
    %c0_33 = arith.constant 0 : index
    %c512_34 = arith.constant 512 : index
    %46 = vector.load %arg3[%c0_33, %c512_34] : memref<1024x1024xbf16, #tpu.memory_space<vmem>>, vector<1024x256xbf16>
    %cst_35 = arith.constant dense<0.000000e+00> : vector<2x256xf32>
    %47 = tpu.matmul %31, %46, %cst_35 {dimension_numbers = #tpu.dot_dimension_numbers<[1], [0], [0], [1], [0, 0, 1, 1], [], []>} : vector<2x1024xbf16>, vector<1024x256xbf16>, vector<2x256xf32> -> vector<2x256xf32>
    %c0_36 = arith.constant 0 : index
    %c512_37 = arith.constant 512 : index
    %48 = vector.load %arg4[%c0_36, %c512_37] : memref<1x1024xf32, #tpu.memory_space<vmem>>, vector<1x256xf32>
    %49 = vector.broadcast %48 : vector<1x256xf32> to vector<2x256xf32>
    %50 = arith.addf %47, %49 : vector<2x256xf32>
    %cst_38 = arith.constant 0.000000e+00 : f32
    %51 = vector.broadcast %cst_38 : f32 to vector<2x256xf32>
    %52 = arith.maximumf %50, %51 : vector<2x256xf32>
    %c0_39 = arith.constant 0 : index
    %c768_40 = arith.constant 768 : index
    %53 = vector.load %arg3[%c0_39, %c768_40] : memref<1024x1024xbf16, #tpu.memory_space<vmem>>, vector<1024x256xbf16>
    %cst_41 = arith.constant dense<0.000000e+00> : vector<2x256xf32>
    %54 = tpu.matmul %31, %53, %cst_41 {dimension_numbers = #tpu.dot_dimension_numbers<[1], [0], [0], [1], [0, 0, 1, 1], [], []>} : vector<2x1024xbf16>, vector<1024x256xbf16>, vector<2x256xf32> -> vector<2x256xf32>
    %c0_42 = arith.constant 0 : index
    %c768_43 = arith.constant 768 : index
    %55 = vector.load %arg4[%c0_42, %c768_43] : memref<1x1024xf32, #tpu.memory_space<vmem>>, vector<1x256xf32>
    %56 = vector.broadcast %55 : vector<1x256xf32> to vector<2x256xf32>
    %57 = arith.addf %54, %56 : vector<2x256xf32>
    %cst_44 = arith.constant 0.000000e+00 : f32
    %58 = vector.broadcast %cst_44 : f32 to vector<2x256xf32>
    %59 = arith.maximumf %57, %58 : vector<2x256xf32>
    %60 = tpu.concatenate %38, %45, %52, %59 in 1 : vector<2x256xf32>, vector<2x256xf32>, vector<2x256xf32>, vector<2x256xf32> -> vector<2x1024xf32>
    %c0_45 = arith.constant 0 : index
    %c0_46 = arith.constant 0 : index
    %61 = vector.load %arg5[%c0_45, %c0_46] : memref<1024x64xf32, #tpu.memory_space<vmem>>, vector<1024x64xf32>
    %cst_47 = arith.constant dense<0.000000e+00> : vector<2x64xf32>
    %62 = tpu.matmul %60, %61, %cst_47 {dimension_numbers = #tpu.dot_dimension_numbers<[1], [0], [0], [1], [0, 0, 1, 1], [], []>} : vector<2x1024xf32>, vector<1024x64xf32>, vector<2x64xf32> -> vector<2x64xf32>
    %c0_48 = arith.constant 0 : index
    %c0_49 = arith.constant 0 : index
    %63 = vector.load %arg6[%c0_48, %c0_49] : memref<1x64xf32, #tpu.memory_space<vmem>>, vector<1x64xf32>
    %64 = vector.broadcast %63 : vector<1x64xf32> to vector<2x64xf32>
    %65 = arith.addf %62, %64 : vector<2x64xf32>
    %cst_50 = arith.constant 0.000000e+00 : f32
    %66 = vector.broadcast %cst_50 : f32 to vector<2x64xf32>
    %67 = arith.maximumf %65, %66 : vector<2x64xf32>
    %c0_51 = arith.constant 0 : index
    %c0_52 = arith.constant 0 : index
    %68 = vector.load %arg7[%c0_51, %c0_52] : memref<64x64xf32, #tpu.memory_space<vmem>>, vector<64x64xf32>
    %cst_53 = arith.constant dense<0.000000e+00> : vector<2x64xf32>
    %69 = tpu.matmul %67, %68, %cst_53 {dimension_numbers = #tpu.dot_dimension_numbers<[1], [0], [0], [1], [0, 0, 1, 1], [], []>} : vector<2x64xf32>, vector<64x64xf32>, vector<2x64xf32> -> vector<2x64xf32>
    %c0_54 = arith.constant 0 : index
    %c0_55 = arith.constant 0 : index
    %70 = vector.load %arg8[%c0_54, %c0_55] : memref<1x64xf32, #tpu.memory_space<vmem>>, vector<1x64xf32>
    %71 = vector.broadcast %70 : vector<1x64xf32> to vector<2x64xf32>
    %72 = arith.addf %69, %71 : vector<2x64xf32>
    %cst_56 = arith.constant 0.000000e+00 : f32
    %73 = vector.broadcast %cst_56 : f32 to vector<2x64xf32>
    %74 = arith.maximumf %72, %73 : vector<2x64xf32>
    %c0_57 = arith.constant 0 : index
    %c0_58 = arith.constant 0 : index
    %75 = vector.load %arg9[%c0_57, %c0_58] : memref<64x16xf32, #tpu.memory_space<vmem>>, vector<64x16xf32>
    %cst_59 = arith.constant dense<0.000000e+00> : vector<2x16xf32>
    %76 = tpu.matmul %74, %75, %cst_59 {dimension_numbers = #tpu.dot_dimension_numbers<[1], [0], [0], [1], [0, 0, 1, 1], [], []>} : vector<2x64xf32>, vector<64x16xf32>, vector<2x16xf32> -> vector<2x16xf32>
    %c0_60 = arith.constant 0 : index
    %c0_61 = arith.constant 0 : index
    %77 = vector.load %arg10[%c0_60, %c0_61] : memref<1x16xf32, #tpu.memory_space<vmem>>, vector<1x16xf32>
    %78 = vector.broadcast %77 : vector<1x16xf32> to vector<2x16xf32>
    %79 = arith.addf %76, %78 : vector<2x16xf32>
    %cst_62 = arith.constant 0.000000e+00 : f32
    %80 = vector.broadcast %cst_62 : f32 to vector<2x16xf32>
    %81 = arith.maximumf %79, %80 : vector<2x16xf32>
    %82 = math.absf %81 : vector<2x16xf32>
    %cst_63 = arith.constant 0.000000e+00 : f32
    %83 = vector.broadcast %cst_63 : f32 to vector<2x1xf32>
    %cst_64 = arith.constant dense<0xFF800000> : vector<2xf32>
    %84 = vector.multi_reduction <maximumf>, %82, %cst_64 [1] : vector<2x16xf32> to vector<2xf32>
    %85 = vector.shape_cast %84 : vector<2xf32> to vector<2x1xf32>
    %86 = arith.addf %83, %85 : vector<2x1xf32>
    %cst_65 = arith.constant 1.000000e+00 : f32
    %87 = vector.broadcast %cst_65 : f32 to vector<2x1xf32>
    %88 = arith.divf %86, %87 : vector<2x1xf32>
    %c0_66 = arith.constant 0 : index
    %c0_67 = arith.constant 0 : index
    %89 = vector.load %arg11[%c0_66, %c0_67] : memref<2x1xf32, #tpu.memory_space<vmem>>, vector<2x1xf32>
    tpu.vector_store %arg11[%c0_66, %c0_67], %88 {strides = array<i32>} : memref<2x1xf32, #tpu.memory_space<vmem>>, vector<2x1xf32>,
    return
  }
}

</mosaic_0001>

<llo_original>
// kernel: tpu_custom_call.1
$region0: #{tpu_custom_call.1}
  #allocation0 [shape = 'u32[]', space=smem, size = 0x4, offset = 0x4, fixed_abs, tag = 'smem constant byte address 0x4 - core index']
  #allocation1 [shape = 'u32[144,128]{1,0:T(1,128)}', space=vmem, size = 0x12000, scoped, tag = 'internal scratch']
  %s0 = inlined_call_operand.hbm [shape: f32[2,1024], index: 0, kind: input, shape index: {}]
  %s1 = inlined_call_operand.hbm [shape: bf16[1024,1024], index: 1, kind: input, shape index: {}]
  %s2 = inlined_call_operand.hbm [shape: f32[1,1024], index: 2, kind: input, shape index: {}]
  %s3 = inlined_call_operand.hbm [shape: bf16[1024,1024], index: 3, kind: input, shape index: {}]
  %s4 = inlined_call_operand.hbm [shape: f32[1,1024], index: 4, kind: input, shape index: {}]
  %s5 = inlined_call_operand.vmem [shape: f32[1024,64], index: 5, kind: input, shape index: {}]
  %s6 = inlined_call_operand.hbm [shape: f32[1,64], index: 6, kind: input, shape index: {}]
  %s7 = inlined_call_operand.hbm [shape: f32[64,64], index: 7, kind: input, shape index: {}]
  %s8 = inlined_call_operand.hbm [shape: f32[1,64], index: 8, kind: input, shape index: {}]
  %s9 = inlined_call_operand.vmem [shape: f32[64,16], index: 9, kind: input, shape index: {}]
  %s10 = inlined_call_operand.hbm [shape: f32[1,16], index: 10, kind: input, shape index: {}]
  %s11 = inlined_call_operand.vmem [shape: f32[2,1], index: 11, kind: output, shape index: {}]
  %s12 = sld [smem:[#allocation0]]
  $region90: #{tpu_custom_call.1} parent=0
    _
  %s14 = ssub.s32 1, %s12
  %s15 = scalar_select 0, %s14, %s12
  $region1: #{tpu_custom_call.1} parent=0
    #allocation2 [shape = 'u8[8192]{0}', space=vmem, size = 0x2000, scoped, tag = 'input window, operand 0, single buffered']
    #allocation3 [shape = 's32[1]{0}', space=sflag, size = 0x4, scoped, tag = 'scoped memory for tpu_custom_call.1']
    #allocation4 [shape = 'u8[2097152]{0}', space=vmem, size = 0x200000, scoped, tag = 'input window, operand 1, single buffered']
    #allocation5 [shape = 's32[1]{0}', space=sflag, size = 0x4, scoped, tag = 'scoped memory for tpu_custom_call.1']
    #allocation6 [shape = 'u8[4096]{0}', space=vmem, size = 0x1000, scoped, tag = 'input window, operand 2, single buffered']
    #allocation7 [shape = 'u8[2097152]{0}', space=vmem, size = 0x200000, scoped, tag = 'input window, operand 3, single buffered']
    #allocation8 [shape = 's32[1]{0}', space=sflag, size = 0x4, scoped, tag = 'scoped memory for tpu_custom_call.1']
    #allocation9 [shape = 'u8[4096]{0}', space=vmem, size = 0x1000, scoped, tag = 'input window, operand 4, single buffered']
    #allocation10 [shape = 'u8[512]{0}', space=vmem, size = 0x400, scoped, tag = 'input window, operand 6, single buffered']
    #allocation11 [shape = 's32[1]{0}', space=sflag, size = 0x4, scoped, tag = 'scoped memory for tpu_custom_call.1']
    #allocation12 [shape = 'u8[32768]{0}', space=vmem, size = 0x8000, scoped, tag = 'input window, operand 7, single buffered']
    #allocation13 [shape = 'u8[512]{0}', space=vmem, size = 0x400, scoped, tag = 'input window, operand 8, single buffered']
    #allocation14 [shape = 's32[1]{0}', space=sflag, size = 0x4, scoped, tag = 'scoped memory for tpu_custom_call.1']
    #allocation15 [shape = 'u8[512]{0}', space=vmem, size = 0x400, scoped, tag = 'input window, operand 10, single buffered']
    %16 = vsyncpa [#allocation3], 0
    %17 = vsyncpa [#allocation5], 0
    %18 = vsyncpa [#allocation8], 0
    %19 = vsyncpa [#allocation11], 0
    %20 = vsyncpa [#allocation14], 0
    // Predicated region
    $region2: #{tpu_custom_call.1} parent=1 // pred_check
      _
    $region3: #{tpu_custom_call.1} parent=1 // pred_check_branch
      %22 = sbr.rel (0) target = $region5
    $region4: #{tpu_custom_call.1} parent=1 // pred_region
      %s24 = ssub.s32 256, 256
      %25 = vsyncadd [#allocation3], %s24
      %s27 = sshll.u32 [#allocation2], 4
      %s28 = int_to_ptr.vmem [resolvable:$true] %s27
      %30 = dma.hbm_to_vmem [thread:$0]  %s0, 256, %s28, [#allocation3]
    $region5: #{tpu_custom_call.1} parent=1 // pred_fallthru
      _
    // Predicated region
    $region6: #{tpu_custom_call.1} parent=1 // pred_check
      _
    $region7: #{tpu_custom_call.1} parent=1 // pred_check_branch
      %32 = sbr.rel (0) target = $region9
    $region8: #{tpu_custom_call.1} parent=1 // pred_region
      %s34 = ssub.s32 65536, 65536
      %35 = vsyncadd [#allocation5], %s34
      %s36 = sshll.u32 [#allocation4], 4
      %s37 = int_to_ptr.vmem [resolvable:$true] %s36
      %42 = dma.hbm_to_vmem [thread:$0]  %s1, 65536, %s37, [#allocation5], 512, 512, 32
    $region9: #{tpu_custom_call.1} parent=1 // pred_fallthru
      _
    // Predicated region
    $region10: #{tpu_custom_call.1} parent=1 // pred_check
      _
    $region11: #{tpu_custom_call.1} parent=1 // pred_check_branch
      %44 = sbr.rel (0) target = $region13
    $region12: #{tpu_custom_call.1} parent=1 // pred_region
      %s46 = ssub.s32 128, 128
      %47 = vsyncadd [#allocation5], %s46
      %s49 = sshll.u32 [#allocation6], 4
      %s50 = int_to_ptr.vmem [resolvable:$true] %s49
      %52 = dma.hbm_to_vmem [thread:$0]  %s2, 128, %s50, [#allocation5]
    $region13: #{tpu_custom_call.1} parent=1 // pred_fallthru
      _
    // Predicated region
    $region14: #{tpu_custom_call.1} parent=1 // pred_check
      _
    $region15: #{tpu_custom_call.1} parent=1 // pred_check_branch
      %54 = sbr.rel (0) target = $region17
    $region16: #{tpu_custom_call.1} parent=1 // pred_region
      %s56 = ssub.s32 65536, 65536
      %57 = vsyncadd [#allocation8], %s56
      %s58 = sshll.u32 [#allocation7], 4
      %s59 = int_to_ptr.vmem [resolvable:$true] %s58
      %64 = dma.hbm_to_vmem [thread:$0]  %s3, 65536, %s59, [#allocation8], 512, 512, 32
    $region17: #{tpu_custom_call.1} parent=1 // pred_fallthru
      _
    // Predicated region
    $region18: #{tpu_custom_call.1} parent=1 // pred_check
      _
    $region19: #{tpu_custom_call.1} parent=1 // pred_check_branch
      %66 = sbr.rel (0) target = $region21
    $region20: #{tpu_custom_call.1} parent=1 // pred_region
      %s68 = ssub.s32 128, 128
      %69 = vsyncadd [#allocation8], %s68
      %s71 = sshll.u32 [#allocation9], 4
      %s72 = int_to_ptr.vmem [resolvable:$true] %s71
      %74 = dma.hbm_to_vmem [thread:$0]  %s4, 128, %s72, [#allocation8]
    $region21: #{tpu_custom_call.1} parent=1 // pred_fallthru
      _
    // Predicated region
    $region22: #{tpu_custom_call.1} parent=1 // pred_check
      _
    $region23: #{tpu_custom_call.1} parent=1 // pred_check_branch
      %76 = sbr.rel (0) target = $region25
    $region24: #{tpu_custom_call.1} parent=1 // pred_region
      _
    $region25: #{tpu_custom_call.1} parent=1 // pred_fallthru
      _
    // Predicated region
    $region26: #{tpu_custom_call.1} parent=1 // pred_check
      _
    $region27: #{tpu_custom_call.1} parent=1 // pred_check_branch
      %78 = sbr.rel (0) target = $region29
    $region28: #{tpu_custom_call.1} parent=1 // pred_region
      %s80 = ssub.s32 16, 16
      %81 = vsyncadd [#allocation11], %s80
      %s83 = sshll.u32 [#allocation10], 4
      %s84 = int_to_ptr.vmem [resolvable:$true] %s83
      %86 = dma.hbm_to_vmem [thread:$0]  %s6, 16, %s84, [#allocation11]
    $region29: #{tpu_custom_call.1} parent=1 // pred_fallthru
      _
    // Predicated region
    $region30: #{tpu_custom_call.1} parent=1 // pred_check
      _
    $region31: #{tpu_custom_call.1} parent=1 // pred_check_branch
      %88 = sbr.rel (0) target = $region33
    $region32: #{tpu_custom_call.1} parent=1 // pred_region
      %s90 = ssub.s32 1024, 1024
      %91 = vsyncadd [#allocation11], %s90
      %s92 = sshll.u32 [#allocation12], 4
      %s93 = int_to_ptr.vmem [resolvable:$true] %s92
      %98 = dma.hbm_to_vmem [thread:$0]  %s7, 1024, %s93, [#allocation11], 128, 128, 8
    $region33: #{tpu_custom_call.1} parent=1 // pred_fallthru
      _
    // Predicated region
    $region34: #{tpu_custom_call.1} parent=1 // pred_check
      _
    $region35: #{tpu_custom_call.1} parent=1 // pred_check_branch
      %100 = sbr.rel (0) target = $region37
    $region36: #{tpu_custom_call.1} parent=1 // pred_region
      %s102 = ssub.s32 16, 16
      %103 = vsyncadd [#allocation14], %s102
      %s105 = sshll.u32 [#allocation13], 4
      %s106 = int_to_ptr.vmem [resolvable:$true] %s105
      %108 = dma.hbm_to_vmem [thread:$0]  %s8, 16, %s106, [#allocation14]
    $region37: #{tpu_custom_call.1} parent=1 // pred_fallthru
      _
    // Predicated region
    $region38: #{tpu_custom_call.1} parent=1 // pred_check
      _
    $region39: #{tpu_custom_call.1} parent=1 // pred_check_branch
      %110 = sbr.rel (0) target = $region41
    $region40: #{tpu_custom_call.1} parent=1 // pred_region
      _
    $region41: #{tpu_custom_call.1} parent=1 // pred_fallthru
      _
    // Predicated region
    $region42: #{tpu_custom_call.1} parent=1 // pred_check
      _
    $region43: #{tpu_custom_call.1} parent=1 // pred_check_branch
      %112 = sbr.rel (0) target = $region45
    $region44: #{tpu_custom_call.1} parent=1 // pred_region
      %s114 = ssub.s32 16, 16
      %115 = vsyncadd [#allocation14], %s114
      %s117 = sshll.u32 [#allocation15], 4
      %s118 = int_to_ptr.vmem [resolvable:$true] %s117
      %120 = dma.hbm_to_vmem [thread:$0]  %s10, 16, %s118, [#allocation14]
    $region45: #{tpu_custom_call.1} parent=1 // pred_fallthru
      _
    // Predicated region
    $region46: #{tpu_custom_call.1} parent=1 // pred_check
      _
    $region47: #{tpu_custom_call.1} parent=1 // pred_check_branch
      %122 = sbr.rel (0) target = $region49
    $region48: #{tpu_custom_call.1} parent=1 // pred_region
      %123 = dma.done [#allocation3], 256
    $region49: #{tpu_custom_call.1} parent=1 // pred_fallthru
      _
    // Predicated region
    $region50: #{tpu_custom_call.1} parent=1 // pred_check
      _
    $region51: #{tpu_custom_call.1} parent=1 // pred_check_branch
      %125 = sbr.rel (0) target = $region53
    $region52: #{tpu_custom_call.1} parent=1 // pred_region
      %126 = dma.done [#allocation5], 65536
    $region53: #{tpu_custom_call.1} parent=1 // pred_fallthru
      _
    // Predicated region
    $region54: #{tpu_custom_call.1} parent=1 // pred_check
      _
    $region55: #{tpu_custom_call.1} parent=1 // pred_check_branch
      %128 = sbr.rel (0) target = $region57
    $region56: #{tpu_custom_call.1} parent=1 // pred_region
      %129 = dma.done [#allocation5], 128
    $region57: #{tpu_custom_call.1} parent=1 // pred_fallthru
      _
    // Predicated region
    $region58: #{tpu_custom_call.1} parent=1 // pred_check
      _
    $region59: #{tpu_custom_call.1} parent=1 // pred_check_branch
      %131 = sbr.rel (0) target = $region61
    $region60: #{tpu_custom_call.1} parent=1 // pred_region
      %132 = dma.done [#allocation8], 65536
    $region61: #{tpu_custom_call.1} parent=1 // pred_fallthru
      _
    // Predicated region
    $region62: #{tpu_custom_call.1} parent=1 // pred_check
      _
    $region63: #{tpu_custom_call.1} parent=1 // pred_check_branch
      %134 = sbr.rel (0) target = $region65
    $region64: #{tpu_custom_call.1} parent=1 // pred_region
      %135 = dma.done [#allocation8], 128
    $region65: #{tpu_custom_call.1} parent=1 // pred_fallthru
      _
    // Predicated region
    $region66: #{tpu_custom_call.1} parent=1 // pred_check
      _
    $region67: #{tpu_custom_call.1} parent=1 // pred_check_branch
      %137 = sbr.rel (0) target = $region69
    $region68: #{tpu_custom_call.1} parent=1 // pred_region
      %138 = dma.done [#allocation11], 16
    $region69: #{tpu_custom_call.1} parent=1 // pred_fallthru
      _
    // Predicated region
    $region70: #{tpu_custom_call.1} parent=1 // pred_check
      _
    $region71: #{tpu_custom_call.1} parent=1 // pred_check_branch
      %140 = sbr.rel (0) target = $region73
    $region72: #{tpu_custom_call.1} parent=1 // pred_region
      %141 = dma.done [#allocation11], 1024
    $region73: #{tpu_custom_call.1} parent=1 // pred_fallthru
      _
    // Predicated region
    $region74: #{tpu_custom_call.1} parent=1 // pred_check
      _
    $region75: #{tpu_custom_call.1} parent=1 // pred_check_branch
      %143 = sbr.rel (0) target = $region77
    $region76: #{tpu_custom_call.1} parent=1 // pred_region
      %144 = dma.done [#allocation14], 16
    $region77: #{tpu_custom_call.1} parent=1 // pred_fallthru
      _
    // Predicated region
    $region78: #{tpu_custom_call.1} parent=1 // pred_check
      _
    $region79: #{tpu_custom_call.1} parent=1 // pred_check_branch
      %146 = sbr.rel (0) target = $region81
    $region80: #{tpu_custom_call.1} parent=1 // pred_region
      %147 = dma.done [#allocation14], 16
    $region81: #{tpu_custom_call.1} parent=1 // pred_fallthru
      _
    %v148 = vld [vmem:[#allocation2] sm:$0xff]
    %v149 = vld [vmem:[#allocation2 + $0x8] sm:$0xff]
    %v152 = vcombine.high %v148, %v148
    %v154 = vunpack.c.l.s4 1983009808
    %v155 = vunpack.c.0.s8 %v154
    %v156 = vlaneseq
    %v157 = vshrl.u32 %v156, 7
    %v158 = vsub.s32 %v155, %v157
    %v159 = vrot.slane %v148, %v158
    %v161 = vunpack.c.l.s4 1983009808
    %v162 = vunpack.c.0.s8 %v161
    %v163 = vlaneseq
    %v164 = vshrl.u32 %v163, 7
    %v165 = vsub.s32 %v162, %v164
    %v166 = vrot.slane %v152, %v165
    %v167 = vcombine.high %v159, %v159
    %v168 = vcombine.high %v166, %v166
    %v169 = vcombine.high %v149, %v149
    %v171 = vunpack.c.l.s4 1983009808
    %v172 = vunpack.c.0.s8 %v171
    %v173 = vlaneseq
    %v174 = vshrl.u32 %v173, 7
    %v175 = vsub.s32 %v172, %v174
    %v176 = vrot.slane %v149, %v175
    %v178 = vunpack.c.l.s4 1983009808
    %v179 = vunpack.c.0.s8 %v178
    %v180 = vlaneseq
    %v181 = vshrl.u32 %v180, 7
    %v182 = vsub.s32 %v179, %v181
    %v183 = vrot.slane %v169, %v182
    %v184 = vcombine.high %v176, %v176
    %v185 = vcombine.high %v183, %v183
    %v194 = vpack.c.bf16 %v159, %v159
    %v195 = vpack.c.bf16 %v167, %v167
    %v196 = vpack.c.bf16 %v166, %v166
    %v197 = vpack.c.bf16 %v168, %v168
    %v198 = vpack.c.bf16 %v176, %v176
    %v199 = vpack.c.bf16 %v184, %v184
    %v200 = vpack.c.bf16 %v183, %v183
    %v201 = vpack.c.bf16 %v185, %v185
    %v202 = vld [vmem:[#allocation4] sm:$0xff]
    %v203 = vld [vmem:[#allocation4 + $0x20] sm:$0xff]
    %v204 = vld [vmem:[#allocation4 + $0x40] sm:$0xff]
    %v205 = vld [vmem:[#allocation4 + $0x60] sm:$0xff]
    %v206 = vld [vmem:[#allocation4 + $0x80] sm:$0xff]
    %v207 = vld [vmem:[#allocation4 + $0xa0] sm:$0xff]
    %v208 = vld [vmem:[#allocation4 + $0xc0] sm:$0xff]
    %v209 = vld [vmem:[#allocation4 + $0xe0] sm:$0xff]
    %v210 = vld [vmem:[#allocation4 + $0x100] sm:$0xff]
    %v211 = vld [vmem:[#allocation4 + $0x120] sm:$0xff]
    %v212 = vld [vmem:[#allocation4 + $0x140] sm:$0xff]
    %v213 = vld [vmem:[#allocation4 + $0x160] sm:$0xff]
    %v214 = vld [vmem:[#allocation4 + $0x180] sm:$0xff]
    %v215 = vld [vmem:[#allocation4 + $0x1a0] sm:$0xff]
    %v216 = vld [vmem:[#allocation4 + $0x1c0] sm:$0xff]
    %v217 = vld [vmem:[#allocation4 + $0x1e0] sm:$0xff]
    %v218 = vld [vmem:[#allocation4 + $0x200] sm:$0xff]
    %v219 = vld [vmem:[#allocation4 + $0x220] sm:$0xff]
    %v220 = vld [vmem:[#allocation4 + $0x240] sm:$0xff]
    %v221 = vld [vmem:[#allocation4 + $0x260] sm:$0xff]
    %v222 = vld [vmem:[#allocation4 + $0x280] sm:$0xff]
    %v223 = vld [vmem:[#allocation4 + $0x2a0] sm:$0xff]
    %v224 = vld [vmem:[#allocation4 + $0x2c0] sm:$0xff]
    %v225 = vld [vmem:[#allocation4 + $0x2e0] sm:$0xff]
    %v226 = vld [vmem:[#allocation4 + $0x300] sm:$0xff]
    %v227 = vld [vmem:[#allocation4 + $0x320] sm:$0xff]
    %v228 = vld [vmem:[#allocation4 + $0x340] sm:$0xff]
    %v229 = vld [vmem:[#allocation4 + $0x360] sm:$0xff]
    %v230 = vld [vmem:[#allocation4 + $0x380] sm:$0xff]
    %v231 = vld [vmem:[#allocation4 + $0x3a0] sm:$0xff]
    %v232 = vld [vmem:[#allocation4 + $0x3c0] sm:$0xff]
    %v233 = vld [vmem:[#allocation4 + $0x3e0] sm:$0xff]
    %v234 = vld [vmem:[#allocation4 + $0x400] sm:$0xff]
    %v235 = vld [vmem:[#allocation4 + $0x420] sm:$0xff]
    %v236 = vld [vmem:[#allocation4 + $0x440] sm:$0xff]
    %v237 = vld [vmem:[#allocation4 + $0x460] sm:$0xff]
    %v238 = vld [vmem:[#allocation4 + $0x480] sm:$0xff]
    %v239 = vld [vmem:[#allocation4 + $0x4a0] sm:$0xff]
    %v240 = vld [vmem:[#allocation4 + $0x4c0] sm:$0xff]
    %v241 = vld [vmem:[#allocation4 + $0x4e0] sm:$0xff]
    %v242 = vld [vmem:[#allocation4 + $0x500] sm:$0xff]
    %v243 = vld [vmem:[#allocation4 + $0x520] sm:$0xff]
    %v244 = vld [vmem:[#allocation4 + $0x540] sm:$0xff]
    %v245 = vld [vmem:[#allocation4 + $0x560] sm:$0xff]
    %v246 = vld [vmem:[#allocation4 + $0x580] sm:$0xff]
    %v247 = vld [vmem:[#allocation4 + $0x5a0] sm:$0xff]
    %v248 = vld [vmem:[#allocation4 + $0x5c0] sm:$0xff]
    %v249 = vld [vmem:[#allocation4 + $0x5e0] sm:$0xff]
    %v250 = vld [vmem:[#allocation4 + $0x600] sm:$0xff]
    %v251 = vld [vmem:[#allocation4 + $0x620] sm:$0xff]
    %v252 = vld [vmem:[#allocation4 + $0x640] sm:$0xff]
    %v253 = vld [vmem:[#allocation4 + $0x660] sm:$0xff]
    %v254 = vld [vmem:[#allocation4 + $0x680] sm:$0xff]
    %v255 = vld [vmem:[#allocation4 + $0x6a0] sm:$0xff]
    %v256 = vld [vmem:[#allocation4 + $0x6c0] sm:$0xff]
    %v257 = vld [vmem:[#allocation4 + $0x6e0] sm:$0xff]
    %v258 = vld [vmem:[#allocation4 + $0x700] sm:$0xff]
    %v259 = vld [vmem:[#allocation4 + $0x720] sm:$0xff]
    %v260 = vld [vmem:[#allocation4 + $0x740] sm:$0xff]
    %v261 = vld [vmem:[#allocation4 + $0x760] sm:$0xff]
    %v262 = vld [vmem:[#allocation4 + $0x780] sm:$0xff]
    %v263 = vld [vmem:[#allocation4 + $0x7a0] sm:$0xff]
    %v264 = vld [vmem:[#allocation4 + $0x7c0] sm:$0xff]
    %v265 = vld [vmem:[#allocation4 + $0x7e0] sm:$0xff]
    %v266 = vld [vmem:[#allocation4 + $0x800] sm:$0xff]
    %v267 = vld [vmem:[#allocation4 + $0x820] sm:$0xff]
    %v268 = vld [vmem:[#allocation4 + $0x840] sm:$0xff]
    %v269 = vld [vmem:[#allocation4 + $0x860] sm:$0xff]
    %v270 = vld [vmem:[#allocation4 + $0x880] sm:$0xff]
    %v271 = vld [vmem:[#allocation4 + $0x8a0] sm:$0xff]
    %v272 = vld [vmem:[#allocation4 + $0x8c0] sm:$0xff]
    %v273 = vld [vmem:[#allocation4 + $0x8e0] sm:$0xff]
    %v274 = vld [vmem:[#allocation4 + $0x900] sm:$0xff]
    %v275 = vld [vmem:[#allocation4 + $0x920] sm:$0xff]
    %v276 = vld [vmem:[#allocation4 + $0x940] sm:$0xff]
    %v277 = vld [vmem:[#allocation4 + $0x960] sm:$0xff]
    %v278 = vld [vmem:[#allocation4 + $0x980] sm:$0xff]
    %v279 = vld [vmem:[#allocation4 + $0x9a0] sm:$0xff]
    %v280 = vld [vmem:[#allocation4 + $0x9c0] sm:$0xff]
    %v281 = vld [vmem:[#allocation4 + $0x9e0] sm:$0xff]
    %v282 = vld [vmem:[#allocation4 + $0xa00] sm:$0xff]
    %v283 = vld [vmem:[#allocation4 + $0xa20] sm:$0xff]
    %v284 = vld [vmem:[#allocation4 + $0xa40] sm:$0xff]
    %v285 = vld [vmem:[#allocation4 + $0xa60] sm:$0xff]
    %v286 = vld [vmem:[#allocation4 + $0xa80] sm:$0xff]
    %v287 = vld [vmem:[#allocation4 + $0xaa0] sm:$0xff]
    %v288 = vld [vmem:[#allocation4 + $0xac0] sm:$0xff]
    %v289 = vld [vmem:[#allocation4 + $0xae0] sm:$0xff]
    %v290 = vld [vmem:[#allocation4 + $0xb00] sm:$0xff]
    %v291 = vld [vmem:[#allocation4 + $0xb20] sm:$0xff]
    %v292 = vld [vmem:[#allocation4 + $0xb40] sm:$0xff]
    %v293 = vld [vmem:[#allocation4 + $0xb60] sm:$0xff]
    %v294 = vld [vmem:[#allocation4 + $0xb80] sm:$0xff]
    %v295 = vld [vmem:[#allocation4 + $0xba0] sm:$0xff]
    %v296 = vld [vmem:[#allocation4 + $0xbc0] sm:$0xff]
    %v297 = vld [vmem:[#allocation4 + $0xbe0] sm:$0xff]
    %v298 = vld [vmem:[#allocation4 + $0xc00] sm:$0xff]
    %v299 = vld [vmem:[#allocation4 + $0xc20] sm:$0xff]
    %v300 = vld [vmem:[#allocation4 + $0xc40] sm:$0xff]
    %v301 = vld [vmem:[#allocation4 + $0xc60] sm:$0xff]
    %v302 = vld [vmem:[#allocation4 + $0xc80] sm:$0xff]
    %v303 = vld [vmem:[#allocation4 + $0xca0] sm:$0xff]
    %v304 = vld [vmem:[#allocation4 + $0xcc0] sm:$0xff]
    %v305 = vld [vmem:[#allocation4 + $0xce0] sm:$0xff]
    %v306 = vld [vmem:[#allocation4 + $0xd00] sm:$0xff]
    %v307 = vld [vmem:[#allocation4 + $0xd20] sm:$0xff]
    %v308 = vld [vmem:[#allocation4 + $0xd40] sm:$0xff]
    %v309 = vld [vmem:[#allocation4 + $0xd60] sm:$0xff]
    %v310 = vld [vmem:[#allocation4 + $0xd80] sm:$0xff]
    %v311 = vld [vmem:[#allocation4 + $0xda0] sm:$0xff]
    %v312 = vld [vmem:[#allocation4 + $0xdc0] sm:$0xff]
    %v313 = vld [vmem:[#allocation4 + $0xde0] sm:$0xff]
    %v314 = vld [vmem:[#allocation4 + $0xe00] sm:$0xff]
    %v315 = vld [vmem:[#allocation4 + $0xe20] sm:$0xff]
    %v316 = vld [vmem:[#allocation4 + $0xe40] sm:$0xff]
    %v317 = vld [vmem:[#allocation4 + $0xe60] sm:$0xff]
    %v318 = vld [vmem:[#allocation4 + $0xe80] sm:$0xff]
    %v319 = vld [vmem:[#allocation4 + $0xea0] sm:$0xff]
    %v320 = vld [vmem:[#allocation4 + $0xec0] sm:$0xff]
    %v321 = vld [vmem:[#allocation4 + $0xee0] sm:$0xff]
    %v322 = vld [vmem:[#allocation4 + $0xf00] sm:$0xff]
    %v323 = vld [vmem:[#allocation4 + $0xf20] sm:$0xff]
    %v324 = vld [vmem:[#allocation4 + $0xf40] sm:$0xff]
    %v325 = vld [vmem:[#allocation4 + $0xf60] sm:$0xff]
    %v326 = vld [vmem:[#allocation4 + $0xf80] sm:$0xff]
    %v327 = vld [vmem:[#allocation4 + $0xfa0] sm:$0xff]
    %v328 = vld [vmem:[#allocation4 + $0xfc0] sm:$0xff]
    %v329 = vld [vmem:[#allocation4 + $0xfe0] sm:$0xff]
    %v330 = vld [vmem:[#allocation6] sm:$0x3]
    %v332 = vlaneseq
    %v333 = vshrl.u32 %v332, 7
    %v334 = vsub.s32 0, %v333
    %v335 = vrot.slane %v330, %v334
    %v336 = vlaneseq
    %v337 = vshrl.u32 %v336, 7
    %v338 = vsub.s32 1, %v337
    %v339 = vrot.slane %v330, %v338
    %v470 = vunpack.c.l.b16 %v202
    %v471 = vunpack.c.h.b16 %v202
    %v472 = vunpack.c.l.b16 %v203
    %v473 = vunpack.c.h.b16 %v203
    %v474 = vunpack.c.l.b16 %v204
    %v475 = vunpack.c.h.b16 %v204
    %v476 = vunpack.c.l.b16 %v205
    %v477 = vunpack.c.h.b16 %v205
    %v478 = vunpack.c.l.b16 %v206
    %v479 = vunpack.c.h.b16 %v206
    %v480 = vunpack.c.l.b16 %v207
    %v481 = vunpack.c.h.b16 %v207
    %v482 = vunpack.c.l.b16 %v208
    %v483 = vunpack.c.h.b16 %v208
    %v484 = vunpack.c.l.b16 %v209
    %v485 = vunpack.c.h.b16 %v209
    %v486 = vunpack.c.l.b16 %v210
    %v487 = vunpack.c.h.b16 %v210
    %v488 = vunpack.c.l.b16 %v211
    %v489 = vunpack.c.h.b16 %v211
    %v490 = vunpack.c.l.b16 %v212
    %v491 = vunpack.c.h.b16 %v212
    %v492 = vunpack.c.l.b16 %v213
    %v493 = vunpack.c.h.b16 %v213
    %v494 = vunpack.c.l.b16 %v214
    %v495 = vunpack.c.h.b16 %v214
    %v496 = vunpack.c.l.b16 %v215
    %v497 = vunpack.c.h.b16 %v215
    %v498 = vunpack.c.l.b16 %v216
    %v499 = vunpack.c.h.b16 %v216
    %v500 = vunpack.c.l.b16 %v217
    %v501 = vunpack.c.h.b16 %v217
    %v502 = vunpack.c.l.b16 %v218
    %v503 = vunpack.c.h.b16 %v218
    %v504 = vunpack.c.l.b16 %v219
    %v505 = vunpack.c.h.b16 %v219
    %v506 = vunpack.c.l.b16 %v220
    %v507 = vunpack.c.h.b16 %v220
    %v508 = vunpack.c.l.b16 %v221
    %v509 = vunpack.c.h.b16 %v221
    %v510 = vunpack.c.l.b16 %v222
    %v511 = vunpack.c.h.b16 %v222
    %v512 = vunpack.c.l.b16 %v223
    %v513 = vunpack.c.h.b16 %v223
    %v514 = vunpack.c.l.b16 %v224
    %v515 = vunpack.c.h.b16 %v224
    %v516 = vunpack.c.l.b16 %v225
    %v517 = vunpack.c.h.b16 %v225
    %v518 = vunpack.c.l.b16 %v226
    %v519 = vunpack.c.h.b16 %v226
    %v520 = vunpack.c.l.b16 %v227
    %v521 = vunpack.c.h.b16 %v227
    %v522 = vunpack.c.l.b16 %v228
    %v523 = vunpack.c.h.b16 %v228
    %v524 = vunpack.c.l.b16 %v229
    %v525 = vunpack.c.h.b16 %v229
    %v526 = vunpack.c.l.b16 %v230
    %v527 = vunpack.c.h.b16 %v230
    %v528 = vunpack.c.l.b16 %v231
    %v529 = vunpack.c.h.b16 %v231
    %v530 = vunpack.c.l.b16 %v232
    %v531 = vunpack.c.h.b16 %v232
    %v532 = vunpack.c.l.b16 %v233
    %v533 = vunpack.c.h.b16 %v233
    %v534 = vunpack.c.l.b16 %v234
    %v535 = vunpack.c.h.b16 %v234
    %v536 = vunpack.c.l.b16 %v235
    %v537 = vunpack.c.h.b16 %v235
    %v538 = vunpack.c.l.b16 %v236
    %v539 = vunpack.c.h.b16 %v236
    %v540 = vunpack.c.l.b16 %v237
    %v541 = vunpack.c.h.b16 %v237
    %v542 = vunpack.c.l.b16 %v238
    %v543 = vunpack.c.h.b16 %v238
    %v544 = vunpack.c.l.b16 %v239
    %v545 = vunpack.c.h.b16 %v239
    %v546 = vunpack.c.l.b16 %v240
    %v547 = vunpack.c.h.b16 %v240
    %v548 = vunpack.c.l.b16 %v241
    %v549 = vunpack.c.h.b16 %v241
    %v550 = vunpack.c.l.b16 %v242
    %v551 = vunpack.c.h.b16 %v242
    %v552 = vunpack.c.l.b16 %v243
    %v553 = vunpack.c.h.b16 %v243
    %v554 = vunpack.c.l.b16 %v244
    %v555 = vunpack.c.h.b16 %v244
    %v556 = vunpack.c.l.b16 %v245
    %v557 = vunpack.c.h.b16 %v245
    %v558 = vunpack.c.l.b16 %v246
    %v559 = vunpack.c.h.b16 %v246
    %v560 = vunpack.c.l.b16 %v247
    %v561 = vunpack.c.h.b16 %v247
    %v562 = vunpack.c.l.b16 %v248
    %v563 = vunpack.c.h.b16 %v248
    %v564 = vunpack.c.l.b16 %v249
    %v565 = vunpack.c.h.b16 %v249
    %v566 = vunpack.c.l.b16 %v250
    %v567 = vunpack.c.h.b16 %v250
    %v568 = vunpack.c.l.b16 %v251
    %v569 = vunpack.c.h.b16 %v251
    %v570 = vunpack.c.l.b16 %v252
    %v571 = vunpack.c.h.b16 %v252
    %v572 = vunpack.c.l.b16 %v253
    %v573 = vunpack.c.h.b16 %v253
    %v574 = vunpack.c.l.b16 %v254
    %v575 = vunpack.c.h.b16 %v254
    %v576 = vunpack.c.l.b16 %v255
    %v577 = vunpack.c.h.b16 %v255
    %v578 = vunpack.c.l.b16 %v256
    %v579 = vunpack.c.h.b16 %v256
    %v580 = vunpack.c.l.b16 %v257
    %v581 = vunpack.c.h.b16 %v257
    %v582 = vunpack.c.l.b16 %v258
    %v583 = vunpack.c.h.b16 %v258
    %v584 = vunpack.c.l.b16 %v259
    %v585 = vunpack.c.h.b16 %v259
    %v586 = vunpack.c.l.b16 %v260
    %v587 = vunpack.c.h.b16 %v260
    %v588 = vunpack.c.l.b16 %v261
    %v589 = vunpack.c.h.b16 %v261
    %v590 = vunpack.c.l.b16 %v262
    %v591 = vunpack.c.h.b16 %v262
    %v592 = vunpack.c.l.b16 %v263
    %v593 = vunpack.c.h.b16 %v263
    %v594 = vunpack.c.l.b16 %v264
    %v595 = vunpack.c.h.b16 %v264
    %v596 = vunpack.c.l.b16 %v265
    %v597 = vunpack.c.h.b16 %v265
    %v598 = vunpack.c.l.b16 %v266
    %v599 = vunpack.c.h.b16 %v266
    %v600 = vunpack.c.l.b16 %v267
    %v601 = vunpack.c.h.b16 %v267
    %v602 = vunpack.c.l.b16 %v268
    %v603 = vunpack.c.h.b16 %v268
    %v604 = vunpack.c.l.b16 %v269
    %v605 = vunpack.c.h.b16 %v269
    %v606 = vunpack.c.l.b16 %v270
    %v607 = vunpack.c.h.b16 %v270
    %v608 = vunpack.c.l.b16 %v271
    %v609 = vunpack.c.h.b16 %v271
    %v610 = vunpack.c.l.b16 %v272
    %v611 = vunpack.c.h.b16 %v272
    %v612 = vunpack.c.l.b16 %v273
    %v613 = vunpack.c.h.b16 %v273
    %v614 = vunpack.c.l.b16 %v274
    %v615 = vunpack.c.h.b16 %v274
    %v616 = vunpack.c.l.b16 %v275
    %v617 = vunpack.c.h.b16 %v275
    %v618 = vunpack.c.l.b16 %v276
    %v619 = vunpack.c.h.b16 %v276
    %v620 = vunpack.c.l.b16 %v277
    %v621 = vunpack.c.h.b16 %v277
    %v622 = vunpack.c.l.b16 %v278
    %v623 = vunpack.c.h.b16 %v278
    %v624 = vunpack.c.l.b16 %v279
    %v625 = vunpack.c.h.b16 %v279
    %v626 = vunpack.c.l.b16 %v280
    %v627 = vunpack.c.h.b16 %v280
    %v628 = vunpack.c.l.b16 %v281
    %v629 = vunpack.c.h.b16 %v281
    %v630 = vunpack.c.l.b16 %v282
    %v631 = vunpack.c.h.b16 %v282
    %v632 = vunpack.c.l.b16 %v283
    %v633 = vunpack.c.h.b16 %v283
    %v634 = vunpack.c.l.b16 %v284
    %v635 = vunpack.c.h.b16 %v284
    %v636 = vunpack.c.l.b16 %v285
    %v637 = vunpack.c.h.b16 %v285
    %v638 = vunpack.c.l.b16 %v286
    %v639 = vunpack.c.h.b16 %v286
    %v640 = vunpack.c.l.b16 %v287
    %v641 = vunpack.c.h.b16 %v287
    %v642 = vunpack.c.l.b16 %v288
    %v643 = vunpack.c.h.b16 %v288
    %v644 = vunpack.c.l.b16 %v289
    %v645 = vunpack.c.h.b16 %v289
    %v646 = vunpack.c.l.b16 %v290
    %v647 = vunpack.c.h.b16 %v290
    %v648 = vunpack.c.l.b16 %v291
    %v649 = vunpack.c.h.b16 %v291
    %v650 = vunpack.c.l.b16 %v292
    %v651 = vunpack.c.h.b16 %v292
    %v652 = vunpack.c.l.b16 %v293
    %v653 = vunpack.c.h.b16 %v293
    %v654 = vunpack.c.l.b16 %v294
    %v655 = vunpack.c.h.b16 %v294
    %v656 = vunpack.c.l.b16 %v295
    %v657 = vunpack.c.h.b16 %v295
    %v658 = vunpack.c.l.b16 %v296
    %v659 = vunpack.c.h.b16 %v296
    %v660 = vunpack.c.l.b16 %v297
    %v661 = vunpack.c.h.b16 %v297
    %v662 = vunpack.c.l.b16 %v298
    %v663 = vunpack.c.h.b16 %v298
    %v664 = vunpack.c.l.b16 %v299
    %v665 = vunpack.c.h.b16 %v299
    %v666 = vunpack.c.l.b16 %v300
    %v667 = vunpack.c.h.b16 %v300
    %v668 = vunpack.c.l.b16 %v301
    %v669 = vunpack.c.h.b16 %v301
    %v670 = vunpack.c.l.b16 %v302
    %v671 = vunpack.c.h.b16 %v302
    %v672 = vunpack.c.l.b16 %v303
    %v673 = vunpack.c.h.b16 %v303
    %v674 = vunpack.c.l.b16 %v304
    %v675 = vunpack.c.h.b16 %v304
    %v676 = vunpack.c.l.b16 %v305
    %v677 = vunpack.c.h.b16 %v305
    %v678 = vunpack.c.l.b16 %v306
    %v679 = vunpack.c.h.b16 %v306
    %v680 = vunpack.c.l.b16 %v307
    %v681 = vunpack.c.h.b16 %v307
    %v682 = vunpack.c.l.b16 %v308
    %v683 = vunpack.c.h.b16 %v308
    %v684 = vunpack.c.l.b16 %v309
    %v685 = vunpack.c.h.b16 %v309
    %v686 = vunpack.c.l.b16 %v310
    %v687 = vunpack.c.h.b16 %v310
    %v688 = vunpack.c.l.b16 %v311
    %v689 = vunpack.c.h.b16 %v311
    %v690 = vunpack.c.l.b16 %v312
    %v691 = vunpack.c.h.b16 %v312
    %v692 = vunpack.c.l.b16 %v313
    %v693 = vunpack.c.h.b16 %v313
    %v694 = vunpack.c.l.b16 %v314
    %v695 = vunpack.c.h.b16 %v314
    %v696 = vunpack.c.l.b16 %v315
    %v697 = vunpack.c.h.b16 %v315
    %v698 = vunpack.c.l.b16 %v316
    %v699 = vunpack.c.h.b16 %v316
    %v700 = vunpack.c.l.b16 %v317
    %v701 = vunpack.c.h.b16 %v317
    %v702 = vunpack.c.l.b16 %v318
    %v703 = vunpack.c.h.b16 %v318
    %v704 = vunpack.c.l.b16 %v319
    %v705 = vunpack.c.h.b16 %v319
    %v706 = vunpack.c.l.b16 %v320
    %v707 = vunpack.c.h.b16 %v320
    %v708 = vunpack.c.l.b16 %v321
    %v709 = vunpack.c.h.b16 %v321
    %v710 = vunpack.c.l.b16 %v322
    %v711 = vunpack.c.h.b16 %v322
    %v712 = vunpack.c.l.b16 %v323
    %v713 = vunpack.c.h.b16 %v323
    %v714 = vunpack.c.l.b16 %v324
    %v715 = vunpack.c.h.b16 %v324
    %v716 = vunpack.c.l.b16 %v325
    %v717 = vunpack.c.h.b16 %v325
    %v718 = vunpack.c.l.b16 %v326
    %v719 = vunpack.c.h.b16 %v326
    %v720 = vunpack.c.l.b16 %v327
    %v721 = vunpack.c.h.b16 %v327
    %v722 = vunpack.c.l.b16 %v328
    %v723 = vunpack.c.h.b16 %v328
    %v724 = vunpack.c.l.b16 %v329
    %v725 = vunpack.c.h.b16 %v329
    %v726 = vpack.c.b16 %v472, %v470
    %v727 = vpack.c.b16 %v473, %v471
    %v728 = vpack.c.b16 %v476, %v474
    %v729 = vpack.c.b16 %v477, %v475
    %v730 = vpack.c.b16 %v480, %v478
    %v731 = vpack.c.b16 %v481, %v479
    %v732 = vpack.c.b16 %v484, %v482
    %v733 = vpack.c.b16 %v485, %v483
    %v734 = vpack.c.b16 %v488, %v486
    %v735 = vpack.c.b16 %v489, %v487
    %v736 = vpack.c.b16 %v492, %v490
    %v737 = vpack.c.b16 %v493, %v491
    %v738 = vpack.c.b16 %v496, %v494
    %v739 = vpack.c.b16 %v497, %v495
    %v740 = vpack.c.b16 %v500, %v498
    %v741 = vpack.c.b16 %v501, %v499
    %v742 = vpack.c.b16 %v504, %v502
    %v743 = vpack.c.b16 %v505, %v503
    %v744 = vpack.c.b16 %v508, %v506
    %v745 = vpack.c.b16 %v509, %v507
    %v746 = vpack.c.b16 %v512, %v510
    %v747 = vpack.c.b16 %v513, %v511
    %v748 = vpack.c.b16 %v516, %v514
    %v749 = vpack.c.b16 %v517, %v515
    %v750 = vpack.c.b16 %v520, %v518
    %v751 = vpack.c.b16 %v521, %v519
    %v752 = vpack.c.b16 %v524, %v522
    %v753 = vpack.c.b16 %v525, %v523
    %v754 = vpack.c.b16 %v528, %v526
    %v755 = vpack.c.b16 %v529, %v527
    %v756 = vpack.c.b16 %v532, %v530
    %v757 = vpack.c.b16 %v533, %v531
    %v758 = vpack.c.b16 %v536, %v534
    %v759 = vpack.c.b16 %v537, %v535
    %v760 = vpack.c.b16 %v540, %v538
    %v761 = vpack.c.b16 %v541, %v539
    %v762 = vpack.c.b16 %v544, %v542
    %v763 = vpack.c.b16 %v545, %v543
    %v764 = vpack.c.b16 %v548, %v546
    %v765 = vpack.c.b16 %v549, %v547
    %v766 = vpack.c.b16 %v552, %v550
    %v767 = vpack.c.b16 %v553, %v551
    %v768 = vpack.c.b16 %v556, %v554
    %v769 = vpack.c.b16 %v557, %v555
    %v770 = vpack.c.b16 %v560, %v558
    %v771 = vpack.c.b16 %v561, %v559
    %v772 = vpack.c.b16 %v564, %v562
    %v773 = vpack.c.b16 %v565, %v563
    %v774 = vpack.c.b16 %v568, %v566
    %v775 = vpack.c.b16 %v569, %v567
    %v776 = vpack.c.b16 %v572, %v570
    %v777 = vpack.c.b16 %v573, %v571
    %v778 = vpack.c.b16 %v576, %v574
    %v779 = vpack.c.b16 %v577, %v575
    %v780 = vpack.c.b16 %v580, %v578
    %v781 = vpack.c.b16 %v581, %v579
    %v782 = vpack.c.b16 %v584, %v582
    %v783 = vpack.c.b16 %v585, %v583
    %v784 = vpack.c.b16 %v588, %v586
    %v785 = vpack.c.b16 %v589, %v587
    %v786 = vpack.c.b16 %v592, %v590
    %v787 = vpack.c.b16 %v593, %v591
    %v788 = vpack.c.b16 %v596, %v594
    %v789 = vpack.c.b16 %v597, %v595
    %v790 = vpack.c.b16 %v600, %v598
    %v791 = vpack.c.b16 %v601, %v599
    %v792 = vpack.c.b16 %v604, %v602
    %v793 = vpack.c.b16 %v605, %v603
    %v794 = vpack.c.b16 %v608, %v606
    %v795 = vpack.c.b16 %v609, %v607
    %v796 = vpack.c.b16 %v612, %v610
    %v797 = vpack.c.b16 %v613, %v611
    %v798 = vpack.c.b16 %v616, %v614
    %v799 = vpack.c.b16 %v617, %v615
    %v800 = vpack.c.b16 %v620, %v618
    %v801 = vpack.c.b16 %v621, %v619
    %v802 = vpack.c.b16 %v624, %v622
    %v803 = vpack.c.b16 %v625, %v623
    %v804 = vpack.c.b16 %v628, %v626
    %v805 = vpack.c.b16 %v629, %v627
    %v806 = vpack.c.b16 %v632, %v630
    %v807 = vpack.c.b16 %v633, %v631
    %v808 = vpack.c.b16 %v636, %v634
    %v809 = vpack.c.b16 %v637, %v635
    %v810 = vpack.c.b16 %v640, %v638
    %v811 = vpack.c.b16 %v641, %v639
    %v812 = vpack.c.b16 %v644, %v642
    %v813 = vpack.c.b16 %v645, %v643
    %v814 = vpack.c.b16 %v648, %v646
    %v815 = vpack.c.b16 %v649, %v647
    %v816 = vpack.c.b16 %v652, %v650
    %v817 = vpack.c.b16 %v653, %v651
    %v818 = vpack.c.b16 %v656, %v654
    %v819 = vpack.c.b16 %v657, %v655
    %v820 = vpack.c.b16 %v660, %v658
    %v821 = vpack.c.b16 %v661, %v659
    %v822 = vpack.c.b16 %v664, %v662
    %v823 = vpack.c.b16 %v665, %v663
    %v824 = vpack.c.b16 %v668, %v666
    %v825 = vpack.c.b16 %v669, %v667
    %v826 = vpack.c.b16 %v672, %v670
    %v827 = vpack.c.b16 %v673, %v671
    %v828 = vpack.c.b16 %v676, %v674
    %v829 = vpack.c.b16 %v677, %v675
    %v830 = vpack.c.b16 %v680, %v678
    %v831 = vpack.c.b16 %v681, %v679
    %v832 = vpack.c.b16 %v684, %v682
    %v833 = vpack.c.b16 %v685, %v683
    %v834 = vpack.c.b16 %v688, %v686
    %v835 = vpack.c.b16 %v689, %v687
    %v836 = vpack.c.b16 %v692, %v690
    %v837 = vpack.c.b16 %v693, %v691
    %v838 = vpack.c.b16 %v696, %v694
    %v839 = vpack.c.b16 %v697, %v695
    %v840 = vpack.c.b16 %v700, %v698
    %v841 = vpack.c.b16 %v701, %v699
    %v842 = vpack.c.b16 %v704, %v702
    %v843 = vpack.c.b16 %v705, %v703
    %v844 = vpack.c.b16 %v708, %v706
    %v845 = vpack.c.b16 %v709, %v707
    %v846 = vpack.c.b16 %v712, %v710
    %v847 = vpack.c.b16 %v713, %v711
    %v848 = vpack.c.b16 %v716, %v714
    %v849 = vpack.c.b16 %v717, %v715
    %v850 = vpack.c.b16 %v720, %v718
    %v851 = vpack.c.b16 %v721, %v719
    %v852 = vpack.c.b16 %v724, %v722
    %v853 = vpack.c.b16 %v725, %v723
    %982 = vmatprep.subr.bf16.mxu0 %v727
    %983 = vmatpush1.bf16.msra.mxu0 %v726
    %984 = vmatprep.subr.bf16.mxu0 %v729
    %985 = vmatpush1.bf16.msra.mxu0 %v728
    %986 = vmatprep.subr.bf16.mxu0 %v731
    %987 = vmatpush1.bf16.msra.mxu0 %v730
    %988 = vmatprep.subr.bf16.mxu0 %v733
    %989 = vmatpush1.bf16.msra.mxu0 %v732
    %990 = vmatprep.subr.bf16.mxu0 %v735
    %991 = vmatpush1.bf16.msra.mxu0 %v734
    %992 = vmatprep.subr.bf16.mxu0 %v737
    %993 = vmatpush1.bf16.msra.mxu0 %v736
    %994 = vmatprep.subr.bf16.mxu0 %v739
    %995 = vmatpush1.bf16.msra.mxu0 %v738
    %996 = vmatprep.subr.bf16.mxu0 %v741
    %997 = vmatpush1.bf16.msra.mxu0 %v740
    %998 = vmatprep.subr.bf16.mxu0 %v743
    %999 = vmatpush1.bf16.msra.mxu0 %v742
    %1000 = vmatprep.subr.bf16.mxu0 %v745
    %1001 = vmatpush1.bf16.msra.mxu0 %v744
    %1002 = vmatprep.subr.bf16.mxu0 %v747
    %1003 = vmatpush1.bf16.msra.mxu0 %v746
    %1004 = vmatprep.subr.bf16.mxu0 %v749
    %1005 = vmatpush1.bf16.msra.mxu0 %v748
    %1006 = vmatprep.subr.bf16.mxu0 %v751
    %1007 = vmatpush1.bf16.msra.mxu0 %v750
    %1008 = vmatprep.subr.bf16.mxu0 %v753
    %1009 = vmatpush1.bf16.msra.mxu0 %v752
    %1010 = vmatprep.subr.bf16.mxu0 %v755
    %1011 = vmatpush1.bf16.msra.mxu0 %v754
    %1012 = vmatprep.subr.bf16.mxu0 %v757
    %1013 = vmatpush1.bf16.msra.mxu0 %v756
    %1014 = vmatprep.mubr.bf16.mxu0 %v195
    %1015 = vmatmul.mubr.bf16.gmra.mrb[0].mxu0 %v194
    %v1016 = vpop.f32.mrb[0].mxu0
    %v1017 = vadd.f32 %v335, %v1016
    %v1018 = vpop.f32.mrb[0].mxu0
    %v1019 = vadd.f32 %v339, %v1018
    %v1020 = vpop.f32.mrb[0].mxu0
    %v1021 = vpop.f32.mrb[0].mxu0
    %1022 = vdwg.mxu0
    %1023 = vmatprep.subr.bf16.mxu0 %v759
    %1024 = vmatpush1.bf16.msra.mxu0 %v758
    %1025 = vmatprep.subr.bf16.mxu0 %v761
    %1026 = vmatpush1.bf16.msra.mxu0 %v760
    %1027 = vmatprep.subr.bf16.mxu0 %v763
    %1028 = vmatpush1.bf16.msra.mxu0 %v762
    %1029 = vmatprep.subr.bf16.mxu0 %v765
    %1030 = vmatpush1.bf16.msra.mxu0 %v764
    %1031 = vmatprep.subr.bf16.mxu0 %v767
    %1032 = vmatpush1.bf16.msra.mxu0 %v766
    %1033 = vmatprep.subr.bf16.mxu0 %v769
    %1034 = vmatpush1.bf16.msra.mxu0 %v768
    %1035 = vmatprep.subr.bf16.mxu0 %v771
    %1036 = vmatpush1.bf16.msra.mxu0 %v770
    %1037 = vmatprep.subr.bf16.mxu0 %v773
    %1038 = vmatpush1.bf16.msra.mxu0 %v772
    %1039 = vmatprep.subr.bf16.mxu0 %v775
    %1040 = vmatpush1.bf16.msra.mxu0 %v774
    %1041 = vmatprep.subr.bf16.mxu0 %v777
    %1042 = vmatpush1.bf16.msra.mxu0 %v776
    %1043 = vmatprep.subr.bf16.mxu0 %v779
    %1044 = vmatpush1.bf16.msra.mxu0 %v778
    %1045 = vmatprep.subr.bf16.mxu0 %v781
    %1046 = vmatpush1.bf16.msra.mxu0 %v780
    %1047 = vmatprep.subr.bf16.mxu0 %v783
    %1048 = vmatpush1.bf16.msra.mxu0 %v782
    %1049 = vmatprep.subr.bf16.mxu0 %v785
    %1050 = vmatpush1.bf16.msra.mxu0 %v784
    %1051 = vmatprep.subr.bf16.mxu0 %v787
    %1052 = vmatpush1.bf16.msra.mxu0 %v786
    %1053 = vmatprep.subr.bf16.mxu0 %v789
    %1054 = vmatpush1.bf16.msra.mxu0 %v788
    %1055 = vmatprep.mubr.bf16.mxu0 %v197
    %1056 = vmatmul.mubr.bf16.gmra.mrb[0].mxu0 %v196
    %v1057 = vpop.f32.mrb[0].mxu0
    %v1058 = vadd.f32 %v1017, %v1057
    %v1059 = vpop.f32.mrb[0].mxu0
    %v1060 = vadd.f32 %v1019, %v1059
    %v1061 = vpop.f32.mrb[0].mxu0
    %v1062 = vpop.f32.mrb[0].mxu0
    %1063 = vdwg.mxu0
    %1064 = vmatprep.subr.bf16.mxu0 %v791
    %1065 = vmatpush1.bf16.msra.mxu0 %v790
    %1066 = vmatprep.subr.bf16.mxu0 %v793
    %1067 = vmatpush1.bf16.msra.mxu0 %v792
    %1068 = vmatprep.subr.bf16.mxu0 %v795
    %1069 = vmatpush1.bf16.msra.mxu0 %v794
    %1070 = vmatprep.subr.bf16.mxu0 %v797
    %1071 = vmatpush1.bf16.msra.mxu0 %v796
    %1072 = vmatprep.subr.bf16.mxu0 %v799
    %1073 = vmatpush1.bf16.msra.mxu0 %v798
    %1074 = vmatprep.subr.bf16.mxu0 %v801
    %1075 = vmatpush1.bf16.msra.mxu0 %v800
    %1076 = vmatprep.subr.bf16.mxu0 %v803
    %1077 = vmatpush1.bf16.msra.mxu0 %v802
    %1078 = vmatprep.subr.bf16.mxu0 %v805
    %1079 = vmatpush1.bf16.msra.mxu0 %v804
    %1080 = vmatprep.subr.bf16.mxu0 %v807
    %1081 = vmatpush1.bf16.msra.mxu0 %v806
    %1082 = vmatprep.subr.bf16.mxu0 %v809
    %1083 = vmatpush1.bf16.msra.mxu0 %v808
    %1084 = vmatprep.subr.bf16.mxu0 %v811
    %1085 = vmatpush1.bf16.msra.mxu0 %v810
    %1086 = vmatprep.subr.bf16.mxu0 %v813
    %1087 = vmatpush1.bf16.msra.mxu0 %v812
    %1088 = vmatprep.subr.bf16.mxu0 %v815
    %1089 = vmatpush1.bf16.msra.mxu0 %v814
    %1090 = vmatprep.subr.bf16.mxu0 %v817
    %1091 = vmatpush1.bf16.msra.mxu0 %v816
    %1092 = vmatprep.subr.bf16.mxu0 %v819
    %1093 = vmatpush1.bf16.msra.mxu0 %v818
    %1094 = vmatprep.subr.bf16.mxu0 %v821
    %1095 = vmatpush1.bf16.msra.mxu0 %v820
    %1096 = vmatprep.mubr.bf16.mxu0 %v199
    %1097 = vmatmul.mubr.bf16.gmra.mrb[0].mxu0 %v198
    %v1098 = vpop.f32.mrb[0].mxu0
    %v1099 = vadd.f32 %v1058, %v1098
    %v1100 = vpop.f32.mrb[0].mxu0
    %v1101 = vadd.f32 %v1060, %v1100
    %v1102 = vpop.f32.mrb[0].mxu0
    %v1103 = vpop.f32.mrb[0].mxu0
    %1104 = vdwg.mxu0
    %1105 = vmatprep.subr.bf16.mxu0 %v823
    %1106 = vmatpush1.bf16.msra.mxu0 %v822
    %1107 = vmatprep.subr.bf16.mxu0 %v825
    %1108 = vmatpush1.bf16.msra.mxu0 %v824
    %1109 = vmatprep.subr.bf16.mxu0 %v827
    %1110 = vmatpush1.bf16.msra.mxu0 %v826
    %1111 = vmatprep.subr.bf16.mxu0 %v829
    %1112 = vmatpush1.bf16.msra.mxu0 %v828
    %1113 = vmatprep.subr.bf16.mxu0 %v831
    %1114 = vmatpush1.bf16.msra.mxu0 %v830
    %1115 = vmatprep.subr.bf16.mxu0 %v833
    %1116 = vmatpush1.bf16.msra.mxu0 %v832
    %1117 = vmatprep.subr.bf16.mxu0 %v835
    %1118 = vmatpush1.bf16.msra.mxu0 %v834
    %1119 = vmatprep.subr.bf16.mxu0 %v837
    %1120 = vmatpush1.bf16.msra.mxu0 %v836
    %1121 = vmatprep.subr.bf16.mxu0 %v839
    %1122 = vmatpush1.bf16.msra.mxu0 %v838
    %1123 = vmatprep.subr.bf16.mxu0 %v841
    %1124 = vmatpush1.bf16.msra.mxu0 %v840
    %1125 = vmatprep.subr.bf16.mxu0 %v843
    %1126 = vmatpush1.bf16.msra.mxu0 %v842
    %1127 = vmatprep.subr.bf16.mxu0 %v845
    %1128 = vmatpush1.bf16.msra.mxu0 %v844
    %1129 = vmatprep.subr.bf16.mxu0 %v847
    %1130 = vmatpush1.bf16.msra.mxu0 %v846
    %1131 = vmatprep.subr.bf16.mxu0 %v849
    %1132 = vmatpush1.bf16.msra.mxu0 %v848
    %1133 = vmatprep.subr.bf16.mxu0 %v851
    %1134 = vmatpush1.bf16.msra.mxu0 %v850
    %1135 = vmatprep.subr.bf16.mxu0 %v853
    %1136 = vmatpush1.bf16.msra.mxu0 %v852
    %1137 = vmatprep.mubr.bf16.mxu0 %v201
    %1138 = vmatmul.mubr.bf16.gmra.mrb[0].mxu0 %v200
    %v1139 = vpop.f32.mrb[0].mxu0
    %v1140 = vadd.f32 %v1099, %v1139
    %v1141 = vpop.f32.mrb[0].mxu0
    %v1142 = vadd.f32 %v1101, %v1141
    %v1143 = vpop.f32.mrb[0].mxu0
    %v1144 = vpop.f32.mrb[0].mxu0
    %1145 = vdwg.mxu0
    %v1146 = vmax.f32 %v1140, 0.0
    %v1147 = vmax.f32 %v1142, 0.0
    %v1148 = vld [vmem:[#allocation4 + $0x8] sm:$0xff]
    %v1149 = vld [vmem:[#allocation4 + $0x28] sm:$0xff]
    %v1150 = vld [vmem:[#allocation4 + $0x48] sm:$0xff]
    %v1151 = vld [vmem:[#allocation4 + $0x68] sm:$0xff]
    %v1152 = vld [vmem:[#allocation4 + $0x88] sm:$0xff]
    %v1153 = vld [vmem:[#allocation4 + $0xa8] sm:$0xff]
    %v1154 = vld [vmem:[#allocation4 + $0xc8] sm:$0xff]
    %v1155 = vld [vmem:[#allocation4 + $0xe8] sm:$0xff]
    %v1156 = vld [vmem:[#allocation4 + $0x108] sm:$0xff]
    %v1157 = vld [vmem:[#allocation4 + $0x128] sm:$0xff]
    %v1158 = vld [vmem:[#allocation4 + $0x148] sm:$0xff]
    %v1159 = vld [vmem:[#allocation4 + $0x168] sm:$0xff]
    %v1160 = vld [vmem:[#allocation4 + $0x188] sm:$0xff]
    %v1161 = vld [vmem:[#allocation4 + $0x1a8] sm:$0xff]
    %v1162 = vld [vmem:[#allocation4 + $0x1c8] sm:$0xff]
    %v1163 = vld [vmem:[#allocation4 + $0x1e8] sm:$0xff]
    %v1164 = vld [vmem:[#allocation4 + $0x208] sm:$0xff]
    %v1165 = vld [vmem:[#allocation4 + $0x228] sm:$0xff]
    %v1166 = vld [vmem:[#allocation4 + $0x248] sm:$0xff]
    %v1167 = vld [vmem:[#allocation4 + $0x268] sm:$0xff]
    %v1168 = vld [vmem:[#allocation4 + $0x288] sm:$0xff]
    %v1169 = vld [vmem:[#allocation4 + $0x2a8] sm:$0xff]
    %v1170 = vld [vmem:[#allocation4 + $0x2c8] sm:$0xff]
    %v1171 = vld [vmem:[#allocation4 + $0x2e8] sm:$0xff]
    %v1172 = vld [vmem:[#allocation4 + $0x308] sm:$0xff]
    %v1173 = vld [vmem:[#allocation4 + $0x328] sm:$0xff]
    %v1174 = vld [vmem:[#allocation4 + $0x348] sm:$0xff]
    %v1175 = vld [vmem:[#allocation4 + $0x368] sm:$0xff]
    %v1176 = vld [vmem:[#allocation4 + $0x388] sm:$0xff]
    %v1177 = vld [vmem:[#allocation4 + $0x3a8] sm:$0xff]
    %v1178 = vld [vmem:[#allocation4 + $0x3c8] sm:$0xff]
    %v1179 = vld [vmem:[#allocation4 + $0x3e8] sm:$0xff]
    %v1180 = vld [vmem:[#allocation4 + $0x408] sm:$0xff]
    %v1181 = vld [vmem:[#allocation4 + $0x428] sm:$0xff]
    %v1182 = vld [vmem:[#allocation4 + $0x448] sm:$0xff]
    %v1183 = vld [vmem:[#allocation4 + $0x468] sm:$0xff]
    %v1184 = vld [vmem:[#allocation4 + $0x488] sm:$0xff]
    %v1185 = vld [vmem:[#allocation4 + $0x4a8] sm:$0xff]
    %v1186 = vld [vmem:[#allocation4 + $0x4c8] sm:$0xff]
    %v1187 = vld [vmem:[#allocation4 + $0x4e8] sm:$0xff]
    %v1188 = vld [vmem:[#allocation4 + $0x508] sm:$0xff]
    %v1189 = vld [vmem:[#allocation4 + $0x528] sm:$0xff]
    %v1190 = vld [vmem:[#allocation4 + $0x548] sm:$0xff]
    %v1191 = vld [vmem:[#allocation4 + $0x568] sm:$0xff]
    %v1192 = vld [vmem:[#allocation4 + $0x588] sm:$0xff]
    %v1193 = vld [vmem:[#allocation4 + $0x5a8] sm:$0xff]
    %v1194 = vld [vmem:[#allocation4 + $0x5c8] sm:$0xff]
    %v1195 = vld [vmem:[#allocation4 + $0x5e8] sm:$0xff]
    %v1196 = vld [vmem:[#allocation4 + $0x608] sm:$0xff]
    %v1197 = vld [vmem:[#allocation4 + $0x628] sm:$0xff]
    %v1198 = vld [vmem:[#allocation4 + $0x648] sm:$0xff]
    %v1199 = vld [vmem:[#allocation4 + $0x668] sm:$0xff]
    %v1200 = vld [vmem:[#allocation4 + $0x688] sm:$0xff]
    %v1201 = vld [vmem:[#allocation4 + $0x6a8] sm:$0xff]
    %v1202 = vld [vmem:[#allocation4 + $0x6c8] sm:$0xff]
    %v1203 = vld [vmem:[#allocation4 + $0x6e8] sm:$0xff]
    %v1204 = vld [vmem:[#allocation4 + $0x708] sm:$0xff]
    %v1205 = vld [vmem:[#allocation4 + $0x728] sm:$0xff]
    %v1206 = vld [vmem:[#allocation4 + $0x748] sm:$0xff]
    %v1207 = vld [vmem:[#allocation4 + $0x768] sm:$0xff]
    %v1208 = vld [vmem:[#allocation4 + $0x788] sm:$0xff]
    %v1209 = vld [vmem:[#allocation4 + $0x7a8] sm:$0xff]
    %v1210 = vld [vmem:[#allocation4 + $0x7c8] sm:$0xff]
    %v1211 = vld [vmem:[#allocation4 + $0x7e8] sm:$0xff]
    %v1212 = vld [vmem:[#allocation4 + $0x808] sm:$0xff]
    %v1213 = vld [vmem:[#allocation4 + $0x828] sm:$0xff]
    %v1214 = vld [vmem:[#allocation4 + $0x848] sm:$0xff]
    %v1215 = vld [vmem:[#allocation4 + $0x868] sm:$0xff]
    %v1216 = vld [vmem:[#allocation4 + $0x888] sm:$0xff]
    %v1217 = vld [vmem:[#allocation4 + $0x8a8] sm:$0xff]
    %v1218 = vld [vmem:[#allocation4 + $0x8c8] sm:$0xff]
    %v1219 = vld [vmem:[#allocation4 + $0x8e8] sm:$0xff]
    %v1220 = vld [vmem:[#allocation4 + $0x908] sm:$0xff]
    %v1221 = vld [vmem:[#allocation4 + $0x928] sm:$0xff]
    %v1222 = vld [vmem:[#allocation4 + $0x948] sm:$0xff]
    %v1223 = vld [vmem:[#allocation4 + $0x968] sm:$0xff]
    %v1224 = vld [vmem:[#allocation4 + $0x988] sm:$0xff]
    %v1225 = vld [vmem:[#allocation4 + $0x9a8] sm:$0xff]
    %v1226 = vld [vmem:[#allocation4 + $0x9c8] sm:$0xff]
    %v1227 = vld [vmem:[#allocation4 + $0x9e8] sm:$0xff]
    %v1228 = vld [vmem:[#allocation4 + $0xa08] sm:$0xff]
    %v1229 = vld [vmem:[#allocation4 + $0xa28] sm:$0xff]
    %v1230 = vld [vmem:[#allocation4 + $0xa48] sm:$0xff]
    %v1231 = vld [vmem:[#allocation4 + $0xa68] sm:$0xff]
    %v1232 = vld [vmem:[#allocation4 + $0xa88] sm:$0xff]
    %v1233 = vld [vmem:[#allocation4 + $0xaa8] sm:$0xff]
    %v1234 = vld [vmem:[#allocation4 + $0xac8] sm:$0xff]
    %v1235 = vld [vmem:[#allocation4 + $0xae8] sm:$0xff]
    %v1236 = vld [vmem:[#allocation4 + $0xb08] sm:$0xff]
    %v1237 = vld [vmem:[#allocation4 + $0xb28] sm:$0xff]
    %v1238 = vld [vmem:[#allocation4 + $0xb48] sm:$0xff]
    %v1239 = vld [vmem:[#allocation4 + $0xb68] sm:$0xff]
    %v1240 = vld [vmem:[#allocation4 + $0xb88] sm:$0xff]
    %v1241 = vld [vmem:[#allocation4 + $0xba8] sm:$0xff]
    %v1242 = vld [vmem:[#allocation4 + $0xbc8] sm:$0xff]
    %v1243 = vld [vmem:[#allocation4 + $0xbe8] sm:$0xff]
    %v1244 = vld [vmem:[#allocation4 + $0xc08] sm:$0xff]
    %v1245 = vld [vmem:[#allocation4 + $0xc28] sm:$0xff]
    %v1246 = vld [vmem:[#allocation4 + $0xc48] sm:$0xff]
    %v1247 = vld [vmem:[#allocation4 + $0xc68] sm:$0xff]
    %v1248 = vld [vmem:[#allocation4 + $0xc88] sm:$0xff]
    %v1249 = vld [vmem:[#allocation4 + $0xca8] sm:$0xff]
    %v1250 = vld [vmem:[#allocation4 + $0xcc8] sm:$0xff]
    %v1251 = vld [vmem:[#allocation4 + $0xce8] sm:$0xff]
    %v1252 = vld [vmem:[#allocation4 + $0xd08] sm:$0xff]
    %v1253 = vld [vmem:[#allocation4 + $0xd28] sm:$0xff]
    %v1254 = vld [vmem:[#allocation4 + $0xd48] sm:$0xff]
    %v1255 = vld [vmem:[#allocation4 + $0xd68] sm:$0xff]
    %v1256 = vld [vmem:[#allocation4 + $0xd88] sm:$0xff]
    %v1257 = vld [vmem:[#allocation4 + $0xda8] sm:$0xff]
    %v1258 = vld [vmem:[#allocation4 + $0xdc8] sm:$0xff]
    %v1259 = vld [vmem:[#allocation4 + $0xde8] sm:$0xff]
    %v1260 = vld [vmem:[#allocation4 + $0xe08] sm:$0xff]
    %v1261 = vld [vmem:[#allocation4 + $0xe28] sm:$0xff]
    %v1262 = vld [vmem:[#allocation4 + $0xe48] sm:$0xff]
    %v1263 = vld [vmem:[#allocation4 + $0xe68] sm:$0xff]
    %v1264 = vld [vmem:[#allocation4 + $0xe88] sm:$0xff]
    %v1265 = vld [vmem:[#allocation4 + $0xea8] sm:$0xff]
    %v1266 = vld [vmem:[#allocation4 + $0xec8] sm:$0xff]
    %v1267 = vld [vmem:[#allocation4 + $0xee8] sm:$0xff]
    %v1268 = vld [vmem:[#allocation4 + $0xf08] sm:$0xff]
    %v1269 = vld [vmem:[#allocation4 + $0xf28] sm:$0xff]
    %v1270 = vld [vmem:[#allocation4 + $0xf48] sm:$0xff]
    %v1271 = vld [vmem:[#allocation4 + $0xf68] sm:$0xff]
    %v1272 = vld [vmem:[#allocation4 + $0xf88] sm:$0xff]
    %v1273 = vld [vmem:[#allocation4 + $0xfa8] sm:$0xff]
    %v1274 = vld [vmem:[#allocation4 + $0xfc8] sm:$0xff]
    %v1275 = vld [vmem:[#allocation4 + $0xfe8] sm:$0xff]
    %v1276 = vld [vmem:[#allocation6 + $0x2] sm:$0x3]
    %v1278 = vlaneseq
    %v1279 = vshrl.u32 %v1278, 7
    %v1280 = vsub.s32 0, %v1279
    %v1281 = vrot.slane %v1276, %v1280
    %v1282 = vlaneseq
    %v1283 = vshrl.u32 %v1282, 7
    %v1284 = vsub.s32 1, %v1283
    %v1285 = vrot.slane %v1276, %v1284
    %v1416 = vunpack.c.l.b16 %v1148
    %v1417 = vunpack.c.h.b16 %v1148
    %v1418 = vunpack.c.l.b16 %v1149
    %v1419 = vunpack.c.h.b16 %v1149
    %v1420 = vunpack.c.l.b16 %v1150
    %v1421 = vunpack.c.h.b16 %v1150
    %v1422 = vunpack.c.l.b16 %v1151
    %v1423 = vunpack.c.h.b16 %v1151
    %v1424 = vunpack.c.l.b16 %v1152
    %v1425 = vunpack.c.h.b16 %v1152
    %v1426 = vunpack.c.l.b16 %v1153
    %v1427 = vunpack.c.h.b16 %v1153
    %v1428 = vunpack.c.l.b16 %v1154
    %v1429 = vunpack.c.h.b16 %v1154
    %v1430 = vunpack.c.l.b16 %v1155
    %v1431 = vunpack.c.h.b16 %v1155
    %v1432 = vunpack.c.l.b16 %v1156
    %v1433 = vunpack.c.h.b16 %v1156
    %v1434 = vunpack.c.l.b16 %v1157
    %v1435 = vunpack.c.h.b16 %v1157
    %v1436 = vunpack.c.l.b16 %v1158
    %v1437 = vunpack.c.h.b16 %v1158
    %v1438 = vunpack.c.l.b16 %v1159
    %v1439 = vunpack.c.h.b16 %v1159
    %v1440 = vunpack.c.l.b16 %v1160
    %v1441 = vunpack.c.h.b16 %v1160
    %v1442 = vunpack.c.l.b16 %v1161
    %v1443 = vunpack.c.h.b16 %v1161
    %v1444 = vunpack.c.l.b16 %v1162
    %v1445 = vunpack.c.h.b16 %v1162
    %v1446 = vunpack.c.l.b16 %v1163
    %v1447 = vunpack.c.h.b16 %v1163
    %v1448 = vunpack.c.l.b16 %v1164
    %v1449 = vunpack.c.h.b16 %v1164
    %v1450 = vunpack.c.l.b16 %v1165
    %v1451 = vunpack.c.h.b16 %v1165
    %v1452 = vunpack.c.l.b16 %v1166
    %v1453 = vunpack.c.h.b16 %v1166
    %v1454 = vunpack.c.l.b16 %v1167
    %v1455 = vunpack.c.h.b16 %v1167
    %v1456 = vunpack.c.l.b16 %v1168
    %v1457 = vunpack.c.h.b16 %v1168
    %v1458 = vunpack.c.l.b16 %v1169
    %v1459 = vunpack.c.h.b16 %v1169
    %v1460 = vunpack.c.l.b16 %v1170
    %v1461 = vunpack.c.h.b16 %v1170
    %v1462 = vunpack.c.l.b16 %v1171
    %v1463 = vunpack.c.h.b16 %v1171
    %v1464 = vunpack.c.l.b16 %v1172
    %v1465 = vunpack.c.h.b16 %v1172
    %v1466 = vunpack.c.l.b16 %v1173
    %v1467 = vunpack.c.h.b16 %v1173
    %v1468 = vunpack.c.l.b16 %v1174
    %v1469 = vunpack.c.h.b16 %v1174
    %v1470 = vunpack.c.l.b16 %v1175
    %v1471 = vunpack.c.h.b16 %v1175
    %v1472 = vunpack.c.l.b16 %v1176
    %v1473 = vunpack.c.h.b16 %v1176
    %v1474 = vunpack.c.l.b16 %v1177
    %v1475 = vunpack.c.h.b16 %v1177
    %v1476 = vunpack.c.l.b16 %v1178
    %v1477 = vunpack.c.h.b16 %v1178
    %v1478 = vunpack.c.l.b16 %v1179
    %v1479 = vunpack.c.h.b16 %v1179
    %v1480 = vunpack.c.l.b16 %v1180
    %v1481 = vunpack.c.h.b16 %v1180
    %v1482 = vunpack.c.l.b16 %v1181
    %v1483 = vunpack.c.h.b16 %v1181
    %v1484 = vunpack.c.l.b16 %v1182
    %v1485 = vunpack.c.h.b16 %v1182
    %v1486 = vunpack.c.l.b16 %v1183
    %v1487 = vunpack.c.h.b16 %v1183
    %v1488 = vunpack.c.l.b16 %v1184
    %v1489 = vunpack.c.h.b16 %v1184
    %v1490 = vunpack.c.l.b16 %v1185
    %v1491 = vunpack.c.h.b16 %v1185
    %v1492 = vunpack.c.l.b16 %v1186
    %v1493 = vunpack.c.h.b16 %v1186
    %v1494 = vunpack.c.l.b16 %v1187
    %v1495 = vunpack.c.h.b16 %v1187
    %v1496 = vunpack.c.l.b16 %v1188
    %v1497 = vunpack.c.h.b16 %v1188
    %v1498 = vunpack.c.l.b16 %v1189
    %v1499 = vunpack.c.h.b16 %v1189
    %v1500 = vunpack.c.l.b16 %v1190
    %v1501 = vunpack.c.h.b16 %v1190
    %v1502 = vunpack.c.l.b16 %v1191
    %v1503 = vunpack.c.h.b16 %v1191
    %v1504 = vunpack.c.l.b16 %v1192
    %v1505 = vunpack.c.h.b16 %v1192
    %v1506 = vunpack.c.l.b16 %v1193
    %v1507 = vunpack.c.h.b16 %v1193
    %v1508 = vunpack.c.l.b16 %v1194
    %v1509 = vunpack.c.h.b16 %v1194
    %v1510 = vunpack.c.l.b16 %v1195
    %v1511 = vunpack.c.h.b16 %v1195
    %v1512 = vunpack.c.l.b16 %v1196
    %v1513 = vunpack.c.h.b16 %v1196
    %v1514 = vunpack.c.l.b16 %v1197
    %v1515 = vunpack.c.h.b16 %v1197
    %v1516 = vunpack.c.l.b16 %v1198
    %v1517 = vunpack.c.h.b16 %v1198
    %v1518 = vunpack.c.l.b16 %v1199
    %v1519 = vunpack.c.h.b16 %v1199
    %v1520 = vunpack.c.l.b16 %v1200
    %v1521 = vunpack.c.h.b16 %v1200
    %v1522 = vunpack.c.l.b16 %v1201
    %v1523 = vunpack.c.h.b16 %v1201
    %v1524 = vunpack.c.l.b16 %v1202
    %v1525 = vunpack.c.h.b16 %v1202
    %v1526 = vunpack.c.l.b16 %v1203
    %v1527 = vunpack.c.h.b16 %v1203
    %v1528 = vunpack.c.l.b16 %v1204
    %v1529 = vunpack.c.h.b16 %v1204
    %v1530 = vunpack.c.l.b16 %v1205
    %v1531 = vunpack.c.h.b16 %v1205
    %v1532 = vunpack.c.l.b16 %v1206
    %v1533 = vunpack.c.h.b16 %v1206
    %v1534 = vunpack.c.l.b16 %v1207
    %v1535 = vunpack.c.h.b16 %v1207
    %v1536 = vunpack.c.l.b16 %v1208
    %v1537 = vunpack.c.h.b16 %v1208
    %v1538 = vunpack.c.l.b16 %v1209
    %v1539 = vunpack.c.h.b16 %v1209
    %v1540 = vunpack.c.l.b16 %v1210
    %v1541 = vunpack.c.h.b16 %v1210
    %v1542 = vunpack.c.l.b16 %v1211
    %v1543 = vunpack.c.h.b16 %v1211
    %v1544 = vunpack.c.l.b16 %v1212
    %v1545 = vunpack.c.h.b16 %v1212
    %v1546 = vunpack.c.l.b16 %v1213
    %v1547 = vunpack.c.h.b16 %v1213
    %v1548 = vunpack.c.l.b16 %v1214
    %v1549 = vunpack.c.h.b16 %v1214
    %v1550 = vunpack.c.l.b16 %v1215
    %v1551 = vunpack.c.h.b16 %v1215
    %v1552 = vunpack.c.l.b16 %v1216
    %v1553 = vunpack.c.h.b16 %v1216
    %v1554 = vunpack.c.l.b16 %v1217
    %v1555 = vunpack.c.h.b16 %v1217
    %v1556 = vunpack.c.l.b16 %v1218
    %v1557 = vunpack.c.h.b16 %v1218
    %v1558 = vunpack.c.l.b16 %v1219
    %v1559 = vunpack.c.h.b16 %v1219
    %v1560 = vunpack.c.l.b16 %v1220
    %v1561 = vunpack.c.h.b16 %v1220
    %v1562 = vunpack.c.l.b16 %v1221
    %v1563 = vunpack.c.h.b16 %v1221
    %v1564 = vunpack.c.l.b16 %v1222
    %v1565 = vunpack.c.h.b16 %v1222
    %v1566 = vunpack.c.l.b16 %v1223
    %v1567 = vunpack.c.h.b16 %v1223
    %v1568 = vunpack.c.l.b16 %v1224
    %v1569 = vunpack.c.h.b16 %v1224
    %v1570 = vunpack.c.l.b16 %v1225
    %v1571 = vunpack.c.h.b16 %v1225
    %v1572 = vunpack.c.l.b16 %v1226
    %v1573 = vunpack.c.h.b16 %v1226
    %v1574 = vunpack.c.l.b16 %v1227
    %v1575 = vunpack.c.h.b16 %v1227
    %v1576 = vunpack.c.l.b16 %v1228
    %v1577 = vunpack.c.h.b16 %v1228
    %v1578 = vunpack.c.l.b16 %v1229
    %v1579 = vunpack.c.h.b16 %v1229
    %v1580 = vunpack.c.l.b16 %v1230
    %v1581 = vunpack.c.h.b16 %v1230
    %v1582 = vunpack.c.l.b16 %v1231
    %v1583 = vunpack.c.h.b16 %v1231
    %v1584 = vunpack.c.l.b16 %v1232
    %v1585 = vunpack.c.h.b16 %v1232
    %v1586 = vunpack.c.l.b16 %v1233
    %v1587 = vunpack.c.h.b16 %v1233
    %v1588 = vunpack.c.l.b16 %v1234
    %v1589 = vunpack.c.h.b16 %v1234
    %v1590 = vunpack.c.l.b16 %v1235
    %v1591 = vunpack.c.h.b16 %v1235
    %v1592 = vunpack.c.l.b16 %v1236
    %v1593 = vunpack.c.h.b16 %v1236
    %v1594 = vunpack.c.l.b16 %v1237
    %v1595 = vunpack.c.h.b16 %v1237
    %v1596 = vunpack.c.l.b16 %v1238
    %v1597 = vunpack.c.h.b16 %v1238
    %v1598 = vunpack.c.l.b16 %v1239
    %v1599 = vunpack.c.h.b16 %v1239
    %v1600 = vunpack.c.l.b16 %v1240
    %v1601 = vunpack.c.h.b16 %v1240
    %v1602 = vunpack.c.l.b16 %v1241
    %v1603 = vunpack.c.h.b16 %v1241
    %v1604 = vunpack.c.l.b16 %v1242
    %v1605 = vunpack.c.h.b16 %v1242
    %v1606 = vunpack.c.l.b16 %v1243
    %v1607 = vunpack.c.h.b16 %v1243
    %v1608 = vunpack.c.l.b16 %v1244
    %v1609 = vunpack.c.h.b16 %v1244
    %v1610 = vunpack.c.l.b16 %v1245
    %v1611 = vunpack.c.h.b16 %v1245
    %v1612 = vunpack.c.l.b16 %v1246
    %v1613 = vunpack.c.h.b16 %v1246
    %v1614 = vunpack.c.l.b16 %v1247
    %v1615 = vunpack.c.h.b16 %v1247
    %v1616 = vunpack.c.l.b16 %v1248
    %v1617 = vunpack.c.h.b16 %v1248
    %v1618 = vunpack.c.l.b16 %v1249
    %v1619 = vunpack.c.h.b16 %v1249
    %v1620 = vunpack.c.l.b16 %v1250
    %v1621 = vunpack.c.h.b16 %v1250
    %v1622 = vunpack.c.l.b16 %v1251
    %v1623 = vunpack.c.h.b16 %v1251
    %v1624 = vunpack.c.l.b16 %v1252
    %v1625 = vunpack.c.h.b16 %v1252
    %v1626 = vunpack.c.l.b16 %v1253
    %v1627 = vunpack.c.h.b16 %v1253
    %v1628 = vunpack.c.l.b16 %v1254
    %v1629 = vunpack.c.h.b16 %v1254
    %v1630 = vunpack.c.l.b16 %v1255
    %v1631 = vunpack.c.h.b16 %v1255
    %v1632 = vunpack.c.l.b16 %v1256
    %v1633 = vunpack.c.h.b16 %v1256
    %v1634 = vunpack.c.l.b16 %v1257
    %v1635 = vunpack.c.h.b16 %v1257
    %v1636 = vunpack.c.l.b16 %v1258
    %v1637 = vunpack.c.h.b16 %v1258
    %v1638 = vunpack.c.l.b16 %v1259
    %v1639 = vunpack.c.h.b16 %v1259
    %v1640 = vunpack.c.l.b16 %v1260
    %v1641 = vunpack.c.h.b16 %v1260
    %v1642 = vunpack.c.l.b16 %v1261
    %v1643 = vunpack.c.h.b16 %v1261
    %v1644 = vunpack.c.l.b16 %v1262
    %v1645 = vunpack.c.h.b16 %v1262
    %v1646 = vunpack.c.l.b16 %v1263
    %v1647 = vunpack.c.h.b16 %v1263
    %v1648 = vunpack.c.l.b16 %v1264
    %v1649 = vunpack.c.h.b16 %v1264
    %v1650 = vunpack.c.l.b16 %v1265
    %v1651 = vunpack.c.h.b16 %v1265
    %v1652 = vunpack.c.l.b16 %v1266
    %v1653 = vunpack.c.h.b16 %v1266
    %v1654 = vunpack.c.l.b16 %v1267
    %v1655 = vunpack.c.h.b16 %v1267
    %v1656 = vunpack.c.l.b16 %v1268
    %v1657 = vunpack.c.h.b16 %v1268
    %v1658 = vunpack.c.l.b16 %v1269
    %v1659 = vunpack.c.h.b16 %v1269
    %v1660 = vunpack.c.l.b16 %v1270
    %v1661 = vunpack.c.h.b16 %v1270
    %v1662 = vunpack.c.l.b16 %v1271
    %v1663 = vunpack.c.h.b16 %v1271
    %v1664 = vunpack.c.l.b16 %v1272
    %v1665 = vunpack.c.h.b16 %v1272
    %v1666 = vunpack.c.l.b16 %v1273
    %v1667 = vunpack.c.h.b16 %v1273
    %v1668 = vunpack.c.l.b16 %v1274
    %v1669 = vunpack.c.h.b16 %v1274
    %v1670 = vunpack.c.l.b16 %v1275
    %v1671 = vunpack.c.h.b16 %v1275
    %v1672 = vpack.c.b16 %v1418, %v1416
    %v1673 = vpack.c.b16 %v1419, %v1417
    %v1674 = vpack.c.b16 %v1422, %v1420
    %v1675 = vpack.c.b16 %v1423, %v1421
    %v1676 = vpack.c.b16 %v1426, %v1424
    %v1677 = vpack.c.b16 %v1427, %v1425
    %v1678 = vpack.c.b16 %v1430, %v1428
    %v1679 = vpack.c.b16 %v1431, %v1429
    %v1680 = vpack.c.b16 %v1434, %v1432
    %v1681 = vpack.c.b16 %v1435, %v1433
    %v1682 = vpack.c.b16 %v1438, %v1436
    %v1683 = vpack.c.b16 %v1439, %v1437
    %v1684 = vpack.c.b16 %v1442, %v1440
    %v1685 = vpack.c.b16 %v1443, %v1441
    %v1686 = vpack.c.b16 %v1446, %v1444
    %v1687 = vpack.c.b16 %v1447, %v1445
    %v1688 = vpack.c.b16 %v1450, %v1448
    %v1689 = vpack.c.b16 %v1451, %v1449
    %v1690 = vpack.c.b16 %v1454, %v1452
    %v1691 = vpack.c.b16 %v1455, %v1453
    %v1692 = vpack.c.b16 %v1458, %v1456
    %v1693 = vpack.c.b16 %v1459, %v1457
    %v1694 = vpack.c.b16 %v1462, %v1460
    %v1695 = vpack.c.b16 %v1463, %v1461
    %v1696 = vpack.c.b16 %v1466, %v1464
    %v1697 = vpack.c.b16 %v1467, %v1465
    %v1698 = vpack.c.b16 %v1470, %v1468
    %v1699 = vpack.c.b16 %v1471, %v1469
    %v1700 = vpack.c.b16 %v1474, %v1472
    %v1701 = vpack.c.b16 %v1475, %v1473
    %v1702 = vpack.c.b16 %v1478, %v1476
    %v1703 = vpack.c.b16 %v1479, %v1477
    %v1704 = vpack.c.b16 %v1482, %v1480
    %v1705 = vpack.c.b16 %v1483, %v1481
    %v1706 = vpack.c.b16 %v1486, %v1484
    %v1707 = vpack.c.b16 %v1487, %v1485
    %v1708 = vpack.c.b16 %v1490, %v1488
    %v1709 = vpack.c.b16 %v1491, %v1489
    %v1710 = vpack.c.b16 %v1494, %v1492
    %v1711 = vpack.c.b16 %v1495, %v1493
    %v1712 = vpack.c.b16 %v1498, %v1496
    %v1713 = vpack.c.b16 %v1499, %v1497
    %v1714 = vpack.c.b16 %v1502, %v1500
    %v1715 = vpack.c.b16 %v1503, %v1501
    %v1716 = vpack.c.b16 %v1506, %v1504
    %v1717 = vpack.c.b16 %v1507, %v1505
    %v1718 = vpack.c.b16 %v1510, %v1508
    %v1719 = vpack.c.b16 %v1511, %v1509
    %v1720 = vpack.c.b16 %v1514, %v1512
    %v1721 = vpack.c.b16 %v1515, %v1513
    %v1722 = vpack.c.b16 %v1518, %v1516
    %v1723 = vpack.c.b16 %v1519, %v1517
    %v1724 = vpack.c.b16 %v1522, %v1520
    %v1725 = vpack.c.b16 %v1523, %v1521
    %v1726 = vpack.c.b16 %v1526, %v1524
    %v1727 = vpack.c.b16 %v1527, %v1525
    %v1728 = vpack.c.b16 %v1530, %v1528
    %v1729 = vpack.c.b16 %v1531, %v1529
    %v1730 = vpack.c.b16 %v1534, %v1532
    %v1731 = vpack.c.b16 %v1535, %v1533
    %v1732 = vpack.c.b16 %v1538, %v1536
    %v1733 = vpack.c.b16 %v1539, %v1537
    %v1734 = vpack.c.b16 %v1542, %v1540
    %v1735 = vpack.c.b16 %v1543, %v1541
    %v1736 = vpack.c.b16 %v1546, %v1544
    %v1737 = vpack.c.b16 %v1547, %v1545
    %v1738 = vpack.c.b16 %v1550, %v1548
    %v1739 = vpack.c.b16 %v1551, %v1549
    %v1740 = vpack.c.b16 %v1554, %v1552
    %v1741 = vpack.c.b16 %v1555, %v1553
    %v1742 = vpack.c.b16 %v1558, %v1556
    %v1743 = vpack.c.b16 %v1559, %v1557
    %v1744 = vpack.c.b16 %v1562, %v1560
    %v1745 = vpack.c.b16 %v1563, %v1561
    %v1746 = vpack.c.b16 %v1566, %v1564
    %v1747 = vpack.c.b16 %v1567, %v1565
    %v1748 = vpack.c.b16 %v1570, %v1568
    %v1749 = vpack.c.b16 %v1571, %v1569
    %v1750 = vpack.c.b16 %v1574, %v1572
    %v1751 = vpack.c.b16 %v1575, %v1573
    %v1752 = vpack.c.b16 %v1578, %v1576
    %v1753 = vpack.c.b16 %v1579, %v1577
    %v1754 = vpack.c.b16 %v1582, %v1580
    %v1755 = vpack.c.b16 %v1583, %v1581
    %v1756 = vpack.c.b16 %v1586, %v1584
    %v1757 = vpack.c.b16 %v1587, %v1585
    %v1758 = vpack.c.b16 %v1590, %v1588
    %v1759 = vpack.c.b16 %v1591, %v1589
    %v1760 = vpack.c.b16 %v1594, %v1592
    %v1761 = vpack.c.b16 %v1595, %v1593
    %v1762 = vpack.c.b16 %v1598, %v1596
    %v1763 = vpack.c.b16 %v1599, %v1597
    %v1764 = vpack.c.b16 %v1602, %v1600
    %v1765 = vpack.c.b16 %v1603, %v1601
    %v1766 = vpack.c.b16 %v1606, %v1604
    %v1767 = vpack.c.b16 %v1607, %v1605
    %v1768 = vpack.c.b16 %v1610, %v1608
    %v1769 = vpack.c.b16 %v1611, %v1609
    %v1770 = vpack.c.b16 %v1614, %v1612
    %v1771 = vpack.c.b16 %v1615, %v1613
    %v1772 = vpack.c.b16 %v1618, %v1616
    %v1773 = vpack.c.b16 %v1619, %v1617
    %v1774 = vpack.c.b16 %v1622, %v1620
    %v1775 = vpack.c.b16 %v1623, %v1621
    %v1776 = vpack.c.b16 %v1626, %v1624
    %v1777 = vpack.c.b16 %v1627, %v1625
    %v1778 = vpack.c.b16 %v1630, %v1628
    %v1779 = vpack.c.b16 %v1631, %v1629
    %v1780 = vpack.c.b16 %v1634, %v1632
    %v1781 = vpack.c.b16 %v1635, %v1633
    %v1782 = vpack.c.b16 %v1638, %v1636
    %v1783 = vpack.c.b16 %v1639, %v1637
    %v1784 = vpack.c.b16 %v1642, %v1640
    %v1785 = vpack.c.b16 %v1643, %v1641
    %v1786 = vpack.c.b16 %v1646, %v1644
    %v1787 = vpack.c.b16 %v1647, %v1645
    %v1788 = vpack.c.b16 %v1650, %v1648
    %v1789 = vpack.c.b16 %v1651, %v1649
    %v1790 = vpack.c.b16 %v1654, %v1652
    %v1791 = vpack.c.b16 %v1655, %v1653
    %v1792 = vpack.c.b16 %v1658, %v1656
    %v1793 = vpack.c.b16 %v1659, %v1657
    %v1794 = vpack.c.b16 %v1662, %v1660
    %v1795 = vpack.c.b16 %v1663, %v1661
    %v1796 = vpack.c.b16 %v1666, %v1664
    %v1797 = vpack.c.b16 %v1667, %v1665
    %v1798 = vpack.c.b16 %v1670, %v1668
    %v1799 = vpack.c.b16 %v1671, %v1669
    %1928 = vmatprep.subr.bf16.mxu0 %v1673
    %1929 = vmatpush1.bf16.msra.mxu0 %v1672
    %1930 = vmatprep.subr.bf16.mxu0 %v1675
    %1931 = vmatpush1.bf16.msra.mxu0 %v1674
    %1932 = vmatprep.subr.bf16.mxu0 %v1677
    %1933 = vmatpush1.bf16.msra.mxu0 %v1676
    %1934 = vmatprep.subr.bf16.mxu0 %v1679
    %1935 = vmatpush1.bf16.msra.mxu0 %v1678
    %1936 = vmatprep.subr.bf16.mxu0 %v1681
    %1937 = vmatpush1.bf16.msra.mxu0 %v1680
    %1938 = vmatprep.subr.bf16.mxu0 %v1683
    %1939 = vmatpush1.bf16.msra.mxu0 %v1682
    %1940 = vmatprep.subr.bf16.mxu0 %v1685
    %1941 = vmatpush1.bf16.msra.mxu0 %v1684
    %1942 = vmatprep.subr.bf16.mxu0 %v1687
    %1943 = vmatpush1.bf16.msra.mxu0 %v1686
    %1944 = vmatprep.subr.bf16.mxu0 %v1689
    %1945 = vmatpush1.bf16.msra.mxu0 %v1688
    %1946 = vmatprep.subr.bf16.mxu0 %v1691
    %1947 = vmatpush1.bf16.msra.mxu0 %v1690
    %1948 = vmatprep.subr.bf16.mxu0 %v1693
    %1949 = vmatpush1.bf16.msra.mxu0 %v1692
    %1950 = vmatprep.subr.bf16.mxu0 %v1695
    %1951 = vmatpush1.bf16.msra.mxu0 %v1694
    %1952 = vmatprep.subr.bf16.mxu0 %v1697
    %1953 = vmatpush1.bf16.msra.mxu0 %v1696
    %1954 = vmatprep.subr.bf16.mxu0 %v1699
    %1955 = vmatpush1.bf16.msra.mxu0 %v1698
    %1956 = vmatprep.subr.bf16.mxu0 %v1701
    %1957 = vmatpush1.bf16.msra.mxu0 %v1700
    %1958 = vmatprep.subr.bf16.mxu0 %v1703
    %1959 = vmatpush1.bf16.msra.mxu0 %v1702
    %1960 = vmatprep.mubr.bf16.mxu0 %v195
    %1961 = vmatmul.mubr.bf16.gmra.mrb[0].mxu0 %v194
    %v1962 = vpop.f32.mrb[0].mxu0
    %v1963 = vadd.f32 %v1281, %v1962
    %v1964 = vpop.f32.mrb[0].mxu0
    %v1965 = vadd.f32 %v1285, %v1964
    %v1966 = vpop.f32.mrb[0].mxu0
    %v1967 = vpop.f32.mrb[0].mxu0
    %1968 = vdwg.mxu0
    %1969 = vmatprep.subr.bf16.mxu0 %v1705
    %1970 = vmatpush1.bf16.msra.mxu0 %v1704
    %1971 = vmatprep.subr.bf16.mxu0 %v1707
    %1972 = vmatpush1.bf16.msra.mxu0 %v1706
    %1973 = vmatprep.subr.bf16.mxu0 %v1709
    %1974 = vmatpush1.bf16.msra.mxu0 %v1708
    %1975 = vmatprep.subr.bf16.mxu0 %v1711
    %1976 = vmatpush1.bf16.msra.mxu0 %v1710
    %1977 = vmatprep.subr.bf16.mxu0 %v1713
    %1978 = vmatpush1.bf16.msra.mxu0 %v1712
    %1979 = vmatprep.subr.bf16.mxu0 %v1715
    %1980 = vmatpush1.bf16.msra.mxu0 %v1714
    %1981 = vmatprep.subr.bf16.mxu0 %v1717
    %1982 = vmatpush1.bf16.msra.mxu0 %v1716
    %1983 = vmatprep.subr.bf16.mxu0 %v1719
    %1984 = vmatpush1.bf16.msra.mxu0 %v1718
    %1985 = vmatprep.subr.bf16.mxu0 %v1721
    %1986 = vmatpush1.bf16.msra.mxu0 %v1720
    %1987 = vmatprep.subr.bf16.mxu0 %v1723
    %1988 = vmatpush1.bf16.msra.mxu0 %v1722
    %1989 = vmatprep.subr.bf16.mxu0 %v1725
    %1990 = vmatpush1.bf16.msra.mxu0 %v1724
    %1991 = vmatprep.subr.bf16.mxu0 %v1727
    %1992 = vmatpush1.bf16.msra.mxu0 %v1726
    %1993 = vmatprep.subr.bf16.mxu0 %v1729
    %1994 = vmatpush1.bf16.msra.mxu0 %v1728
    %1995 = vmatprep.subr.bf16.mxu0 %v1731
    %1996 = vmatpush1.bf16.msra.mxu0 %v1730
    %1997 = vmatprep.subr.bf16.mxu0 %v1733
    %1998 = vmatpush1.bf16.msra.mxu0 %v1732
    %1999 = vmatprep.subr.bf16.mxu0 %v1735
    %2000 = vmatpush1.bf16.msra.mxu0 %v1734
    %2001 = vmatprep.mubr.bf16.mxu0 %v197
    %2002 = vmatmul.mubr.bf16.gmra.mrb[0].mxu0 %v196
    %v2003 = vpop.f32.mrb[0].mxu0
    %v2004 = vadd.f32 %v1963, %v2003
    %v2005 = vpop.f32.mrb[0].mxu0
    %v2006 = vadd.f32 %v1965, %v2005
    %v2007 = vpop.f32.mrb[0].mxu0
    %v2008 = vpop.f32.mrb[0].mxu0
    %2009 = vdwg.mxu0
    %2010 = vmatprep.subr.bf16.mxu0 %v1737
    %2011 = vmatpush1.bf16.msra.mxu0 %v1736
    %2012 = vmatprep.subr.bf16.mxu0 %v1739
    %2013 = vmatpush1.bf16.msra.mxu0 %v1738
    %2014 = vmatprep.subr.bf16.mxu0 %v1741
    %2015 = vmatpush1.bf16.msra.mxu0 %v1740
    %2016 = vmatprep.subr.bf16.mxu0 %v1743
    %2017 = vmatpush1.bf16.msra.mxu0 %v1742
    %2018 = vmatprep.subr.bf16.mxu0 %v1745
    %2019 = vmatpush1.bf16.msra.mxu0 %v1744
    %2020 = vmatprep.subr.bf16.mxu0 %v1747
    %2021 = vmatpush1.bf16.msra.mxu0 %v1746
    %2022 = vmatprep.subr.bf16.mxu0 %v1749
    %2023 = vmatpush1.bf16.msra.mxu0 %v1748
    %2024 = vmatprep.subr.bf16.mxu0 %v1751
    %2025 = vmatpush1.bf16.msra.mxu0 %v1750
    %2026 = vmatprep.subr.bf16.mxu0 %v1753
    %2027 = vmatpush1.bf16.msra.mxu0 %v1752
    %2028 = vmatprep.subr.bf16.mxu0 %v1755
    %2029 = vmatpush1.bf16.msra.mxu0 %v1754
    %2030 = vmatprep.subr.bf16.mxu0 %v1757
    %2031 = vmatpush1.bf16.msra.mxu0 %v1756
    %2032 = vmatprep.subr.bf16.mxu0 %v1759
    %2033 = vmatpush1.bf16.msra.mxu0 %v1758
    %2034 = vmatprep.subr.bf16.mxu0 %v1761
    %2035 = vmatpush1.bf16.msra.mxu0 %v1760
    %2036 = vmatprep.subr.bf16.mxu0 %v1763
    %2037 = vmatpush1.bf16.msra.mxu0 %v1762
    %2038 = vmatprep.subr.bf16.mxu0 %v1765
    %2039 = vmatpush1.bf16.msra.mxu0 %v1764
    %2040 = vmatprep.subr.bf16.mxu0 %v1767
    %2041 = vmatpush1.bf16.msra.mxu0 %v1766
    %2042 = vmatprep.mubr.bf16.mxu0 %v199
    %2043 = vmatmul.mubr.bf16.gmra.mrb[0].mxu0 %v198
    %v2044 = vpop.f32.mrb[0].mxu0
    %v2045 = vadd.f32 %v2004, %v2044
    %v2046 = vpop.f32.mrb[0].mxu0
    %v2047 = vadd.f32 %v2006, %v2046
    %v2048 = vpop.f32.mrb[0].mxu0
    %v2049 = vpop.f32.mrb[0].mxu0
    %2050 = vdwg.mxu0
    %2051 = vmatprep.subr.bf16.mxu0 %v1769
    %2052 = vmatpush1.bf16.msra.mxu0 %v1768
    %2053 = vmatprep.subr.bf16.mxu0 %v1771
    %2054 = vmatpush1.bf16.msra.mxu0 %v1770
    %2055 = vmatprep.subr.bf16.mxu0 %v1773
    %2056 = vmatpush1.bf16.msra.mxu0 %v1772
    %2057 = vmatprep.subr.bf16.mxu0 %v1775
    %2058 = vmatpush1.bf16.msra.mxu0 %v1774
    %2059 = vmatprep.subr.bf16.mxu0 %v1777
    %2060 = vmatpush1.bf16.msra.mxu0 %v1776
    %2061 = vmatprep.subr.bf16.mxu0 %v1779
    %2062 = vmatpush1.bf16.msra.mxu0 %v1778
    %2063 = vmatprep.subr.bf16.mxu0 %v1781
    %2064 = vmatpush1.bf16.msra.mxu0 %v1780
    %2065 = vmatprep.subr.bf16.mxu0 %v1783
    %2066 = vmatpush1.bf16.msra.mxu0 %v1782
    %2067 = vmatprep.subr.bf16.mxu0 %v1785
    %2068 = vmatpush1.bf16.msra.mxu0 %v1784
    %2069 = vmatprep.subr.bf16.mxu0 %v1787
    %2070 = vmatpush1.bf16.msra.mxu0 %v1786
    %2071 = vmatprep.subr.bf16.mxu0 %v1789
    %2072 = vmatpush1.bf16.msra.mxu0 %v1788
    %2073 = vmatprep.subr.bf16.mxu0 %v1791
    %2074 = vmatpush1.bf16.msra.mxu0 %v1790
    %2075 = vmatprep.subr.bf16.mxu0 %v1793
    %2076 = vmatpush1.bf16.msra.mxu0 %v1792
    %2077 = vmatprep.subr.bf16.mxu0 %v1795
    %2078 = vmatpush1.bf16.msra.mxu0 %v1794
    %2079 = vmatprep.subr.bf16.mxu0 %v1797
    %2080 = vmatpush1.bf16.msra.mxu0 %v1796
    %2081 = vmatprep.subr.bf16.mxu0 %v1799
    %2082 = vmatpush1.bf16.msra.mxu0 %v1798
    %2083 = vmatprep.mubr.bf16.mxu0 %v201
    %2084 = vmatmul.mubr.bf16.gmra.mrb[0].mxu0 %v200
    %v2085 = vpop.f32.mrb[0].mxu0
    %v2086 = vadd.f32 %v2045, %v2085
    %v2087 = vpop.f32.mrb[0].mxu0
    %v2088 = vadd.f32 %v2047, %v2087
    %v2089 = vpop.f32.mrb[0].mxu0
    %v2090 = vpop.f32.mrb[0].mxu0
    %2091 = vdwg.mxu0
    %v2092 = vmax.f32 %v2086, 0.0
    %v2093 = vmax.f32 %v2088, 0.0
    %v2094 = vld [vmem:[#allocation4 + $0x10] sm:$0xff]
    %v2095 = vld [vmem:[#allocation4 + $0x30] sm:$0xff]
    %v2096 = vld [vmem:[#allocation4 + $0x50] sm:$0xff]
    %v2097 = vld [vmem:[#allocation4 + $0x70] sm:$0xff]
    %v2098 = vld [vmem:[#allocation4 + $0x90] sm:$0xff]
    %v2099 = vld [vmem:[#allocation4 + $0xb0] sm:$0xff]
    %v2100 = vld [vmem:[#allocation4 + $0xd0] sm:$0xff]
    %v2101 = vld [vmem:[#allocation4 + $0xf0] sm:$0xff]
    %v2102 = vld [vmem:[#allocation4 + $0x110] sm:$0xff]
    %v2103 = vld [vmem:[#allocation4 + $0x130] sm:$0xff]
    %v2104 = vld [vmem:[#allocation4 + $0x150] sm:$0xff]
    %v2105 = vld [vmem:[#allocation4 + $0x170] sm:$0xff]
    %v2106 = vld [vmem:[#allocation4 + $0x190] sm:$0xff]
    %v2107 = vld [vmem:[#allocation4 + $0x1b0] sm:$0xff]
    %v2108 = vld [vmem:[#allocation4 + $0x1d0] sm:$0xff]
    %v2109 = vld [vmem:[#allocation4 + $0x1f0] sm:$0xff]
    %v2110 = vld [vmem:[#allocation4 + $0x210] sm:$0xff]
    %v2111 = vld [vmem:[#allocation4 + $0x230] sm:$0xff]
    %v2112 = vld [vmem:[#allocation4 + $0x250] sm:$0xff]
    %v2113 = vld [vmem:[#allocation4 + $0x270] sm:$0xff]
    %v2114 = vld [vmem:[#allocation4 + $0x290] sm:$0xff]
    %v2115 = vld [vmem:[#allocation4 + $0x2b0] sm:$0xff]
    %v2116 = vld [vmem:[#allocation4 + $0x2d0] sm:$0xff]
    %v2117 = vld [vmem:[#allocation4 + $0x2f0] sm:$0xff]
    %v2118 = vld [vmem:[#allocation4 + $0x310] sm:$0xff]
    %v2119 = vld [vmem:[#allocation4 + $0x330] sm:$0xff]
    %v2120 = vld [vmem:[#allocation4 + $0x350] sm:$0xff]
    %v2121 = vld [vmem:[#allocation4 + $0x370] sm:$0xff]
    %v2122 = vld [vmem:[#allocation4 + $0x390] sm:$0xff]
    %v2123 = vld [vmem:[#allocation4 + $0x3b0] sm:$0xff]
    %v2124 = vld [vmem:[#allocation4 + $0x3d0] sm:$0xff]
    %v2125 = vld [vmem:[#allocation4 + $0x3f0] sm:$0xff]
    %v2126 = vld [vmem:[#allocation4 + $0x410] sm:$0xff]
    %v2127 = vld [vmem:[#allocation4 + $0x430] sm:$0xff]
    %v2128 = vld [vmem:[#allocation4 + $0x450] sm:$0xff]
    %v2129 = vld [vmem:[#allocation4 + $0x470] sm:$0xff]
    %v2130 = vld [vmem:[#allocation4 + $0x490] sm:$0xff]
    %v2131 = vld [vmem:[#allocation4 + $0x4b0] sm:$0xff]
    %v2132 = vld [vmem:[#allocation4 + $0x4d0] sm:$0xff]
    %v2133 = vld [vmem:[#allocation4 + $0x4f0] sm:$0xff]
    %v2134 = vld [vmem:[#allocation4 + $0x510] sm:$0xff]
    %v2135 = vld [vmem:[#allocation4 + $0x530] sm:$0xff]
    %v2136 = vld [vmem:[#allocation4 + $0x550] sm:$0xff]
    %v2137 = vld [vmem:[#allocation4 + $0x570] sm:$0xff]
    %v2138 = vld [vmem:[#allocation4 + $0x590] sm:$0xff]
    %v2139 = vld [vmem:[#allocation4 + $0x5b0] sm:$0xff]
    %v2140 = vld [vmem:[#allocation4 + $0x5d0] sm:$0xff]
    %v2141 = vld [vmem:[#allocation4 + $0x5f0] sm:$0xff]
    %v2142 = vld [vmem:[#allocation4 + $0x610] sm:$0xff]
    %v2143 = vld [vmem:[#allocation4 + $0x630] sm:$0xff]
    %v2144 = vld [vmem:[#allocation4 + $0x650] sm:$0xff]
    %v2145 = vld [vmem:[#allocation4 + $0x670] sm:$0xff]
    %v2146 = vld [vmem:[#allocation4 + $0x690] sm:$0xff]
    %v2147 = vld [vmem:[#allocation4 + $0x6b0] sm:$0xff]
    %v2148 = vld [vmem:[#allocation4 + $0x6d0] sm:$0xff]
    %v2149 = vld [vmem:[#allocation4 + $0x6f0] sm:$0xff]
    %v2150 = vld [vmem:[#allocation4 + $0x710] sm:$0xff]
    %v2151 = vld [vmem:[#allocation4 + $0x730] sm:$0xff]
    %v2152 = vld [vmem:[#allocation4 + $0x750] sm:$0xff]
    %v2153 = vld [vmem:[#allocation4 + $0x770] sm:$0xff]
    %v2154 = vld [vmem:[#allocation4 + $0x790] sm:$0xff]
    %v2155 = vld [vmem:[#allocation4 + $0x7b0] sm:$0xff]
    %v2156 = vld [vmem:[#allocation4 + $0x7d0] sm:$0xff]
    %v2157 = vld [vmem:[#allocation4 + $0x7f0] sm:$0xff]
    %v2158 = vld [vmem:[#allocation4 + $0x810] sm:$0xff]
    %v2159 = vld [vmem:[#allocation4 + $0x830] sm:$0xff]
    %v2160 = vld [vmem:[#allocation4 + $0x850] sm:$0xff]
    %v2161 = vld [vmem:[#allocation4 + $0x870] sm:$0xff]
    %v2162 = vld [vmem:[#allocation4 + $0x890] sm:$0xff]
    %v2163 = vld [vmem:[#allocation4 + $0x8b0] sm:$0xff]
    %v2164 = vld [vmem:[#allocation4 + $0x8d0] sm:$0xff]
    %v2165 = vld [vmem:[#allocation4 + $0x8f0] sm:$0xff]
    %v2166 = vld [vmem:[#allocation4 + $0x910] sm:$0xff]
    %v2167 = vld [vmem:[#allocation4 + $0x930] sm:$0xff]
    %v2168 = vld [vmem:[#allocation4 + $0x950] sm:$0xff]
    %v2169 = vld [vmem:[#allocation4 + $0x970] sm:$0xff]
    %v2170 = vld [vmem:[#allocation4 + $0x990] sm:$0xff]
    %v2171 = vld [vmem:[#allocation4 + $0x9b0] sm:$0xff]
    %v2172 = vld [vmem:[#allocation4 + $0x9d0] sm:$0xff]
    %v2173 = vld [vmem:[#allocation4 + $0x9f0] sm:$0xff]
    %v2174 = vld [vmem:[#allocation4 + $0xa10] sm:$0xff]
    %v2175 = vld [vmem:[#allocation4 + $0xa30] sm:$0xff]
    %v2176 = vld [vmem:[#allocation4 + $0xa50] sm:$0xff]
    %v2177 = vld [vmem:[#allocation4 + $0xa70] sm:$0xff]
    %v2178 = vld [vmem:[#allocation4 + $0xa90] sm:$0xff]
    %v2179 = vld [vmem:[#allocation4 + $0xab0] sm:$0xff]
    %v2180 = vld [vmem:[#allocation4 + $0xad0] sm:$0xff]
    %v2181 = vld [vmem:[#allocation4 + $0xaf0] sm:$0xff]
    %v2182 = vld [vmem:[#allocation4 + $0xb10] sm:$0xff]
    %v2183 = vld [vmem:[#allocation4 + $0xb30] sm:$0xff]
    %v2184 = vld [vmem:[#allocation4 + $0xb50] sm:$0xff]
    %v2185 = vld [vmem:[#allocation4 + $0xb70] sm:$0xff]
    %v2186 = vld [vmem:[#allocation4 + $0xb90] sm:$0xff]
    %v2187 = vld [vmem:[#allocation4 + $0xbb0] sm:$0xff]
    %v2188 = vld [vmem:[#allocation4 + $0xbd0] sm:$0xff]
    %v2189 = vld [vmem:[#allocation4 + $0xbf0] sm:$0xff]
    %v2190 = vld [vmem:[#allocation4 + $0xc10] sm:$0xff]
    %v2191 = vld [vmem:[#allocation4 + $0xc30] sm:$0xff]
    %v2192 = vld [vmem:[#allocation4 + $0xc50] sm:$0xff]
    %v2193 = vld [vmem:[#allocation4 + $0xc70] sm:$0xff]
    %v2194 = vld [vmem:[#allocation4 + $0xc90] sm:$0xff]
    %v2195 = vld [vmem:[#allocation4 + $0xcb0] sm:$0xff]
    %v2196 = vld [vmem:[#allocation4 + $0xcd0] sm:$0xff]
    %v2197 = vld [vmem:[#allocation4 + $0xcf0] sm:$0xff]
    %v2198 = vld [vmem:[#allocation4 + $0xd10] sm:$0xff]
    %v2199 = vld [vmem:[#allocation4 + $0xd30] sm:$0xff]
    %v2200 = vld [vmem:[#allocation4 + $0xd50] sm:$0xff]
    %v2201 = vld [vmem:[#allocation4 + $0xd70] sm:$0xff]
    %v2202 = vld [vmem:[#allocation4 + $0xd90] sm:$0xff]
    %v2203 = vld [vmem:[#allocation4 + $0xdb0] sm:$0xff]
    %v2204 = vld [vmem:[#allocation4 + $0xdd0] sm:$0xff]
    %v2205 = vld [vmem:[#allocation4 + $0xdf0] sm:$0xff]
    %v2206 = vld [vmem:[#allocation4 + $0xe10] sm:$0xff]
    %v2207 = vld [vmem:[#allocation4 + $0xe30] sm:$0xff]
    %v2208 = vld [vmem:[#allocation4 + $0xe50] sm:$0xff]
    %v2209 = vld [vmem:[#allocation4 + $0xe70] sm:$0xff]
    %v2210 = vld [vmem:[#allocation4 + $0xe90] sm:$0xff]
    %v2211 = vld [vmem:[#allocation4 + $0xeb0] sm:$0xff]
    %v2212 = vld [vmem:[#allocation4 + $0xed0] sm:$0xff]
    %v2213 = vld [vmem:[#allocation4 + $0xef0] sm:$0xff]
    %v2214 = vld [vmem:[#allocation4 + $0xf10] sm:$0xff]
    %v2215 = vld [vmem:[#allocation4 + $0xf30] sm:$0xff]
    %v2216 = vld [vmem:[#allocation4 + $0xf50] sm:$0xff]
    %v2217 = vld [vmem:[#allocation4 + $0xf70] sm:$0xff]
    %v2218 = vld [vmem:[#allocation4 + $0xf90] sm:$0xff]
    %v2219 = vld [vmem:[#allocation4 + $0xfb0] sm:$0xff]
    %v2220 = vld [vmem:[#allocation4 + $0xfd0] sm:$0xff]
    %v2221 = vld [vmem:[#allocation4 + $0xff0] sm:$0xff]
    %v2222 = vld [vmem:[#allocation6 + $0x4] sm:$0x3]
    %v2224 = vlaneseq
    %v2225 = vshrl.u32 %v2224, 7
    %v2226 = vsub.s32 0, %v2225
    %v2227 = vrot.slane %v2222, %v2226
    %v2228 = vlaneseq
    %v2229 = vshrl.u32 %v2228, 7
    %v2230 = vsub.s32 1, %v2229
    %v2231 = vrot.slane %v2222, %v2230
    %v2362 = vunpack.c.l.b16 %v2094
    %v2363 = vunpack.c.h.b16 %v2094
    %v2364 = vunpack.c.l.b16 %v2095
    %v2365 = vunpack.c.h.b16 %v2095
    %v2366 = vunpack.c.l.b16 %v2096
    %v2367 = vunpack.c.h.b16 %v2096
    %v2368 = vunpack.c.l.b16 %v2097
    %v2369 = vunpack.c.h.b16 %v2097
    %v2370 = vunpack.c.l.b16 %v2098
    %v2371 = vunpack.c.h.b16 %v2098
    %v2372 = vunpack.c.l.b16 %v2099
    %v2373 = vunpack.c.h.b16 %v2099
    %v2374 = vunpack.c.l.b16 %v2100
    %v2375 = vunpack.c.h.b16 %v2100
    %v2376 = vunpack.c.l.b16 %v2101
    %v2377 = vunpack.c.h.b16 %v2101
    %v2378 = vunpack.c.l.b16 %v2102
    %v2379 = vunpack.c.h.b16 %v2102
    %v2380 = vunpack.c.l.b16 %v2103
    %v2381 = vunpack.c.h.b16 %v2103
    %v2382 = vunpack.c.l.b16 %v2104
    %v2383 = vunpack.c.h.b16 %v2104
    %v2384 = vunpack.c.l.b16 %v2105
    %v2385 = vunpack.c.h.b16 %v2105
    %v2386 = vunpack.c.l.b16 %v2106
    %v2387 = vunpack.c.h.b16 %v2106
    %v2388 = vunpack.c.l.b16 %v2107
    %v2389 = vunpack.c.h.b16 %v2107
    %v2390 = vunpack.c.l.b16 %v2108
    %v2391 = vunpack.c.h.b16 %v2108
    %v2392 = vunpack.c.l.b16 %v2109
    %v2393 = vunpack.c.h.b16 %v2109
    %v2394 = vunpack.c.l.b16 %v2110
    %v2395 = vunpack.c.h.b16 %v2110
    %v2396 = vunpack.c.l.b16 %v2111
    %v2397 = vunpack.c.h.b16 %v2111
    %v2398 = vunpack.c.l.b16 %v2112
    %v2399 = vunpack.c.h.b16 %v2112
    %v2400 = vunpack.c.l.b16 %v2113
    %v2401 = vunpack.c.h.b16 %v2113
    %v2402 = vunpack.c.l.b16 %v2114
    %v2403 = vunpack.c.h.b16 %v2114
    %v2404 = vunpack.c.l.b16 %v2115
    %v2405 = vunpack.c.h.b16 %v2115
    %v2406 = vunpack.c.l.b16 %v2116
    %v2407 = vunpack.c.h.b16 %v2116
    %v2408 = vunpack.c.l.b16 %v2117
    %v2409 = vunpack.c.h.b16 %v2117
    %v2410 = vunpack.c.l.b16 %v2118
    %v2411 = vunpack.c.h.b16 %v2118
    %v2412 = vunpack.c.l.b16 %v2119
    %v2413 = vunpack.c.h.b16 %v2119
    %v2414 = vunpack.c.l.b16 %v2120
    %v2415 = vunpack.c.h.b16 %v2120
    %v2416 = vunpack.c.l.b16 %v2121
    %v2417 = vunpack.c.h.b16 %v2121
    %v2418 = vunpack.c.l.b16 %v2122
    %v2419 = vunpack.c.h.b16 %v2122
    %v2420 = vunpack.c.l.b16 %v2123
    %v2421 = vunpack.c.h.b16 %v2123
    %v2422 = vunpack.c.l.b16 %v2124
    %v2423 = vunpack.c.h.b16 %v2124
    %v2424 = vunpack.c.l.b16 %v2125
    %v2425 = vunpack.c.h.b16 %v2125
    %v2426 = vunpack.c.l.b16 %v2126
    %v2427 = vunpack.c.h.b16 %v2126
    %v2428 = vunpack.c.l.b16 %v2127
    %v2429 = vunpack.c.h.b16 %v2127
    %v2430 = vunpack.c.l.b16 %v2128
    %v2431 = vunpack.c.h.b16 %v2128
    %v2432 = vunpack.c.l.b16 %v2129
    %v2433 = vunpack.c.h.b16 %v2129
    %v2434 = vunpack.c.l.b16 %v2130
    %v2435 = vunpack.c.h.b16 %v2130
    %v2436 = vunpack.c.l.b16 %v2131
    %v2437 = vunpack.c.h.b16 %v2131
    %v2438 = vunpack.c.l.b16 %v2132
    %v2439 = vunpack.c.h.b16 %v2132
    %v2440 = vunpack.c.l.b16 %v2133
    %v2441 = vunpack.c.h.b16 %v2133
    %v2442 = vunpack.c.l.b16 %v2134
    %v2443 = vunpack.c.h.b16 %v2134
    %v2444 = vunpack.c.l.b16 %v2135
    %v2445 = vunpack.c.h.b16 %v2135
    %v2446 = vunpack.c.l.b16 %v2136
    %v2447 = vunpack.c.h.b16 %v2136
    %v2448 = vunpack.c.l.b16 %v2137
    %v2449 = vunpack.c.h.b16 %v2137
    %v2450 = vunpack.c.l.b16 %v2138
    %v2451 = vunpack.c.h.b16 %v2138
    %v2452 = vunpack.c.l.b16 %v2139
    %v2453 = vunpack.c.h.b16 %v2139
    %v2454 = vunpack.c.l.b16 %v2140
    %v2455 = vunpack.c.h.b16 %v2140
    %v2456 = vunpack.c.l.b16 %v2141
    %v2457 = vunpack.c.h.b16 %v2141
    %v2458 = vunpack.c.l.b16 %v2142
    %v2459 = vunpack.c.h.b16 %v2142
    %v2460 = vunpack.c.l.b16 %v2143
    %v2461 = vunpack.c.h.b16 %v2143
    %v2462 = vunpack.c.l.b16 %v2144
    %v2463 = vunpack.c.h.b16 %v2144
    %v2464 = vunpack.c.l.b16 %v2145
    %v2465 = vunpack.c.h.b16 %v2145
    %v2466 = vunpack.c.l.b16 %v2146
    %v2467 = vunpack.c.h.b16 %v2146
    %v2468 = vunpack.c.l.b16 %v2147
    %v2469 = vunpack.c.h.b16 %v2147
    %v2470 = vunpack.c.l.b16 %v2148
    %v2471 = vunpack.c.h.b16 %v2148
    %v2472 = vunpack.c.l.b16 %v2149
    %v2473 = vunpack.c.h.b16 %v2149
    %v2474 = vunpack.c.l.b16 %v2150
    %v2475 = vunpack.c.h.b16 %v2150
    %v2476 = vunpack.c.l.b16 %v2151
    %v2477 = vunpack.c.h.b16 %v2151
    %v2478 = vunpack.c.l.b16 %v2152
    %v2479 = vunpack.c.h.b16 %v2152
    %v2480 = vunpack.c.l.b16 %v2153
    %v2481 = vunpack.c.h.b16 %v2153
    %v2482 = vunpack.c.l.b16 %v2154
    %v2483 = vunpack.c.h.b16 %v2154
    %v2484 = vunpack.c.l.b16 %v2155
    %v2485 = vunpack.c.h.b16 %v2155
    %v2486 = vunpack.c.l.b16 %v2156
    %v2487 = vunpack.c.h.b16 %v2156
    %v2488 = vunpack.c.l.b16 %v2157
    %v2489 = vunpack.c.h.b16 %v2157
    %v2490 = vunpack.c.l.b16 %v2158
    %v2491 = vunpack.c.h.b16 %v2158
    %v2492 = vunpack.c.l.b16 %v2159
    %v2493 = vunpack.c.h.b16 %v2159
    %v2494 = vunpack.c.l.b16 %v2160
    %v2495 = vunpack.c.h.b16 %v2160
    %v2496 = vunpack.c.l.b16 %v2161
    %v2497 = vunpack.c.h.b16 %v2161
    %v2498 = vunpack.c.l.b16 %v2162
    %v2499 = vunpack.c.h.b16 %v2162
    %v2500 = vunpack.c.l.b16 %v2163
    %v2501 = vunpack.c.h.b16 %v2163
    %v2502 = vunpack.c.l.b16 %v2164
    %v2503 = vunpack.c.h.b16 %v2164
    %v2504 = vunpack.c.l.b16 %v2165
    %v2505 = vunpack.c.h.b16 %v2165
    %v2506 = vunpack.c.l.b16 %v2166
    %v2507 = vunpack.c.h.b16 %v2166
    %v2508 = vunpack.c.l.b16 %v2167
    %v2509 = vunpack.c.h.b16 %v2167
    %v2510 = vunpack.c.l.b16 %v2168
    %v2511 = vunpack.c.h.b16 %v2168
    %v2512 = vunpack.c.l.b16 %v2169
    %v2513 = vunpack.c.h.b16 %v2169
    %v2514 = vunpack.c.l.b16 %v2170
    %v2515 = vunpack.c.h.b16 %v2170
    %v2516 = vunpack.c.l.b16 %v2171
    %v2517 = vunpack.c.h.b16 %v2171
    %v2518 = vunpack.c.l.b16 %v2172
    %v2519 = vunpack.c.h.b16 %v2172
    %v2520 = vunpack.c.l.b16 %v2173
    %v2521 = vunpack.c.h.b16 %v2173
    %v2522 = vunpack.c.l.b16 %v2174
    %v2523 = vunpack.c.h.b16 %v2174
    %v2524 = vunpack.c.l.b16 %v2175
    %v2525 = vunpack.c.h.b16 %v2175
    %v2526 = vunpack.c.l.b16 %v2176
    %v2527 = vunpack.c.h.b16 %v2176
    %v2528 = vunpack.c.l.b16 %v2177
    %v2529 = vunpack.c.h.b16 %v2177
    %v2530 = vunpack.c.l.b16 %v2178
    %v2531 = vunpack.c.h.b16 %v2178
    %v2532 = vunpack.c.l.b16 %v2179
    %v2533 = vunpack.c.h.b16 %v2179
    %v2534 = vunpack.c.l.b16 %v2180
    %v2535 = vunpack.c.h.b16 %v2180
    %v2536 = vunpack.c.l.b16 %v2181
    %v2537 = vunpack.c.h.b16 %v2181
    %v2538 = vunpack.c.l.b16 %v2182
    %v2539 = vunpack.c.h.b16 %v2182
    %v2540 = vunpack.c.l.b16 %v2183
    %v2541 = vunpack.c.h.b16 %v2183
    %v2542 = vunpack.c.l.b16 %v2184
    %v2543 = vunpack.c.h.b16 %v2184
    %v2544 = vunpack.c.l.b16 %v2185
    %v2545 = vunpack.c.h.b16 %v2185
    %v2546 = vunpack.c.l.b16 %v2186
    %v2547 = vunpack.c.h.b16 %v2186
    %v2548 = vunpack.c.l.b16 %v2187
    %v2549 = vunpack.c.h.b16 %v2187
    %v2550 = vunpack.c.l.b16 %v2188
    %v2551 = vunpack.c.h.b16 %v2188
    %v2552 = vunpack.c.l.b16 %v2189
    %v2553 = vunpack.c.h.b16 %v2189
    %v2554 = vunpack.c.l.b16 %v2190
    %v2555 = vunpack.c.h.b16 %v2190
    %v2556 = vunpack.c.l.b16 %v2191
    %v2557 = vunpack.c.h.b16 %v2191
    %v2558 = vunpack.c.l.b16 %v2192
    %v2559 = vunpack.c.h.b16 %v2192
    %v2560 = vunpack.c.l.b16 %v2193
    %v2561 = vunpack.c.h.b16 %v2193
    %v2562 = vunpack.c.l.b16 %v2194
    %v2563 = vunpack.c.h.b16 %v2194
    %v2564 = vunpack.c.l.b16 %v2195
    %v2565 = vunpack.c.h.b16 %v2195
    %v2566 = vunpack.c.l.b16 %v2196
    %v2567 = vunpack.c.h.b16 %v2196
    %v2568 = vunpack.c.l.b16 %v2197
    %v2569 = vunpack.c.h.b16 %v2197
    %v2570 = vunpack.c.l.b16 %v2198
    %v2571 = vunpack.c.h.b16 %v2198
    %v2572 = vunpack.c.l.b16 %v2199
    %v2573 = vunpack.c.h.b16 %v2199
    %v2574 = vunpack.c.l.b16 %v2200
    %v2575 = vunpack.c.h.b16 %v2200
    %v2576 = vunpack.c.l.b16 %v2201
    %v2577 = vunpack.c.h.b16 %v2201
    %v2578 = vunpack.c.l.b16 %v2202
    %v2579 = vunpack.c.h.b16 %v2202
    %v2580 = vunpack.c.l.b16 %v2203
    %v2581 = vunpack.c.h.b16 %v2203
    %v2582 = vunpack.c.l.b16 %v2204
    %v2583 = vunpack.c.h.b16 %v2204
    %v2584 = vunpack.c.l.b16 %v2205
    %v2585 = vunpack.c.h.b16 %v2205
    %v2586 = vunpack.c.l.b16 %v2206
    %v2587 = vunpack.c.h.b16 %v2206
    %v2588 = vunpack.c.l.b16 %v2207
    %v2589 = vunpack.c.h.b16 %v2207
    %v2590 = vunpack.c.l.b16 %v2208
    %v2591 = vunpack.c.h.b16 %v2208
    %v2592 = vunpack.c.l.b16 %v2209
    %v2593 = vunpack.c.h.b16 %v2209
    %v2594 = vunpack.c.l.b16 %v2210
    %v2595 = vunpack.c.h.b16 %v2210
    %v2596 = vunpack.c.l.b16 %v2211
    %v2597 = vunpack.c.h.b16 %v2211
    %v2598 = vunpack.c.l.b16 %v2212
    %v2599 = vunpack.c.h.b16 %v2212
    %v2600 = vunpack.c.l.b16 %v2213
    %v2601 = vunpack.c.h.b16 %v2213
    %v2602 = vunpack.c.l.b16 %v2214
    %v2603 = vunpack.c.h.b16 %v2214
    %v2604 = vunpack.c.l.b16 %v2215
    %v2605 = vunpack.c.h.b16 %v2215
    %v2606 = vunpack.c.l.b16 %v2216
    %v2607 = vunpack.c.h.b16 %v2216
    %v2608 = vunpack.c.l.b16 %v2217
    %v2609 = vunpack.c.h.b16 %v2217
    %v2610 = vunpack.c.l.b16 %v2218
    %v2611 = vunpack.c.h.b16 %v2218
    %v2612 = vunpack.c.l.b16 %v2219
    %v2613 = vunpack.c.h.b16 %v2219
    %v2614 = vunpack.c.l.b16 %v2220
    %v2615 = vunpack.c.h.b16 %v2220
    %v2616 = vunpack.c.l.b16 %v2221
    %v2617 = vunpack.c.h.b16 %v2221
    %v2618 = vpack.c.b16 %v2364, %v2362
    %v2619 = vpack.c.b16 %v2365, %v2363
    %v2620 = vpack.c.b16 %v2368, %v2366
    %v2621 = vpack.c.b16 %v2369, %v2367
    %v2622 = vpack.c.b16 %v2372, %v2370
    %v2623 = vpack.c.b16 %v2373, %v2371
    %v2624 = vpack.c.b16 %v2376, %v2374
    %v2625 = vpack.c.b16 %v2377, %v2375
    %v2626 = vpack.c.b16 %v2380, %v2378
    %v2627 = vpack.c.b16 %v2381, %v2379
    %v2628 = vpack.c.b16 %v2384, %v2382
    %v2629 = vpack.c.b16 %v2385, %v2383
    %v2630 = vpack.c.b16 %v2388, %v2386
    %v2631 = vpack.c.b16 %v2389, %v2387
    %v2632 = vpack.c.b16 %v2392, %v2390
    %v2633 = vpack.c.b16 %v2393, %v2391
    %v2634 = vpack.c.b16 %v2396, %v2394
    %v2635 = vpack.c.b16 %v2397, %v2395
    %v2636 = vpack.c.b16 %v2400, %v2398
    %v2637 = vpack.c.b16 %v2401, %v2399
    %v2638 = vpack.c.b16 %v2404, %v2402
    %v2639 = vpack.c.b16 %v2405, %v2403
    %v2640 = vpack.c.b16 %v2408, %v2406
    %v2641 = vpack.c.b16 %v2409, %v2407
    %v2642 = vpack.c.b16 %v2412, %v2410
    %v2643 = vpack.c.b16 %v2413, %v2411
    %v2644 = vpack.c.b16 %v2416, %v2414
    %v2645 = vpack.c.b16 %v2417, %v2415
    %v2646 = vpack.c.b16 %v2420, %v2418
    %v2647 = vpack.c.b16 %v2421, %v2419
    %v2648 = vpack.c.b16 %v2424, %v2422
    %v2649 = vpack.c.b16 %v2425, %v2423
    %v2650 = vpack.c.b16 %v2428, %v2426
    %v2651 = vpack.c.b16 %v2429, %v2427
    %v2652 = vpack.c.b16 %v2432, %v2430
    %v2653 = vpack.c.b16 %v2433, %v2431
    %v2654 = vpack.c.b16 %v2436, %v2434
    %v2655 = vpack.c.b16 %v2437, %v2435
    %v2656 = vpack.c.b16 %v2440, %v2438
    %v2657 = vpack.c.b16 %v2441, %v2439
    %v2658 = vpack.c.b16 %v2444, %v2442
    %v2659 = vpack.c.b16 %v2445, %v2443
    %v2660 = vpack.c.b16 %v2448, %v2446
    %v2661 = vpack.c.b16 %v2449, %v2447
    %v2662 = vpack.c.b16 %v2452, %v2450
    %v2663 = vpack.c.b16 %v2453, %v2451
    %v2664 = vpack.c.b16 %v2456, %v2454
    %v2665 = vpack.c.b16 %v2457, %v2455
    %v2666 = vpack.c.b16 %v2460, %v2458
    %v2667 = vpack.c.b16 %v2461, %v2459
    %v2668 = vpack.c.b16 %v2464, %v2462
    %v2669 = vpack.c.b16 %v2465, %v2463
    %v2670 = vpack.c.b16 %v2468, %v2466
    %v2671 = vpack.c.b16 %v2469, %v2467
    %v2672 = vpack.c.b16 %v2472, %v2470
    %v2673 = vpack.c.b16 %v2473, %v2471
    %v2674 = vpack.c.b16 %v2476, %v2474
    %v2675 = vpack.c.b16 %v2477, %v2475
    %v2676 = vpack.c.b16 %v2480, %v2478
    %v2677 = vpack.c.b16 %v2481, %v2479
    %v2678 = vpack.c.b16 %v2484, %v2482
    %v2679 = vpack.c.b16 %v2485, %v2483
    %v2680 = vpack.c.b16 %v2488, %v2486
    %v2681 = vpack.c.b16 %v2489, %v2487
    %v2682 = vpack.c.b16 %v2492, %v2490
    %v2683 = vpack.c.b16 %v2493, %v2491
    %v2684 = vpack.c.b16 %v2496, %v2494
    %v2685 = vpack.c.b16 %v2497, %v2495
    %v2686 = vpack.c.b16 %v2500, %v2498
    %v2687 = vpack.c.b16 %v2501, %v2499
    %v2688 = vpack.c.b16 %v2504, %v2502
    %v2689 = vpack.c.b16 %v2505, %v2503
    %v2690 = vpack.c.b16 %v2508, %v2506
    %v2691 = vpack.c.b16 %v2509, %v2507
    %v2692 = vpack.c.b16 %v2512, %v2510
    %v2693 = vpack.c.b16 %v2513, %v2511
    %v2694 = vpack.c.b16 %v2516, %v2514
    %v2695 = vpack.c.b16 %v2517, %v2515
    %v2696 = vpack.c.b16 %v2520, %v2518
    %v2697 = vpack.c.b16 %v2521, %v2519
    %v2698 = vpack.c.b16 %v2524, %v2522
    %v2699 = vpack.c.b16 %v2525, %v2523
    %v2700 = vpack.c.b16 %v2528, %v2526
    %v2701 = vpack.c.b16 %v2529, %v2527
    %v2702 = vpack.c.b16 %v2532, %v2530
    %v2703 = vpack.c.b16 %v2533, %v2531
    %v2704 = vpack.c.b16 %v2536, %v2534
    %v2705 = vpack.c.b16 %v2537, %v2535
    %v2706 = vpack.c.b16 %v2540, %v2538
    %v2707 = vpack.c.b16 %v2541, %v2539
    %v2708 = vpack.c.b16 %v2544, %v2542
    %v2709 = vpack.c.b16 %v2545, %v2543
    %v2710 = vpack.c.b16 %v2548, %v2546
    %v2711 = vpack.c.b16 %v2549, %v2547
    %v2712 = vpack.c.b16 %v2552, %v2550
    %v2713 = vpack.c.b16 %v2553, %v2551
    %v2714 = vpack.c.b16 %v2556, %v2554
    %v2715 = vpack.c.b16 %v2557, %v2555
    %v2716 = vpack.c.b16 %v2560, %v2558
    %v2717 = vpack.c.b16 %v2561, %v2559
    %v2718 = vpack.c.b16 %v2564, %v2562
    %v2719 = vpack.c.b16 %v2565, %v2563
    %v2720 = vpack.c.b16 %v2568, %v2566
    %v2721 = vpack.c.b16 %v2569, %v2567
    %v2722 = vpack.c.b16 %v2572, %v2570
    %v2723 = vpack.c.b16 %v2573, %v2571
    %v2724 = vpack.c.b16 %v2576, %v2574
    %v2725 = vpack.c.b16 %v2577, %v2575
    %v2726 = vpack.c.b16 %v2580, %v2578
    %v2727 = vpack.c.b16 %v2581, %v2579
    %v2728 = vpack.c.b16 %v2584, %v2582
    %v2729 = vpack.c.b16 %v2585, %v2583
    %v2730 = vpack.c.b16 %v2588, %v2586
    %v2731 = vpack.c.b16 %v2589, %v2587
    %v2732 = vpack.c.b16 %v2592, %v2590
    %v2733 = vpack.c.b16 %v2593, %v2591
    %v2734 = vpack.c.b16 %v2596, %v2594
    %v2735 = vpack.c.b16 %v2597, %v2595
    %v2736 = vpack.c.b16 %v2600, %v2598
    %v2737 = vpack.c.b16 %v2601, %v2599
    %v2738 = vpack.c.b16 %v2604, %v2602
    %v2739 = vpack.c.b16 %v2605, %v2603
    %v2740 = vpack.c.b16 %v2608, %v2606
    %v2741 = vpack.c.b16 %v2609, %v2607
    %v2742 = vpack.c.b16 %v2612, %v2610
    %v2743 = vpack.c.b16 %v2613, %v2611
    %v2744 = vpack.c.b16 %v2616, %v2614
    %v2745 = vpack.c.b16 %v2617, %v2615
    %2874 = vmatprep.subr.bf16.mxu0 %v2619
    %2875 = vmatpush1.bf16.msra.mxu0 %v2618
    %2876 = vmatprep.subr.bf16.mxu0 %v2621
    %2877 = vmatpush1.bf16.msra.mxu0 %v2620
    %2878 = vmatprep.subr.bf16.mxu0 %v2623
    %2879 = vmatpush1.bf16.msra.mxu0 %v2622
    %2880 = vmatprep.subr.bf16.mxu0 %v2625
    %2881 = vmatpush1.bf16.msra.mxu0 %v2624
    %2882 = vmatprep.subr.bf16.mxu0 %v2627
    %2883 = vmatpush1.bf16.msra.mxu0 %v2626
    %2884 = vmatprep.subr.bf16.mxu0 %v2629
    %2885 = vmatpush1.bf16.msra.mxu0 %v2628
    %2886 = vmatprep.subr.bf16.mxu0 %v2631
    %2887 = vmatpush1.bf16.msra.mxu0 %v2630
    %2888 = vmatprep.subr.bf16.mxu0 %v2633
    %2889 = vmatpush1.bf16.msra.mxu0 %v2632
    %2890 = vmatprep.subr.bf16.mxu0 %v2635
    %2891 = vmatpush1.bf16.msra.mxu0 %v2634
    %2892 = vmatprep.subr.bf16.mxu0 %v2637
    %2893 = vmatpush1.bf16.msra.mxu0 %v2636
    %2894 = vmatprep.subr.bf16.mxu0 %v2639
    %2895 = vmatpush1.bf16.msra.mxu0 %v2638
    %2896 = vmatprep.subr.bf16.mxu0 %v2641
    %2897 = vmatpush1.bf16.msra.mxu0 %v2640
    %2898 = vmatprep.subr.bf16.mxu0 %v2643
    %2899 = vmatpush1.bf16.msra.mxu0 %v2642
    %2900 = vmatprep.subr.bf16.mxu0 %v2645
    %2901 = vmatpush1.bf16.msra.mxu0 %v2644
    %2902 = vmatprep.subr.bf16.mxu0 %v2647
    %2903 = vmatpush1.bf16.msra.mxu0 %v2646
    %2904 = vmatprep.subr.bf16.mxu0 %v2649
    %2905 = vmatpush1.bf16.msra.mxu0 %v2648
    %2906 = vmatprep.mubr.bf16.mxu0 %v195
    %2907 = vmatmul.mubr.bf16.gmra.mrb[0].mxu0 %v194
    %v2908 = vpop.f32.mrb[0].mxu0
    %v2909 = vadd.f32 %v2227, %v2908
    %v2910 = vpop.f32.mrb[0].mxu0
    %v2911 = vadd.f32 %v2231, %v2910
    %v2912 = vpop.f32.mrb[0].mxu0
    %v2913 = vpop.f32.mrb[0].mxu0
    %2914 = vdwg.mxu0
    %2915 = vmatprep.subr.bf16.mxu0 %v2651
    %2916 = vmatpush1.bf16.msra.mxu0 %v2650
    %2917 = vmatprep.subr.bf16.mxu0 %v2653
    %2918 = vmatpush1.bf16.msra.mxu0 %v2652
    %2919 = vmatprep.subr.bf16.mxu0 %v2655
    %2920 = vmatpush1.bf16.msra.mxu0 %v2654
    %2921 = vmatprep.subr.bf16.mxu0 %v2657
    %2922 = vmatpush1.bf16.msra.mxu0 %v2656
    %2923 = vmatprep.subr.bf16.mxu0 %v2659
    %2924 = vmatpush1.bf16.msra.mxu0 %v2658
    %2925 = vmatprep.subr.bf16.mxu0 %v2661
    %2926 = vmatpush1.bf16.msra.mxu0 %v2660
    %2927 = vmatprep.subr.bf16.mxu0 %v2663
    %2928 = vmatpush1.bf16.msra.mxu0 %v2662
    %2929 = vmatprep.subr.bf16.mxu0 %v2665
    %2930 = vmatpush1.bf16.msra.mxu0 %v2664
    %2931 = vmatprep.subr.bf16.mxu0 %v2667
    %2932 = vmatpush1.bf16.msra.mxu0 %v2666
    %2933 = vmatprep.subr.bf16.mxu0 %v2669
    %2934 = vmatpush1.bf16.msra.mxu0 %v2668
    %2935 = vmatprep.subr.bf16.mxu0 %v2671
    %2936 = vmatpush1.bf16.msra.mxu0 %v2670
    %2937 = vmatprep.subr.bf16.mxu0 %v2673
    %2938 = vmatpush1.bf16.msra.mxu0 %v2672
    %2939 = vmatprep.subr.bf16.mxu0 %v2675
    %2940 = vmatpush1.bf16.msra.mxu0 %v2674
    %2941 = vmatprep.subr.bf16.mxu0 %v2677
    %2942 = vmatpush1.bf16.msra.mxu0 %v2676
    %2943 = vmatprep.subr.bf16.mxu0 %v2679
    %2944 = vmatpush1.bf16.msra.mxu0 %v2678
    %2945 = vmatprep.subr.bf16.mxu0 %v2681
    %2946 = vmatpush1.bf16.msra.mxu0 %v2680
    %2947 = vmatprep.mubr.bf16.mxu0 %v197
    %2948 = vmatmul.mubr.bf16.gmra.mrb[0].mxu0 %v196
    %v2949 = vpop.f32.mrb[0].mxu0
    %v2950 = vadd.f32 %v2909, %v2949
    %v2951 = vpop.f32.mrb[0].mxu0
    %v2952 = vadd.f32 %v2911, %v2951
    %v2953 = vpop.f32.mrb[0].mxu0
    %v2954 = vpop.f32.mrb[0].mxu0
    %2955 = vdwg.mxu0
    %2956 = vmatprep.subr.bf16.mxu0 %v2683
    %2957 = vmatpush1.bf16.msra.mxu0 %v2682
    %2958 = vmatprep.subr.bf16.mxu0 %v2685
    %2959 = vmatpush1.bf16.msra.mxu0 %v2684
    %2960 = vmatprep.subr.bf16.mxu0 %v2687
    %2961 = vmatpush1.bf16.msra.mxu0 %v2686
    %2962 = vmatprep.subr.bf16.mxu0 %v2689
    %2963 = vmatpush1.bf16.msra.mxu0 %v2688
    %2964 = vmatprep.subr.bf16.mxu0 %v2691
    %2965 = vmatpush1.bf16.msra.mxu0 %v2690
    %2966 = vmatprep.subr.bf16.mxu0 %v2693
    %2967 = vmatpush1.bf16.msra.mxu0 %v2692
    %2968 = vmatprep.subr.bf16.mxu0 %v2695
    %2969 = vmatpush1.bf16.msra.mxu0 %v2694
    %2970 = vmatprep.subr.bf16.mxu0 %v2697
    %2971 = vmatpush1.bf16.msra.mxu0 %v2696
    %2972 = vmatprep.subr.bf16.mxu0 %v2699
    %2973 = vmatpush1.bf16.msra.mxu0 %v2698
    %2974 = vmatprep.subr.bf16.mxu0 %v2701
    %2975 = vmatpush1.bf16.msra.mxu0 %v2700
    %2976 = vmatprep.subr.bf16.mxu0 %v2703
    %2977 = vmatpush1.bf16.msra.mxu0 %v2702
    %2978 = vmatprep.subr.bf16.mxu0 %v2705
    %2979 = vmatpush1.bf16.msra.mxu0 %v2704
    %2980 = vmatprep.subr.bf16.mxu0 %v2707
    %2981 = vmatpush1.bf16.msra.mxu0 %v2706
    %2982 = vmatprep.subr.bf16.mxu0 %v2709
    %2983 = vmatpush1.bf16.msra.mxu0 %v2708
    %2984 = vmatprep.subr.bf16.mxu0 %v2711
    %2985 = vmatpush1.bf16.msra.mxu0 %v2710
    %2986 = vmatprep.subr.bf16.mxu0 %v2713
    %2987 = vmatpush1.bf16.msra.mxu0 %v2712
    %2988 = vmatprep.mubr.bf16.mxu0 %v199
    %2989 = vmatmul.mubr.bf16.gmra.mrb[0].mxu0 %v198
    %v2990 = vpop.f32.mrb[0].mxu0
    %v2991 = vadd.f32 %v2950, %v2990
    %v2992 = vpop.f32.mrb[0].mxu0
    %v2993 = vadd.f32 %v2952, %v2992
    %v2994 = vpop.f32.mrb[0].mxu0
    %v2995 = vpop.f32.mrb[0].mxu0
    %2996 = vdwg.mxu0
    %2997 = vmatprep.subr.bf16.mxu0 %v2715
    %2998 = vmatpush1.bf16.msra.mxu0 %v2714
    %2999 = vmatprep.subr.bf16.mxu0 %v2717
    %3000 = vmatpush1.bf16.msra.mxu0 %v2716
    %3001 = vmatprep.subr.bf16.mxu0 %v2719
    %3002 = vmatpush1.bf16.msra.mxu0 %v2718
    %3003 = vmatprep.subr.bf16.mxu0 %v2721
    %3004 = vmatpush1.bf16.msra.mxu0 %v2720
    %3005 = vmatprep.subr.bf16.mxu0 %v2723
    %3006 = vmatpush1.bf16.msra.mxu0 %v2722
    %3007 = vmatprep.subr.bf16.mxu0 %v2725
    %3008 = vmatpush1.bf16.msra.mxu0 %v2724
    %3009 = vmatprep.subr.bf16.mxu0 %v2727
    %3010 = vmatpush1.bf16.msra.mxu0 %v2726
    %3011 = vmatprep.subr.bf16.mxu0 %v2729
    %3012 = vmatpush1.bf16.msra.mxu0 %v2728
    %3013 = vmatprep.subr.bf16.mxu0 %v2731
    %3014 = vmatpush1.bf16.msra.mxu0 %v2730
    %3015 = vmatprep.subr.bf16.mxu0 %v2733
    %3016 = vmatpush1.bf16.msra.mxu0 %v2732
    %3017 = vmatprep.subr.bf16.mxu0 %v2735
    %3018 = vmatpush1.bf16.msra.mxu0 %v2734
    %3019 = vmatprep.subr.bf16.mxu0 %v2737
    %3020 = vmatpush1.bf16.msra.mxu0 %v2736
    %3021 = vmatprep.subr.bf16.mxu0 %v2739
    %3022 = vmatpush1.bf16.msra.mxu0 %v2738
    %3023 = vmatprep.subr.bf16.mxu0 %v2741
    %3024 = vmatpush1.bf16.msra.mxu0 %v2740
    %3025 = vmatprep.subr.bf16.mxu0 %v2743
    %3026 = vmatpush1.bf16.msra.mxu0 %v2742
    %3027 = vmatprep.subr.bf16.mxu0 %v2745
    %3028 = vmatpush1.bf16.msra.mxu0 %v2744
    %3029 = vmatprep.mubr.bf16.mxu0 %v201
    %3030 = vmatmul.mubr.bf16.gmra.mrb[0].mxu0 %v200
    %v3031 = vpop.f32.mrb[0].mxu0
    %v3032 = vadd.f32 %v2991, %v3031
    %v3033 = vpop.f32.mrb[0].mxu0
    %v3034 = vadd.f32 %v2993, %v3033
    %v3035 = vpop.f32.mrb[0].mxu0
    %v3036 = vpop.f32.mrb[0].mxu0
    %3037 = vdwg.mxu0
    %v3038 = vmax.f32 %v3032, 0.0
    %v3039 = vmax.f32 %v3034, 0.0
    %v3040 = vld [vmem:[#allocation4 + $0x18] sm:$0xff]
    %v3041 = vld [vmem:[#allocation4 + $0x38] sm:$0xff]
    %v3042 = vld [vmem:[#allocation4 + $0x58] sm:$0xff]
    %v3043 = vld [vmem:[#allocation4 + $0x78] sm:$0xff]
    %v3044 = vld [vmem:[#allocation4 + $0x98] sm:$0xff]
    %v3045 = vld [vmem:[#allocation4 + $0xb8] sm:$0xff]
    %v3046 = vld [vmem:[#allocation4 + $0xd8] sm:$0xff]
    %v3047 = vld [vmem:[#allocation4 + $0xf8] sm:$0xff]
    %v3048 = vld [vmem:[#allocation4 + $0x118] sm:$0xff]
    %v3049 = vld [vmem:[#allocation4 + $0x138] sm:$0xff]
    %v3050 = vld [vmem:[#allocation4 + $0x158] sm:$0xff]
    %v3051 = vld [vmem:[#allocation4 + $0x178] sm:$0xff]
    %v3052 = vld [vmem:[#allocation4 + $0x198] sm:$0xff]
    %v3053 = vld [vmem:[#allocation4 + $0x1b8] sm:$0xff]
    %v3054 = vld [vmem:[#allocation4 + $0x1d8] sm:$0xff]
    %v3055 = vld [vmem:[#allocation4 + $0x1f8] sm:$0xff]
    %v3056 = vld [vmem:[#allocation4 + $0x218] sm:$0xff]
    %v3057 = vld [vmem:[#allocation4 + $0x238] sm:$0xff]
    %v3058 = vld [vmem:[#allocation4 + $0x258] sm:$0xff]
    %v3059 = vld [vmem:[#allocation4 + $0x278] sm:$0xff]
    %v3060 = vld [vmem:[#allocation4 + $0x298] sm:$0xff]
    %v3061 = vld [vmem:[#allocation4 + $0x2b8] sm:$0xff]
    %v3062 = vld [vmem:[#allocation4 + $0x2d8] sm:$0xff]
    %v3063 = vld [vmem:[#allocation4 + $0x2f8] sm:$0xff]
    %v3064 = vld [vmem:[#allocation4 + $0x318] sm:$0xff]
    %v3065 = vld [vmem:[#allocation4 + $0x338] sm:$0xff]
    %v3066 = vld [vmem:[#allocation4 + $0x358] sm:$0xff]
    %v3067 = vld [vmem:[#allocation4 + $0x378] sm:$0xff]
    %v3068 = vld [vmem:[#allocation4 + $0x398] sm:$0xff]
    %v3069 = vld [vmem:[#allocation4 + $0x3b8] sm:$0xff]
    %v3070 = vld [vmem:[#allocation4 + $0x3d8] sm:$0xff]
    %v3071 = vld [vmem:[#allocation4 + $0x3f8] sm:$0xff]
    %v3072 = vld [vmem:[#allocation4 + $0x418] sm:$0xff]
    %v3073 = vld [vmem:[#allocation4 + $0x438] sm:$0xff]
    %v3074 = vld [vmem:[#allocation4 + $0x458] sm:$0xff]
    %v3075 = vld [vmem:[#allocation4 + $0x478] sm:$0xff]
    %v3076 = vld [vmem:[#allocation4 + $0x498] sm:$0xff]
    %v3077 = vld [vmem:[#allocation4 + $0x4b8] sm:$0xff]
    %v3078 = vld [vmem:[#allocation4 + $0x4d8] sm:$0xff]
    %v3079 = vld [vmem:[#allocation4 + $0x4f8] sm:$0xff]
    %v3080 = vld [vmem:[#allocation4 + $0x518] sm:$0xff]
    %v3081 = vld [vmem:[#allocation4 + $0x538] sm:$0xff]
    %v3082 = vld [vmem:[#allocation4 + $0x558] sm:$0xff]
    %v3083 = vld [vmem:[#allocation4 + $0x578] sm:$0xff]
    %v3084 = vld [vmem:[#allocation4 + $0x598] sm:$0xff]
    %v3085 = vld [vmem:[#allocation4 + $0x5b8] sm:$0xff]
    %v3086 = vld [vmem:[#allocation4 + $0x5d8] sm:$0xff]
    %v3087 = vld [vmem:[#allocation4 + $0x5f8] sm:$0xff]
    %v3088 = vld [vmem:[#allocation4 + $0x618] sm:$0xff]
    %v3089 = vld [vmem:[#allocation4 + $0x638] sm:$0xff]
    %v3090 = vld [vmem:[#allocation4 + $0x658] sm:$0xff]
    %v3091 = vld [vmem:[#allocation4 + $0x678] sm:$0xff]
    %v3092 = vld [vmem:[#allocation4 + $0x698] sm:$0xff]
    %v3093 = vld [vmem:[#allocation4 + $0x6b8] sm:$0xff]
    %v3094 = vld [vmem:[#allocation4 + $0x6d8] sm:$0xff]
    %v3095 = vld [vmem:[#allocation4 + $0x6f8] sm:$0xff]
    %v3096 = vld [vmem:[#allocation4 + $0x718] sm:$0xff]
    %v3097 = vld [vmem:[#allocation4 + $0x738] sm:$0xff]
    %v3098 = vld [vmem:[#allocation4 + $0x758] sm:$0xff]
    %v3099 = vld [vmem:[#allocation4 + $0x778] sm:$0xff]
    %v3100 = vld [vmem:[#allocation4 + $0x798] sm:$0xff]
    %v3101 = vld [vmem:[#allocation4 + $0x7b8] sm:$0xff]
    %v3102 = vld [vmem:[#allocation4 + $0x7d8] sm:$0xff]
    %v3103 = vld [vmem:[#allocation4 + $0x7f8] sm:$0xff]
    %v3104 = vld [vmem:[#allocation4 + $0x818] sm:$0xff]
    %v3105 = vld [vmem:[#allocation4 + $0x838] sm:$0xff]
    %v3106 = vld [vmem:[#allocation4 + $0x858] sm:$0xff]
    %v3107 = vld [vmem:[#allocation4 + $0x878] sm:$0xff]
    %v3108 = vld [vmem:[#allocation4 + $0x898] sm:$0xff]
    %v3109 = vld [vmem:[#allocation4 + $0x8b8] sm:$0xff]
    %v3110 = vld [vmem:[#allocation4 + $0x8d8] sm:$0xff]
    %v3111 = vld [vmem:[#allocation4 + $0x8f8] sm:$0xff]
    %v3112 = vld [vmem:[#allocation4 + $0x918] sm:$0xff]
    %v3113 = vld [vmem:[#allocation4 + $0x938] sm:$0xff]
    %v3114 = vld [vmem:[#allocation4 + $0x958] sm:$0xff]
    %v3115 = vld [vmem:[#allocation4 + $0x978] sm:$0xff]
    %v3116 = vld [vmem:[#allocation4 + $0x998] sm:$0xff]
    %v3117 = vld [vmem:[#allocation4 + $0x9b8] sm:$0xff]
    %v3118 = vld [vmem:[#allocation4 + $0x9d8] sm:$0xff]
    %v3119 = vld [vmem:[#allocation4 + $0x9f8] sm:$0xff]
    %v3120 = vld [vmem:[#allocation4 + $0xa18] sm:$0xff]
    %v3121 = vld [vmem:[#allocation4 + $0xa38] sm:$0xff]
    %v3122 = vld [vmem:[#allocation4 + $0xa58] sm:$0xff]
    %v3123 = vld [vmem:[#allocation4 + $0xa78] sm:$0xff]
    %v3124 = vld [vmem:[#allocation4 + $0xa98] sm:$0xff]
    %v3125 = vld [vmem:[#allocation4 + $0xab8] sm:$0xff]
    %v3126 = vld [vmem:[#allocation4 + $0xad8] sm:$0xff]
    %v3127 = vld [vmem:[#allocation4 + $0xaf8] sm:$0xff]
    %v3128 = vld [vmem:[#allocation4 + $0xb18] sm:$0xff]
    %v3129 = vld [vmem:[#allocation4 + $0xb38] sm:$0xff]
    %v3130 = vld [vmem:[#allocation4 + $0xb58] sm:$0xff]
    %v3131 = vld [vmem:[#allocation4 + $0xb78] sm:$0xff]
    %v3132 = vld [vmem:[#allocation4 + $0xb98] sm:$0xff]
    %v3133 = vld [vmem:[#allocation4 + $0xbb8] sm:$0xff]
    %v3134 = vld [vmem:[#allocation4 + $0xbd8] sm:$0xff]
    %v3135 = vld [vmem:[#allocation4 + $0xbf8] sm:$0xff]
    %v3136 = vld [vmem:[#allocation4 + $0xc18] sm:$0xff]
    %v3137 = vld [vmem:[#allocation4 + $0xc38] sm:$0xff]
    %v3138 = vld [vmem:[#allocation4 + $0xc58] sm:$0xff]
    %v3139 = vld [vmem:[#allocation4 + $0xc78] sm:$0xff]
    %v3140 = vld [vmem:[#allocation4 + $0xc98] sm:$0xff]
    %v3141 = vld [vmem:[#allocation4 + $0xcb8] sm:$0xff]
    %v3142 = vld [vmem:[#allocation4 + $0xcd8] sm:$0xff]
    %v3143 = vld [vmem:[#allocation4 + $0xcf8] sm:$0xff]
    %v3144 = vld [vmem:[#allocation4 + $0xd18] sm:$0xff]
    %v3145 = vld [vmem:[#allocation4 + $0xd38] sm:$0xff]
    %v3146 = vld [vmem:[#allocation4 + $0xd58] sm:$0xff]
    %v3147 = vld [vmem:[#allocation4 + $0xd78] sm:$0xff]
    %v3148 = vld [vmem:[#allocation4 + $0xd98] sm:$0xff]
    %v3149 = vld [vmem:[#allocation4 + $0xdb8] sm:$0xff]
    %v3150 = vld [vmem:[#allocation4 + $0xdd8] sm:$0xff]
    %v3151 = vld [vmem:[#allocation4 + $0xdf8] sm:$0xff]
    %v3152 = vld [vmem:[#allocation4 + $0xe18] sm:$0xff]
    %v3153 = vld [vmem:[#allocation4 + $0xe38] sm:$0xff]
    %v3154 = vld [vmem:[#allocation4 + $0xe58] sm:$0xff]
    %v3155 = vld [vmem:[#allocation4 + $0xe78] sm:$0xff]
    %v3156 = vld [vmem:[#allocation4 + $0xe98] sm:$0xff]
    %v3157 = vld [vmem:[#allocation4 + $0xeb8] sm:$0xff]
    %v3158 = vld [vmem:[#allocation4 + $0xed8] sm:$0xff]
    %v3159 = vld [vmem:[#allocation4 + $0xef8] sm:$0xff]
    %v3160 = vld [vmem:[#allocation4 + $0xf18] sm:$0xff]
    %v3161 = vld [vmem:[#allocation4 + $0xf38] sm:$0xff]
    %v3162 = vld [vmem:[#allocation4 + $0xf58] sm:$0xff]
    %v3163 = vld [vmem:[#allocation4 + $0xf78] sm:$0xff]
    %v3164 = vld [vmem:[#allocation4 + $0xf98] sm:$0xff]
    %v3165 = vld [vmem:[#allocation4 + $0xfb8] sm:$0xff]
    %v3166 = vld [vmem:[#allocation4 + $0xfd8] sm:$0xff]
    %v3167 = vld [vmem:[#allocation4 + $0xff8] sm:$0xff]
    %v3168 = vld [vmem:[#allocation6 + $0x6] sm:$0x3]
    %v3170 = vlaneseq
    %v3171 = vshrl.u32 %v3170, 7
    %v3172 = vsub.s32 0, %v3171
    %v3173 = vrot.slane %v3168, %v3172
    %v3174 = vlaneseq
    %v3175 = vshrl.u32 %v3174, 7
    %v3176 = vsub.s32 1, %v3175
    %v3177 = vrot.slane %v3168, %v3176
    %v3308 = vunpack.c.l.b16 %v3040
    %v3309 = vunpack.c.h.b16 %v3040
    %v3310 = vunpack.c.l.b16 %v3041
    %v3311 = vunpack.c.h.b16 %v3041
    %v3312 = vunpack.c.l.b16 %v3042
    %v3313 = vunpack.c.h.b16 %v3042
    %v3314 = vunpack.c.l.b16 %v3043
    %v3315 = vunpack.c.h.b16 %v3043
    %v3316 = vunpack.c.l.b16 %v3044
    %v3317 = vunpack.c.h.b16 %v3044
    %v3318 = vunpack.c.l.b16 %v3045
    %v3319 = vunpack.c.h.b16 %v3045
    %v3320 = vunpack.c.l.b16 %v3046
    %v3321 = vunpack.c.h.b16 %v3046
    %v3322 = vunpack.c.l.b16 %v3047
    %v3323 = vunpack.c.h.b16 %v3047
    %v3324 = vunpack.c.l.b16 %v3048
    %v3325 = vunpack.c.h.b16 %v3048
    %v3326 = vunpack.c.l.b16 %v3049
    %v3327 = vunpack.c.h.b16 %v3049
    %v3328 = vunpack.c.l.b16 %v3050
    %v3329 = vunpack.c.h.b16 %v3050
    %v3330 = vunpack.c.l.b16 %v3051
    %v3331 = vunpack.c.h.b16 %v3051
    %v3332 = vunpack.c.l.b16 %v3052
    %v3333 = vunpack.c.h.b16 %v3052
    %v3334 = vunpack.c.l.b16 %v3053
    %v3335 = vunpack.c.h.b16 %v3053
    %v3336 = vunpack.c.l.b16 %v3054
    %v3337 = vunpack.c.h.b16 %v3054
    %v3338 = vunpack.c.l.b16 %v3055
    %v3339 = vunpack.c.h.b16 %v3055
    %v3340 = vunpack.c.l.b16 %v3056
    %v3341 = vunpack.c.h.b16 %v3056
    %v3342 = vunpack.c.l.b16 %v3057
    %v3343 = vunpack.c.h.b16 %v3057
    %v3344 = vunpack.c.l.b16 %v3058
    %v3345 = vunpack.c.h.b16 %v3058
    %v3346 = vunpack.c.l.b16 %v3059
    %v3347 = vunpack.c.h.b16 %v3059
    %v3348 = vunpack.c.l.b16 %v3060
    %v3349 = vunpack.c.h.b16 %v3060
    %v3350 = vunpack.c.l.b16 %v3061
    %v3351 = vunpack.c.h.b16 %v3061
    %v3352 = vunpack.c.l.b16 %v3062
    %v3353 = vunpack.c.h.b16 %v3062
    %v3354 = vunpack.c.l.b16 %v3063
    %v3355 = vunpack.c.h.b16 %v3063
    %v3356 = vunpack.c.l.b16 %v3064
    %v3357 = vunpack.c.h.b16 %v3064
    %v3358 = vunpack.c.l.b16 %v3065
    %v3359 = vunpack.c.h.b16 %v3065
    %v3360 = vunpack.c.l.b16 %v3066
    %v3361 = vunpack.c.h.b16 %v3066
    %v3362 = vunpack.c.l.b16 %v3067
    %v3363 = vunpack.c.h.b16 %v3067
    %v3364 = vunpack.c.l.b16 %v3068
    %v3365 = vunpack.c.h.b16 %v3068
    %v3366 = vunpack.c.l.b16 %v3069
    %v3367 = vunpack.c.h.b16 %v3069
    %v3368 = vunpack.c.l.b16 %v3070
    %v3369 = vunpack.c.h.b16 %v3070
    %v3370 = vunpack.c.l.b16 %v3071
    %v3371 = vunpack.c.h.b16 %v3071
    %v3372 = vunpack.c.l.b16 %v3072
    %v3373 = vunpack.c.h.b16 %v3072
    %v3374 = vunpack.c.l.b16 %v3073
    %v3375 = vunpack.c.h.b16 %v3073
    %v3376 = vunpack.c.l.b16 %v3074
    %v3377 = vunpack.c.h.b16 %v3074
    %v3378 = vunpack.c.l.b16 %v3075
    %v3379 = vunpack.c.h.b16 %v3075
    %v3380 = vunpack.c.l.b16 %v3076
    %v3381 = vunpack.c.h.b16 %v3076
    %v3382 = vunpack.c.l.b16 %v3077
    %v3383 = vunpack.c.h.b16 %v3077
    %v3384 = vunpack.c.l.b16 %v3078
    %v3385 = vunpack.c.h.b16 %v3078
    %v3386 = vunpack.c.l.b16 %v3079
    %v3387 = vunpack.c.h.b16 %v3079
    %v3388 = vunpack.c.l.b16 %v3080
    %v3389 = vunpack.c.h.b16 %v3080
    %v3390 = vunpack.c.l.b16 %v3081
    %v3391 = vunpack.c.h.b16 %v3081
    %v3392 = vunpack.c.l.b16 %v3082
    %v3393 = vunpack.c.h.b16 %v3082
    %v3394 = vunpack.c.l.b16 %v3083
    %v3395 = vunpack.c.h.b16 %v3083
    %v3396 = vunpack.c.l.b16 %v3084
    %v3397 = vunpack.c.h.b16 %v3084
    %v3398 = vunpack.c.l.b16 %v3085
    %v3399 = vunpack.c.h.b16 %v3085
    %v3400 = vunpack.c.l.b16 %v3086
    %v3401 = vunpack.c.h.b16 %v3086
    %v3402 = vunpack.c.l.b16 %v3087
    %v3403 = vunpack.c.h.b16 %v3087
    %v3404 = vunpack.c.l.b16 %v3088
    %v3405 = vunpack.c.h.b16 %v3088
    %v3406 = vunpack.c.l.b16 %v3089
    %v3407 = vunpack.c.h.b16 %v3089
    %v3408 = vunpack.c.l.b16 %v3090
    %v3409 = vunpack.c.h.b16 %v3090
    %v3410 = vunpack.c.l.b16 %v3091
    %v3411 = vunpack.c.h.b16 %v3091
    %v3412 = vunpack.c.l.b16 %v3092
    %v3413 = vunpack.c.h.b16 %v3092
    %v3414 = vunpack.c.l.b16 %v3093
    %v3415 = vunpack.c.h.b16 %v3093
    %v3416 = vunpack.c.l.b16 %v3094
    %v3417 = vunpack.c.h.b16 %v3094
    %v3418 = vunpack.c.l.b16 %v3095
    %v3419 = vunpack.c.h.b16 %v3095
    %v3420 = vunpack.c.l.b16 %v3096
    %v3421 = vunpack.c.h.b16 %v3096
    %v3422 = vunpack.c.l.b16 %v3097
    %v3423 = vunpack.c.h.b16 %v3097
    %v3424 = vunpack.c.l.b16 %v3098
    %v3425 = vunpack.c.h.b16 %v3098
    %v3426 = vunpack.c.l.b16 %v3099
    %v3427 = vunpack.c.h.b16 %v3099
    %v3428 = vunpack.c.l.b16 %v3100
    %v3429 = vunpack.c.h.b16 %v3100
    %v3430 = vunpack.c.l.b16 %v3101
    %v3431 = vunpack.c.h.b16 %v3101
    %v3432 = vunpack.c.l.b16 %v3102
    %v3433 = vunpack.c.h.b16 %v3102
    %v3434 = vunpack.c.l.b16 %v3103
    %v3435 = vunpack.c.h.b16 %v3103
    %v3436 = vunpack.c.l.b16 %v3104
    %v3437 = vunpack.c.h.b16 %v3104
    %v3438 = vunpack.c.l.b16 %v3105
    %v3439 = vunpack.c.h.b16 %v3105
    %v3440 = vunpack.c.l.b16 %v3106
    %v3441 = vunpack.c.h.b16 %v3106
    %v3442 = vunpack.c.l.b16 %v3107
    %v3443 = vunpack.c.h.b16 %v3107
    %v3444 = vunpack.c.l.b16 %v3108
    %v3445 = vunpack.c.h.b16 %v3108
    %v3446 = vunpack.c.l.b16 %v3109
    %v3447 = vunpack.c.h.b16 %v3109
    %v3448 = vunpack.c.l.b16 %v3110
    %v3449 = vunpack.c.h.b16 %v3110
    %v3450 = vunpack.c.l.b16 %v3111
    %v3451 = vunpack.c.h.b16 %v3111
    %v3452 = vunpack.c.l.b16 %v3112
    %v3453 = vunpack.c.h.b16 %v3112
    %v3454 = vunpack.c.l.b16 %v3113
    %v3455 = vunpack.c.h.b16 %v3113
    %v3456 = vunpack.c.l.b16 %v3114
    %v3457 = vunpack.c.h.b16 %v3114
    %v3458 = vunpack.c.l.b16 %v3115
    %v3459 = vunpack.c.h.b16 %v3115
    %v3460 = vunpack.c.l.b16 %v3116
    %v3461 = vunpack.c.h.b16 %v3116
    %v3462 = vunpack.c.l.b16 %v3117
    %v3463 = vunpack.c.h.b16 %v3117
    %v3464 = vunpack.c.l.b16 %v3118
    %v3465 = vunpack.c.h.b16 %v3118
    %v3466 = vunpack.c.l.b16 %v3119
    %v3467 = vunpack.c.h.b16 %v3119
    %v3468 = vunpack.c.l.b16 %v3120
    %v3469 = vunpack.c.h.b16 %v3120
    %v3470 = vunpack.c.l.b16 %v3121
    %v3471 = vunpack.c.h.b16 %v3121
    %v3472 = vunpack.c.l.b16 %v3122
    %v3473 = vunpack.c.h.b16 %v3122
    %v3474 = vunpack.c.l.b16 %v3123
    %v3475 = vunpack.c.h.b16 %v3123
    %v3476 = vunpack.c.l.b16 %v3124
    %v3477 = vunpack.c.h.b16 %v3124
    %v3478 = vunpack.c.l.b16 %v3125
    %v3479 = vunpack.c.h.b16 %v3125
    %v3480 = vunpack.c.l.b16 %v3126
    %v3481 = vunpack.c.h.b16 %v3126
    %v3482 = vunpack.c.l.b16 %v3127
    %v3483 = vunpack.c.h.b16 %v3127
    %v3484 = vunpack.c.l.b16 %v3128
    %v3485 = vunpack.c.h.b16 %v3128
    %v3486 = vunpack.c.l.b16 %v3129
    %v3487 = vunpack.c.h.b16 %v3129
    %v3488 = vunpack.c.l.b16 %v3130
    %v3489 = vunpack.c.h.b16 %v3130
    %v3490 = vunpack.c.l.b16 %v3131
    %v3491 = vunpack.c.h.b16 %v3131
    %v3492 = vunpack.c.l.b16 %v3132
    %v3493 = vunpack.c.h.b16 %v3132
    %v3494 = vunpack.c.l.b16 %v3133
    %v3495 = vunpack.c.h.b16 %v3133
    %v3496 = vunpack.c.l.b16 %v3134
    %v3497 = vunpack.c.h.b16 %v3134
    %v3498 = vunpack.c.l.b16 %v3135
    %v3499 = vunpack.c.h.b16 %v3135
    %v3500 = vunpack.c.l.b16 %v3136
    %v3501 = vunpack.c.h.b16 %v3136
    %v3502 = vunpack.c.l.b16 %v3137
    %v3503 = vunpack.c.h.b16 %v3137
    %v3504 = vunpack.c.l.b16 %v3138
    %v3505 = vunpack.c.h.b16 %v3138
    %v3506 = vunpack.c.l.b16 %v3139
    %v3507 = vunpack.c.h.b16 %v3139
    %v3508 = vunpack.c.l.b16 %v3140
    %v3509 = vunpack.c.h.b16 %v3140
    %v3510 = vunpack.c.l.b16 %v3141
    %v3511 = vunpack.c.h.b16 %v3141
    %v3512 = vunpack.c.l.b16 %v3142
    %v3513 = vunpack.c.h.b16 %v3142
    %v3514 = vunpack.c.l.b16 %v3143
    %v3515 = vunpack.c.h.b16 %v3143
    %v3516 = vunpack.c.l.b16 %v3144
    %v3517 = vunpack.c.h.b16 %v3144
    %v3518 = vunpack.c.l.b16 %v3145
    %v3519 = vunpack.c.h.b16 %v3145
    %v3520 = vunpack.c.l.b16 %v3146
    %v3521 = vunpack.c.h.b16 %v3146
    %v3522 = vunpack.c.l.b16 %v3147
    %v3523 = vunpack.c.h.b16 %v3147
    %v3524 = vunpack.c.l.b16 %v3148
    %v3525 = vunpack.c.h.b16 %v3148
    %v3526 = vunpack.c.l.b16 %v3149
    %v3527 = vunpack.c.h.b16 %v3149
    %v3528 = vunpack.c.l.b16 %v3150
    %v3529 = vunpack.c.h.b16 %v3150
    %v3530 = vunpack.c.l.b16 %v3151
    %v3531 = vunpack.c.h.b16 %v3151
    %v3532 = vunpack.c.l.b16 %v3152
    %v3533 = vunpack.c.h.b16 %v3152
    %v3534 = vunpack.c.l.b16 %v3153
    %v3535 = vunpack.c.h.b16 %v3153
    %v3536 = vunpack.c.l.b16 %v3154
    %v3537 = vunpack.c.h.b16 %v3154
    %v3538 = vunpack.c.l.b16 %v3155
    %v3539 = vunpack.c.h.b16 %v3155
    %v3540 = vunpack.c.l.b16 %v3156
    %v3541 = vunpack.c.h.b16 %v3156
    %v3542 = vunpack.c.l.b16 %v3157
    %v3543 = vunpack.c.h.b16 %v3157
    %v3544 = vunpack.c.l.b16 %v3158
    %v3545 = vunpack.c.h.b16 %v3158
    %v3546 = vunpack.c.l.b16 %v3159
    %v3547 = vunpack.c.h.b16 %v3159
    %v3548 = vunpack.c.l.b16 %v3160
    %v3549 = vunpack.c.h.b16 %v3160
    %v3550 = vunpack.c.l.b16 %v3161
    %v3551 = vunpack.c.h.b16 %v3161
    %v3552 = vunpack.c.l.b16 %v3162
    %v3553 = vunpack.c.h.b16 %v3162
    %v3554 = vunpack.c.l.b16 %v3163
    %v3555 = vunpack.c.h.b16 %v3163
    %v3556 = vunpack.c.l.b16 %v3164
    %v3557 = vunpack.c.h.b16 %v3164
    %v3558 = vunpack.c.l.b16 %v3165
    %v3559 = vunpack.c.h.b16 %v3165
    %v3560 = vunpack.c.l.b16 %v3166
    %v3561 = vunpack.c.h.b16 %v3166
    %v3562 = vunpack.c.l.b16 %v3167
    %v3563 = vunpack.c.h.b16 %v3167
    %v3564 = vpack.c.b16 %v3310, %v3308
    %v3565 = vpack.c.b16 %v3311, %v3309
    %v3566 = vpack.c.b16 %v3314, %v3312
    %v3567 = vpack.c.b16 %v3315, %v3313
    %v3568 = vpack.c.b16 %v3318, %v3316
    %v3569 = vpack.c.b16 %v3319, %v3317
    %v3570 = vpack.c.b16 %v3322, %v3320
    %v3571 = vpack.c.b16 %v3323, %v3321
    %v3572 = vpack.c.b16 %v3326, %v3324
    %v3573 = vpack.c.b16 %v3327, %v3325
    %v3574 = vpack.c.b16 %v3330, %v3328
    %v3575 = vpack.c.b16 %v3331, %v3329
    %v3576 = vpack.c.b16 %v3334, %v3332
    %v3577 = vpack.c.b16 %v3335, %v3333
    %v3578 = vpack.c.b16 %v3338, %v3336
    %v3579 = vpack.c.b16 %v3339, %v3337
    %v3580 = vpack.c.b16 %v3342, %v3340
    %v3581 = vpack.c.b16 %v3343, %v3341
    %v3582 = vpack.c.b16 %v3346, %v3344
    %v3583 = vpack.c.b16 %v3347, %v3345
    %v3584 = vpack.c.b16 %v3350, %v3348
    %v3585 = vpack.c.b16 %v3351, %v3349
    %v3586 = vpack.c.b16 %v3354, %v3352
    %v3587 = vpack.c.b16 %v3355, %v3353
    %v3588 = vpack.c.b16 %v3358, %v3356
    %v3589 = vpack.c.b16 %v3359, %v3357
    %v3590 = vpack.c.b16 %v3362, %v3360
    %v3591 = vpack.c.b16 %v3363, %v3361
    %v3592 = vpack.c.b16 %v3366, %v3364
    %v3593 = vpack.c.b16 %v3367, %v3365
    %v3594 = vpack.c.b16 %v3370, %v3368
    %v3595 = vpack.c.b16 %v3371, %v3369
    %v3596 = vpack.c.b16 %v3374, %v3372
    %v3597 = vpack.c.b16 %v3375, %v3373
    %v3598 = vpack.c.b16 %v3378, %v3376
    %v3599 = vpack.c.b16 %v3379, %v3377
    %v3600 = vpack.c.b16 %v3382, %v3380
    %v3601 = vpack.c.b16 %v3383, %v3381
    %v3602 = vpack.c.b16 %v3386, %v3384
    %v3603 = vpack.c.b16 %v3387, %v3385
    %v3604 = vpack.c.b16 %v3390, %v3388
    %v3605 = vpack.c.b16 %v3391, %v3389
    %v3606 = vpack.c.b16 %v3394, %v3392
    %v3607 = vpack.c.b16 %v3395, %v3393
    %v3608 = vpack.c.b16 %v3398, %v3396
    %v3609 = vpack.c.b16 %v3399, %v3397
    %v3610 = vpack.c.b16 %v3402, %v3400
    %v3611 = vpack.c.b16 %v3403, %v3401
    %v3612 = vpack.c.b16 %v3406, %v3404
    %v3613 = vpack.c.b16 %v3407, %v3405
    %v3614 = vpack.c.b16 %v3410, %v3408
    %v3615 = vpack.c.b16 %v3411, %v3409
    %v3616 = vpack.c.b16 %v3414, %v3412
    %v3617 = vpack.c.b16 %v3415, %v3413
    %v3618 = vpack.c.b16 %v3418, %v3416
    %v3619 = vpack.c.b16 %v3419, %v3417
    %v3620 = vpack.c.b16 %v3422, %v3420
    %v3621 = vpack.c.b16 %v3423, %v3421
    %v3622 = vpack.c.b16 %v3426, %v3424
    %v3623 = vpack.c.b16 %v3427, %v3425
    %v3624 = vpack.c.b16 %v3430, %v3428
    %v3625 = vpack.c.b16 %v3431, %v3429
    %v3626 = vpack.c.b16 %v3434, %v3432
    %v3627 = vpack.c.b16 %v3435, %v3433
    %v3628 = vpack.c.b16 %v3438, %v3436
    %v3629 = vpack.c.b16 %v3439, %v3437
    %v3630 = vpack.c.b16 %v3442, %v3440
    %v3631 = vpack.c.b16 %v3443, %v3441
    %v3632 = vpack.c.b16 %v3446, %v3444
    %v3633 = vpack.c.b16 %v3447, %v3445
    %v3634 = vpack.c.b16 %v3450, %v3448
    %v3635 = vpack.c.b16 %v3451, %v3449
    %v3636 = vpack.c.b16 %v3454, %v3452
    %v3637 = vpack.c.b16 %v3455, %v3453
    %v3638 = vpack.c.b16 %v3458, %v3456
    %v3639 = vpack.c.b16 %v3459, %v3457
    %v3640 = vpack.c.b16 %v3462, %v3460
    %v3641 = vpack.c.b16 %v3463, %v3461
    %v3642 = vpack.c.b16 %v3466, %v3464
    %v3643 = vpack.c.b16 %v3467, %v3465
    %v3644 = vpack.c.b16 %v3470, %v3468
    %v3645 = vpack.c.b16 %v3471, %v3469
    %v3646 = vpack.c.b16 %v3474, %v3472
    %v3647 = vpack.c.b16 %v3475, %v3473
    %v3648 = vpack.c.b16 %v3478, %v3476
    %v3649 = vpack.c.b16 %v3479, %v3477
    %v3650 = vpack.c.b16 %v3482, %v3480
    %v3651 = vpack.c.b16 %v3483, %v3481
    %v3652 = vpack.c.b16 %v3486, %v3484
    %v3653 = vpack.c.b16 %v3487, %v3485
    %v3654 = vpack.c.b16 %v3490, %v3488
    %v3655 = vpack.c.b16 %v3491, %v3489
    %v3656 = vpack.c.b16 %v3494, %v3492
    %v3657 = vpack.c.b16 %v3495, %v3493
    %v3658 = vpack.c.b16 %v3498, %v3496
    %v3659 = vpack.c.b16 %v3499, %v3497
    %v3660 = vpack.c.b16 %v3502, %v3500
    %v3661 = vpack.c.b16 %v3503, %v3501
    %v3662 = vpack.c.b16 %v3506, %v3504
    %v3663 = vpack.c.b16 %v3507, %v3505
    %v3664 = vpack.c.b16 %v3510, %v3508
    %v3665 = vpack.c.b16 %v3511, %v3509
    %v3666 = vpack.c.b16 %v3514, %v3512
    %v3667 = vpack.c.b16 %v3515, %v3513
    %v3668 = vpack.c.b16 %v3518, %v3516
    %v3669 = vpack.c.b16 %v3519, %v3517
    %v3670 = vpack.c.b16 %v3522, %v3520
    %v3671 = vpack.c.b16 %v3523, %v3521
    %v3672 = vpack.c.b16 %v3526, %v3524
    %v3673 = vpack.c.b16 %v3527, %v3525
    %v3674 = vpack.c.b16 %v3530, %v3528
    %v3675 = vpack.c.b16 %v3531, %v3529
    %v3676 = vpack.c.b16 %v3534, %v3532
    %v3677 = vpack.c.b16 %v3535, %v3533
    %v3678 = vpack.c.b16 %v3538, %v3536
    %v3679 = vpack.c.b16 %v3539, %v3537
    %v3680 = vpack.c.b16 %v3542, %v3540
    %v3681 = vpack.c.b16 %v3543, %v3541
    %v3682 = vpack.c.b16 %v3546, %v3544
    %v3683 = vpack.c.b16 %v3547, %v3545
    %v3684 = vpack.c.b16 %v3550, %v3548
    %v3685 = vpack.c.b16 %v3551, %v3549
    %v3686 = vpack.c.b16 %v3554, %v3552
    %v3687 = vpack.c.b16 %v3555, %v3553
    %v3688 = vpack.c.b16 %v3558, %v3556
    %v3689 = vpack.c.b16 %v3559, %v3557
    %v3690 = vpack.c.b16 %v3562, %v3560
    %v3691 = vpack.c.b16 %v3563, %v3561
    %3820 = vmatprep.subr.bf16.mxu0 %v3565
    %3821 = vmatpush1.bf16.msra.mxu0 %v3564
    %3822 = vmatprep.subr.bf16.mxu0 %v3567
    %3823 = vmatpush1.bf16.msra.mxu0 %v3566
    %3824 = vmatprep.subr.bf16.mxu0 %v3569
    %3825 = vmatpush1.bf16.msra.mxu0 %v3568
    %3826 = vmatprep.subr.bf16.mxu0 %v3571
    %3827 = vmatpush1.bf16.msra.mxu0 %v3570
    %3828 = vmatprep.subr.bf16.mxu0 %v3573
    %3829 = vmatpush1.bf16.msra.mxu0 %v3572
    %3830 = vmatprep.subr.bf16.mxu0 %v3575
    %3831 = vmatpush1.bf16.msra.mxu0 %v3574
    %3832 = vmatprep.subr.bf16.mxu0 %v3577
    %3833 = vmatpush1.bf16.msra.mxu0 %v3576
    %3834 = vmatprep.subr.bf16.mxu0 %v3579
    %3835 = vmatpush1.bf16.msra.mxu0 %v3578
    %3836 = vmatprep.subr.bf16.mxu0 %v3581
    %3837 = vmatpush1.bf16.msra.mxu0 %v3580
    %3838 = vmatprep.subr.bf16.mxu0 %v3583
    %3839 = vmatpush1.bf16.msra.mxu0 %v3582
    %3840 = vmatprep.subr.bf16.mxu0 %v3585
    %3841 = vmatpush1.bf16.msra.mxu0 %v3584
    %3842 = vmatprep.subr.bf16.mxu0 %v3587
    %3843 = vmatpush1.bf16.msra.mxu0 %v3586
    %3844 = vmatprep.subr.bf16.mxu0 %v3589
    %3845 = vmatpush1.bf16.msra.mxu0 %v3588
    %3846 = vmatprep.subr.bf16.mxu0 %v3591
    %3847 = vmatpush1.bf16.msra.mxu0 %v3590
    %3848 = vmatprep.subr.bf16.mxu0 %v3593
    %3849 = vmatpush1.bf16.msra.mxu0 %v3592
    %3850 = vmatprep.subr.bf16.mxu0 %v3595
    %3851 = vmatpush1.bf16.msra.mxu0 %v3594
    %3852 = vmatprep.mubr.bf16.mxu0 %v195
    %3853 = vmatmul.mubr.bf16.gmra.mrb[0].mxu0 %v194
    %v3854 = vpop.f32.mrb[0].mxu0
    %v3855 = vadd.f32 %v3173, %v3854
    %v3856 = vpop.f32.mrb[0].mxu0
    %v3857 = vadd.f32 %v3177, %v3856
    %v3858 = vpop.f32.mrb[0].mxu0
    %v3859 = vpop.f32.mrb[0].mxu0
    %3860 = vdwg.mxu0
    %3861 = vmatprep.subr.bf16.mxu0 %v3597
    %3862 = vmatpush1.bf16.msra.mxu0 %v3596
    %3863 = vmatprep.subr.bf16.mxu0 %v3599
    %3864 = vmatpush1.bf16.msra.mxu0 %v3598
    %3865 = vmatprep.subr.bf16.mxu0 %v3601
    %3866 = vmatpush1.bf16.msra.mxu0 %v3600
    %3867 = vmatprep.subr.bf16.mxu0 %v3603
    %3868 = vmatpush1.bf16.msra.mxu0 %v3602
    %3869 = vmatprep.subr.bf16.mxu0 %v3605
    %3870 = vmatpush1.bf16.msra.mxu0 %v3604
    %3871 = vmatprep.subr.bf16.mxu0 %v3607
    %3872 = vmatpush1.bf16.msra.mxu0 %v3606
    %3873 = vmatprep.subr.bf16.mxu0 %v3609
    %3874 = vmatpush1.bf16.msra.mxu0 %v3608
    %3875 = vmatprep.subr.bf16.mxu0 %v3611
    %3876 = vmatpush1.bf16.msra.mxu0 %v3610
    %3877 = vmatprep.subr.bf16.mxu0 %v3613
    %3878 = vmatpush1.bf16.msra.mxu0 %v3612
    %3879 = vmatprep.subr.bf16.mxu0 %v3615
    %3880 = vmatpush1.bf16.msra.mxu0 %v3614
    %3881 = vmatprep.subr.bf16.mxu0 %v3617
    %3882 = vmatpush1.bf16.msra.mxu0 %v3616
    %3883 = vmatprep.subr.bf16.mxu0 %v3619
    %3884 = vmatpush1.bf16.msra.mxu0 %v3618
    %3885 = vmatprep.subr.bf16.mxu0 %v3621
    %3886 = vmatpush1.bf16.msra.mxu0 %v3620
    %3887 = vmatprep.subr.bf16.mxu0 %v3623
    %3888 = vmatpush1.bf16.msra.mxu0 %v3622
    %3889 = vmatprep.subr.bf16.mxu0 %v3625
    %3890 = vmatpush1.bf16.msra.mxu0 %v3624
    %3891 = vmatprep.subr.bf16.mxu0 %v3627
    %3892 = vmatpush1.bf16.msra.mxu0 %v3626
    %3893 = vmatprep.mubr.bf16.mxu0 %v197
    %3894 = vmatmul.mubr.bf16.gmra.mrb[0].mxu0 %v196
    %v3895 = vpop.f32.mrb[0].mxu0
    %v3896 = vadd.f32 %v3855, %v3895
    %v3897 = vpop.f32.mrb[0].mxu0
    %v3898 = vadd.f32 %v3857, %v3897
    %v3899 = vpop.f32.mrb[0].mxu0
    %v3900 = vpop.f32.mrb[0].mxu0
    %3901 = vdwg.mxu0
    %3902 = vmatprep.subr.bf16.mxu0 %v3629
    %3903 = vmatpush1.bf16.msra.mxu0 %v3628
    %3904 = vmatprep.subr.bf16.mxu0 %v3631
    %3905 = vmatpush1.bf16.msra.mxu0 %v3630
    %3906 = vmatprep.subr.bf16.mxu0 %v3633
    %3907 = vmatpush1.bf16.msra.mxu0 %v3632
    %3908 = vmatprep.subr.bf16.mxu0 %v3635
    %3909 = vmatpush1.bf16.msra.mxu0 %v3634
    %3910 = vmatprep.subr.bf16.mxu0 %v3637
    %3911 = vmatpush1.bf16.msra.mxu0 %v3636
    %3912 = vmatprep.subr.bf16.mxu0 %v3639
    %3913 = vmatpush1.bf16.msra.mxu0 %v3638
    %3914 = vmatprep.subr.bf16.mxu0 %v3641
    %3915 = vmatpush1.bf16.msra.mxu0 %v3640
    %3916 = vmatprep.subr.bf16.mxu0 %v3643
    %3917 = vmatpush1.bf16.msra.mxu0 %v3642
    %3918 = vmatprep.subr.bf16.mxu0 %v3645
    %3919 = vmatpush1.bf16.msra.mxu0 %v3644
    %3920 = vmatprep.subr.bf16.mxu0 %v3647
    %3921 = vmatpush1.bf16.msra.mxu0 %v3646
    %3922 = vmatprep.subr.bf16.mxu0 %v3649
    %3923 = vmatpush1.bf16.msra.mxu0 %v3648
    %3924 = vmatprep.subr.bf16.mxu0 %v3651
    %3925 = vmatpush1.bf16.msra.mxu0 %v3650
    %3926 = vmatprep.subr.bf16.mxu0 %v3653
    %3927 = vmatpush1.bf16.msra.mxu0 %v3652
    %3928 = vmatprep.subr.bf16.mxu0 %v3655
    %3929 = vmatpush1.bf16.msra.mxu0 %v3654
    %3930 = vmatprep.subr.bf16.mxu0 %v3657
    %3931 = vmatpush1.bf16.msra.mxu0 %v3656
    %3932 = vmatprep.subr.bf16.mxu0 %v3659
    %3933 = vmatpush1.bf16.msra.mxu0 %v3658
    %3934 = vmatprep.mubr.bf16.mxu0 %v199
    %3935 = vmatmul.mubr.bf16.gmra.mrb[0].mxu0 %v198
    %v3936 = vpop.f32.mrb[0].mxu0
    %v3937 = vadd.f32 %v3896, %v3936
    %v3938 = vpop.f32.mrb[0].mxu0
    %v3939 = vadd.f32 %v3898, %v3938
    %v3940 = vpop.f32.mrb[0].mxu0
    %v3941 = vpop.f32.mrb[0].mxu0
    %3942 = vdwg.mxu0
    %3943 = vmatprep.subr.bf16.mxu0 %v3661
    %3944 = vmatpush1.bf16.msra.mxu0 %v3660
    %3945 = vmatprep.subr.bf16.mxu0 %v3663
    %3946 = vmatpush1.bf16.msra.mxu0 %v3662
    %3947 = vmatprep.subr.bf16.mxu0 %v3665
    %3948 = vmatpush1.bf16.msra.mxu0 %v3664
    %3949 = vmatprep.subr.bf16.mxu0 %v3667
    %3950 = vmatpush1.bf16.msra.mxu0 %v3666
    %3951 = vmatprep.subr.bf16.mxu0 %v3669
    %3952 = vmatpush1.bf16.msra.mxu0 %v3668
    %3953 = vmatprep.subr.bf16.mxu0 %v3671
    %3954 = vmatpush1.bf16.msra.mxu0 %v3670
    %3955 = vmatprep.subr.bf16.mxu0 %v3673
    %3956 = vmatpush1.bf16.msra.mxu0 %v3672
    %3957 = vmatprep.subr.bf16.mxu0 %v3675
    %3958 = vmatpush1.bf16.msra.mxu0 %v3674
    %3959 = vmatprep.subr.bf16.mxu0 %v3677
    %3960 = vmatpush1.bf16.msra.mxu0 %v3676
    %3961 = vmatprep.subr.bf16.mxu0 %v3679
    %3962 = vmatpush1.bf16.msra.mxu0 %v3678
    %3963 = vmatprep.subr.bf16.mxu0 %v3681
    %3964 = vmatpush1.bf16.msra.mxu0 %v3680
    %3965 = vmatprep.subr.bf16.mxu0 %v3683
    %3966 = vmatpush1.bf16.msra.mxu0 %v3682
    %3967 = vmatprep.subr.bf16.mxu0 %v3685
    %3968 = vmatpush1.bf16.msra.mxu0 %v3684
    %3969 = vmatprep.subr.bf16.mxu0 %v3687
    %3970 = vmatpush1.bf16.msra.mxu0 %v3686
    %3971 = vmatprep.subr.bf16.mxu0 %v3689
    %3972 = vmatpush1.bf16.msra.mxu0 %v3688
    %3973 = vmatprep.subr.bf16.mxu0 %v3691
    %3974 = vmatpush1.bf16.msra.mxu0 %v3690
    %3975 = vmatprep.mubr.bf16.mxu0 %v201
    %3976 = vmatmul.mubr.bf16.gmra.mrb[0].mxu0 %v200
    %v3977 = vpop.f32.mrb[0].mxu0
    %v3978 = vadd.f32 %v3937, %v3977
    %v3979 = vpop.f32.mrb[0].mxu0
    %v3980 = vadd.f32 %v3939, %v3979
    %v3981 = vpop.f32.mrb[0].mxu0
    %v3982 = vpop.f32.mrb[0].mxu0
    %3983 = vdwg.mxu0
    %v3984 = vmax.f32 %v3978, 0.0
    %v3985 = vmax.f32 %v3980, 0.0
    %v3986 = vpack.c.bf16 %v1146, %v1146
    %v3987 = vpack.c.bf16 %v1147, %v1147
    %v3988 = vpack.c.bf16 %v2092, %v2092
    %v3989 = vpack.c.bf16 %v2093, %v2093
    %v3990 = vpack.c.bf16 %v3038, %v3038
    %v3991 = vpack.c.bf16 %v3039, %v3039
    %v3992 = vpack.c.bf16 %v3984, %v3984
    %v3993 = vpack.c.bf16 %v3985, %v3985
    %v3994 = vld [vmem:[#allocation7] sm:$0xff]
    %v3995 = vld [vmem:[#allocation7 + $0x20] sm:$0xff]
    %v3996 = vld [vmem:[#allocation7 + $0x40] sm:$0xff]
    %v3997 = vld [vmem:[#allocation7 + $0x60] sm:$0xff]
    %v3998 = vld [vmem:[#allocation7 + $0x80] sm:$0xff]
    %v3999 = vld [vmem:[#allocation7 + $0xa0] sm:$0xff]
    %v4000 = vld [vmem:[#allocation7 + $0xc0] sm:$0xff]
    %v4001 = vld [vmem:[#allocation7 + $0xe0] sm:$0xff]
    %v4002 = vld [vmem:[#allocation7 + $0x100] sm:$0xff]
    %v4003 = vld [vmem:[#allocation7 + $0x120] sm:$0xff]
    %v4004 = vld [vmem:[#allocation7 + $0x140] sm:$0xff]
    %v4005 = vld [vmem:[#allocation7 + $0x160] sm:$0xff]
    %v4006 = vld [vmem:[#allocation7 + $0x180] sm:$0xff]
    %v4007 = vld [vmem:[#allocation7 + $0x1a0] sm:$0xff]
    %v4008 = vld [vmem:[#allocation7 + $0x1c0] sm:$0xff]
    %v4009 = vld [vmem:[#allocation7 + $0x1e0] sm:$0xff]
    %v4010 = vld [vmem:[#allocation7 + $0x200] sm:$0xff]
    %v4011 = vld [vmem:[#allocation7 + $0x220] sm:$0xff]
    %v4012 = vld [vmem:[#allocation7 + $0x240] sm:$0xff]
    %v4013 = vld [vmem:[#allocation7 + $0x260] sm:$0xff]
    %v4014 = vld [vmem:[#allocation7 + $0x280] sm:$0xff]
    %v4015 = vld [vmem:[#allocation7 + $0x2a0] sm:$0xff]
    %v4016 = vld [vmem:[#allocation7 + $0x2c0] sm:$0xff]
    %v4017 = vld [vmem:[#allocation7 + $0x2e0] sm:$0xff]
    %v4018 = vld [vmem:[#allocation7 + $0x300] sm:$0xff]
    %v4019 = vld [vmem:[#allocation7 + $0x320] sm:$0xff]
    %v4020 = vld [vmem:[#allocation7 + $0x340] sm:$0xff]
    %v4021 = vld [vmem:[#allocation7 + $0x360] sm:$0xff]
    %v4022 = vld [vmem:[#allocation7 + $0x380] sm:$0xff]
    %v4023 = vld [vmem:[#allocation7 + $0x3a0] sm:$0xff]
    %v4024 = vld [vmem:[#allocation7 + $0x3c0] sm:$0xff]
    %v4025 = vld [vmem:[#allocation7 + $0x3e0] sm:$0xff]
    %v4026 = vld [vmem:[#allocation7 + $0x400] sm:$0xff]
    %v4027 = vld [vmem:[#allocation7 + $0x420] sm:$0xff]
    %v4028 = vld [vmem:[#allocation7 + $0x440] sm:$0xff]
    %v4029 = vld [vmem:[#allocation7 + $0x460] sm:$0xff]
    %v4030 = vld [vmem:[#allocation7 + $0x480] sm:$0xff]
    %v4031 = vld [vmem:[#allocation7 + $0x4a0] sm:$0xff]
    %v4032 = vld [vmem:[#allocation7 + $0x4c0] sm:$0xff]
    %v4033 = vld [vmem:[#allocation7 + $0x4e0] sm:$0xff]
    %v4034 = vld [vmem:[#allocation7 + $0x500] sm:$0xff]
    %v4035 = vld [vmem:[#allocation7 + $0x520] sm:$0xff]
    %v4036 = vld [vmem:[#allocation7 + $0x540] sm:$0xff]
    %v4037 = vld [vmem:[#allocation7 + $0x560] sm:$0xff]
    %v4038 = vld [vmem:[#allocation7 + $0x580] sm:$0xff]
    %v4039 = vld [vmem:[#allocation7 + $0x5a0] sm:$0xff]
    %v4040 = vld [vmem:[#allocation7 + $0x5c0] sm:$0xff]
    %v4041 = vld [vmem:[#allocation7 + $0x5e0] sm:$0xff]
    %v4042 = vld [vmem:[#allocation7 + $0x600] sm:$0xff]
    %v4043 = vld [vmem:[#allocation7 + $0x620] sm:$0xff]
    %v4044 = vld [vmem:[#allocation7 + $0x640] sm:$0xff]
    %v4045 = vld [vmem:[#allocation7 + $0x660] sm:$0xff]
    %v4046 = vld [vmem:[#allocation7 + $0x680] sm:$0xff]
    %v4047 = vld [vmem:[#allocation7 + $0x6a0] sm:$0xff]
    %v4048 = vld [vmem:[#allocation7 + $0x6c0] sm:$0xff]
    %v4049 = vld [vmem:[#allocation7 + $0x6e0] sm:$0xff]
    %v4050 = vld [vmem:[#allocation7 + $0x700] sm:$0xff]
    %v4051 = vld [vmem:[#allocation7 + $0x720] sm:$0xff]
    %v4052 = vld [vmem:[#allocation7 + $0x740] sm:$0xff]
    %v4053 = vld [vmem:[#allocation7 + $0x760] sm:$0xff]
    %v4054 = vld [vmem:[#allocation7 + $0x780] sm:$0xff]
    %v4055 = vld [vmem:[#allocation7 + $0x7a0] sm:$0xff]
    %v4056 = vld [vmem:[#allocation7 + $0x7c0] sm:$0xff]
    %v4057 = vld [vmem:[#allocation7 + $0x7e0] sm:$0xff]
    %v4058 = vld [vmem:[#allocation7 + $0x800] sm:$0xff]
    %v4059 = vld [vmem:[#allocation7 + $0x820] sm:$0xff]
    %v4060 = vld [vmem:[#allocation7 + $0x840] sm:$0xff]
    %v4061 = vld [vmem:[#allocation7 + $0x860] sm:$0xff]
    %v4062 = vld [vmem:[#allocation7 + $0x880] sm:$0xff]
    %v4063 = vld [vmem:[#allocation7 + $0x8a0] sm:$0xff]
    %v4064 = vld [vmem:[#allocation7 + $0x8c0] sm:$0xff]
    %v4065 = vld [vmem:[#allocation7 + $0x8e0] sm:$0xff]
    %v4066 = vld [vmem:[#allocation7 + $0x900] sm:$0xff]
    %v4067 = vld [vmem:[#allocation7 + $0x920] sm:$0xff]
    %v4068 = vld [vmem:[#allocation7 + $0x940] sm:$0xff]
    %v4069 = vld [vmem:[#allocation7 + $0x960] sm:$0xff]
    %v4070 = vld [vmem:[#allocation7 + $0x980] sm:$0xff]
    %v4071 = vld [vmem:[#allocation7 + $0x9a0] sm:$0xff]
    %v4072 = vld [vmem:[#allocation7 + $0x9c0] sm:$0xff]
    %v4073 = vld [vmem:[#allocation7 + $0x9e0] sm:$0xff]
    %v4074 = vld [vmem:[#allocation7 + $0xa00] sm:$0xff]
    %v4075 = vld [vmem:[#allocation7 + $0xa20] sm:$0xff]
    %v4076 = vld [vmem:[#allocation7 + $0xa40] sm:$0xff]
    %v4077 = vld [vmem:[#allocation7 + $0xa60] sm:$0xff]
    %v4078 = vld [vmem:[#allocation7 + $0xa80] sm:$0xff]
    %v4079 = vld [vmem:[#allocation7 + $0xaa0] sm:$0xff]
    %v4080 = vld [vmem:[#allocation7 + $0xac0] sm:$0xff]
    %v4081 = vld [vmem:[#allocation7 + $0xae0] sm:$0xff]
    %v4082 = vld [vmem:[#allocation7 + $0xb00] sm:$0xff]
    %v4083 = vld [vmem:[#allocation7 + $0xb20] sm:$0xff]
    %v4084 = vld [vmem:[#allocation7 + $0xb40] sm:$0xff]
    %v4085 = vld [vmem:[#allocation7 + $0xb60] sm:$0xff]
    %v4086 = vld [vmem:[#allocation7 + $0xb80] sm:$0xff]
    %v4087 = vld [vmem:[#allocation7 + $0xba0] sm:$0xff]
    %v4088 = vld [vmem:[#allocation7 + $0xbc0] sm:$0xff]
    %v4089 = vld [vmem:[#allocation7 + $0xbe0] sm:$0xff]
    %v4090 = vld [vmem:[#allocation7 + $0xc00] sm:$0xff]
    %v4091 = vld [vmem:[#allocation7 + $0xc20] sm:$0xff]
    %v4092 = vld [vmem:[#allocation7 + $0xc40] sm:$0xff]
    %v4093 = vld [vmem:[#allocation7 + $0xc60] sm:$0xff]
    %v4094 = vld [vmem:[#allocation7 + $0xc80] sm:$0xff]
    %v4095 = vld [vmem:[#allocation7 + $0xca0] sm:$0xff]
    %v4096 = vld [vmem:[#allocation7 + $0xcc0] sm:$0xff]
    %v4097 = vld [vmem:[#allocation7 + $0xce0] sm:$0xff]
    %v4098 = vld [vmem:[#allocation7 + $0xd00] sm:$0xff]
    %v4099 = vld [vmem:[#allocation7 + $0xd20] sm:$0xff]
    %v4100 = vld [vmem:[#allocation7 + $0xd40] sm:$0xff]
    %v4101 = vld [vmem:[#allocation7 + $0xd60] sm:$0xff]
    %v4102 = vld [vmem:[#allocation7 + $0xd80] sm:$0xff]
    %v4103 = vld [vmem:[#allocation7 + $0xda0] sm:$0xff]
    %v4104 = vld [vmem:[#allocation7 + $0xdc0] sm:$0xff]
    %v4105 = vld [vmem:[#allocation7 + $0xde0] sm:$0xff]
    %v4106 = vld [vmem:[#allocation7 + $0xe00] sm:$0xff]
    %v4107 = vld [vmem:[#allocation7 + $0xe20] sm:$0xff]
    %v4108 = vld [vmem:[#allocation7 + $0xe40] sm:$0xff]
    %v4109 = vld [vmem:[#allocation7 + $0xe60] sm:$0xff]
    %v4110 = vld [vmem:[#allocation7 + $0xe80] sm:$0xff]
    %v4111 = vld [vmem:[#allocation7 + $0xea0] sm:$0xff]
    %v4112 = vld [vmem:[#allocation7 + $0xec0] sm:$0xff]
    %v4113 = vld [vmem:[#allocation7 + $0xee0] sm:$0xff]
    %v4114 = vld [vmem:[#allocation7 + $0xf00] sm:$0xff]
    %v4115 = vld [vmem:[#allocation7 + $0xf20] sm:$0xff]
    %v4116 = vld [vmem:[#allocation7 + $0xf40] sm:$0xff]
    %v4117 = vld [vmem:[#allocation7 + $0xf60] sm:$0xff]
    %v4118 = vld [vmem:[#allocation7 + $0xf80] sm:$0xff]
    %v4119 = vld [vmem:[#allocation7 + $0xfa0] sm:$0xff]
    %v4120 = vld [vmem:[#allocation7 + $0xfc0] sm:$0xff]
    %v4121 = vld [vmem:[#allocation7 + $0xfe0] sm:$0xff]
    %v4122 = vld [vmem:[#allocation9] sm:$0x3]
    %v4124 = vlaneseq
    %v4125 = vshrl.u32 %v4124, 7
    %v4126 = vsub.s32 0, %v4125
    %v4127 = vrot.slane %v4122, %v4126
    %v4128 = vlaneseq
    %v4129 = vshrl.u32 %v4128, 7
    %v4130 = vsub.s32 1, %v4129
    %v4131 = vrot.slane %v4122, %v4130
    %v4262 = vunpack.c.l.b16 %v3994
    %v4263 = vunpack.c.h.b16 %v3994
    %v4264 = vunpack.c.l.b16 %v3995
    %v4265 = vunpack.c.h.b16 %v3995
    %v4266 = vunpack.c.l.b16 %v3996
    %v4267 = vunpack.c.h.b16 %v3996
    %v4268 = vunpack.c.l.b16 %v3997
    %v4269 = vunpack.c.h.b16 %v3997
    %v4270 = vunpack.c.l.b16 %v3998
    %v4271 = vunpack.c.h.b16 %v3998
    %v4272 = vunpack.c.l.b16 %v3999
    %v4273 = vunpack.c.h.b16 %v3999
    %v4274 = vunpack.c.l.b16 %v4000
    %v4275 = vunpack.c.h.b16 %v4000
    %v4276 = vunpack.c.l.b16 %v4001
    %v4277 = vunpack.c.h.b16 %v4001
    %v4278 = vunpack.c.l.b16 %v4002
    %v4279 = vunpack.c.h.b16 %v4002
    %v4280 = vunpack.c.l.b16 %v4003
    %v4281 = vunpack.c.h.b16 %v4003
    %v4282 = vunpack.c.l.b16 %v4004
    %v4283 = vunpack.c.h.b16 %v4004
    %v4284 = vunpack.c.l.b16 %v4005
    %v4285 = vunpack.c.h.b16 %v4005
    %v4286 = vunpack.c.l.b16 %v4006
    %v4287 = vunpack.c.h.b16 %v4006
    %v4288 = vunpack.c.l.b16 %v4007
    %v4289 = vunpack.c.h.b16 %v4007
    %v4290 = vunpack.c.l.b16 %v4008
    %v4291 = vunpack.c.h.b16 %v4008
    %v4292 = vunpack.c.l.b16 %v4009
    %v4293 = vunpack.c.h.b16 %v4009
    %v4294 = vunpack.c.l.b16 %v4010
    %v4295 = vunpack.c.h.b16 %v4010
    %v4296 = vunpack.c.l.b16 %v4011
    %v4297 = vunpack.c.h.b16 %v4011
    %v4298 = vunpack.c.l.b16 %v4012
    %v4299 = vunpack.c.h.b16 %v4012
    %v4300 = vunpack.c.l.b16 %v4013
    %v4301 = vunpack.c.h.b16 %v4013
    %v4302 = vunpack.c.l.b16 %v4014
    %v4303 = vunpack.c.h.b16 %v4014
    %v4304 = vunpack.c.l.b16 %v4015
    %v4305 = vunpack.c.h.b16 %v4015
    %v4306 = vunpack.c.l.b16 %v4016
    %v4307 = vunpack.c.h.b16 %v4016
    %v4308 = vunpack.c.l.b16 %v4017
    %v4309 = vunpack.c.h.b16 %v4017
    %v4310 = vunpack.c.l.b16 %v4018
    %v4311 = vunpack.c.h.b16 %v4018
    %v4312 = vunpack.c.l.b16 %v4019
    %v4313 = vunpack.c.h.b16 %v4019
    %v4314 = vunpack.c.l.b16 %v4020
    %v4315 = vunpack.c.h.b16 %v4020
    %v4316 = vunpack.c.l.b16 %v4021
    %v4317 = vunpack.c.h.b16 %v4021
    %v4318 = vunpack.c.l.b16 %v4022
    %v4319 = vunpack.c.h.b16 %v4022
    %v4320 = vunpack.c.l.b16 %v4023
    %v4321 = vunpack.c.h.b16 %v4023
    %v4322 = vunpack.c.l.b16 %v4024
    %v4323 = vunpack.c.h.b16 %v4024
    %v4324 = vunpack.c.l.b16 %v4025
    %v4325 = vunpack.c.h.b16 %v4025
    %v4326 = vunpack.c.l.b16 %v4026
    %v4327 = vunpack.c.h.b16 %v4026
    %v4328 = vunpack.c.l.b16 %v4027
    %v4329 = vunpack.c.h.b16 %v4027
    %v4330 = vunpack.c.l.b16 %v4028
    %v4331 = vunpack.c.h.b16 %v4028
    %v4332 = vunpack.c.l.b16 %v4029
    %v4333 = vunpack.c.h.b16 %v4029
    %v4334 = vunpack.c.l.b16 %v4030
    %v4335 = vunpack.c.h.b16 %v4030
    %v4336 = vunpack.c.l.b16 %v4031
    %v4337 = vunpack.c.h.b16 %v4031
    %v4338 = vunpack.c.l.b16 %v4032
    %v4339 = vunpack.c.h.b16 %v4032
    %v4340 = vunpack.c.l.b16 %v4033
    %v4341 = vunpack.c.h.b16 %v4033
    %v4342 = vunpack.c.l.b16 %v4034
    %v4343 = vunpack.c.h.b16 %v4034
    %v4344 = vunpack.c.l.b16 %v4035
    %v4345 = vunpack.c.h.b16 %v4035
    %v4346 = vunpack.c.l.b16 %v4036
    %v4347 = vunpack.c.h.b16 %v4036
    %v4348 = vunpack.c.l.b16 %v4037
    %v4349 = vunpack.c.h.b16 %v4037
    %v4350 = vunpack.c.l.b16 %v4038
    %v4351 = vunpack.c.h.b16 %v4038
    %v4352 = vunpack.c.l.b16 %v4039
    %v4353 = vunpack.c.h.b16 %v4039
    %v4354 = vunpack.c.l.b16 %v4040
    %v4355 = vunpack.c.h.b16 %v4040
    %v4356 = vunpack.c.l.b16 %v4041
    %v4357 = vunpack.c.h.b16 %v4041
    %v4358 = vunpack.c.l.b16 %v4042
    %v4359 = vunpack.c.h.b16 %v4042
    %v4360 = vunpack.c.l.b16 %v4043
    %v4361 = vunpack.c.h.b16 %v4043
    %v4362 = vunpack.c.l.b16 %v4044
    %v4363 = vunpack.c.h.b16 %v4044
    %v4364 = vunpack.c.l.b16 %v4045
    %v4365 = vunpack.c.h.b16 %v4045
    %v4366 = vunpack.c.l.b16 %v4046
    %v4367 = vunpack.c.h.b16 %v4046
    %v4368 = vunpack.c.l.b16 %v4047
    %v4369 = vunpack.c.h.b16 %v4047
    %v4370 = vunpack.c.l.b16 %v4048
    %v4371 = vunpack.c.h.b16 %v4048
    %v4372 = vunpack.c.l.b16 %v4049
    %v4373 = vunpack.c.h.b16 %v4049
    %v4374 = vunpack.c.l.b16 %v4050
    %v4375 = vunpack.c.h.b16 %v4050
    %v4376 = vunpack.c.l.b16 %v4051
    %v4377 = vunpack.c.h.b16 %v4051
    %v4378 = vunpack.c.l.b16 %v4052
    %v4379 = vunpack.c.h.b16 %v4052
    %v4380 = vunpack.c.l.b16 %v4053
    %v4381 = vunpack.c.h.b16 %v4053
    %v4382 = vunpack.c.l.b16 %v4054
    %v4383 = vunpack.c.h.b16 %v4054
    %v4384 = vunpack.c.l.b16 %v4055
    %v4385 = vunpack.c.h.b16 %v4055
    %v4386 = vunpack.c.l.b16 %v4056
    %v4387 = vunpack.c.h.b16 %v4056
    %v4388 = vunpack.c.l.b16 %v4057
    %v4389 = vunpack.c.h.b16 %v4057
    %v4390 = vunpack.c.l.b16 %v4058
    %v4391 = vunpack.c.h.b16 %v4058
    %v4392 = vunpack.c.l.b16 %v4059
    %v4393 = vunpack.c.h.b16 %v4059
    %v4394 = vunpack.c.l.b16 %v4060
    %v4395 = vunpack.c.h.b16 %v4060
    %v4396 = vunpack.c.l.b16 %v4061
    %v4397 = vunpack.c.h.b16 %v4061
    %v4398 = vunpack.c.l.b16 %v4062
    %v4399 = vunpack.c.h.b16 %v4062
    %v4400 = vunpack.c.l.b16 %v4063
    %v4401 = vunpack.c.h.b16 %v4063
    %v4402 = vunpack.c.l.b16 %v4064
    %v4403 = vunpack.c.h.b16 %v4064
    %v4404 = vunpack.c.l.b16 %v4065
    %v4405 = vunpack.c.h.b16 %v4065
    %v4406 = vunpack.c.l.b16 %v4066
    %v4407 = vunpack.c.h.b16 %v4066
    %v4408 = vunpack.c.l.b16 %v4067
    %v4409 = vunpack.c.h.b16 %v4067
    %v4410 = vunpack.c.l.b16 %v4068
    %v4411 = vunpack.c.h.b16 %v4068
    %v4412 = vunpack.c.l.b16 %v4069
    %v4413 = vunpack.c.h.b16 %v4069
    %v4414 = vunpack.c.l.b16 %v4070
    %v4415 = vunpack.c.h.b16 %v4070
    %v4416 = vunpack.c.l.b16 %v4071
    %v4417 = vunpack.c.h.b16 %v4071
    %v4418 = vunpack.c.l.b16 %v4072
    %v4419 = vunpack.c.h.b16 %v4072
    %v4420 = vunpack.c.l.b16 %v4073
    %v4421 = vunpack.c.h.b16 %v4073
    %v4422 = vunpack.c.l.b16 %v4074
    %v4423 = vunpack.c.h.b16 %v4074
    %v4424 = vunpack.c.l.b16 %v4075
    %v4425 = vunpack.c.h.b16 %v4075
    %v4426 = vunpack.c.l.b16 %v4076
    %v4427 = vunpack.c.h.b16 %v4076
    %v4428 = vunpack.c.l.b16 %v4077
    %v4429 = vunpack.c.h.b16 %v4077
    %v4430 = vunpack.c.l.b16 %v4078
    %v4431 = vunpack.c.h.b16 %v4078
    %v4432 = vunpack.c.l.b16 %v4079
    %v4433 = vunpack.c.h.b16 %v4079
    %v4434 = vunpack.c.l.b16 %v4080
    %v4435 = vunpack.c.h.b16 %v4080
    %v4436 = vunpack.c.l.b16 %v4081
    %v4437 = vunpack.c.h.b16 %v4081
    %v4438 = vunpack.c.l.b16 %v4082
    %v4439 = vunpack.c.h.b16 %v4082
    %v4440 = vunpack.c.l.b16 %v4083
    %v4441 = vunpack.c.h.b16 %v4083
    %v4442 = vunpack.c.l.b16 %v4084
    %v4443 = vunpack.c.h.b16 %v4084
    %v4444 = vunpack.c.l.b16 %v4085
    %v4445 = vunpack.c.h.b16 %v4085
    %v4446 = vunpack.c.l.b16 %v4086
    %v4447 = vunpack.c.h.b16 %v4086
    %v4448 = vunpack.c.l.b16 %v4087
    %v4449 = vunpack.c.h.b16 %v4087
    %v4450 = vunpack.c.l.b16 %v4088
    %v4451 = vunpack.c.h.b16 %v4088
    %v4452 = vunpack.c.l.b16 %v4089
    %v4453 = vunpack.c.h.b16 %v4089
    %v4454 = vunpack.c.l.b16 %v4090
    %v4455 = vunpack.c.h.b16 %v4090
    %v4456 = vunpack.c.l.b16 %v4091
    %v4457 = vunpack.c.h.b16 %v4091
    %v4458 = vunpack.c.l.b16 %v4092
    %v4459 = vunpack.c.h.b16 %v4092
    %v4460 = vunpack.c.l.b16 %v4093
    %v4461 = vunpack.c.h.b16 %v4093
    %v4462 = vunpack.c.l.b16 %v4094
    %v4463 = vunpack.c.h.b16 %v4094
    %v4464 = vunpack.c.l.b16 %v4095
    %v4465 = vunpack.c.h.b16 %v4095
    %v4466 = vunpack.c.l.b16 %v4096
    %v4467 = vunpack.c.h.b16 %v4096
    %v4468 = vunpack.c.l.b16 %v4097
    %v4469 = vunpack.c.h.b16 %v4097
    %v4470 = vunpack.c.l.b16 %v4098
    %v4471 = vunpack.c.h.b16 %v4098
    %v4472 = vunpack.c.l.b16 %v4099
    %v4473 = vunpack.c.h.b16 %v4099
    %v4474 = vunpack.c.l.b16 %v4100
    %v4475 = vunpack.c.h.b16 %v4100
    %v4476 = vunpack.c.l.b16 %v4101
    %v4477 = vunpack.c.h.b16 %v4101
    %v4478 = vunpack.c.l.b16 %v4102
    %v4479 = vunpack.c.h.b16 %v4102
    %v4480 = vunpack.c.l.b16 %v4103
    %v4481 = vunpack.c.h.b16 %v4103
    %v4482 = vunpack.c.l.b16 %v4104
    %v4483 = vunpack.c.h.b16 %v4104
    %v4484 = vunpack.c.l.b16 %v4105
    %v4485 = vunpack.c.h.b16 %v4105
    %v4486 = vunpack.c.l.b16 %v4106
    %v4487 = vunpack.c.h.b16 %v4106
    %v4488 = vunpack.c.l.b16 %v4107
    %v4489 = vunpack.c.h.b16 %v4107
    %v4490 = vunpack.c.l.b16 %v4108
    %v4491 = vunpack.c.h.b16 %v4108
    %v4492 = vunpack.c.l.b16 %v4109
    %v4493 = vunpack.c.h.b16 %v4109
    %v4494 = vunpack.c.l.b16 %v4110
    %v4495 = vunpack.c.h.b16 %v4110
    %v4496 = vunpack.c.l.b16 %v4111
    %v4497 = vunpack.c.h.b16 %v4111
    %v4498 = vunpack.c.l.b16 %v4112
    %v4499 = vunpack.c.h.b16 %v4112
    %v4500 = vunpack.c.l.b16 %v4113
    %v4501 = vunpack.c.h.b16 %v4113
    %v4502 = vunpack.c.l.b16 %v4114
    %v4503 = vunpack.c.h.b16 %v4114
    %v4504 = vunpack.c.l.b16 %v4115
    %v4505 = vunpack.c.h.b16 %v4115
    %v4506 = vunpack.c.l.b16 %v4116
    %v4507 = vunpack.c.h.b16 %v4116
    %v4508 = vunpack.c.l.b16 %v4117
    %v4509 = vunpack.c.h.b16 %v4117
    %v4510 = vunpack.c.l.b16 %v4118
    %v4511 = vunpack.c.h.b16 %v4118
    %v4512 = vunpack.c.l.b16 %v4119
    %v4513 = vunpack.c.h.b16 %v4119
    %v4514 = vunpack.c.l.b16 %v4120
    %v4515 = vunpack.c.h.b16 %v4120
    %v4516 = vunpack.c.l.b16 %v4121
    %v4517 = vunpack.c.h.b16 %v4121
    %v4518 = vpack.c.b16 %v4264, %v4262
    %v4519 = vpack.c.b16 %v4265, %v4263
    %v4520 = vpack.c.b16 %v4268, %v4266
    %v4521 = vpack.c.b16 %v4269, %v4267
    %v4522 = vpack.c.b16 %v4272, %v4270
    %v4523 = vpack.c.b16 %v4273, %v4271
    %v4524 = vpack.c.b16 %v4276, %v4274
    %v4525 = vpack.c.b16 %v4277, %v4275
    %v4526 = vpack.c.b16 %v4280, %v4278
    %v4527 = vpack.c.b16 %v4281, %v4279
    %v4528 = vpack.c.b16 %v4284, %v4282
    %v4529 = vpack.c.b16 %v4285, %v4283
    %v4530 = vpack.c.b16 %v4288, %v4286
    %v4531 = vpack.c.b16 %v4289, %v4287
    %v4532 = vpack.c.b16 %v4292, %v4290
    %v4533 = vpack.c.b16 %v4293, %v4291
    %v4534 = vpack.c.b16 %v4296, %v4294
    %v4535 = vpack.c.b16 %v4297, %v4295
    %v4536 = vpack.c.b16 %v4300, %v4298
    %v4537 = vpack.c.b16 %v4301, %v4299
    %v4538 = vpack.c.b16 %v4304, %v4302
    %v4539 = vpack.c.b16 %v4305, %v4303
    %v4540 = vpack.c.b16 %v4308, %v4306
    %v4541 = vpack.c.b16 %v4309, %v4307
    %v4542 = vpack.c.b16 %v4312, %v4310
    %v4543 = vpack.c.b16 %v4313, %v4311
    %v4544 = vpack.c.b16 %v4316, %v4314
    %v4545 = vpack.c.b16 %v4317, %v4315
    %v4546 = vpack.c.b16 %v4320, %v4318
    %v4547 = vpack.c.b16 %v4321, %v4319
    %v4548 = vpack.c.b16 %v4324, %v4322
    %v4549 = vpack.c.b16 %v4325, %v4323
    %v4550 = vpack.c.b16 %v4328, %v4326
    %v4551 = vpack.c.b16 %v4329, %v4327
    %v4552 = vpack.c.b16 %v4332, %v4330
    %v4553 = vpack.c.b16 %v4333, %v4331
    %v4554 = vpack.c.b16 %v4336, %v4334
    %v4555 = vpack.c.b16 %v4337, %v4335
    %v4556 = vpack.c.b16 %v4340, %v4338
    %v4557 = vpack.c.b16 %v4341, %v4339
    %v4558 = vpack.c.b16 %v4344, %v4342
    %v4559 = vpack.c.b16 %v4345, %v4343
    %v4560 = vpack.c.b16 %v4348, %v4346
    %v4561 = vpack.c.b16 %v4349, %v4347
    %v4562 = vpack.c.b16 %v4352, %v4350
    %v4563 = vpack.c.b16 %v4353, %v4351
    %v4564 = vpack.c.b16 %v4356, %v4354
    %v4565 = vpack.c.b16 %v4357, %v4355
    %v4566 = vpack.c.b16 %v4360, %v4358
    %v4567 = vpack.c.b16 %v4361, %v4359
    %v4568 = vpack.c.b16 %v4364, %v4362
    %v4569 = vpack.c.b16 %v4365, %v4363
    %v4570 = vpack.c.b16 %v4368, %v4366
    %v4571 = vpack.c.b16 %v4369, %v4367
    %v4572 = vpack.c.b16 %v4372, %v4370
    %v4573 = vpack.c.b16 %v4373, %v4371
    %v4574 = vpack.c.b16 %v4376, %v4374
    %v4575 = vpack.c.b16 %v4377, %v4375
    %v4576 = vpack.c.b16 %v4380, %v4378
    %v4577 = vpack.c.b16 %v4381, %v4379
    %v4578 = vpack.c.b16 %v4384, %v4382
    %v4579 = vpack.c.b16 %v4385, %v4383
    %v4580 = vpack.c.b16 %v4388, %v4386
    %v4581 = vpack.c.b16 %v4389, %v4387
    %v4582 = vpack.c.b16 %v4392, %v4390
    %v4583 = vpack.c.b16 %v4393, %v4391
    %v4584 = vpack.c.b16 %v4396, %v4394
    %v4585 = vpack.c.b16 %v4397, %v4395
    %v4586 = vpack.c.b16 %v4400, %v4398
    %v4587 = vpack.c.b16 %v4401, %v4399
    %v4588 = vpack.c.b16 %v4404, %v4402
    %v4589 = vpack.c.b16 %v4405, %v4403
    %v4590 = vpack.c.b16 %v4408, %v4406
    %v4591 = vpack.c.b16 %v4409, %v4407
    %v4592 = vpack.c.b16 %v4412, %v4410
    %v4593 = vpack.c.b16 %v4413, %v4411
    %v4594 = vpack.c.b16 %v4416, %v4414
    %v4595 = vpack.c.b16 %v4417, %v4415
    %v4596 = vpack.c.b16 %v4420, %v4418
    %v4597 = vpack.c.b16 %v4421, %v4419
    %v4598 = vpack.c.b16 %v4424, %v4422
    %v4599 = vpack.c.b16 %v4425, %v4423
    %v4600 = vpack.c.b16 %v4428, %v4426
    %v4601 = vpack.c.b16 %v4429, %v4427
    %v4602 = vpack.c.b16 %v4432, %v4430
    %v4603 = vpack.c.b16 %v4433, %v4431
    %v4604 = vpack.c.b16 %v4436, %v4434
    %v4605 = vpack.c.b16 %v4437, %v4435
    %v4606 = vpack.c.b16 %v4440, %v4438
    %v4607 = vpack.c.b16 %v4441, %v4439
    %v4608 = vpack.c.b16 %v4444, %v4442
    %v4609 = vpack.c.b16 %v4445, %v4443
    %v4610 = vpack.c.b16 %v4448, %v4446
    %v4611 = vpack.c.b16 %v4449, %v4447
    %v4612 = vpack.c.b16 %v4452, %v4450
    %v4613 = vpack.c.b16 %v4453, %v4451
    %v4614 = vpack.c.b16 %v4456, %v4454
    %v4615 = vpack.c.b16 %v4457, %v4455
    %v4616 = vpack.c.b16 %v4460, %v4458
    %v4617 = vpack.c.b16 %v4461, %v4459
    %v4618 = vpack.c.b16 %v4464, %v4462
    %v4619 = vpack.c.b16 %v4465, %v4463
    %v4620 = vpack.c.b16 %v4468, %v4466
    %v4621 = vpack.c.b16 %v4469, %v4467
    %v4622 = vpack.c.b16 %v4472, %v4470
    %v4623 = vpack.c.b16 %v4473, %v4471
    %v4624 = vpack.c.b16 %v4476, %v4474
    %v4625 = vpack.c.b16 %v4477, %v4475
    %v4626 = vpack.c.b16 %v4480, %v4478
    %v4627 = vpack.c.b16 %v4481, %v4479
    %v4628 = vpack.c.b16 %v4484, %v4482
    %v4629 = vpack.c.b16 %v4485, %v4483
    %v4630 = vpack.c.b16 %v4488, %v4486
    %v4631 = vpack.c.b16 %v4489, %v4487
    %v4632 = vpack.c.b16 %v4492, %v4490
    %v4633 = vpack.c.b16 %v4493, %v4491
    %v4634 = vpack.c.b16 %v4496, %v4494
    %v4635 = vpack.c.b16 %v4497, %v4495
    %v4636 = vpack.c.b16 %v4500, %v4498
    %v4637 = vpack.c.b16 %v4501, %v4499
    %v4638 = vpack.c.b16 %v4504, %v4502
    %v4639 = vpack.c.b16 %v4505, %v4503
    %v4640 = vpack.c.b16 %v4508, %v4506
    %v4641 = vpack.c.b16 %v4509, %v4507
    %v4642 = vpack.c.b16 %v4512, %v4510
    %v4643 = vpack.c.b16 %v4513, %v4511
    %v4644 = vpack.c.b16 %v4516, %v4514
    %v4645 = vpack.c.b16 %v4517, %v4515
    %4774 = vmatprep.subr.bf16.mxu0 %v4519
    %4775 = vmatpush1.bf16.msra.mxu0 %v4518
    %4776 = vmatprep.subr.bf16.mxu0 %v4521
    %4777 = vmatpush1.bf16.msra.mxu0 %v4520
    %4778 = vmatprep.subr.bf16.mxu0 %v4523
    %4779 = vmatpush1.bf16.msra.mxu0 %v4522
    %4780 = vmatprep.subr.bf16.mxu0 %v4525
    %4781 = vmatpush1.bf16.msra.mxu0 %v4524
    %4782 = vmatprep.subr.bf16.mxu0 %v4527
    %4783 = vmatpush1.bf16.msra.mxu0 %v4526
    %4784 = vmatprep.subr.bf16.mxu0 %v4529
    %4785 = vmatpush1.bf16.msra.mxu0 %v4528
    %4786 = vmatprep.subr.bf16.mxu0 %v4531
    %4787 = vmatpush1.bf16.msra.mxu0 %v4530
    %4788 = vmatprep.subr.bf16.mxu0 %v4533
    %4789 = vmatpush1.bf16.msra.mxu0 %v4532
    %4790 = vmatprep.subr.bf16.mxu0 %v4535
    %4791 = vmatpush1.bf16.msra.mxu0 %v4534
    %4792 = vmatprep.subr.bf16.mxu0 %v4537
    %4793 = vmatpush1.bf16.msra.mxu0 %v4536
    %4794 = vmatprep.subr.bf16.mxu0 %v4539
    %4795 = vmatpush1.bf16.msra.mxu0 %v4538
    %4796 = vmatprep.subr.bf16.mxu0 %v4541
    %4797 = vmatpush1.bf16.msra.mxu0 %v4540
    %4798 = vmatprep.subr.bf16.mxu0 %v4543
    %4799 = vmatpush1.bf16.msra.mxu0 %v4542
    %4800 = vmatprep.subr.bf16.mxu0 %v4545
    %4801 = vmatpush1.bf16.msra.mxu0 %v4544
    %4802 = vmatprep.subr.bf16.mxu0 %v4547
    %4803 = vmatpush1.bf16.msra.mxu0 %v4546
    %4804 = vmatprep.subr.bf16.mxu0 %v4549
    %4805 = vmatpush1.bf16.msra.mxu0 %v4548
    %4806 = vmatprep.mubr.bf16.mxu0 %v3987
    %4807 = vmatmul.mubr.bf16.gmra.mrb[0].mxu0 %v3986
    %v4808 = vpop.f32.mrb[0].mxu0
    %v4809 = vadd.f32 %v4127, %v4808
    %v4810 = vpop.f32.mrb[0].mxu0
    %v4811 = vadd.f32 %v4131, %v4810
    %v4812 = vpop.f32.mrb[0].mxu0
    %v4813 = vpop.f32.mrb[0].mxu0
    %4814 = vdwg.mxu0
    %4815 = vmatprep.subr.bf16.mxu0 %v4551
    %4816 = vmatpush1.bf16.msra.mxu0 %v4550
    %4817 = vmatprep.subr.bf16.mxu0 %v4553
    %4818 = vmatpush1.bf16.msra.mxu0 %v4552
    %4819 = vmatprep.subr.bf16.mxu0 %v4555
    %4820 = vmatpush1.bf16.msra.mxu0 %v4554
    %4821 = vmatprep.subr.bf16.mxu0 %v4557
    %4822 = vmatpush1.bf16.msra.mxu0 %v4556
    %4823 = vmatprep.subr.bf16.mxu0 %v4559
    %4824 = vmatpush1.bf16.msra.mxu0 %v4558
    %4825 = vmatprep.subr.bf16.mxu0 %v4561
    %4826 = vmatpush1.bf16.msra.mxu0 %v4560
    %4827 = vmatprep.subr.bf16.mxu0 %v4563
    %4828 = vmatpush1.bf16.msra.mxu0 %v4562
    %4829 = vmatprep.subr.bf16.mxu0 %v4565
    %4830 = vmatpush1.bf16.msra.mxu0 %v4564
    %4831 = vmatprep.subr.bf16.mxu0 %v4567
    %4832 = vmatpush1.bf16.msra.mxu0 %v4566
    %4833 = vmatprep.subr.bf16.mxu0 %v4569
    %4834 = vmatpush1.bf16.msra.mxu0 %v4568
    %4835 = vmatprep.subr.bf16.mxu0 %v4571
    %4836 = vmatpush1.bf16.msra.mxu0 %v4570
    %4837 = vmatprep.subr.bf16.mxu0 %v4573
    %4838 = vmatpush1.bf16.msra.mxu0 %v4572
    %4839 = vmatprep.subr.bf16.mxu0 %v4575
    %4840 = vmatpush1.bf16.msra.mxu0 %v4574
    %4841 = vmatprep.subr.bf16.mxu0 %v4577
    %4842 = vmatpush1.bf16.msra.mxu0 %v4576
    %4843 = vmatprep.subr.bf16.mxu0 %v4579
    %4844 = vmatpush1.bf16.msra.mxu0 %v4578
    %4845 = vmatprep.subr.bf16.mxu0 %v4581
    %4846 = vmatpush1.bf16.msra.mxu0 %v4580
    %4847 = vmatprep.mubr.bf16.mxu0 %v3989
    %4848 = vmatmul.mubr.bf16.gmra.mrb[0].mxu0 %v3988
    %v4849 = vpop.f32.mrb[0].mxu0
    %v4850 = vadd.f32 %v4809, %v4849
    %v4851 = vpop.f32.mrb[0].mxu0
    %v4852 = vadd.f32 %v4811, %v4851
    %v4853 = vpop.f32.mrb[0].mxu0
    %v4854 = vpop.f32.mrb[0].mxu0
    %4855 = vdwg.mxu0
    %4856 = vmatprep.subr.bf16.mxu0 %v4583
    %4857 = vmatpush1.bf16.msra.mxu0 %v4582
    %4858 = vmatprep.subr.bf16.mxu0 %v4585
    %4859 = vmatpush1.bf16.msra.mxu0 %v4584
    %4860 = vmatprep.subr.bf16.mxu0 %v4587
    %4861 = vmatpush1.bf16.msra.mxu0 %v4586
    %4862 = vmatprep.subr.bf16.mxu0 %v4589
    %4863 = vmatpush1.bf16.msra.mxu0 %v4588
    %4864 = vmatprep.subr.bf16.mxu0 %v4591
    %4865 = vmatpush1.bf16.msra.mxu0 %v4590
    %4866 = vmatprep.subr.bf16.mxu0 %v4593
    %4867 = vmatpush1.bf16.msra.mxu0 %v4592
    %4868 = vmatprep.subr.bf16.mxu0 %v4595
    %4869 = vmatpush1.bf16.msra.mxu0 %v4594
    %4870 = vmatprep.subr.bf16.mxu0 %v4597
    %4871 = vmatpush1.bf16.msra.mxu0 %v4596
    %4872 = vmatprep.subr.bf16.mxu0 %v4599
    %4873 = vmatpush1.bf16.msra.mxu0 %v4598
    %4874 = vmatprep.subr.bf16.mxu0 %v4601
    %4875 = vmatpush1.bf16.msra.mxu0 %v4600
    %4876 = vmatprep.subr.bf16.mxu0 %v4603
    %4877 = vmatpush1.bf16.msra.mxu0 %v4602
    %4878 = vmatprep.subr.bf16.mxu0 %v4605
    %4879 = vmatpush1.bf16.msra.mxu0 %v4604
    %4880 = vmatprep.subr.bf16.mxu0 %v4607
    %4881 = vmatpush1.bf16.msra.mxu0 %v4606
    %4882 = vmatprep.subr.bf16.mxu0 %v4609
    %4883 = vmatpush1.bf16.msra.mxu0 %v4608
    %4884 = vmatprep.subr.bf16.mxu0 %v4611
    %4885 = vmatpush1.bf16.msra.mxu0 %v4610
    %4886 = vmatprep.subr.bf16.mxu0 %v4613
    %4887 = vmatpush1.bf16.msra.mxu0 %v4612
    %4888 = vmatprep.mubr.bf16.mxu0 %v3991
    %4889 = vmatmul.mubr.bf16.gmra.mrb[0].mxu0 %v3990
    %v4890 = vpop.f32.mrb[0].mxu0
    %v4891 = vadd.f32 %v4850, %v4890
    %v4892 = vpop.f32.mrb[0].mxu0
    %v4893 = vadd.f32 %v4852, %v4892
    %v4894 = vpop.f32.mrb[0].mxu0
    %v4895 = vpop.f32.mrb[0].mxu0
    %4896 = vdwg.mxu0
    %4897 = vmatprep.subr.bf16.mxu0 %v4615
    %4898 = vmatpush1.bf16.msra.mxu0 %v4614
    %4899 = vmatprep.subr.bf16.mxu0 %v4617
    %4900 = vmatpush1.bf16.msra.mxu0 %v4616
    %4901 = vmatprep.subr.bf16.mxu0 %v4619
    %4902 = vmatpush1.bf16.msra.mxu0 %v4618
    %4903 = vmatprep.subr.bf16.mxu0 %v4621
    %4904 = vmatpush1.bf16.msra.mxu0 %v4620
    %4905 = vmatprep.subr.bf16.mxu0 %v4623
    %4906 = vmatpush1.bf16.msra.mxu0 %v4622
    %4907 = vmatprep.subr.bf16.mxu0 %v4625
    %4908 = vmatpush1.bf16.msra.mxu0 %v4624
    %4909 = vmatprep.subr.bf16.mxu0 %v4627
    %4910 = vmatpush1.bf16.msra.mxu0 %v4626
    %4911 = vmatprep.subr.bf16.mxu0 %v4629
    %4912 = vmatpush1.bf16.msra.mxu0 %v4628
    %4913 = vmatprep.subr.bf16.mxu0 %v4631
    %4914 = vmatpush1.bf16.msra.mxu0 %v4630
    %4915 = vmatprep.subr.bf16.mxu0 %v4633
    %4916 = vmatpush1.bf16.msra.mxu0 %v4632
    %4917 = vmatprep.subr.bf16.mxu0 %v4635
    %4918 = vmatpush1.bf16.msra.mxu0 %v4634
    %4919 = vmatprep.subr.bf16.mxu0 %v4637
    %4920 = vmatpush1.bf16.msra.mxu0 %v4636
    %4921 = vmatprep.subr.bf16.mxu0 %v4639
    %4922 = vmatpush1.bf16.msra.mxu0 %v4638
    %4923 = vmatprep.subr.bf16.mxu0 %v4641
    %4924 = vmatpush1.bf16.msra.mxu0 %v4640
    %4925 = vmatprep.subr.bf16.mxu0 %v4643
    %4926 = vmatpush1.bf16.msra.mxu0 %v4642
    %4927 = vmatprep.subr.bf16.mxu0 %v4645
    %4928 = vmatpush1.bf16.msra.mxu0 %v4644
    %4929 = vmatprep.mubr.bf16.mxu0 %v3993
    %4930 = vmatmul.mubr.bf16.gmra.mrb[0].mxu0 %v3992
    %v4931 = vpop.f32.mrb[0].mxu0
    %v4932 = vadd.f32 %v4891, %v4931
    %v4933 = vpop.f32.mrb[0].mxu0
    %v4934 = vadd.f32 %v4893, %v4933
    %v4935 = vpop.f32.mrb[0].mxu0
    %v4936 = vpop.f32.mrb[0].mxu0
    %4937 = vdwg.mxu0
    %v4938 = vmax.f32 %v4932, 0.0
    %v4939 = vmax.f32 %v4934, 0.0
    %v4940 = vld [vmem:[#allocation7 + $0x8] sm:$0xff]
    %v4941 = vld [vmem:[#allocation7 + $0x28] sm:$0xff]
    %v4942 = vld [vmem:[#allocation7 + $0x48] sm:$0xff]
    %v4943 = vld [vmem:[#allocation7 + $0x68] sm:$0xff]
    %v4944 = vld [vmem:[#allocation7 + $0x88] sm:$0xff]
    %v4945 = vld [vmem:[#allocation7 + $0xa8] sm:$0xff]
    %v4946 = vld [vmem:[#allocation7 + $0xc8] sm:$0xff]
    %v4947 = vld [vmem:[#allocation7 + $0xe8] sm:$0xff]
    %v4948 = vld [vmem:[#allocation7 + $0x108] sm:$0xff]
    %v4949 = vld [vmem:[#allocation7 + $0x128] sm:$0xff]
    %v4950 = vld [vmem:[#allocation7 + $0x148] sm:$0xff]
    %v4951 = vld [vmem:[#allocation7 + $0x168] sm:$0xff]
    %v4952 = vld [vmem:[#allocation7 + $0x188] sm:$0xff]
    %v4953 = vld [vmem:[#allocation7 + $0x1a8] sm:$0xff]
    %v4954 = vld [vmem:[#allocation7 + $0x1c8] sm:$0xff]
    %v4955 = vld [vmem:[#allocation7 + $0x1e8] sm:$0xff]
    %v4956 = vld [vmem:[#allocation7 + $0x208] sm:$0xff]
    %v4957 = vld [vmem:[#allocation7 + $0x228] sm:$0xff]
    %v4958 = vld [vmem:[#allocation7 + $0x248] sm:$0xff]
    %v4959 = vld [vmem:[#allocation7 + $0x268] sm:$0xff]
    %v4960 = vld [vmem:[#allocation7 + $0x288] sm:$0xff]
    %v4961 = vld [vmem:[#allocation7 + $0x2a8] sm:$0xff]
    %v4962 = vld [vmem:[#allocation7 + $0x2c8] sm:$0xff]
    %v4963 = vld [vmem:[#allocation7 + $0x2e8] sm:$0xff]
    %v4964 = vld [vmem:[#allocation7 + $0x308] sm:$0xff]
    %v4965 = vld [vmem:[#allocation7 + $0x328] sm:$0xff]
    %v4966 = vld [vmem:[#allocation7 + $0x348] sm:$0xff]
    %v4967 = vld [vmem:[#allocation7 + $0x368] sm:$0xff]
    %v4968 = vld [vmem:[#allocation7 + $0x388] sm:$0xff]
    %v4969 = vld [vmem:[#allocation7 + $0x3a8] sm:$0xff]
    %v4970 = vld [vmem:[#allocation7 + $0x3c8] sm:$0xff]
    %v4971 = vld [vmem:[#allocation7 + $0x3e8] sm:$0xff]
    %v4972 = vld [vmem:[#allocation7 + $0x408] sm:$0xff]
    %v4973 = vld [vmem:[#allocation7 + $0x428] sm:$0xff]
    %v4974 = vld [vmem:[#allocation7 + $0x448] sm:$0xff]
    %v4975 = vld [vmem:[#allocation7 + $0x468] sm:$0xff]
    %v4976 = vld [vmem:[#allocation7 + $0x488] sm:$0xff]
    %v4977 = vld [vmem:[#allocation7 + $0x4a8] sm:$0xff]
    %v4978 = vld [vmem:[#allocation7 + $0x4c8] sm:$0xff]
    %v4979 = vld [vmem:[#allocation7 + $0x4e8] sm:$0xff]
    %v4980 = vld [vmem:[#allocation7 + $0x508] sm:$0xff]
    %v4981 = vld [vmem:[#allocation7 + $0x528] sm:$0xff]
    %v4982 = vld [vmem:[#allocation7 + $0x548] sm:$0xff]
    %v4983 = vld [vmem:[#allocation7 + $0x568] sm:$0xff]
    %v4984 = vld [vmem:[#allocation7 + $0x588] sm:$0xff]
    %v4985 = vld [vmem:[#allocation7 + $0x5a8] sm:$0xff]
    %v4986 = vld [vmem:[#allocation7 + $0x5c8] sm:$0xff]
    %v4987 = vld [vmem:[#allocation7 + $0x5e8] sm:$0xff]
    %v4988 = vld [vmem:[#allocation7 + $0x608] sm:$0xff]
    %v4989 = vld [vmem:[#allocation7 + $0x628] sm:$0xff]
    %v4990 = vld [vmem:[#allocation7 + $0x648] sm:$0xff]
    %v4991 = vld [vmem:[#allocation7 + $0x668] sm:$0xff]
    %v4992 = vld [vmem:[#allocation7 + $0x688] sm:$0xff]
    %v4993 = vld [vmem:[#allocation7 + $0x6a8] sm:$0xff]
    %v4994 = vld [vmem:[#allocation7 + $0x6c8] sm:$0xff]
    %v4995 = vld [vmem:[#allocation7 + $0x6e8] sm:$0xff]
    %v4996 = vld [vmem:[#allocation7 + $0x708] sm:$0xff]
    %v4997 = vld [vmem:[#allocation7 + $0x728] sm:$0xff]
    %v4998 = vld [vmem:[#allocation7 + $0x748] sm:$0xff]
    %v4999 = vld [vmem:[#allocation7 + $0x768] sm:$0xff]
    %v5000 = vld [vmem:[#allocation7 + $0x788] sm:$0xff]
    %v5001 = vld [vmem:[#allocation7 + $0x7a8] sm:$0xff]
    %v5002 = vld [vmem:[#allocation7 + $0x7c8] sm:$0xff]
    %v5003 = vld [vmem:[#allocation7 + $0x7e8] sm:$0xff]
    %v5004 = vld [vmem:[#allocation7 + $0x808] sm:$0xff]
    %v5005 = vld [vmem:[#allocation7 + $0x828] sm:$0xff]
    %v5006 = vld [vmem:[#allocation7 + $0x848] sm:$0xff]
    %v5007 = vld [vmem:[#allocation7 + $0x868] sm:$0xff]
    %v5008 = vld [vmem:[#allocation7 + $0x888] sm:$0xff]
    %v5009 = vld [vmem:[#allocation7 + $0x8a8] sm:$0xff]
    %v5010 = vld [vmem:[#allocation7 + $0x8c8] sm:$0xff]
    %v5011 = vld [vmem:[#allocation7 + $0x8e8] sm:$0xff]
    %v5012 = vld [vmem:[#allocation7 + $0x908] sm:$0xff]
    %v5013 = vld [vmem:[#allocation7 + $0x928] sm:$0xff]
    %v5014 = vld [vmem:[#allocation7 + $0x948] sm:$0xff]
    %v5015 = vld [vmem:[#allocation7 + $0x968] sm:$0xff]
    %v5016 = vld [vmem:[#allocation7 + $0x988] sm:$0xff]
    %v5017 = vld [vmem:[#allocation7 + $0x9a8] sm:$0xff]
    %v5018 = vld [vmem:[#allocation7 + $0x9c8] sm:$0xff]
    %v5019 = vld [vmem:[#allocation7 + $0x9e8] sm:$0xff]
    %v5020 = vld [vmem:[#allocation7 + $0xa08] sm:$0xff]
    %v5021 = vld [vmem:[#allocation7 + $0xa28] sm:$0xff]
    %v5022 = vld [vmem:[#allocation7 + $0xa48] sm:$0xff]
    %v5023 = vld [vmem:[#allocation7 + $0xa68] sm:$0xff]
    %v5024 = vld [vmem:[#allocation7 + $0xa88] sm:$0xff]
    %v5025 = vld [vmem:[#allocation7 + $0xaa8] sm:$0xff]
    %v5026 = vld [vmem:[#allocation7 + $0xac8] sm:$0xff]
    %v5027 = vld [vmem:[#allocation7 + $0xae8] sm:$0xff]
    %v5028 = vld [vmem:[#allocation7 + $0xb08] sm:$0xff]
    %v5029 = vld [vmem:[#allocation7 + $0xb28] sm:$0xff]
    %v5030 = vld [vmem:[#allocation7 + $0xb48] sm:$0xff]
    %v5031 = vld [vmem:[#allocation7 + $0xb68] sm:$0xff]
    %v5032 = vld [vmem:[#allocation7 + $0xb88] sm:$0xff]
    %v5033 = vld [vmem:[#allocation7 + $0xba8] sm:$0xff]
    %v5034 = vld [vmem:[#allocation7 + $0xbc8] sm:$0xff]
    %v5035 = vld [vmem:[#allocation7 + $0xbe8] sm:$0xff]
    %v5036 = vld [vmem:[#allocation7 + $0xc08] sm:$0xff]
    %v5037 = vld [vmem:[#allocation7 + $0xc28] sm:$0xff]
    %v5038 = vld [vmem:[#allocation7 + $0xc48] sm:$0xff]
    %v5039 = vld [vmem:[#allocation7 + $0xc68] sm:$0xff]
    %v5040 = vld [vmem:[#allocation7 + $0xc88] sm:$0xff]
    %v5041 = vld [vmem:[#allocation7 + $0xca8] sm:$0xff]
    %v5042 = vld [vmem:[#allocation7 + $0xcc8] sm:$0xff]
    %v5043 = vld [vmem:[#allocation7 + $0xce8] sm:$0xff]
    %v5044 = vld [vmem:[#allocation7 + $0xd08] sm:$0xff]
    %v5045 = vld [vmem:[#allocation7 + $0xd28] sm:$0xff]
    %v5046 = vld [vmem:[#allocation7 + $0xd48] sm:$0xff]
    %v5047 = vld [vmem:[#allocation7 + $0xd68] sm:$0xff]
    %v5048 = vld [vmem:[#allocation7 + $0xd88] sm:$0xff]
    %v5049 = vld [vmem:[#allocation7 + $0xda8] sm:$0xff]
    %v5050 = vld [vmem:[#allocation7 + $0xdc8] sm:$0xff]
    %v5051 = vld [vmem:[#allocation7 + $0xde8] sm:$0xff]
    %v5052 = vld [vmem:[#allocation7 + $0xe08] sm:$0xff]
    %v5053 = vld [vmem:[#allocation7 + $0xe28] sm:$0xff]
    %v5054 = vld [vmem:[#allocation7 + $0xe48] sm:$0xff]
    %v5055 = vld [vmem:[#allocation7 + $0xe68] sm:$0xff]
    %v5056 = vld [vmem:[#allocation7 + $0xe88] sm:$0xff]
    %v5057 = vld [vmem:[#allocation7 + $0xea8] sm:$0xff]
    %v5058 = vld [vmem:[#allocation7 + $0xec8] sm:$0xff]
    %v5059 = vld [vmem:[#allocation7 + $0xee8] sm:$0xff]
    %v5060 = vld [vmem:[#allocation7 + $0xf08] sm:$0xff]
    %v5061 = vld [vmem:[#allocation7 + $0xf28] sm:$0xff]
    %v5062 = vld [vmem:[#allocation7 + $0xf48] sm:$0xff]
    %v5063 = vld [vmem:[#allocation7 + $0xf68] sm:$0xff]
    %v5064 = vld [vmem:[#allocation7 + $0xf88] sm:$0xff]
    %v5065 = vld [vmem:[#allocation7 + $0xfa8] sm:$0xff]
    %v5066 = vld [vmem:[#allocation7 + $0xfc8] sm:$0xff]
    %v5067 = vld [vmem:[#allocation7 + $0xfe8] sm:$0xff]
    %v5068 = vld [vmem:[#allocation9 + $0x2] sm:$0x3]
    %v5070 = vlaneseq
    %v5071 = vshrl.u32 %v5070, 7
    %v5072 = vsub.s32 0, %v5071
    %v5073 = vrot.slane %v5068, %v5072
    %v5074 = vlaneseq
    %v5075 = vshrl.u32 %v5074, 7
    %v5076 = vsub.s32 1, %v5075
    %v5077 = vrot.slane %v5068, %v5076
    %v5208 = vunpack.c.l.b16 %v4940
    %v5209 = vunpack.c.h.b16 %v4940
    %v5210 = vunpack.c.l.b16 %v4941
    %v5211 = vunpack.c.h.b16 %v4941
    %v5212 = vunpack.c.l.b16 %v4942
    %v5213 = vunpack.c.h.b16 %v4942
    %v5214 = vunpack.c.l.b16 %v4943
    %v5215 = vunpack.c.h.b16 %v4943
    %v5216 = vunpack.c.l.b16 %v4944
    %v5217 = vunpack.c.h.b16 %v4944
    %v5218 = vunpack.c.l.b16 %v4945
    %v5219 = vunpack.c.h.b16 %v4945
    %v5220 = vunpack.c.l.b16 %v4946
    %v5221 = vunpack.c.h.b16 %v4946
    %v5222 = vunpack.c.l.b16 %v4947
    %v5223 = vunpack.c.h.b16 %v4947
    %v5224 = vunpack.c.l.b16 %v4948
    %v5225 = vunpack.c.h.b16 %v4948
    %v5226 = vunpack.c.l.b16 %v4949
    %v5227 = vunpack.c.h.b16 %v4949
    %v5228 = vunpack.c.l.b16 %v4950
    %v5229 = vunpack.c.h.b16 %v4950
    %v5230 = vunpack.c.l.b16 %v4951
    %v5231 = vunpack.c.h.b16 %v4951
    %v5232 = vunpack.c.l.b16 %v4952
    %v5233 = vunpack.c.h.b16 %v4952
    %v5234 = vunpack.c.l.b16 %v4953
    %v5235 = vunpack.c.h.b16 %v4953
    %v5236 = vunpack.c.l.b16 %v4954
    %v5237 = vunpack.c.h.b16 %v4954
    %v5238 = vunpack.c.l.b16 %v4955
    %v5239 = vunpack.c.h.b16 %v4955
    %v5240 = vunpack.c.l.b16 %v4956
    %v5241 = vunpack.c.h.b16 %v4956
    %v5242 = vunpack.c.l.b16 %v4957
    %v5243 = vunpack.c.h.b16 %v4957
    %v5244 = vunpack.c.l.b16 %v4958
    %v5245 = vunpack.c.h.b16 %v4958
    %v5246 = vunpack.c.l.b16 %v4959
    %v5247 = vunpack.c.h.b16 %v4959
    %v5248 = vunpack.c.l.b16 %v4960
    %v5249 = vunpack.c.h.b16 %v4960
    %v5250 = vunpack.c.l.b16 %v4961
    %v5251 = vunpack.c.h.b16 %v4961
    %v5252 = vunpack.c.l.b16 %v4962
    %v5253 = vunpack.c.h.b16 %v4962
    %v5254 = vunpack.c.l.b16 %v4963
    %v5255 = vunpack.c.h.b16 %v4963
    %v5256 = vunpack.c.l.b16 %v4964
    %v5257 = vunpack.c.h.b16 %v4964
    %v5258 = vunpack.c.l.b16 %v4965
    %v5259 = vunpack.c.h.b16 %v4965
    %v5260 = vunpack.c.l.b16 %v4966
    %v5261 = vunpack.c.h.b16 %v4966
    %v5262 = vunpack.c.l.b16 %v4967
    %v5263 = vunpack.c.h.b16 %v4967
    %v5264 = vunpack.c.l.b16 %v4968
    %v5265 = vunpack.c.h.b16 %v4968
    %v5266 = vunpack.c.l.b16 %v4969
    %v5267 = vunpack.c.h.b16 %v4969
    %v5268 = vunpack.c.l.b16 %v4970
    %v5269 = vunpack.c.h.b16 %v4970
    %v5270 = vunpack.c.l.b16 %v4971
    %v5271 = vunpack.c.h.b16 %v4971
    %v5272 = vunpack.c.l.b16 %v4972
    %v5273 = vunpack.c.h.b16 %v4972
    %v5274 = vunpack.c.l.b16 %v4973
    %v5275 = vunpack.c.h.b16 %v4973
    %v5276 = vunpack.c.l.b16 %v4974
    %v5277 = vunpack.c.h.b16 %v4974
    %v5278 = vunpack.c.l.b16 %v4975
    %v5279 = vunpack.c.h.b16 %v4975
    %v5280 = vunpack.c.l.b16 %v4976
    %v5281 = vunpack.c.h.b16 %v4976
    %v5282 = vunpack.c.l.b16 %v4977
    %v5283 = vunpack.c.h.b16 %v4977
    %v5284 = vunpack.c.l.b16 %v4978
    %v5285 = vunpack.c.h.b16 %v4978
    %v5286 = vunpack.c.l.b16 %v4979
    %v5287 = vunpack.c.h.b16 %v4979
    %v5288 = vunpack.c.l.b16 %v4980
    %v5289 = vunpack.c.h.b16 %v4980
    %v5290 = vunpack.c.l.b16 %v4981
    %v5291 = vunpack.c.h.b16 %v4981
    %v5292 = vunpack.c.l.b16 %v4982
    %v5293 = vunpack.c.h.b16 %v4982
    %v5294 = vunpack.c.l.b16 %v4983
    %v5295 = vunpack.c.h.b16 %v4983
    %v5296 = vunpack.c.l.b16 %v4984
    %v5297 = vunpack.c.h.b16 %v4984
    %v5298 = vunpack.c.l.b16 %v4985
    %v5299 = vunpack.c.h.b16 %v4985
    %v5300 = vunpack.c.l.b16 %v4986
    %v5301 = vunpack.c.h.b16 %v4986
    %v5302 = vunpack.c.l.b16 %v4987
    %v5303 = vunpack.c.h.b16 %v4987
    %v5304 = vunpack.c.l.b16 %v4988
    %v5305 = vunpack.c.h.b16 %v4988
    %v5306 = vunpack.c.l.b16 %v4989
    %v5307 = vunpack.c.h.b16 %v4989
    %v5308 = vunpack.c.l.b16 %v4990
    %v5309 = vunpack.c.h.b16 %v4990
    %v5310 = vunpack.c.l.b16 %v4991
    %v5311 = vunpack.c.h.b16 %v4991
    %v5312 = vunpack.c.l.b16 %v4992
    %v5313 = vunpack.c.h.b16 %v4992
    %v5314 = vunpack.c.l.b16 %v4993
    %v5315 = vunpack.c.h.b16 %v4993
    %v5316 = vunpack.c.l.b16 %v4994
    %v5317 = vunpack.c.h.b16 %v4994
    %v5318 = vunpack.c.l.b16 %v4995
    %v5319 = vunpack.c.h.b16 %v4995
    %v5320 = vunpack.c.l.b16 %v4996
    %v5321 = vunpack.c.h.b16 %v4996
    %v5322 = vunpack.c.l.b16 %v4997
    %v5323 = vunpack.c.h.b16 %v4997
    %v5324 = vunpack.c.l.b16 %v4998
    %v5325 = vunpack.c.h.b16 %v4998
    %v5326 = vunpack.c.l.b16 %v4999
    %v5327 = vunpack.c.h.b16 %v4999
    %v5328 = vunpack.c.l.b16 %v5000
    %v5329 = vunpack.c.h.b16 %v5000
    %v5330 = vunpack.c.l.b16 %v5001
    %v5331 = vunpack.c.h.b16 %v5001
    %v5332 = vunpack.c.l.b16 %v5002
    %v5333 = vunpack.c.h.b16 %v5002
    %v5334 = vunpack.c.l.b16 %v5003
    %v5335 = vunpack.c.h.b16 %v5003
    %v5336 = vunpack.c.l.b16 %v5004
    %v5337 = vunpack.c.h.b16 %v5004
    %v5338 = vunpack.c.l.b16 %v5005
    %v5339 = vunpack.c.h.b16 %v5005
    %v5340 = vunpack.c.l.b16 %v5006
    %v5341 = vunpack.c.h.b16 %v5006
    %v5342 = vunpack.c.l.b16 %v5007
    %v5343 = vunpack.c.h.b16 %v5007
    %v5344 = vunpack.c.l.b16 %v5008
    %v5345 = vunpack.c.h.b16 %v5008
    %v5346 = vunpack.c.l.b16 %v5009
    %v5347 = vunpack.c.h.b16 %v5009
    %v5348 = vunpack.c.l.b16 %v5010
    %v5349 = vunpack.c.h.b16 %v5010
    %v5350 = vunpack.c.l.b16 %v5011
    %v5351 = vunpack.c.h.b16 %v5011
    %v5352 = vunpack.c.l.b16 %v5012
    %v5353 = vunpack.c.h.b16 %v5012
    %v5354 = vunpack.c.l.b16 %v5013
    %v5355 = vunpack.c.h.b16 %v5013
    %v5356 = vunpack.c.l.b16 %v5014
    %v5357 = vunpack.c.h.b16 %v5014
    %v5358 = vunpack.c.l.b16 %v5015
    %v5359 = vunpack.c.h.b16 %v5015
    %v5360 = vunpack.c.l.b16 %v5016
    %v5361 = vunpack.c.h.b16 %v5016
    %v5362 = vunpack.c.l.b16 %v5017
    %v5363 = vunpack.c.h.b16 %v5017
    %v5364 = vunpack.c.l.b16 %v5018
    %v5365 = vunpack.c.h.b16 %v5018
    %v5366 = vunpack.c.l.b16 %v5019
    %v5367 = vunpack.c.h.b16 %v5019
    %v5368 = vunpack.c.l.b16 %v5020
    %v5369 = vunpack.c.h.b16 %v5020
    %v5370 = vunpack.c.l.b16 %v5021
    %v5371 = vunpack.c.h.b16 %v5021
    %v5372 = vunpack.c.l.b16 %v5022
    %v5373 = vunpack.c.h.b16 %v5022
    %v5374 = vunpack.c.l.b16 %v5023
    %v5375 = vunpack.c.h.b16 %v5023
    %v5376 = vunpack.c.l.b16 %v5024
    %v5377 = vunpack.c.h.b16 %v5024
    %v5378 = vunpack.c.l.b16 %v5025
    %v5379 = vunpack.c.h.b16 %v5025
    %v5380 = vunpack.c.l.b16 %v5026
    %v5381 = vunpack.c.h.b16 %v5026
    %v5382 = vunpack.c.l.b16 %v5027
    %v5383 = vunpack.c.h.b16 %v5027
    %v5384 = vunpack.c.l.b16 %v5028
    %v5385 = vunpack.c.h.b16 %v5028
    %v5386 = vunpack.c.l.b16 %v5029
    %v5387 = vunpack.c.h.b16 %v5029
    %v5388 = vunpack.c.l.b16 %v5030
    %v5389 = vunpack.c.h.b16 %v5030
    %v5390 = vunpack.c.l.b16 %v5031
    %v5391 = vunpack.c.h.b16 %v5031
    %v5392 = vunpack.c.l.b16 %v5032
    %v5393 = vunpack.c.h.b16 %v5032
    %v5394 = vunpack.c.l.b16 %v5033
    %v5395 = vunpack.c.h.b16 %v5033
    %v5396 = vunpack.c.l.b16 %v5034
    %v5397 = vunpack.c.h.b16 %v5034
    %v5398 = vunpack.c.l.b16 %v5035
    %v5399 = vunpack.c.h.b16 %v5035
    %v5400 = vunpack.c.l.b16 %v5036
    %v5401 = vunpack.c.h.b16 %v5036
    %v5402 = vunpack.c.l.b16 %v5037
    %v5403 = vunpack.c.h.b16 %v5037
    %v5404 = vunpack.c.l.b16 %v5038
    %v5405 = vunpack.c.h.b16 %v5038
    %v5406 = vunpack.c.l.b16 %v5039
    %v5407 = vunpack.c.h.b16 %v5039
    %v5408 = vunpack.c.l.b16 %v5040
    %v5409 = vunpack.c.h.b16 %v5040
    %v5410 = vunpack.c.l.b16 %v5041
    %v5411 = vunpack.c.h.b16 %v5041
    %v5412 = vunpack.c.l.b16 %v5042
    %v5413 = vunpack.c.h.b16 %v5042
    %v5414 = vunpack.c.l.b16 %v5043
    %v5415 = vunpack.c.h.b16 %v5043
    %v5416 = vunpack.c.l.b16 %v5044
    %v5417 = vunpack.c.h.b16 %v5044
    %v5418 = vunpack.c.l.b16 %v5045
    %v5419 = vunpack.c.h.b16 %v5045
    %v5420 = vunpack.c.l.b16 %v5046
    %v5421 = vunpack.c.h.b16 %v5046
    %v5422 = vunpack.c.l.b16 %v5047
    %v5423 = vunpack.c.h.b16 %v5047
    %v5424 = vunpack.c.l.b16 %v5048
    %v5425 = vunpack.c.h.b16 %v5048
    %v5426 = vunpack.c.l.b16 %v5049
    %v5427 = vunpack.c.h.b16 %v5049
    %v5428 = vunpack.c.l.b16 %v5050
    %v5429 = vunpack.c.h.b16 %v5050
    %v5430 = vunpack.c.l.b16 %v5051
    %v5431 = vunpack.c.h.b16 %v5051
    %v5432 = vunpack.c.l.b16 %v5052
    %v5433 = vunpack.c.h.b16 %v5052
    %v5434 = vunpack.c.l.b16 %v5053
    %v5435 = vunpack.c.h.b16 %v5053
    %v5436 = vunpack.c.l.b16 %v5054
    %v5437 = vunpack.c.h.b16 %v5054
    %v5438 = vunpack.c.l.b16 %v5055
    %v5439 = vunpack.c.h.b16 %v5055
    %v5440 = vunpack.c.l.b16 %v5056
    %v5441 = vunpack.c.h.b16 %v5056
    %v5442 = vunpack.c.l.b16 %v5057
    %v5443 = vunpack.c.h.b16 %v5057
    %v5444 = vunpack.c.l.b16 %v5058
    %v5445 = vunpack.c.h.b16 %v5058
    %v5446 = vunpack.c.l.b16 %v5059
    %v5447 = vunpack.c.h.b16 %v5059
    %v5448 = vunpack.c.l.b16 %v5060
    %v5449 = vunpack.c.h.b16 %v5060
    %v5450 = vunpack.c.l.b16 %v5061
    %v5451 = vunpack.c.h.b16 %v5061
    %v5452 = vunpack.c.l.b16 %v5062
    %v5453 = vunpack.c.h.b16 %v5062
    %v5454 = vunpack.c.l.b16 %v5063
    %v5455 = vunpack.c.h.b16 %v5063
    %v5456 = vunpack.c.l.b16 %v5064
    %v5457 = vunpack.c.h.b16 %v5064
    %v5458 = vunpack.c.l.b16 %v5065
    %v5459 = vunpack.c.h.b16 %v5065
    %v5460 = vunpack.c.l.b16 %v5066
    %v5461 = vunpack.c.h.b16 %v5066
    %v5462 = vunpack.c.l.b16 %v5067
    %v5463 = vunpack.c.h.b16 %v5067
    %v5464 = vpack.c.b16 %v5210, %v5208
    %v5465 = vpack.c.b16 %v5211, %v5209
    %v5466 = vpack.c.b16 %v5214, %v5212
    %v5467 = vpack.c.b16 %v5215, %v5213
    %v5468 = vpack.c.b16 %v5218, %v5216
    %v5469 = vpack.c.b16 %v5219, %v5217
    %v5470 = vpack.c.b16 %v5222, %v5220
    %v5471 = vpack.c.b16 %v5223, %v5221
    %v5472 = vpack.c.b16 %v5226, %v5224
    %v5473 = vpack.c.b16 %v5227, %v5225
    %v5474 = vpack.c.b16 %v5230, %v5228
    %v5475 = vpack.c.b16 %v5231, %v5229
    %v5476 = vpack.c.b16 %v5234, %v5232
    %v5477 = vpack.c.b16 %v5235, %v5233
    %v5478 = vpack.c.b16 %v5238, %v5236
    %v5479 = vpack.c.b16 %v5239, %v5237
    %v5480 = vpack.c.b16 %v5242, %v5240
    %v5481 = vpack.c.b16 %v5243, %v5241
    %v5482 = vpack.c.b16 %v5246, %v5244
    %v5483 = vpack.c.b16 %v5247, %v5245
    %v5484 = vpack.c.b16 %v5250, %v5248
    %v5485 = vpack.c.b16 %v5251, %v5249
    %v5486 = vpack.c.b16 %v5254, %v5252
    %v5487 = vpack.c.b16 %v5255, %v5253
    %v5488 = vpack.c.b16 %v5258, %v5256
    %v5489 = vpack.c.b16 %v5259, %v5257
    %v5490 = vpack.c.b16 %v5262, %v5260
    %v5491 = vpack.c.b16 %v5263, %v5261
    %v5492 = vpack.c.b16 %v5266, %v5264
    %v5493 = vpack.c.b16 %v5267, %v5265
    %v5494 = vpack.c.b16 %v5270, %v5268
    %v5495 = vpack.c.b16 %v5271, %v5269
    %v5496 = vpack.c.b16 %v5274, %v5272
    %v5497 = vpack.c.b16 %v5275, %v5273
    %v5498 = vpack.c.b16 %v5278, %v5276
    %v5499 = vpack.c.b16 %v5279, %v5277
    %v5500 = vpack.c.b16 %v5282, %v5280
    %v5501 = vpack.c.b16 %v5283, %v5281
    %v5502 = vpack.c.b16 %v5286, %v5284
    %v5503 = vpack.c.b16 %v5287, %v5285
    %v5504 = vpack.c.b16 %v5290, %v5288
    %v5505 = vpack.c.b16 %v5291, %v5289
    %v5506 = vpack.c.b16 %v5294, %v5292
    %v5507 = vpack.c.b16 %v5295, %v5293
    %v5508 = vpack.c.b16 %v5298, %v5296
    %v5509 = vpack.c.b16 %v5299, %v5297
    %v5510 = vpack.c.b16 %v5302, %v5300
    %v5511 = vpack.c.b16 %v5303, %v5301
    %v5512 = vpack.c.b16 %v5306, %v5304
    %v5513 = vpack.c.b16 %v5307, %v5305
    %v5514 = vpack.c.b16 %v5310, %v5308
    %v5515 = vpack.c.b16 %v5311, %v5309
    %v5516 = vpack.c.b16 %v5314, %v5312
    %v5517 = vpack.c.b16 %v5315, %v5313
    %v5518 = vpack.c.b16 %v5318, %v5316
    %v5519 = vpack.c.b16 %v5319, %v5317
    %v5520 = vpack.c.b16 %v5322, %v5320
    %v5521 = vpack.c.b16 %v5323, %v5321
    %v5522 = vpack.c.b16 %v5326, %v5324
    %v5523 = vpack.c.b16 %v5327, %v5325
    %v5524 = vpack.c.b16 %v5330, %v5328
    %v5525 = vpack.c.b16 %v5331, %v5329
    %v5526 = vpack.c.b16 %v5334, %v5332
    %v5527 = vpack.c.b16 %v5335, %v5333
    %v5528 = vpack.c.b16 %v5338, %v5336
    %v5529 = vpack.c.b16 %v5339, %v5337
    %v5530 = vpack.c.b16 %v5342, %v5340
    %v5531 = vpack.c.b16 %v5343, %v5341
    %v5532 = vpack.c.b16 %v5346, %v5344
    %v5533 = vpack.c.b16 %v5347, %v5345
    %v5534 = vpack.c.b16 %v5350, %v5348
    %v5535 = vpack.c.b16 %v5351, %v5349
    %v5536 = vpack.c.b16 %v5354, %v5352
    %v5537 = vpack.c.b16 %v5355, %v5353
    %v5538 = vpack.c.b16 %v5358, %v5356
    %v5539 = vpack.c.b16 %v5359, %v5357
    %v5540 = vpack.c.b16 %v5362, %v5360
    %v5541 = vpack.c.b16 %v5363, %v5361
    %v5542 = vpack.c.b16 %v5366, %v5364
    %v5543 = vpack.c.b16 %v5367, %v5365
    %v5544 = vpack.c.b16 %v5370, %v5368
    %v5545 = vpack.c.b16 %v5371, %v5369
    %v5546 = vpack.c.b16 %v5374, %v5372
    %v5547 = vpack.c.b16 %v5375, %v5373
    %v5548 = vpack.c.b16 %v5378, %v5376
    %v5549 = vpack.c.b16 %v5379, %v5377
    %v5550 = vpack.c.b16 %v5382, %v5380
    %v5551 = vpack.c.b16 %v5383, %v5381
    %v5552 = vpack.c.b16 %v5386, %v5384
    %v5553 = vpack.c.b16 %v5387, %v5385
    %v5554 = vpack.c.b16 %v5390, %v5388
    %v5555 = vpack.c.b16 %v5391, %v5389
    %v5556 = vpack.c.b16 %v5394, %v5392
    %v5557 = vpack.c.b16 %v5395, %v5393
    %v5558 = vpack.c.b16 %v5398, %v5396
    %v5559 = vpack.c.b16 %v5399, %v5397
    %v5560 = vpack.c.b16 %v5402, %v5400
    %v5561 = vpack.c.b16 %v5403, %v5401
    %v5562 = vpack.c.b16 %v5406, %v5404
    %v5563 = vpack.c.b16 %v5407, %v5405
    %v5564 = vpack.c.b16 %v5410, %v5408
    %v5565 = vpack.c.b16 %v5411, %v5409
    %v5566 = vpack.c.b16 %v5414, %v5412
    %v5567 = vpack.c.b16 %v5415, %v5413
    %v5568 = vpack.c.b16 %v5418, %v5416
    %v5569 = vpack.c.b16 %v5419, %v5417
    %v5570 = vpack.c.b16 %v5422, %v5420
    %v5571 = vpack.c.b16 %v5423, %v5421
    %v5572 = vpack.c.b16 %v5426, %v5424
    %v5573 = vpack.c.b16 %v5427, %v5425
    %v5574 = vpack.c.b16 %v5430, %v5428
    %v5575 = vpack.c.b16 %v5431, %v5429
    %v5576 = vpack.c.b16 %v5434, %v5432
    %v5577 = vpack.c.b16 %v5435, %v5433
    %v5578 = vpack.c.b16 %v5438, %v5436
    %v5579 = vpack.c.b16 %v5439, %v5437
    %v5580 = vpack.c.b16 %v5442, %v5440
    %v5581 = vpack.c.b16 %v5443, %v5441
    %v5582 = vpack.c.b16 %v5446, %v5444
    %v5583 = vpack.c.b16 %v5447, %v5445
    %v5584 = vpack.c.b16 %v5450, %v5448
    %v5585 = vpack.c.b16 %v5451, %v5449
    %v5586 = vpack.c.b16 %v5454, %v5452
    %v5587 = vpack.c.b16 %v5455, %v5453
    %v5588 = vpack.c.b16 %v5458, %v5456
    %v5589 = vpack.c.b16 %v5459, %v5457
    %v5590 = vpack.c.b16 %v5462, %v5460
    %v5591 = vpack.c.b16 %v5463, %v5461
    %5720 = vmatprep.subr.bf16.mxu0 %v5465
    %5721 = vmatpush1.bf16.msra.mxu0 %v5464
    %5722 = vmatprep.subr.bf16.mxu0 %v5467
    %5723 = vmatpush1.bf16.msra.mxu0 %v5466
    %5724 = vmatprep.subr.bf16.mxu0 %v5469
    %5725 = vmatpush1.bf16.msra.mxu0 %v5468
    %5726 = vmatprep.subr.bf16.mxu0 %v5471
    %5727 = vmatpush1.bf16.msra.mxu0 %v5470
    %5728 = vmatprep.subr.bf16.mxu0 %v5473
    %5729 = vmatpush1.bf16.msra.mxu0 %v5472
    %5730 = vmatprep.subr.bf16.mxu0 %v5475
    %5731 = vmatpush1.bf16.msra.mxu0 %v5474
    %5732 = vmatprep.subr.bf16.mxu0 %v5477
    %5733 = vmatpush1.bf16.msra.mxu0 %v5476
    %5734 = vmatprep.subr.bf16.mxu0 %v5479
    %5735 = vmatpush1.bf16.msra.mxu0 %v5478
    %5736 = vmatprep.subr.bf16.mxu0 %v5481
    %5737 = vmatpush1.bf16.msra.mxu0 %v5480
    %5738 = vmatprep.subr.bf16.mxu0 %v5483
    %5739 = vmatpush1.bf16.msra.mxu0 %v5482
    %5740 = vmatprep.subr.bf16.mxu0 %v5485
    %5741 = vmatpush1.bf16.msra.mxu0 %v5484
    %5742 = vmatprep.subr.bf16.mxu0 %v5487
    %5743 = vmatpush1.bf16.msra.mxu0 %v5486
    %5744 = vmatprep.subr.bf16.mxu0 %v5489
    %5745 = vmatpush1.bf16.msra.mxu0 %v5488
    %5746 = vmatprep.subr.bf16.mxu0 %v5491
    %5747 = vmatpush1.bf16.msra.mxu0 %v5490
    %5748 = vmatprep.subr.bf16.mxu0 %v5493
    %5749 = vmatpush1.bf16.msra.mxu0 %v5492
    %5750 = vmatprep.subr.bf16.mxu0 %v5495
    %5751 = vmatpush1.bf16.msra.mxu0 %v5494
    %5752 = vmatprep.mubr.bf16.mxu0 %v3987
    %5753 = vmatmul.mubr.bf16.gmra.mrb[0].mxu0 %v3986
    %v5754 = vpop.f32.mrb[0].mxu0
    %v5755 = vadd.f32 %v5073, %v5754
    %v5756 = vpop.f32.mrb[0].mxu0
    %v5757 = vadd.f32 %v5077, %v5756
    %v5758 = vpop.f32.mrb[0].mxu0
    %v5759 = vpop.f32.mrb[0].mxu0
    %5760 = vdwg.mxu0
    %5761 = vmatprep.subr.bf16.mxu0 %v5497
    %5762 = vmatpush1.bf16.msra.mxu0 %v5496
    %5763 = vmatprep.subr.bf16.mxu0 %v5499
    %5764 = vmatpush1.bf16.msra.mxu0 %v5498
    %5765 = vmatprep.subr.bf16.mxu0 %v5501
    %5766 = vmatpush1.bf16.msra.mxu0 %v5500
    %5767 = vmatprep.subr.bf16.mxu0 %v5503
    %5768 = vmatpush1.bf16.msra.mxu0 %v5502
    %5769 = vmatprep.subr.bf16.mxu0 %v5505
    %5770 = vmatpush1.bf16.msra.mxu0 %v5504
    %5771 = vmatprep.subr.bf16.mxu0 %v5507
    %5772 = vmatpush1.bf16.msra.mxu0 %v5506
    %5773 = vmatprep.subr.bf16.mxu0 %v5509
    %5774 = vmatpush1.bf16.msra.mxu0 %v5508
    %5775 = vmatprep.subr.bf16.mxu0 %v5511
    %5776 = vmatpush1.bf16.msra.mxu0 %v5510
    %5777 = vmatprep.subr.bf16.mxu0 %v5513
    %5778 = vmatpush1.bf16.msra.mxu0 %v5512
    %5779 = vmatprep.subr.bf16.mxu0 %v5515
    %5780 = vmatpush1.bf16.msra.mxu0 %v5514
    %5781 = vmatprep.subr.bf16.mxu0 %v5517
    %5782 = vmatpush1.bf16.msra.mxu0 %v5516
    %5783 = vmatprep.subr.bf16.mxu0 %v5519
    %5784 = vmatpush1.bf16.msra.mxu0 %v5518
    %5785 = vmatprep.subr.bf16.mxu0 %v5521
    %5786 = vmatpush1.bf16.msra.mxu0 %v5520
    %5787 = vmatprep.subr.bf16.mxu0 %v5523
    %5788 = vmatpush1.bf16.msra.mxu0 %v5522
    %5789 = vmatprep.subr.bf16.mxu0 %v5525
    %5790 = vmatpush1.bf16.msra.mxu0 %v5524
    %5791 = vmatprep.subr.bf16.mxu0 %v5527
    %5792 = vmatpush1.bf16.msra.mxu0 %v5526
    %5793 = vmatprep.mubr.bf16.mxu0 %v3989
    %5794 = vmatmul.mubr.bf16.gmra.mrb[0].mxu0 %v3988
    %v5795 = vpop.f32.mrb[0].mxu0
    %v5796 = vadd.f32 %v5755, %v5795
    %v5797 = vpop.f32.mrb[0].mxu0
    %v5798 = vadd.f32 %v5757, %v5797
    %v5799 = vpop.f32.mrb[0].mxu0
    %v5800 = vpop.f32.mrb[0].mxu0
    %5801 = vdwg.mxu0
    %5802 = vmatprep.subr.bf16.mxu0 %v5529
    %5803 = vmatpush1.bf16.msra.mxu0 %v5528
    %5804 = vmatprep.subr.bf16.mxu0 %v5531
    %5805 = vmatpush1.bf16.msra.mxu0 %v5530
    %5806 = vmatprep.subr.bf16.mxu0 %v5533
    %5807 = vmatpush1.bf16.msra.mxu0 %v5532
    %5808 = vmatprep.subr.bf16.mxu0 %v5535
    %5809 = vmatpush1.bf16.msra.mxu0 %v5534
    %5810 = vmatprep.subr.bf16.mxu0 %v5537
    %5811 = vmatpush1.bf16.msra.mxu0 %v5536
    %5812 = vmatprep.subr.bf16.mxu0 %v5539
    %5813 = vmatpush1.bf16.msra.mxu0 %v5538
    %5814 = vmatprep.subr.bf16.mxu0 %v5541
    %5815 = vmatpush1.bf16.msra.mxu0 %v5540
    %5816 = vmatprep.subr.bf16.mxu0 %v5543
    %5817 = vmatpush1.bf16.msra.mxu0 %v5542
    %5818 = vmatprep.subr.bf16.mxu0 %v5545
    %5819 = vmatpush1.bf16.msra.mxu0 %v5544
    %5820 = vmatprep.subr.bf16.mxu0 %v5547
    %5821 = vmatpush1.bf16.msra.mxu0 %v5546
    %5822 = vmatprep.subr.bf16.mxu0 %v5549
    %5823 = vmatpush1.bf16.msra.mxu0 %v5548
    %5824 = vmatprep.subr.bf16.mxu0 %v5551
    %5825 = vmatpush1.bf16.msra.mxu0 %v5550
    %5826 = vmatprep.subr.bf16.mxu0 %v5553
    %5827 = vmatpush1.bf16.msra.mxu0 %v5552
    %5828 = vmatprep.subr.bf16.mxu0 %v5555
    %5829 = vmatpush1.bf16.msra.mxu0 %v5554
    %5830 = vmatprep.subr.bf16.mxu0 %v5557
    %5831 = vmatpush1.bf16.msra.mxu0 %v5556
    %5832 = vmatprep.subr.bf16.mxu0 %v5559
    %5833 = vmatpush1.bf16.msra.mxu0 %v5558
    %5834 = vmatprep.mubr.bf16.mxu0 %v3991
    %5835 = vmatmul.mubr.bf16.gmra.mrb[0].mxu0 %v3990
    %v5836 = vpop.f32.mrb[0].mxu0
    %v5837 = vadd.f32 %v5796, %v5836
    %v5838 = vpop.f32.mrb[0].mxu0
    %v5839 = vadd.f32 %v5798, %v5838
    %v5840 = vpop.f32.mrb[0].mxu0
    %v5841 = vpop.f32.mrb[0].mxu0
    %5842 = vdwg.mxu0
    %5843 = vmatprep.subr.bf16.mxu0 %v5561
    %5844 = vmatpush1.bf16.msra.mxu0 %v5560
    %5845 = vmatprep.subr.bf16.mxu0 %v5563
    %5846 = vmatpush1.bf16.msra.mxu0 %v5562
    %5847 = vmatprep.subr.bf16.mxu0 %v5565
    %5848 = vmatpush1.bf16.msra.mxu0 %v5564
    %5849 = vmatprep.subr.bf16.mxu0 %v5567
    %5850 = vmatpush1.bf16.msra.mxu0 %v5566
    %5851 = vmatprep.subr.bf16.mxu0 %v5569
    %5852 = vmatpush1.bf16.msra.mxu0 %v5568
    %5853 = vmatprep.subr.bf16.mxu0 %v5571
    %5854 = vmatpush1.bf16.msra.mxu0 %v5570
    %5855 = vmatprep.subr.bf16.mxu0 %v5573
    %5856 = vmatpush1.bf16.msra.mxu0 %v5572
    %5857 = vmatprep.subr.bf16.mxu0 %v5575
    %5858 = vmatpush1.bf16.msra.mxu0 %v5574
    %5859 = vmatprep.subr.bf16.mxu0 %v5577
    %5860 = vmatpush1.bf16.msra.mxu0 %v5576
    %5861 = vmatprep.subr.bf16.mxu0 %v5579
    %5862 = vmatpush1.bf16.msra.mxu0 %v5578
    %5863 = vmatprep.subr.bf16.mxu0 %v5581
    %5864 = vmatpush1.bf16.msra.mxu0 %v5580
    %5865 = vmatprep.subr.bf16.mxu0 %v5583
    %5866 = vmatpush1.bf16.msra.mxu0 %v5582
    %5867 = vmatprep.subr.bf16.mxu0 %v5585
    %5868 = vmatpush1.bf16.msra.mxu0 %v5584
    %5869 = vmatprep.subr.bf16.mxu0 %v5587
    %5870 = vmatpush1.bf16.msra.mxu0 %v5586
    %5871 = vmatprep.subr.bf16.mxu0 %v5589
    %5872 = vmatpush1.bf16.msra.mxu0 %v5588
    %5873 = vmatprep.subr.bf16.mxu0 %v5591
    %5874 = vmatpush1.bf16.msra.mxu0 %v5590
    %5875 = vmatprep.mubr.bf16.mxu0 %v3993
    %5876 = vmatmul.mubr.bf16.gmra.mrb[0].mxu0 %v3992
    %v5877 = vpop.f32.mrb[0].mxu0
    %v5878 = vadd.f32 %v5837, %v5877
    %v5879 = vpop.f32.mrb[0].mxu0
    %v5880 = vadd.f32 %v5839, %v5879
    %v5881 = vpop.f32.mrb[0].mxu0
    %v5882 = vpop.f32.mrb[0].mxu0
    %5883 = vdwg.mxu0
    %v5884 = vmax.f32 %v5878, 0.0
    %v5885 = vmax.f32 %v5880, 0.0
    %v5886 = vld [vmem:[#allocation7 + $0x10] sm:$0xff]
    %v5887 = vld [vmem:[#allocation7 + $0x30] sm:$0xff]
    %v5888 = vld [vmem:[#allocation7 + $0x50] sm:$0xff]
    %v5889 = vld [vmem:[#allocation7 + $0x70] sm:$0xff]
    %v5890 = vld [vmem:[#allocation7 + $0x90] sm:$0xff]
    %v5891 = vld [vmem:[#allocation7 + $0xb0] sm:$0xff]
    %v5892 = vld [vmem:[#allocation7 + $0xd0] sm:$0xff]
    %v5893 = vld [vmem:[#allocation7 + $0xf0] sm:$0xff]
    %v5894 = vld [vmem:[#allocation7 + $0x110] sm:$0xff]
    %v5895 = vld [vmem:[#allocation7 + $0x130] sm:$0xff]
    %v5896 = vld [vmem:[#allocation7 + $0x150] sm:$0xff]
    %v5897 = vld [vmem:[#allocation7 + $0x170] sm:$0xff]
    %v5898 = vld [vmem:[#allocation7 + $0x190] sm:$0xff]
    %v5899 = vld [vmem:[#allocation7 + $0x1b0] sm:$0xff]
    %v5900 = vld [vmem:[#allocation7 + $0x1d0] sm:$0xff]
    %v5901 = vld [vmem:[#allocation7 + $0x1f0] sm:$0xff]
    %v5902 = vld [vmem:[#allocation7 + $0x210] sm:$0xff]
    %v5903 = vld [vmem:[#allocation7 + $0x230] sm:$0xff]
    %v5904 = vld [vmem:[#allocation7 + $0x250] sm:$0xff]
    %v5905 = vld [vmem:[#allocation7 + $0x270] sm:$0xff]
    %v5906 = vld [vmem:[#allocation7 + $0x290] sm:$0xff]
    %v5907 = vld [vmem:[#allocation7 + $0x2b0] sm:$0xff]
    %v5908 = vld [vmem:[#allocation7 + $0x2d0] sm:$0xff]
    %v5909 = vld [vmem:[#allocation7 + $0x2f0] sm:$0xff]
    %v5910 = vld [vmem:[#allocation7 + $0x310] sm:$0xff]
    %v5911 = vld [vmem:[#allocation7 + $0x330] sm:$0xff]
    %v5912 = vld [vmem:[#allocation7 + $0x350] sm:$0xff]
    %v5913 = vld [vmem:[#allocation7 + $0x370] sm:$0xff]
    %v5914 = vld [vmem:[#allocation7 + $0x390] sm:$0xff]
    %v5915 = vld [vmem:[#allocation7 + $0x3b0] sm:$0xff]
    %v5916 = vld [vmem:[#allocation7 + $0x3d0] sm:$0xff]
    %v5917 = vld [vmem:[#allocation7 + $0x3f0] sm:$0xff]
    %v5918 = vld [vmem:[#allocation7 + $0x410] sm:$0xff]
    %v5919 = vld [vmem:[#allocation7 + $0x430] sm:$0xff]
    %v5920 = vld [vmem:[#allocation7 + $0x450] sm:$0xff]
    %v5921 = vld [vmem:[#allocation7 + $0x470] sm:$0xff]
    %v5922 = vld [vmem:[#allocation7 + $0x490] sm:$0xff]
    %v5923 = vld [vmem:[#allocation7 + $0x4b0] sm:$0xff]
    %v5924 = vld [vmem:[#allocation7 + $0x4d0] sm:$0xff]
    %v5925 = vld [vmem:[#allocation7 + $0x4f0] sm:$0xff]
    %v5926 = vld [vmem:[#allocation7 + $0x510] sm:$0xff]
    %v5927 = vld [vmem:[#allocation7 + $0x530] sm:$0xff]
    %v5928 = vld [vmem:[#allocation7 + $0x550] sm:$0xff]
    %v5929 = vld [vmem:[#allocation7 + $0x570] sm:$0xff]
    %v5930 = vld [vmem:[#allocation7 + $0x590] sm:$0xff]
    %v5931 = vld [vmem:[#allocation7 + $0x5b0] sm:$0xff]
    %v5932 = vld [vmem:[#allocation7 + $0x5d0] sm:$0xff]
    %v5933 = vld [vmem:[#allocation7 + $0x5f0] sm:$0xff]
    %v5934 = vld [vmem:[#allocation7 + $0x610] sm:$0xff]
    %v5935 = vld [vmem:[#allocation7 + $0x630] sm:$0xff]
    %v5936 = vld [vmem:[#allocation7 + $0x650] sm:$0xff]
    %v5937 = vld [vmem:[#allocation7 + $0x670] sm:$0xff]
    %v5938 = vld [vmem:[#allocation7 + $0x690] sm:$0xff]
    %v5939 = vld [vmem:[#allocation7 + $0x6b0] sm:$0xff]
    %v5940 = vld [vmem:[#allocation7 + $0x6d0] sm:$0xff]
    %v5941 = vld [vmem:[#allocation7 + $0x6f0] sm:$0xff]
    %v5942 = vld [vmem:[#allocation7 + $0x710] sm:$0xff]
    %v5943 = vld [vmem:[#allocation7 + $0x730] sm:$0xff]
    %v5944 = vld [vmem:[#allocation7 + $0x750] sm:$0xff]
    %v5945 = vld [vmem:[#allocation7 + $0x770] sm:$0xff]
    %v5946 = vld [vmem:[#allocation7 + $0x790] sm:$0xff]
    %v5947 = vld [vmem:[#allocation7 + $0x7b0] sm:$0xff]
    %v5948 = vld [vmem:[#allocation7 + $0x7d0] sm:$0xff]
    %v5949 = vld [vmem:[#allocation7 + $0x7f0] sm:$0xff]
    %v5950 = vld [vmem:[#allocation7 + $0x810] sm:$0xff]
    %v5951 = vld [vmem:[#allocation7 + $0x830] sm:$0xff]
    %v5952 = vld [vmem:[#allocation7 + $0x850] sm:$0xff]
    %v5953 = vld [vmem:[#allocation7 + $0x870] sm:$0xff]
    %v5954 = vld [vmem:[#allocation7 + $0x890] sm:$0xff]
    %v5955 = vld [vmem:[#allocation7 + $0x8b0] sm:$0xff]
    %v5956 = vld [vmem:[#allocation7 + $0x8d0] sm:$0xff]
    %v5957 = vld [vmem:[#allocation7 + $0x8f0] sm:$0xff]
    %v5958 = vld [vmem:[#allocation7 + $0x910] sm:$0xff]
    %v5959 = vld [vmem:[#allocation7 + $0x930] sm:$0xff]
    %v5960 = vld [vmem:[#allocation7 + $0x950] sm:$0xff]
    %v5961 = vld [vmem:[#allocation7 + $0x970] sm:$0xff]
    %v5962 = vld [vmem:[#allocation7 + $0x990] sm:$0xff]
    %v5963 = vld [vmem:[#allocation7 + $0x9b0] sm:$0xff]
    %v5964 = vld [vmem:[#allocation7 + $0x9d0] sm:$0xff]
    %v5965 = vld [vmem:[#allocation7 + $0x9f0] sm:$0xff]
    %v5966 = vld [vmem:[#allocation7 + $0xa10] sm:$0xff]
    %v5967 = vld [vmem:[#allocation7 + $0xa30] sm:$0xff]
    %v5968 = vld [vmem:[#allocation7 + $0xa50] sm:$0xff]
    %v5969 = vld [vmem:[#allocation7 + $0xa70] sm:$0xff]
    %v5970 = vld [vmem:[#allocation7 + $0xa90] sm:$0xff]
    %v5971 = vld [vmem:[#allocation7 + $0xab0] sm:$0xff]
    %v5972 = vld [vmem:[#allocation7 + $0xad0] sm:$0xff]
    %v5973 = vld [vmem:[#allocation7 + $0xaf0] sm:$0xff]
    %v5974 = vld [vmem:[#allocation7 + $0xb10] sm:$0xff]
    %v5975 = vld [vmem:[#allocation7 + $0xb30] sm:$0xff]
    %v5976 = vld [vmem:[#allocation7 + $0xb50] sm:$0xff]
    %v5977 = vld [vmem:[#allocation7 + $0xb70] sm:$0xff]
    %v5978 = vld [vmem:[#allocation7 + $0xb90] sm:$0xff]
    %v5979 = vld [vmem:[#allocation7 + $0xbb0] sm:$0xff]
    %v5980 = vld [vmem:[#allocation7 + $0xbd0] sm:$0xff]
    %v5981 = vld [vmem:[#allocation7 + $0xbf0] sm:$0xff]
    %v5982 = vld [vmem:[#allocation7 + $0xc10] sm:$0xff]
    %v5983 = vld [vmem:[#allocation7 + $0xc30] sm:$0xff]
    %v5984 = vld [vmem:[#allocation7 + $0xc50] sm:$0xff]
    %v5985 = vld [vmem:[#allocation7 + $0xc70] sm:$0xff]
    %v5986 = vld [vmem:[#allocation7 + $0xc90] sm:$0xff]
    %v5987 = vld [vmem:[#allocation7 + $0xcb0] sm:$0xff]
    %v5988 = vld [vmem:[#allocation7 + $0xcd0] sm:$0xff]
    %v5989 = vld [vmem:[#allocation7 + $0xcf0] sm:$0xff]
    %v5990 = vld [vmem:[#allocation7 + $0xd10] sm:$0xff]
    %v5991 = vld [vmem:[#allocation7 + $0xd30] sm:$0xff]
    %v5992 = vld [vmem:[#allocation7 + $0xd50] sm:$0xff]
    %v5993 = vld [vmem:[#allocation7 + $0xd70] sm:$0xff]
    %v5994 = vld [vmem:[#allocation7 + $0xd90] sm:$0xff]
    %v5995 = vld [vmem:[#allocation7 + $0xdb0] sm:$0xff]
    %v5996 = vld [vmem:[#allocation7 + $0xdd0] sm:$0xff]
    %v5997 = vld [vmem:[#allocation7 + $0xdf0] sm:$0xff]
    %v5998 = vld [vmem:[#allocation7 + $0xe10] sm:$0xff]
    %v5999 = vld [vmem:[#allocation7 + $0xe30] sm:$0xff]
    %v6000 = vld [vmem:[#allocation7 + $0xe50] sm:$0xff]
    %v6001 = vld [vmem:[#allocation7 + $0xe70] sm:$0xff]
    %v6002 = vld [vmem:[#allocation7 + $0xe90] sm:$0xff]
    %v6003 = vld [vmem:[#allocation7 + $0xeb0] sm:$0xff]
    %v6004 = vld [vmem:[#allocation7 + $0xed0] sm:$0xff]
    %v6005 = vld [vmem:[#allocation7 + $0xef0] sm:$0xff]
    %v6006 = vld [vmem:[#allocation7 + $0xf10] sm:$0xff]
    %v6007 = vld [vmem:[#allocation7 + $0xf30] sm:$0xff]
    %v6008 = vld [vmem:[#allocation7 + $0xf50] sm:$0xff]
    %v6009 = vld [vmem:[#allocation7 + $0xf70] sm:$0xff]
    %v6010 = vld [vmem:[#allocation7 + $0xf90] sm:$0xff]
    %v6011 = vld [vmem:[#allocation7 + $0xfb0] sm:$0xff]
    %v6012 = vld [vmem:[#allocation7 + $0xfd0] sm:$0xff]
    %v6013 = vld [vmem:[#allocation7 + $0xff0] sm:$0xff]
    %v6014 = vld [vmem:[#allocation9 + $0x4] sm:$0x3]
    %v6016 = vlaneseq
    %v6017 = vshrl.u32 %v6016, 7
    %v6018 = vsub.s32 0, %v6017
    %v6019 = vrot.slane %v6014, %v6018
    %v6020 = vlaneseq
    %v6021 = vshrl.u32 %v6020, 7
    %v6022 = vsub.s32 1, %v6021
    %v6023 = vrot.slane %v6014, %v6022
    %v6154 = vunpack.c.l.b16 %v5886
    %v6155 = vunpack.c.h.b16 %v5886
    %v6156 = vunpack.c.l.b16 %v5887
    %v6157 = vunpack.c.h.b16 %v5887
    %v6158 = vunpack.c.l.b16 %v5888
    %v6159 = vunpack.c.h.b16 %v5888
    %v6160 = vunpack.c.l.b16 %v5889
    %v6161 = vunpack.c.h.b16 %v5889
    %v6162 = vunpack.c.l.b16 %v5890
    %v6163 = vunpack.c.h.b16 %v5890
    %v6164 = vunpack.c.l.b16 %v5891
    %v6165 = vunpack.c.h.b16 %v5891
    %v6166 = vunpack.c.l.b16 %v5892
    %v6167 = vunpack.c.h.b16 %v5892
    %v6168 = vunpack.c.l.b16 %v5893
    %v6169 = vunpack.c.h.b16 %v5893
    %v6170 = vunpack.c.l.b16 %v5894
    %v6171 = vunpack.c.h.b16 %v5894
    %v6172 = vunpack.c.l.b16 %v5895
    %v6173 = vunpack.c.h.b16 %v5895
    %v6174 = vunpack.c.l.b16 %v5896
    %v6175 = vunpack.c.h.b16 %v5896
    %v6176 = vunpack.c.l.b16 %v5897
    %v6177 = vunpack.c.h.b16 %v5897
    %v6178 = vunpack.c.l.b16 %v5898
    %v6179 = vunpack.c.h.b16 %v5898
    %v6180 = vunpack.c.l.b16 %v5899
    %v6181 = vunpack.c.h.b16 %v5899
    %v6182 = vunpack.c.l.b16 %v5900
    %v6183 = vunpack.c.h.b16 %v5900
    %v6184 = vunpack.c.l.b16 %v5901
    %v6185 = vunpack.c.h.b16 %v5901
    %v6186 = vunpack.c.l.b16 %v5902
    %v6187 = vunpack.c.h.b16 %v5902
    %v6188 = vunpack.c.l.b16 %v5903
    %v6189 = vunpack.c.h.b16 %v5903
    %v6190 = vunpack.c.l.b16 %v5904
    %v6191 = vunpack.c.h.b16 %v5904
    %v6192 = vunpack.c.l.b16 %v5905
    %v6193 = vunpack.c.h.b16 %v5905
    %v6194 = vunpack.c.l.b16 %v5906
    %v6195 = vunpack.c.h.b16 %v5906
    %v6196 = vunpack.c.l.b16 %v5907
    %v6197 = vunpack.c.h.b16 %v5907
    %v6198 = vunpack.c.l.b16 %v5908
    %v6199 = vunpack.c.h.b16 %v5908
    %v6200 = vunpack.c.l.b16 %v5909
    %v6201 = vunpack.c.h.b16 %v5909
    %v6202 = vunpack.c.l.b16 %v5910
    %v6203 = vunpack.c.h.b16 %v5910
    %v6204 = vunpack.c.l.b16 %v5911
    %v6205 = vunpack.c.h.b16 %v5911
    %v6206 = vunpack.c.l.b16 %v5912
    %v6207 = vunpack.c.h.b16 %v5912
    %v6208 = vunpack.c.l.b16 %v5913
    %v6209 = vunpack.c.h.b16 %v5913
    %v6210 = vunpack.c.l.b16 %v5914
    %v6211 = vunpack.c.h.b16 %v5914
    %v6212 = vunpack.c.l.b16 %v5915
    %v6213 = vunpack.c.h.b16 %v5915
    %v6214 = vunpack.c.l.b16 %v5916
    %v6215 = vunpack.c.h.b16 %v5916
    %v6216 = vunpack.c.l.b16 %v5917
    %v6217 = vunpack.c.h.b16 %v5917
    %v6218 = vunpack.c.l.b16 %v5918
    %v6219 = vunpack.c.h.b16 %v5918
    %v6220 = vunpack.c.l.b16 %v5919
    %v6221 = vunpack.c.h.b16 %v5919
    %v6222 = vunpack.c.l.b16 %v5920
    %v6223 = vunpack.c.h.b16 %v5920
    %v6224 = vunpack.c.l.b16 %v5921
    %v6225 = vunpack.c.h.b16 %v5921
    %v6226 = vunpack.c.l.b16 %v5922
    %v6227 = vunpack.c.h.b16 %v5922
    %v6228 = vunpack.c.l.b16 %v5923
    %v6229 = vunpack.c.h.b16 %v5923
    %v6230 = vunpack.c.l.b16 %v5924
    %v6231 = vunpack.c.h.b16 %v5924
    %v6232 = vunpack.c.l.b16 %v5925
    %v6233 = vunpack.c.h.b16 %v5925
    %v6234 = vunpack.c.l.b16 %v5926
    %v6235 = vunpack.c.h.b16 %v5926
    %v6236 = vunpack.c.l.b16 %v5927
    %v6237 = vunpack.c.h.b16 %v5927
    %v6238 = vunpack.c.l.b16 %v5928
    %v6239 = vunpack.c.h.b16 %v5928
    %v6240 = vunpack.c.l.b16 %v5929
    %v6241 = vunpack.c.h.b16 %v5929
    %v6242 = vunpack.c.l.b16 %v5930
    %v6243 = vunpack.c.h.b16 %v5930
    %v6244 = vunpack.c.l.b16 %v5931
    %v6245 = vunpack.c.h.b16 %v5931
    %v6246 = vunpack.c.l.b16 %v5932
    %v6247 = vunpack.c.h.b16 %v5932
    %v6248 = vunpack.c.l.b16 %v5933
    %v6249 = vunpack.c.h.b16 %v5933
    %v6250 = vunpack.c.l.b16 %v5934
    %v6251 = vunpack.c.h.b16 %v5934
    %v6252 = vunpack.c.l.b16 %v5935
    %v6253 = vunpack.c.h.b16 %v5935
    %v6254 = vunpack.c.l.b16 %v5936
    %v6255 = vunpack.c.h.b16 %v5936
    %v6256 = vunpack.c.l.b16 %v5937
    %v6257 = vunpack.c.h.b16 %v5937
    %v6258 = vunpack.c.l.b16 %v5938
    %v6259 = vunpack.c.h.b16 %v5938
    %v6260 = vunpack.c.l.b16 %v5939
    %v6261 = vunpack.c.h.b16 %v5939
    %v6262 = vunpack.c.l.b16 %v5940
    %v6263 = vunpack.c.h.b16 %v5940
    %v6264 = vunpack.c.l.b16 %v5941
    %v6265 = vunpack.c.h.b16 %v5941
    %v6266 = vunpack.c.l.b16 %v5942
    %v6267 = vunpack.c.h.b16 %v5942
    %v6268 = vunpack.c.l.b16 %v5943
    %v6269 = vunpack.c.h.b16 %v5943
    %v6270 = vunpack.c.l.b16 %v5944
    %v6271 = vunpack.c.h.b16 %v5944
    %v6272 = vunpack.c.l.b16 %v5945
    %v6273 = vunpack.c.h.b16 %v5945
    %v6274 = vunpack.c.l.b16 %v5946
    %v6275 = vunpack.c.h.b16 %v5946
    %v6276 = vunpack.c.l.b16 %v5947
    %v6277 = vunpack.c.h.b16 %v5947
    %v6278 = vunpack.c.l.b16 %v5948
    %v6279 = vunpack.c.h.b16 %v5948
    %v6280 = vunpack.c.l.b16 %v5949
    %v6281 = vunpack.c.h.b16 %v5949
    %v6282 = vunpack.c.l.b16 %v5950
    %v6283 = vunpack.c.h.b16 %v5950
    %v6284 = vunpack.c.l.b16 %v5951
    %v6285 = vunpack.c.h.b16 %v5951
    %v6286 = vunpack.c.l.b16 %v5952
    %v6287 = vunpack.c.h.b16 %v5952
    %v6288 = vunpack.c.l.b16 %v5953
    %v6289 = vunpack.c.h.b16 %v5953
    %v6290 = vunpack.c.l.b16 %v5954
    %v6291 = vunpack.c.h.b16 %v5954
    %v6292 = vunpack.c.l.b16 %v5955
    %v6293 = vunpack.c.h.b16 %v5955
    %v6294 = vunpack.c.l.b16 %v5956
    %v6295 = vunpack.c.h.b16 %v5956
    %v6296 = vunpack.c.l.b16 %v5957
    %v6297 = vunpack.c.h.b16 %v5957
    %v6298 = vunpack.c.l.b16 %v5958
    %v6299 = vunpack.c.h.b16 %v5958
    %v6300 = vunpack.c.l.b16 %v5959
    %v6301 = vunpack.c.h.b16 %v5959
    %v6302 = vunpack.c.l.b16 %v5960
    %v6303 = vunpack.c.h.b16 %v5960
    %v6304 = vunpack.c.l.b16 %v5961
    %v6305 = vunpack.c.h.b16 %v5961
    %v6306 = vunpack.c.l.b16 %v5962
    %v6307 = vunpack.c.h.b16 %v5962
    %v6308 = vunpack.c.l.b16 %v5963
    %v6309 = vunpack.c.h.b16 %v5963
    %v6310 = vunpack.c.l.b16 %v5964
    %v6311 = vunpack.c.h.b16 %v5964
    %v6312 = vunpack.c.l.b16 %v5965
    %v6313 = vunpack.c.h.b16 %v5965
    %v6314 = vunpack.c.l.b16 %v5966
    %v6315 = vunpack.c.h.b16 %v5966
    %v6316 = vunpack.c.l.b16 %v5967
    %v6317 = vunpack.c.h.b16 %v5967
    %v6318 = vunpack.c.l.b16 %v5968
    %v6319 = vunpack.c.h.b16 %v5968
    %v6320 = vunpack.c.l.b16 %v5969
    %v6321 = vunpack.c.h.b16 %v5969
    %v6322 = vunpack.c.l.b16 %v5970
    %v6323 = vunpack.c.h.b16 %v5970
    %v6324 = vunpack.c.l.b16 %v5971
    %v6325 = vunpack.c.h.b16 %v5971
    %v6326 = vunpack.c.l.b16 %v5972
    %v6327 = vunpack.c.h.b16 %v5972
    %v6328 = vunpack.c.l.b16 %v5973
    %v6329 = vunpack.c.h.b16 %v5973
    %v6330 = vunpack.c.l.b16 %v5974
    %v6331 = vunpack.c.h.b16 %v5974
    %v6332 = vunpack.c.l.b16 %v5975
    %v6333 = vunpack.c.h.b16 %v5975
    %v6334 = vunpack.c.l.b16 %v5976
    %v6335 = vunpack.c.h.b16 %v5976
    %v6336 = vunpack.c.l.b16 %v5977
    %v6337 = vunpack.c.h.b16 %v5977
    %v6338 = vunpack.c.l.b16 %v5978
    %v6339 = vunpack.c.h.b16 %v5978
    %v6340 = vunpack.c.l.b16 %v5979
    %v6341 = vunpack.c.h.b16 %v5979
    %v6342 = vunpack.c.l.b16 %v5980
    %v6343 = vunpack.c.h.b16 %v5980
    %v6344 = vunpack.c.l.b16 %v5981
    %v6345 = vunpack.c.h.b16 %v5981
    %v6346 = vunpack.c.l.b16 %v5982
    %v6347 = vunpack.c.h.b16 %v5982
    %v6348 = vunpack.c.l.b16 %v5983
    %v6349 = vunpack.c.h.b16 %v5983
    %v6350 = vunpack.c.l.b16 %v5984
    %v6351 = vunpack.c.h.b16 %v5984
    %v6352 = vunpack.c.l.b16 %v5985
    %v6353 = vunpack.c.h.b16 %v5985
    %v6354 = vunpack.c.l.b16 %v5986
    %v6355 = vunpack.c.h.b16 %v5986
    %v6356 = vunpack.c.l.b16 %v5987
    %v6357 = vunpack.c.h.b16 %v5987
    %v6358 = vunpack.c.l.b16 %v5988
    %v6359 = vunpack.c.h.b16 %v5988
    %v6360 = vunpack.c.l.b16 %v5989
    %v6361 = vunpack.c.h.b16 %v5989
    %v6362 = vunpack.c.l.b16 %v5990
    %v6363 = vunpack.c.h.b16 %v5990
    %v6364 = vunpack.c.l.b16 %v5991
    %v6365 = vunpack.c.h.b16 %v5991
    %v6366 = vunpack.c.l.b16 %v5992
    %v6367 = vunpack.c.h.b16 %v5992
    %v6368 = vunpack.c.l.b16 %v5993
    %v6369 = vunpack.c.h.b16 %v5993
    %v6370 = vunpack.c.l.b16 %v5994
    %v6371 = vunpack.c.h.b16 %v5994
    %v6372 = vunpack.c.l.b16 %v5995
    %v6373 = vunpack.c.h.b16 %v5995
    %v6374 = vunpack.c.l.b16 %v5996
    %v6375 = vunpack.c.h.b16 %v5996
    %v6376 = vunpack.c.l.b16 %v5997
    %v6377 = vunpack.c.h.b16 %v5997
    %v6378 = vunpack.c.l.b16 %v5998
    %v6379 = vunpack.c.h.b16 %v5998
    %v6380 = vunpack.c.l.b16 %v5999
    %v6381 = vunpack.c.h.b16 %v5999
    %v6382 = vunpack.c.l.b16 %v6000
    %v6383 = vunpack.c.h.b16 %v6000
    %v6384 = vunpack.c.l.b16 %v6001
    %v6385 = vunpack.c.h.b16 %v6001
    %v6386 = vunpack.c.l.b16 %v6002
    %v6387 = vunpack.c.h.b16 %v6002
    %v6388 = vunpack.c.l.b16 %v6003
    %v6389 = vunpack.c.h.b16 %v6003
    %v6390 = vunpack.c.l.b16 %v6004
    %v6391 = vunpack.c.h.b16 %v6004
    %v6392 = vunpack.c.l.b16 %v6005
    %v6393 = vunpack.c.h.b16 %v6005
    %v6394 = vunpack.c.l.b16 %v6006
    %v6395 = vunpack.c.h.b16 %v6006
    %v6396 = vunpack.c.l.b16 %v6007
    %v6397 = vunpack.c.h.b16 %v6007
    %v6398 = vunpack.c.l.b16 %v6008
    %v6399 = vunpack.c.h.b16 %v6008
    %v6400 = vunpack.c.l.b16 %v6009
    %v6401 = vunpack.c.h.b16 %v6009
    %v6402 = vunpack.c.l.b16 %v6010
    %v6403 = vunpack.c.h.b16 %v6010
    %v6404 = vunpack.c.l.b16 %v6011
    %v6405 = vunpack.c.h.b16 %v6011
    %v6406 = vunpack.c.l.b16 %v6012
    %v6407 = vunpack.c.h.b16 %v6012
    %v6408 = vunpack.c.l.b16 %v6013
    %v6409 = vunpack.c.h.b16 %v6013
    %v6410 = vpack.c.b16 %v6156, %v6154
    %v6411 = vpack.c.b16 %v6157, %v6155
    %v6412 = vpack.c.b16 %v6160, %v6158
    %v6413 = vpack.c.b16 %v6161, %v6159
    %v6414 = vpack.c.b16 %v6164, %v6162
    %v6415 = vpack.c.b16 %v6165, %v6163
    %v6416 = vpack.c.b16 %v6168, %v6166
    %v6417 = vpack.c.b16 %v6169, %v6167
    %v6418 = vpack.c.b16 %v6172, %v6170
    %v6419 = vpack.c.b16 %v6173, %v6171
    %v6420 = vpack.c.b16 %v6176, %v6174
    %v6421 = vpack.c.b16 %v6177, %v6175
    %v6422 = vpack.c.b16 %v6180, %v6178
    %v6423 = vpack.c.b16 %v6181, %v6179
    %v6424 = vpack.c.b16 %v6184, %v6182
    %v6425 = vpack.c.b16 %v6185, %v6183
    %v6426 = vpack.c.b16 %v6188, %v6186
    %v6427 = vpack.c.b16 %v6189, %v6187
    %v6428 = vpack.c.b16 %v6192, %v6190
    %v6429 = vpack.c.b16 %v6193, %v6191
    %v6430 = vpack.c.b16 %v6196, %v6194
    %v6431 = vpack.c.b16 %v6197, %v6195
    %v6432 = vpack.c.b16 %v6200, %v6198
    %v6433 = vpack.c.b16 %v6201, %v6199
    %v6434 = vpack.c.b16 %v6204, %v6202
    %v6435 = vpack.c.b16 %v6205, %v6203
    %v6436 = vpack.c.b16 %v6208, %v6206
    %v6437 = vpack.c.b16 %v6209, %v6207
    %v6438 = vpack.c.b16 %v6212, %v6210
    %v6439 = vpack.c.b16 %v6213, %v6211
    %v6440 = vpack.c.b16 %v6216, %v6214
    %v6441 = vpack.c.b16 %v6217, %v6215
    %v6442 = vpack.c.b16 %v6220, %v6218
    %v6443 = vpack.c.b16 %v6221, %v6219
    %v6444 = vpack.c.b16 %v6224, %v6222
    %v6445 = vpack.c.b16 %v6225, %v6223
    %v6446 = vpack.c.b16 %v6228, %v6226
    %v6447 = vpack.c.b16 %v6229, %v6227
    %v6448 = vpack.c.b16 %v6232, %v6230
    %v6449 = vpack.c.b16 %v6233, %v6231
    %v6450 = vpack.c.b16 %v6236, %v6234
    %v6451 = vpack.c.b16 %v6237, %v6235
    %v6452 = vpack.c.b16 %v6240, %v6238
    %v6453 = vpack.c.b16 %v6241, %v6239
    %v6454 = vpack.c.b16 %v6244, %v6242
    %v6455 = vpack.c.b16 %v6245, %v6243
    %v6456 = vpack.c.b16 %v6248, %v6246
    %v6457 = vpack.c.b16 %v6249, %v6247
    %v6458 = vpack.c.b16 %v6252, %v6250
    %v6459 = vpack.c.b16 %v6253, %v6251
    %v6460 = vpack.c.b16 %v6256, %v6254
    %v6461 = vpack.c.b16 %v6257, %v6255
    %v6462 = vpack.c.b16 %v6260, %v6258
    %v6463 = vpack.c.b16 %v6261, %v6259
    %v6464 = vpack.c.b16 %v6264, %v6262
    %v6465 = vpack.c.b16 %v6265, %v6263
    %v6466 = vpack.c.b16 %v6268, %v6266
    %v6467 = vpack.c.b16 %v6269, %v6267
    %v6468 = vpack.c.b16 %v6272, %v6270
    %v6469 = vpack.c.b16 %v6273, %v6271
    %v6470 = vpack.c.b16 %v6276, %v6274
    %v6471 = vpack.c.b16 %v6277, %v6275
    %v6472 = vpack.c.b16 %v6280, %v6278
    %v6473 = vpack.c.b16 %v6281, %v6279
    %v6474 = vpack.c.b16 %v6284, %v6282
    %v6475 = vpack.c.b16 %v6285, %v6283
    %v6476 = vpack.c.b16 %v6288, %v6286
    %v6477 = vpack.c.b16 %v6289, %v6287
    %v6478 = vpack.c.b16 %v6292, %v6290
    %v6479 = vpack.c.b16 %v6293, %v6291
    %v6480 = vpack.c.b16 %v6296, %v6294
    %v6481 = vpack.c.b16 %v6297, %v6295
    %v6482 = vpack.c.b16 %v6300, %v6298
    %v6483 = vpack.c.b16 %v6301, %v6299
    %v6484 = vpack.c.b16 %v6304, %v6302
    %v6485 = vpack.c.b16 %v6305, %v6303
    %v6486 = vpack.c.b16 %v6308, %v6306
    %v6487 = vpack.c.b16 %v6309, %v6307
    %v6488 = vpack.c.b16 %v6312, %v6310
    %v6489 = vpack.c.b16 %v6313, %v6311
    %v6490 = vpack.c.b16 %v6316, %v6314
    %v6491 = vpack.c.b16 %v6317, %v6315
    %v6492 = vpack.c.b16 %v6320, %v6318
    %v6493 = vpack.c.b16 %v6321, %v6319
    %v6494 = vpack.c.b16 %v6324, %v6322
    %v6495 = vpack.c.b16 %v6325, %v6323
    %v6496 = vpack.c.b16 %v6328, %v6326
    %v6497 = vpack.c.b16 %v6329, %v6327
    %v6498 = vpack.c.b16 %v6332, %v6330
    %v6499 = vpack.c.b16 %v6333, %v6331
    %v6500 = vpack.c.b16 %v6336, %v6334
    %v6501 = vpack.c.b16 %v6337, %v6335
    %v6502 = vpack.c.b16 %v6340, %v6338
    %v6503 = vpack.c.b16 %v6341, %v6339
    %v6504 = vpack.c.b16 %v6344, %v6342
    %v6505 = vpack.c.b16 %v6345, %v6343
    %v6506 = vpack.c.b16 %v6348, %v6346
    %v6507 = vpack.c.b16 %v6349, %v6347
    %v6508 = vpack.c.b16 %v6352, %v6350
    %v6509 = vpack.c.b16 %v6353, %v6351
    %v6510 = vpack.c.b16 %v6356, %v6354
    %v6511 = vpack.c.b16 %v6357, %v6355
    %v6512 = vpack.c.b16 %v6360, %v6358
    %v6513 = vpack.c.b16 %v6361, %v6359
    %v6514 = vpack.c.b16 %v6364, %v6362
    %v6515 = vpack.c.b16 %v6365, %v6363
    %v6516 = vpack.c.b16 %v6368, %v6366
    %v6517 = vpack.c.b16 %v6369, %v6367
    %v6518 = vpack.c.b16 %v6372, %v6370
    %v6519 = vpack.c.b16 %v6373, %v6371
    %v6520 = vpack.c.b16 %v6376, %v6374
    %v6521 = vpack.c.b16 %v6377, %v6375
    %v6522 = vpack.c.b16 %v6380, %v6378
    %v6523 = vpack.c.b16 %v6381, %v6379
    %v6524 = vpack.c.b16 %v6384, %v6382
    %v6525 = vpack.c.b16 %v6385, %v6383
    %v6526 = vpack.c.b16 %v6388, %v6386
    %v6527 = vpack.c.b16 %v6389, %v6387
    %v6528 = vpack.c.b16 %v6392, %v6390
    %v6529 = vpack.c.b16 %v6393, %v6391
    %v6530 = vpack.c.b16 %v6396, %v6394
    %v6531 = vpack.c.b16 %v6397, %v6395
    %v6532 = vpack.c.b16 %v6400, %v6398
    %v6533 = vpack.c.b16 %v6401, %v6399
    %v6534 = vpack.c.b16 %v6404, %v6402
    %v6535 = vpack.c.b16 %v6405, %v6403
    %v6536 = vpack.c.b16 %v6408, %v6406
    %v6537 = vpack.c.b16 %v6409, %v6407
    %6666 = vmatprep.subr.bf16.mxu0 %v6411
    %6667 = vmatpush1.bf16.msra.mxu0 %v6410
    %6668 = vmatprep.subr.bf16.mxu0 %v6413
    %6669 = vmatpush1.bf16.msra.mxu0 %v6412
    %6670 = vmatprep.subr.bf16.mxu0 %v6415
    %6671 = vmatpush1.bf16.msra.mxu0 %v6414
    %6672 = vmatprep.subr.bf16.mxu0 %v6417
    %6673 = vmatpush1.bf16.msra.mxu0 %v6416
    %6674 = vmatprep.subr.bf16.mxu0 %v6419
    %6675 = vmatpush1.bf16.msra.mxu0 %v6418
    %6676 = vmatprep.subr.bf16.mxu0 %v6421
    %6677 = vmatpush1.bf16.msra.mxu0 %v6420
    %6678 = vmatprep.subr.bf16.mxu0 %v6423
    %6679 = vmatpush1.bf16.msra.mxu0 %v6422
    %6680 = vmatprep.subr.bf16.mxu0 %v6425
    %6681 = vmatpush1.bf16.msra.mxu0 %v6424
    %6682 = vmatprep.subr.bf16.mxu0 %v6427
    %6683 = vmatpush1.bf16.msra.mxu0 %v6426
    %6684 = vmatprep.subr.bf16.mxu0 %v6429
    %6685 = vmatpush1.bf16.msra.mxu0 %v6428
    %6686 = vmatprep.subr.bf16.mxu0 %v6431
    %6687 = vmatpush1.bf16.msra.mxu0 %v6430
    %6688 = vmatprep.subr.bf16.mxu0 %v6433
    %6689 = vmatpush1.bf16.msra.mxu0 %v6432
    %6690 = vmatprep.subr.bf16.mxu0 %v6435
    %6691 = vmatpush1.bf16.msra.mxu0 %v6434
    %6692 = vmatprep.subr.bf16.mxu0 %v6437
    %6693 = vmatpush1.bf16.msra.mxu0 %v6436
    %6694 = vmatprep.subr.bf16.mxu0 %v6439
    %6695 = vmatpush1.bf16.msra.mxu0 %v6438
    %6696 = vmatprep.subr.bf16.mxu0 %v6441
    %6697 = vmatpush1.bf16.msra.mxu0 %v6440
    %6698 = vmatprep.mubr.bf16.mxu0 %v3987
    %6699 = vmatmul.mubr.bf16.gmra.mrb[0].mxu0 %v3986
    %v6700 = vpop.f32.mrb[0].mxu0
    %v6701 = vadd.f32 %v6019, %v6700
    %v6702 = vpop.f32.mrb[0].mxu0
    %v6703 = vadd.f32 %v6023, %v6702
    %v6704 = vpop.f32.mrb[0].mxu0
    %v6705 = vpop.f32.mrb[0].mxu0
    %6706 = vdwg.mxu0
    %6707 = vmatprep.subr.bf16.mxu0 %v6443
    %6708 = vmatpush1.bf16.msra.mxu0 %v6442
    %6709 = vmatprep.subr.bf16.mxu0 %v6445
    %6710 = vmatpush1.bf16.msra.mxu0 %v6444
    %6711 = vmatprep.subr.bf16.mxu0 %v6447
    %6712 = vmatpush1.bf16.msra.mxu0 %v6446
    %6713 = vmatprep.subr.bf16.mxu0 %v6449
    %6714 = vmatpush1.bf16.msra.mxu0 %v6448
    %6715 = vmatprep.subr.bf16.mxu0 %v6451
    %6716 = vmatpush1.bf16.msra.mxu0 %v6450
    %6717 = vmatprep.subr.bf16.mxu0 %v6453
    %6718 = vmatpush1.bf16.msra.mxu0 %v6452
    %6719 = vmatprep.subr.bf16.mxu0 %v6455
    %6720 = vmatpush1.bf16.msra.mxu0 %v6454
    %6721 = vmatprep.subr.bf16.mxu0 %v6457
    %6722 = vmatpush1.bf16.msra.mxu0 %v6456
    %6723 = vmatprep.subr.bf16.mxu0 %v6459
    %6724 = vmatpush1.bf16.msra.mxu0 %v6458
    %6725 = vmatprep.subr.bf16.mxu0 %v6461
    %6726 = vmatpush1.bf16.msra.mxu0 %v6460
    %6727 = vmatprep.subr.bf16.mxu0 %v6463
    %6728 = vmatpush1.bf16.msra.mxu0 %v6462
    %6729 = vmatprep.subr.bf16.mxu0 %v6465
    %6730 = vmatpush1.bf16.msra.mxu0 %v6464
    %6731 = vmatprep.subr.bf16.mxu0 %v6467
    %6732 = vmatpush1.bf16.msra.mxu0 %v6466
    %6733 = vmatprep.subr.bf16.mxu0 %v6469
    %6734 = vmatpush1.bf16.msra.mxu0 %v6468
    %6735 = vmatprep.subr.bf16.mxu0 %v6471
    %6736 = vmatpush1.bf16.msra.mxu0 %v6470
    %6737 = vmatprep.subr.bf16.mxu0 %v6473
    %6738 = vmatpush1.bf16.msra.mxu0 %v6472
    %6739 = vmatprep.mubr.bf16.mxu0 %v3989
    %6740 = vmatmul.mubr.bf16.gmra.mrb[0].mxu0 %v3988
    %v6741 = vpop.f32.mrb[0].mxu0
    %v6742 = vadd.f32 %v6701, %v6741
    %v6743 = vpop.f32.mrb[0].mxu0
    %v6744 = vadd.f32 %v6703, %v6743
    %v6745 = vpop.f32.mrb[0].mxu0
    %v6746 = vpop.f32.mrb[0].mxu0
    %6747 = vdwg.mxu0
    %6748 = vmatprep.subr.bf16.mxu0 %v6475
    %6749 = vmatpush1.bf16.msra.mxu0 %v6474
    %6750 = vmatprep.subr.bf16.mxu0 %v6477
    %6751 = vmatpush1.bf16.msra.mxu0 %v6476
    %6752 = vmatprep.subr.bf16.mxu0 %v6479
    %6753 = vmatpush1.bf16.msra.mxu0 %v6478
    %6754 = vmatprep.subr.bf16.mxu0 %v6481
    %6755 = vmatpush1.bf16.msra.mxu0 %v6480
    %6756 = vmatprep.subr.bf16.mxu0 %v6483
    %6757 = vmatpush1.bf16.msra.mxu0 %v6482
    %6758 = vmatprep.subr.bf16.mxu0 %v6485
    %6759 = vmatpush1.bf16.msra.mxu0 %v6484
    %6760 = vmatprep.subr.bf16.mxu0 %v6487
    %6761 = vmatpush1.bf16.msra.mxu0 %v6486
    %6762 = vmatprep.subr.bf16.mxu0 %v6489
    %6763 = vmatpush1.bf16.msra.mxu0 %v6488
    %6764 = vmatprep.subr.bf16.mxu0 %v6491
    %6765 = vmatpush1.bf16.msra.mxu0 %v6490
    %6766 = vmatprep.subr.bf16.mxu0 %v6493
    %6767 = vmatpush1.bf16.msra.mxu0 %v6492
    %6768 = vmatprep.subr.bf16.mxu0 %v6495
    %6769 = vmatpush1.bf16.msra.mxu0 %v6494
    %6770 = vmatprep.subr.bf16.mxu0 %v6497
    %6771 = vmatpush1.bf16.msra.mxu0 %v6496
    %6772 = vmatprep.subr.bf16.mxu0 %v6499
    %6773 = vmatpush1.bf16.msra.mxu0 %v6498
    %6774 = vmatprep.subr.bf16.mxu0 %v6501
    %6775 = vmatpush1.bf16.msra.mxu0 %v6500
    %6776 = vmatprep.subr.bf16.mxu0 %v6503
    %6777 = vmatpush1.bf16.msra.mxu0 %v6502
    %6778 = vmatprep.subr.bf16.mxu0 %v6505
    %6779 = vmatpush1.bf16.msra.mxu0 %v6504
    %6780 = vmatprep.mubr.bf16.mxu0 %v3991
    %6781 = vmatmul.mubr.bf16.gmra.mrb[0].mxu0 %v3990
    %v6782 = vpop.f32.mrb[0].mxu0
    %v6783 = vadd.f32 %v6742, %v6782
    %v6784 = vpop.f32.mrb[0].mxu0
    %v6785 = vadd.f32 %v6744, %v6784
    %v6786 = vpop.f32.mrb[0].mxu0
    %v6787 = vpop.f32.mrb[0].mxu0
    %6788 = vdwg.mxu0
    %6789 = vmatprep.subr.bf16.mxu0 %v6507
    %6790 = vmatpush1.bf16.msra.mxu0 %v6506
    %6791 = vmatprep.subr.bf16.mxu0 %v6509
    %6792 = vmatpush1.bf16.msra.mxu0 %v6508
    %6793 = vmatprep.subr.bf16.mxu0 %v6511
    %6794 = vmatpush1.bf16.msra.mxu0 %v6510
    %6795 = vmatprep.subr.bf16.mxu0 %v6513
    %6796 = vmatpush1.bf16.msra.mxu0 %v6512
    %6797 = vmatprep.subr.bf16.mxu0 %v6515
    %6798 = vmatpush1.bf16.msra.mxu0 %v6514
    %6799 = vmatprep.subr.bf16.mxu0 %v6517
    %6800 = vmatpush1.bf16.msra.mxu0 %v6516
    %6801 = vmatprep.subr.bf16.mxu0 %v6519
    %6802 = vmatpush1.bf16.msra.mxu0 %v6518
    %6803 = vmatprep.subr.bf16.mxu0 %v6521
    %6804 = vmatpush1.bf16.msra.mxu0 %v6520
    %6805 = vmatprep.subr.bf16.mxu0 %v6523
    %6806 = vmatpush1.bf16.msra.mxu0 %v6522
    %6807 = vmatprep.subr.bf16.mxu0 %v6525
    %6808 = vmatpush1.bf16.msra.mxu0 %v6524
    %6809 = vmatprep.subr.bf16.mxu0 %v6527
    %6810 = vmatpush1.bf16.msra.mxu0 %v6526
    %6811 = vmatprep.subr.bf16.mxu0 %v6529
    %6812 = vmatpush1.bf16.msra.mxu0 %v6528
    %6813 = vmatprep.subr.bf16.mxu0 %v6531
    %6814 = vmatpush1.bf16.msra.mxu0 %v6530
    %6815 = vmatprep.subr.bf16.mxu0 %v6533
    %6816 = vmatpush1.bf16.msra.mxu0 %v6532
    %6817 = vmatprep.subr.bf16.mxu0 %v6535
    %6818 = vmatpush1.bf16.msra.mxu0 %v6534
    %6819 = vmatprep.subr.bf16.mxu0 %v6537
    %6820 = vmatpush1.bf16.msra.mxu0 %v6536
    %6821 = vmatprep.mubr.bf16.mxu0 %v3993
    %6822 = vmatmul.mubr.bf16.gmra.mrb[0].mxu0 %v3992
    %v6823 = vpop.f32.mrb[0].mxu0
    %v6824 = vadd.f32 %v6783, %v6823
    %v6825 = vpop.f32.mrb[0].mxu0
    %v6826 = vadd.f32 %v6785, %v6825
    %v6827 = vpop.f32.mrb[0].mxu0
    %v6828 = vpop.f32.mrb[0].mxu0
    %6829 = vdwg.mxu0
    %v6830 = vmax.f32 %v6824, 0.0
    %v6831 = vmax.f32 %v6826, 0.0
    %v6832 = vld [vmem:[#allocation7 + $0x18] sm:$0xff]
    %v6833 = vld [vmem:[#allocation7 + $0x38] sm:$0xff]
    %v6834 = vld [vmem:[#allocation7 + $0x58] sm:$0xff]
    %v6835 = vld [vmem:[#allocation7 + $0x78] sm:$0xff]
    %v6836 = vld [vmem:[#allocation7 + $0x98] sm:$0xff]
    %v6837 = vld [vmem:[#allocation7 + $0xb8] sm:$0xff]
    %v6838 = vld [vmem:[#allocation7 + $0xd8] sm:$0xff]
    %v6839 = vld [vmem:[#allocation7 + $0xf8] sm:$0xff]
    %v6840 = vld [vmem:[#allocation7 + $0x118] sm:$0xff]
    %v6841 = vld [vmem:[#allocation7 + $0x138] sm:$0xff]
    %v6842 = vld [vmem:[#allocation7 + $0x158] sm:$0xff]
    %v6843 = vld [vmem:[#allocation7 + $0x178] sm:$0xff]
    %v6844 = vld [vmem:[#allocation7 + $0x198] sm:$0xff]
    %v6845 = vld [vmem:[#allocation7 + $0x1b8] sm:$0xff]
    %v6846 = vld [vmem:[#allocation7 + $0x1d8] sm:$0xff]
    %v6847 = vld [vmem:[#allocation7 + $0x1f8] sm:$0xff]
    %v6848 = vld [vmem:[#allocation7 + $0x218] sm:$0xff]
    %v6849 = vld [vmem:[#allocation7 + $0x238] sm:$0xff]
    %v6850 = vld [vmem:[#allocation7 + $0x258] sm:$0xff]
    %v6851 = vld [vmem:[#allocation7 + $0x278] sm:$0xff]
    %v6852 = vld [vmem:[#allocation7 + $0x298] sm:$0xff]
    %v6853 = vld [vmem:[#allocation7 + $0x2b8] sm:$0xff]
    %v6854 = vld [vmem:[#allocation7 + $0x2d8] sm:$0xff]
    %v6855 = vld [vmem:[#allocation7 + $0x2f8] sm:$0xff]
    %v6856 = vld [vmem:[#allocation7 + $0x318] sm:$0xff]
    %v6857 = vld [vmem:[#allocation7 + $0x338] sm:$0xff]
    %v6858 = vld [vmem:[#allocation7 + $0x358] sm:$0xff]
    %v6859 = vld [vmem:[#allocation7 + $0x378] sm:$0xff]
    %v6860 = vld [vmem:[#allocation7 + $0x398] sm:$0xff]
    %v6861 = vld [vmem:[#allocation7 + $0x3b8] sm:$0xff]
    %v6862 = vld [vmem:[#allocation7 + $0x3d8] sm:$0xff]
    %v6863 = vld [vmem:[#allocation7 + $0x3f8] sm:$0xff]
    %v6864 = vld [vmem:[#allocation7 + $0x418] sm:$0xff]
    %v6865 = vld [vmem:[#allocation7 + $0x438] sm:$0xff]
    %v6866 = vld [vmem:[#allocation7 + $0x458] sm:$0xff]
    %v6867 = vld [vmem:[#allocation7 + $0x478] sm:$0xff]
    %v6868 = vld [vmem:[#allocation7 + $0x498] sm:$0xff]
    %v6869 = vld [vmem:[#allocation7 + $0x4b8] sm:$0xff]
    %v6870 = vld [vmem:[#allocation7 + $0x4d8] sm:$0xff]
    %v6871 = vld [vmem:[#allocation7 + $0x4f8] sm:$0xff]
    %v6872 = vld [vmem:[#allocation7 + $0x518] sm:$0xff]
    %v6873 = vld [vmem:[#allocation7 + $0x538] sm:$0xff]
    %v6874 = vld [vmem:[#allocation7 + $0x558] sm:$0xff]
    %v6875 = vld [vmem:[#allocation7 + $0x578] sm:$0xff]
    %v6876 = vld [vmem:[#allocation7 + $0x598] sm:$0xff]
    %v6877 = vld [vmem:[#allocation7 + $0x5b8] sm:$0xff]
    %v6878 = vld [vmem:[#allocation7 + $0x5d8] sm:$0xff]
    %v6879 = vld [vmem:[#allocation7 + $0x5f8] sm:$0xff]
    %v6880 = vld [vmem:[#allocation7 + $0x618] sm:$0xff]
    %v6881 = vld [vmem:[#allocation7 + $0x638] sm:$0xff]
    %v6882 = vld [vmem:[#allocation7 + $0x658] sm:$0xff]
    %v6883 = vld [vmem:[#allocation7 + $0x678] sm:$0xff]
    %v6884 = vld [vmem:[#allocation7 + $0x698] sm:$0xff]
    %v6885 = vld [vmem:[#allocation7 + $0x6b8] sm:$0xff]
    %v6886 = vld [vmem:[#allocation7 + $0x6d8] sm:$0xff]
    %v6887 = vld [vmem:[#allocation7 + $0x6f8] sm:$0xff]
    %v6888 = vld [vmem:[#allocation7 + $0x718] sm:$0xff]
    %v6889 = vld [vmem:[#allocation7 + $0x738] sm:$0xff]
    %v6890 = vld [vmem:[#allocation7 + $0x758] sm:$0xff]
    %v6891 = vld [vmem:[#allocation7 + $0x778] sm:$0xff]
    %v6892 = vld [vmem:[#allocation7 + $0x798] sm:$0xff]
    %v6893 = vld [vmem:[#allocation7 + $0x7b8] sm:$0xff]
    %v6894 = vld [vmem:[#allocation7 + $0x7d8] sm:$0xff]
    %v6895 = vld [vmem:[#allocation7 + $0x7f8] sm:$0xff]
    %v6896 = vld [vmem:[#allocation7 + $0x818] sm:$0xff]
    %v6897 = vld [vmem:[#allocation7 + $0x838] sm:$0xff]
    %v6898 = vld [vmem:[#allocation7 + $0x858] sm:$0xff]
    %v6899 = vld [vmem:[#allocation7 + $0x878] sm:$0xff]
    %v6900 = vld [vmem:[#allocation7 + $0x898] sm:$0xff]
    %v6901 = vld [vmem:[#allocation7 + $0x8b8] sm:$0xff]
    %v6902 = vld [vmem:[#allocation7 + $0x8d8] sm:$0xff]
    %v6903 = vld [vmem:[#allocation7 + $0x8f8] sm:$0xff]
    %v6904 = vld [vmem:[#allocation7 + $0x918] sm:$0xff]
    %v6905 = vld [vmem:[#allocation7 + $0x938] sm:$0xff]
    %v6906 = vld [vmem:[#allocation7 + $0x958] sm:$0xff]
    %v6907 = vld [vmem:[#allocation7 + $0x978] sm:$0xff]
    %v6908 = vld [vmem:[#allocation7 + $0x998] sm:$0xff]
    %v6909 = vld [vmem:[#allocation7 + $0x9b8] sm:$0xff]
    %v6910 = vld [vmem:[#allocation7 + $0x9d8] sm:$0xff]
    %v6911 = vld [vmem:[#allocation7 + $0x9f8] sm:$0xff]
    %v6912 = vld [vmem:[#allocation7 + $0xa18] sm:$0xff]
    %v6913 = vld [vmem:[#allocation7 + $0xa38] sm:$0xff]
    %v6914 = vld [vmem:[#allocation7 + $0xa58] sm:$0xff]
    %v6915 = vld [vmem:[#allocation7 + $0xa78] sm:$0xff]
    %v6916 = vld [vmem:[#allocation7 + $0xa98] sm:$0xff]
    %v6917 = vld [vmem:[#allocation7 + $0xab8] sm:$0xff]
    %v6918 = vld [vmem:[#allocation7 + $0xad8] sm:$0xff]
    %v6919 = vld [vmem:[#allocation7 + $0xaf8] sm:$0xff]
    %v6920 = vld [vmem:[#allocation7 + $0xb18] sm:$0xff]
    %v6921 = vld [vmem:[#allocation7 + $0xb38] sm:$0xff]
    %v6922 = vld [vmem:[#allocation7 + $0xb58] sm:$0xff]
    %v6923 = vld [vmem:[#allocation7 + $0xb78] sm:$0xff]
    %v6924 = vld [vmem:[#allocation7 + $0xb98] sm:$0xff]
    %v6925 = vld [vmem:[#allocation7 + $0xbb8] sm:$0xff]
    %v6926 = vld [vmem:[#allocation7 + $0xbd8] sm:$0xff]
    %v6927 = vld [vmem:[#allocation7 + $0xbf8] sm:$0xff]
    %v6928 = vld [vmem:[#allocation7 + $0xc18] sm:$0xff]
    %v6929 = vld [vmem:[#allocation7 + $0xc38] sm:$0xff]
    %v6930 = vld [vmem:[#allocation7 + $0xc58] sm:$0xff]
    %v6931 = vld [vmem:[#allocation7 + $0xc78] sm:$0xff]
    %v6932 = vld [vmem:[#allocation7 + $0xc98] sm:$0xff]
    %v6933 = vld [vmem:[#allocation7 + $0xcb8] sm:$0xff]
    %v6934 = vld [vmem:[#allocation7 + $0xcd8] sm:$0xff]
    %v6935 = vld [vmem:[#allocation7 + $0xcf8] sm:$0xff]
    %v6936 = vld [vmem:[#allocation7 + $0xd18] sm:$0xff]
    %v6937 = vld [vmem:[#allocation7 + $0xd38] sm:$0xff]
    %v6938 = vld [vmem:[#allocation7 + $0xd58] sm:$0xff]
    %v6939 = vld [vmem:[#allocation7 + $0xd78] sm:$0xff]
    %v6940 = vld [vmem:[#allocation7 + $0xd98] sm:$0xff]
    %v6941 = vld [vmem:[#allocation7 + $0xdb8] sm:$0xff]
    %v6942 = vld [vmem:[#allocation7 + $0xdd8] sm:$0xff]
    %v6943 = vld [vmem:[#allocation7 + $0xdf8] sm:$0xff]
    %v6944 = vld [vmem:[#allocation7 + $0xe18] sm:$0xff]
    %v6945 = vld [vmem:[#allocation7 + $0xe38] sm:$0xff]
    %v6946 = vld [vmem:[#allocation7 + $0xe58] sm:$0xff]
    %v6947 = vld [vmem:[#allocation7 + $0xe78] sm:$0xff]
    %v6948 = vld [vmem:[#allocation7 + $0xe98] sm:$0xff]
    %v6949 = vld [vmem:[#allocation7 + $0xeb8] sm:$0xff]
    %v6950 = vld [vmem:[#allocation7 + $0xed8] sm:$0xff]
    %v6951 = vld [vmem:[#allocation7 + $0xef8] sm:$0xff]
    %v6952 = vld [vmem:[#allocation7 + $0xf18] sm:$0xff]
    %v6953 = vld [vmem:[#allocation7 + $0xf38] sm:$0xff]
    %v6954 = vld [vmem:[#allocation7 + $0xf58] sm:$0xff]
    %v6955 = vld [vmem:[#allocation7 + $0xf78] sm:$0xff]
    %v6956 = vld [vmem:[#allocation7 + $0xf98] sm:$0xff]
    %v6957 = vld [vmem:[#allocation7 + $0xfb8] sm:$0xff]
    %v6958 = vld [vmem:[#allocation7 + $0xfd8] sm:$0xff]
    %v6959 = vld [vmem:[#allocation7 + $0xff8] sm:$0xff]
    %v6960 = vld [vmem:[#allocation9 + $0x6] sm:$0x3]
    %v6962 = vlaneseq
    %v6963 = vshrl.u32 %v6962, 7
    %v6964 = vsub.s32 0, %v6963
    %v6965 = vrot.slane %v6960, %v6964
    %v6966 = vlaneseq
    %v6967 = vshrl.u32 %v6966, 7
    %v6968 = vsub.s32 1, %v6967
    %v6969 = vrot.slane %v6960, %v6968
    %v7100 = vunpack.c.l.b16 %v6832
    %v7101 = vunpack.c.h.b16 %v6832
    %v7102 = vunpack.c.l.b16 %v6833
    %v7103 = vunpack.c.h.b16 %v6833
    %v7104 = vunpack.c.l.b16 %v6834
    %v7105 = vunpack.c.h.b16 %v6834
    %v7106 = vunpack.c.l.b16 %v6835
    %v7107 = vunpack.c.h.b16 %v6835
    %v7108 = vunpack.c.l.b16 %v6836
    %v7109 = vunpack.c.h.b16 %v6836
    %v7110 = vunpack.c.l.b16 %v6837
    %v7111 = vunpack.c.h.b16 %v6837
    %v7112 = vunpack.c.l.b16 %v6838
    %v7113 = vunpack.c.h.b16 %v6838
    %v7114 = vunpack.c.l.b16 %v6839
    %v7115 = vunpack.c.h.b16 %v6839
    %v7116 = vunpack.c.l.b16 %v6840
    %v7117 = vunpack.c.h.b16 %v6840
    %v7118 = vunpack.c.l.b16 %v6841
    %v7119 = vunpack.c.h.b16 %v6841
    %v7120 = vunpack.c.l.b16 %v6842
    %v7121 = vunpack.c.h.b16 %v6842
    %v7122 = vunpack.c.l.b16 %v6843
    %v7123 = vunpack.c.h.b16 %v6843
    %v7124 = vunpack.c.l.b16 %v6844
    %v7125 = vunpack.c.h.b16 %v6844
    %v7126 = vunpack.c.l.b16 %v6845
    %v7127 = vunpack.c.h.b16 %v6845
    %v7128 = vunpack.c.l.b16 %v6846
    %v7129 = vunpack.c.h.b16 %v6846
    %v7130 = vunpack.c.l.b16 %v6847
    %v7131 = vunpack.c.h.b16 %v6847
    %v7132 = vunpack.c.l.b16 %v6848
    %v7133 = vunpack.c.h.b16 %v6848
    %v7134 = vunpack.c.l.b16 %v6849
    %v7135 = vunpack.c.h.b16 %v6849
    %v7136 = vunpack.c.l.b16 %v6850
    %v7137 = vunpack.c.h.b16 %v6850
    %v7138 = vunpack.c.l.b16 %v6851
    %v7139 = vunpack.c.h.b16 %v6851
    %v7140 = vunpack.c.l.b16 %v6852
    %v7141 = vunpack.c.h.b16 %v6852
    %v7142 = vunpack.c.l.b16 %v6853
    %v7143 = vunpack.c.h.b16 %v6853
    %v7144 = vunpack.c.l.b16 %v6854
    %v7145 = vunpack.c.h.b16 %v6854
    %v7146 = vunpack.c.l.b16 %v6855
    %v7147 = vunpack.c.h.b16 %v6855
    %v7148 = vunpack.c.l.b16 %v6856
    %v7149 = vunpack.c.h.b16 %v6856
    %v7150 = vunpack.c.l.b16 %v6857
    %v7151 = vunpack.c.h.b16 %v6857
    %v7152 = vunpack.c.l.b16 %v6858
    %v7153 = vunpack.c.h.b16 %v6858
    %v7154 = vunpack.c.l.b16 %v6859
    %v7155 = vunpack.c.h.b16 %v6859
    %v7156 = vunpack.c.l.b16 %v6860
    %v7157 = vunpack.c.h.b16 %v6860
    %v7158 = vunpack.c.l.b16 %v6861
    %v7159 = vunpack.c.h.b16 %v6861
    %v7160 = vunpack.c.l.b16 %v6862
    %v7161 = vunpack.c.h.b16 %v6862
    %v7162 = vunpack.c.l.b16 %v6863
    %v7163 = vunpack.c.h.b16 %v6863
    %v7164 = vunpack.c.l.b16 %v6864
    %v7165 = vunpack.c.h.b16 %v6864
    %v7166 = vunpack.c.l.b16 %v6865
    %v7167 = vunpack.c.h.b16 %v6865
    %v7168 = vunpack.c.l.b16 %v6866
    %v7169 = vunpack.c.h.b16 %v6866
    %v7170 = vunpack.c.l.b16 %v6867
    %v7171 = vunpack.c.h.b16 %v6867
    %v7172 = vunpack.c.l.b16 %v6868
    %v7173 = vunpack.c.h.b16 %v6868
    %v7174 = vunpack.c.l.b16 %v6869
    %v7175 = vunpack.c.h.b16 %v6869
    %v7176 = vunpack.c.l.b16 %v6870
    %v7177 = vunpack.c.h.b16 %v6870
    %v7178 = vunpack.c.l.b16 %v6871
    %v7179 = vunpack.c.h.b16 %v6871
    %v7180 = vunpack.c.l.b16 %v6872
    %v7181 = vunpack.c.h.b16 %v6872
    %v7182 = vunpack.c.l.b16 %v6873
    %v7183 = vunpack.c.h.b16 %v6873
    %v7184 = vunpack.c.l.b16 %v6874
    %v7185 = vunpack.c.h.b16 %v6874
    %v7186 = vunpack.c.l.b16 %v6875
    %v7187 = vunpack.c.h.b16 %v6875
    %v7188 = vunpack.c.l.b16 %v6876
    %v7189 = vunpack.c.h.b16 %v6876
    %v7190 = vunpack.c.l.b16 %v6877
    %v7191 = vunpack.c.h.b16 %v6877
    %v7192 = vunpack.c.l.b16 %v6878
    %v7193 = vunpack.c.h.b16 %v6878
    %v7194 = vunpack.c.l.b16 %v6879
    %v7195 = vunpack.c.h.b16 %v6879
    %v7196 = vunpack.c.l.b16 %v6880
    %v7197 = vunpack.c.h.b16 %v6880
    %v7198 = vunpack.c.l.b16 %v6881
    %v7199 = vunpack.c.h.b16 %v6881
    %v7200 = vunpack.c.l.b16 %v6882
    %v7201 = vunpack.c.h.b16 %v6882
    %v7202 = vunpack.c.l.b16 %v6883
    %v7203 = vunpack.c.h.b16 %v6883
    %v7204 = vunpack.c.l.b16 %v6884
    %v7205 = vunpack.c.h.b16 %v6884
    %v7206 = vunpack.c.l.b16 %v6885
    %v7207 = vunpack.c.h.b16 %v6885
    %v7208 = vunpack.c.l.b16 %v6886
    %v7209 = vunpack.c.h.b16 %v6886
    %v7210 = vunpack.c.l.b16 %v6887
    %v7211 = vunpack.c.h.b16 %v6887
    %v7212 = vunpack.c.l.b16 %v6888
    %v7213 = vunpack.c.h.b16 %v6888
    %v7214 = vunpack.c.l.b16 %v6889
    %v7215 = vunpack.c.h.b16 %v6889
    %v7216 = vunpack.c.l.b16 %v6890
    %v7217 = vunpack.c.h.b16 %v6890
    %v7218 = vunpack.c.l.b16 %v6891
    %v7219 = vunpack.c.h.b16 %v6891
    %v7220 = vunpack.c.l.b16 %v6892
    %v7221 = vunpack.c.h.b16 %v6892
    %v7222 = vunpack.c.l.b16 %v6893
    %v7223 = vunpack.c.h.b16 %v6893
    %v7224 = vunpack.c.l.b16 %v6894
    %v7225 = vunpack.c.h.b16 %v6894
    %v7226 = vunpack.c.l.b16 %v6895
    %v7227 = vunpack.c.h.b16 %v6895
    %v7228 = vunpack.c.l.b16 %v6896
    %v7229 = vunpack.c.h.b16 %v6896
    %v7230 = vunpack.c.l.b16 %v6897
    %v7231 = vunpack.c.h.b16 %v6897
    %v7232 = vunpack.c.l.b16 %v6898
    %v7233 = vunpack.c.h.b16 %v6898
    %v7234 = vunpack.c.l.b16 %v6899
    %v7235 = vunpack.c.h.b16 %v6899
    %v7236 = vunpack.c.l.b16 %v6900
    %v7237 = vunpack.c.h.b16 %v6900
    %v7238 = vunpack.c.l.b16 %v6901
    %v7239 = vunpack.c.h.b16 %v6901
    %v7240 = vunpack.c.l.b16 %v6902
    %v7241 = vunpack.c.h.b16 %v6902
    %v7242 = vunpack.c.l.b16 %v6903
    %v7243 = vunpack.c.h.b16 %v6903
    %v7244 = vunpack.c.l.b16 %v6904
    %v7245 = vunpack.c.h.b16 %v6904
    %v7246 = vunpack.c.l.b16 %v6905
    %v7247 = vunpack.c.h.b16 %v6905
    %v7248 = vunpack.c.l.b16 %v6906
    %v7249 = vunpack.c.h.b16 %v6906
    %v7250 = vunpack.c.l.b16 %v6907
    %v7251 = vunpack.c.h.b16 %v6907
    %v7252 = vunpack.c.l.b16 %v6908
    %v7253 = vunpack.c.h.b16 %v6908
    %v7254 = vunpack.c.l.b16 %v6909
    %v7255 = vunpack.c.h.b16 %v6909
    %v7256 = vunpack.c.l.b16 %v6910
    %v7257 = vunpack.c.h.b16 %v6910
    %v7258 = vunpack.c.l.b16 %v6911
    %v7259 = vunpack.c.h.b16 %v6911
    %v7260 = vunpack.c.l.b16 %v6912
    %v7261 = vunpack.c.h.b16 %v6912
    %v7262 = vunpack.c.l.b16 %v6913
    %v7263 = vunpack.c.h.b16 %v6913
    %v7264 = vunpack.c.l.b16 %v6914
    %v7265 = vunpack.c.h.b16 %v6914
    %v7266 = vunpack.c.l.b16 %v6915
    %v7267 = vunpack.c.h.b16 %v6915
    %v7268 = vunpack.c.l.b16 %v6916
    %v7269 = vunpack.c.h.b16 %v6916
    %v7270 = vunpack.c.l.b16 %v6917
    %v7271 = vunpack.c.h.b16 %v6917
    %v7272 = vunpack.c.l.b16 %v6918
    %v7273 = vunpack.c.h.b16 %v6918
    %v7274 = vunpack.c.l.b16 %v6919
    %v7275 = vunpack.c.h.b16 %v6919
    %v7276 = vunpack.c.l.b16 %v6920
    %v7277 = vunpack.c.h.b16 %v6920
    %v7278 = vunpack.c.l.b16 %v6921
    %v7279 = vunpack.c.h.b16 %v6921
    %v7280 = vunpack.c.l.b16 %v6922
    %v7281 = vunpack.c.h.b16 %v6922
    %v7282 = vunpack.c.l.b16 %v6923
    %v7283 = vunpack.c.h.b16 %v6923
    %v7284 = vunpack.c.l.b16 %v6924
    %v7285 = vunpack.c.h.b16 %v6924
    %v7286 = vunpack.c.l.b16 %v6925
    %v7287 = vunpack.c.h.b16 %v6925
    %v7288 = vunpack.c.l.b16 %v6926
    %v7289 = vunpack.c.h.b16 %v6926
    %v7290 = vunpack.c.l.b16 %v6927
    %v7291 = vunpack.c.h.b16 %v6927
    %v7292 = vunpack.c.l.b16 %v6928
    %v7293 = vunpack.c.h.b16 %v6928
    %v7294 = vunpack.c.l.b16 %v6929
    %v7295 = vunpack.c.h.b16 %v6929
    %v7296 = vunpack.c.l.b16 %v6930
    %v7297 = vunpack.c.h.b16 %v6930
    %v7298 = vunpack.c.l.b16 %v6931
    %v7299 = vunpack.c.h.b16 %v6931
    %v7300 = vunpack.c.l.b16 %v6932
    %v7301 = vunpack.c.h.b16 %v6932
    %v7302 = vunpack.c.l.b16 %v6933
    %v7303 = vunpack.c.h.b16 %v6933
    %v7304 = vunpack.c.l.b16 %v6934
    %v7305 = vunpack.c.h.b16 %v6934
    %v7306 = vunpack.c.l.b16 %v6935
    %v7307 = vunpack.c.h.b16 %v6935
    %v7308 = vunpack.c.l.b16 %v6936
    %v7309 = vunpack.c.h.b16 %v6936
    %v7310 = vunpack.c.l.b16 %v6937
    %v7311 = vunpack.c.h.b16 %v6937
    %v7312 = vunpack.c.l.b16 %v6938
    %v7313 = vunpack.c.h.b16 %v6938
    %v7314 = vunpack.c.l.b16 %v6939
    %v7315 = vunpack.c.h.b16 %v6939
    %v7316 = vunpack.c.l.b16 %v6940
    %v7317 = vunpack.c.h.b16 %v6940
    %v7318 = vunpack.c.l.b16 %v6941
    %v7319 = vunpack.c.h.b16 %v6941
    %v7320 = vunpack.c.l.b16 %v6942
    %v7321 = vunpack.c.h.b16 %v6942
    %v7322 = vunpack.c.l.b16 %v6943
    %v7323 = vunpack.c.h.b16 %v6943
    %v7324 = vunpack.c.l.b16 %v6944
    %v7325 = vunpack.c.h.b16 %v6944
    %v7326 = vunpack.c.l.b16 %v6945
    %v7327 = vunpack.c.h.b16 %v6945
    %v7328 = vunpack.c.l.b16 %v6946
    %v7329 = vunpack.c.h.b16 %v6946
    %v7330 = vunpack.c.l.b16 %v6947
    %v7331 = vunpack.c.h.b16 %v6947
    %v7332 = vunpack.c.l.b16 %v6948
    %v7333 = vunpack.c.h.b16 %v6948
    %v7334 = vunpack.c.l.b16 %v6949
    %v7335 = vunpack.c.h.b16 %v6949
    %v7336 = vunpack.c.l.b16 %v6950
    %v7337 = vunpack.c.h.b16 %v6950
    %v7338 = vunpack.c.l.b16 %v6951
    %v7339 = vunpack.c.h.b16 %v6951
    %v7340 = vunpack.c.l.b16 %v6952
    %v7341 = vunpack.c.h.b16 %v6952
    %v7342 = vunpack.c.l.b16 %v6953
    %v7343 = vunpack.c.h.b16 %v6953
    %v7344 = vunpack.c.l.b16 %v6954
    %v7345 = vunpack.c.h.b16 %v6954
    %v7346 = vunpack.c.l.b16 %v6955
    %v7347 = vunpack.c.h.b16 %v6955
    %v7348 = vunpack.c.l.b16 %v6956
    %v7349 = vunpack.c.h.b16 %v6956
    %v7350 = vunpack.c.l.b16 %v6957
    %v7351 = vunpack.c.h.b16 %v6957
    %v7352 = vunpack.c.l.b16 %v6958
    %v7353 = vunpack.c.h.b16 %v6958
    %v7354 = vunpack.c.l.b16 %v6959
    %v7355 = vunpack.c.h.b16 %v6959
    %v7356 = vpack.c.b16 %v7102, %v7100
    %v7357 = vpack.c.b16 %v7103, %v7101
    %v7358 = vpack.c.b16 %v7106, %v7104
    %v7359 = vpack.c.b16 %v7107, %v7105
    %v7360 = vpack.c.b16 %v7110, %v7108
    %v7361 = vpack.c.b16 %v7111, %v7109
    %v7362 = vpack.c.b16 %v7114, %v7112
    %v7363 = vpack.c.b16 %v7115, %v7113
    %v7364 = vpack.c.b16 %v7118, %v7116
    %v7365 = vpack.c.b16 %v7119, %v7117
    %v7366 = vpack.c.b16 %v7122, %v7120
    %v7367 = vpack.c.b16 %v7123, %v7121
    %v7368 = vpack.c.b16 %v7126, %v7124
    %v7369 = vpack.c.b16 %v7127, %v7125
    %v7370 = vpack.c.b16 %v7130, %v7128
    %v7371 = vpack.c.b16 %v7131, %v7129
    %v7372 = vpack.c.b16 %v7134, %v7132
    %v7373 = vpack.c.b16 %v7135, %v7133
    %v7374 = vpack.c.b16 %v7138, %v7136
    %v7375 = vpack.c.b16 %v7139, %v7137
    %v7376 = vpack.c.b16 %v7142, %v7140
    %v7377 = vpack.c.b16 %v7143, %v7141
    %v7378 = vpack.c.b16 %v7146, %v7144
    %v7379 = vpack.c.b16 %v7147, %v7145
    %v7380 = vpack.c.b16 %v7150, %v7148
    %v7381 = vpack.c.b16 %v7151, %v7149
    %v7382 = vpack.c.b16 %v7154, %v7152
    %v7383 = vpack.c.b16 %v7155, %v7153
    %v7384 = vpack.c.b16 %v7158, %v7156
    %v7385 = vpack.c.b16 %v7159, %v7157
    %v7386 = vpack.c.b16 %v7162, %v7160
    %v7387 = vpack.c.b16 %v7163, %v7161
    %v7388 = vpack.c.b16 %v7166, %v7164
    %v7389 = vpack.c.b16 %v7167, %v7165
    %v7390 = vpack.c.b16 %v7170, %v7168
    %v7391 = vpack.c.b16 %v7171, %v7169
    %v7392 = vpack.c.b16 %v7174, %v7172
    %v7393 = vpack.c.b16 %v7175, %v7173
    %v7394 = vpack.c.b16 %v7178, %v7176
    %v7395 = vpack.c.b16 %v7179, %v7177
    %v7396 = vpack.c.b16 %v7182, %v7180
    %v7397 = vpack.c.b16 %v7183, %v7181
    %v7398 = vpack.c.b16 %v7186, %v7184
    %v7399 = vpack.c.b16 %v7187, %v7185
    %v7400 = vpack.c.b16 %v7190, %v7188
    %v7401 = vpack.c.b16 %v7191, %v7189
    %v7402 = vpack.c.b16 %v7194, %v7192
    %v7403 = vpack.c.b16 %v7195, %v7193
    %v7404 = vpack.c.b16 %v7198, %v7196
    %v7405 = vpack.c.b16 %v7199, %v7197
    %v7406 = vpack.c.b16 %v7202, %v7200
    %v7407 = vpack.c.b16 %v7203, %v7201
    %v7408 = vpack.c.b16 %v7206, %v7204
    %v7409 = vpack.c.b16 %v7207, %v7205
    %v7410 = vpack.c.b16 %v7210, %v7208
    %v7411 = vpack.c.b16 %v7211, %v7209
    %v7412 = vpack.c.b16 %v7214, %v7212
    %v7413 = vpack.c.b16 %v7215, %v7213
    %v7414 = vpack.c.b16 %v7218, %v7216
    %v7415 = vpack.c.b16 %v7219, %v7217
    %v7416 = vpack.c.b16 %v7222, %v7220
    %v7417 = vpack.c.b16 %v7223, %v7221
    %v7418 = vpack.c.b16 %v7226, %v7224
    %v7419 = vpack.c.b16 %v7227, %v7225
    %v7420 = vpack.c.b16 %v7230, %v7228
    %v7421 = vpack.c.b16 %v7231, %v7229
    %v7422 = vpack.c.b16 %v7234, %v7232
    %v7423 = vpack.c.b16 %v7235, %v7233
    %v7424 = vpack.c.b16 %v7238, %v7236
    %v7425 = vpack.c.b16 %v7239, %v7237
    %v7426 = vpack.c.b16 %v7242, %v7240
    %v7427 = vpack.c.b16 %v7243, %v7241
    %v7428 = vpack.c.b16 %v7246, %v7244
    %v7429 = vpack.c.b16 %v7247, %v7245
    %v7430 = vpack.c.b16 %v7250, %v7248
    %v7431 = vpack.c.b16 %v7251, %v7249
    %v7432 = vpack.c.b16 %v7254, %v7252
    %v7433 = vpack.c.b16 %v7255, %v7253
    %v7434 = vpack.c.b16 %v7258, %v7256
    %v7435 = vpack.c.b16 %v7259, %v7257
    %v7436 = vpack.c.b16 %v7262, %v7260
    %v7437 = vpack.c.b16 %v7263, %v7261
    %v7438 = vpack.c.b16 %v7266, %v7264
    %v7439 = vpack.c.b16 %v7267, %v7265
    %v7440 = vpack.c.b16 %v7270, %v7268
    %v7441 = vpack.c.b16 %v7271, %v7269
    %v7442 = vpack.c.b16 %v7274, %v7272
    %v7443 = vpack.c.b16 %v7275, %v7273
    %v7444 = vpack.c.b16 %v7278, %v7276
    %v7445 = vpack.c.b16 %v7279, %v7277
    %v7446 = vpack.c.b16 %v7282, %v7280
    %v7447 = vpack.c.b16 %v7283, %v7281
    %v7448 = vpack.c.b16 %v7286, %v7284
    %v7449 = vpack.c.b16 %v7287, %v7285
    %v7450 = vpack.c.b16 %v7290, %v7288
    %v7451 = vpack.c.b16 %v7291, %v7289
    %v7452 = vpack.c.b16 %v7294, %v7292
    %v7453 = vpack.c.b16 %v7295, %v7293
    %v7454 = vpack.c.b16 %v7298, %v7296
    %v7455 = vpack.c.b16 %v7299, %v7297
    %v7456 = vpack.c.b16 %v7302, %v7300
    %v7457 = vpack.c.b16 %v7303, %v7301
    %v7458 = vpack.c.b16 %v7306, %v7304
    %v7459 = vpack.c.b16 %v7307, %v7305
    %v7460 = vpack.c.b16 %v7310, %v7308
    %v7461 = vpack.c.b16 %v7311, %v7309
    %v7462 = vpack.c.b16 %v7314, %v7312
    %v7463 = vpack.c.b16 %v7315, %v7313
    %v7464 = vpack.c.b16 %v7318, %v7316
    %v7465 = vpack.c.b16 %v7319, %v7317
    %v7466 = vpack.c.b16 %v7322, %v7320
    %v7467 = vpack.c.b16 %v7323, %v7321
    %v7468 = vpack.c.b16 %v7326, %v7324
    %v7469 = vpack.c.b16 %v7327, %v7325
    %v7470 = vpack.c.b16 %v7330, %v7328
    %v7471 = vpack.c.b16 %v7331, %v7329
    %v7472 = vpack.c.b16 %v7334, %v7332
    %v7473 = vpack.c.b16 %v7335, %v7333
    %v7474 = vpack.c.b16 %v7338, %v7336
    %v7475 = vpack.c.b16 %v7339, %v7337
    %v7476 = vpack.c.b16 %v7342, %v7340
    %v7477 = vpack.c.b16 %v7343, %v7341
    %v7478 = vpack.c.b16 %v7346, %v7344
    %v7479 = vpack.c.b16 %v7347, %v7345
    %v7480 = vpack.c.b16 %v7350, %v7348
    %v7481 = vpack.c.b16 %v7351, %v7349
    %v7482 = vpack.c.b16 %v7354, %v7352
    %v7483 = vpack.c.b16 %v7355, %v7353
    %7612 = vmatprep.subr.bf16.mxu0 %v7357
    %7613 = vmatpush1.bf16.msra.mxu0 %v7356
    %7614 = vmatprep.subr.bf16.mxu0 %v7359
    %7615 = vmatpush1.bf16.msra.mxu0 %v7358
    %7616 = vmatprep.subr.bf16.mxu0 %v7361
    %7617 = vmatpush1.bf16.msra.mxu0 %v7360
    %7618 = vmatprep.subr.bf16.mxu0 %v7363
    %7619 = vmatpush1.bf16.msra.mxu0 %v7362
    %7620 = vmatprep.subr.bf16.mxu0 %v7365
    %7621 = vmatpush1.bf16.msra.mxu0 %v7364
    %7622 = vmatprep.subr.bf16.mxu0 %v7367
    %7623 = vmatpush1.bf16.msra.mxu0 %v7366
    %7624 = vmatprep.subr.bf16.mxu0 %v7369
    %7625 = vmatpush1.bf16.msra.mxu0 %v7368
    %7626 = vmatprep.subr.bf16.mxu0 %v7371
    %7627 = vmatpush1.bf16.msra.mxu0 %v7370
    %7628 = vmatprep.subr.bf16.mxu0 %v7373
    %7629 = vmatpush1.bf16.msra.mxu0 %v7372
    %7630 = vmatprep.subr.bf16.mxu0 %v7375
    %7631 = vmatpush1.bf16.msra.mxu0 %v7374
    %7632 = vmatprep.subr.bf16.mxu0 %v7377
    %7633 = vmatpush1.bf16.msra.mxu0 %v7376
    %7634 = vmatprep.subr.bf16.mxu0 %v7379
    %7635 = vmatpush1.bf16.msra.mxu0 %v7378
    %7636 = vmatprep.subr.bf16.mxu0 %v7381
    %7637 = vmatpush1.bf16.msra.mxu0 %v7380
    %7638 = vmatprep.subr.bf16.mxu0 %v7383
    %7639 = vmatpush1.bf16.msra.mxu0 %v7382
    %7640 = vmatprep.subr.bf16.mxu0 %v7385
    %7641 = vmatpush1.bf16.msra.mxu0 %v7384
    %7642 = vmatprep.subr.bf16.mxu0 %v7387
    %7643 = vmatpush1.bf16.msra.mxu0 %v7386
    %7644 = vmatprep.mubr.bf16.mxu0 %v3987
    %7645 = vmatmul.mubr.bf16.gmra.mrb[0].mxu0 %v3986
    %v7646 = vpop.f32.mrb[0].mxu0
    %v7647 = vadd.f32 %v6965, %v7646
    %v7648 = vpop.f32.mrb[0].mxu0
    %v7649 = vadd.f32 %v6969, %v7648
    %v7650 = vpop.f32.mrb[0].mxu0
    %v7651 = vpop.f32.mrb[0].mxu0
    %7652 = vdwg.mxu0
    %7653 = vmatprep.subr.bf16.mxu0 %v7389
    %7654 = vmatpush1.bf16.msra.mxu0 %v7388
    %7655 = vmatprep.subr.bf16.mxu0 %v7391
    %7656 = vmatpush1.bf16.msra.mxu0 %v7390
    %7657 = vmatprep.subr.bf16.mxu0 %v7393
    %7658 = vmatpush1.bf16.msra.mxu0 %v7392
    %7659 = vmatprep.subr.bf16.mxu0 %v7395
    %7660 = vmatpush1.bf16.msra.mxu0 %v7394
    %7661 = vmatprep.subr.bf16.mxu0 %v7397
    %7662 = vmatpush1.bf16.msra.mxu0 %v7396
    %7663 = vmatprep.subr.bf16.mxu0 %v7399
    %7664 = vmatpush1.bf16.msra.mxu0 %v7398
    %7665 = vmatprep.subr.bf16.mxu0 %v7401
    %7666 = vmatpush1.bf16.msra.mxu0 %v7400
    %7667 = vmatprep.subr.bf16.mxu0 %v7403
    %7668 = vmatpush1.bf16.msra.mxu0 %v7402
    %7669 = vmatprep.subr.bf16.mxu0 %v7405
    %7670 = vmatpush1.bf16.msra.mxu0 %v7404
    %7671 = vmatprep.subr.bf16.mxu0 %v7407
    %7672 = vmatpush1.bf16.msra.mxu0 %v7406
    %7673 = vmatprep.subr.bf16.mxu0 %v7409
    %7674 = vmatpush1.bf16.msra.mxu0 %v7408
    %7675 = vmatprep.subr.bf16.mxu0 %v7411
    %7676 = vmatpush1.bf16.msra.mxu0 %v7410
    %7677 = vmatprep.subr.bf16.mxu0 %v7413
    %7678 = vmatpush1.bf16.msra.mxu0 %v7412
    %7679 = vmatprep.subr.bf16.mxu0 %v7415
    %7680 = vmatpush1.bf16.msra.mxu0 %v7414
    %7681 = vmatprep.subr.bf16.mxu0 %v7417
    %7682 = vmatpush1.bf16.msra.mxu0 %v7416
    %7683 = vmatprep.subr.bf16.mxu0 %v7419
    %7684 = vmatpush1.bf16.msra.mxu0 %v7418
    %7685 = vmatprep.mubr.bf16.mxu0 %v3989
    %7686 = vmatmul.mubr.bf16.gmra.mrb[0].mxu0 %v3988
    %v7687 = vpop.f32.mrb[0].mxu0
    %v7688 = vadd.f32 %v7647, %v7687
    %v7689 = vpop.f32.mrb[0].mxu0
    %v7690 = vadd.f32 %v7649, %v7689
    %v7691 = vpop.f32.mrb[0].mxu0
    %v7692 = vpop.f32.mrb[0].mxu0
    %7693 = vdwg.mxu0
    %7694 = vmatprep.subr.bf16.mxu0 %v7421
    %7695 = vmatpush1.bf16.msra.mxu0 %v7420
    %7696 = vmatprep.subr.bf16.mxu0 %v7423
    %7697 = vmatpush1.bf16.msra.mxu0 %v7422
    %7698 = vmatprep.subr.bf16.mxu0 %v7425
    %7699 = vmatpush1.bf16.msra.mxu0 %v7424
    %7700 = vmatprep.subr.bf16.mxu0 %v7427
    %7701 = vmatpush1.bf16.msra.mxu0 %v7426
    %7702 = vmatprep.subr.bf16.mxu0 %v7429
    %7703 = vmatpush1.bf16.msra.mxu0 %v7428
    %7704 = vmatprep.subr.bf16.mxu0 %v7431
    %7705 = vmatpush1.bf16.msra.mxu0 %v7430
    %7706 = vmatprep.subr.bf16.mxu0 %v7433
    %7707 = vmatpush1.bf16.msra.mxu0 %v7432
    %7708 = vmatprep.subr.bf16.mxu0 %v7435
    %7709 = vmatpush1.bf16.msra.mxu0 %v7434
    %7710 = vmatprep.subr.bf16.mxu0 %v7437
    %7711 = vmatpush1.bf16.msra.mxu0 %v7436
    %7712 = vmatprep.subr.bf16.mxu0 %v7439
    %7713 = vmatpush1.bf16.msra.mxu0 %v7438
    %7714 = vmatprep.subr.bf16.mxu0 %v7441
    %7715 = vmatpush1.bf16.msra.mxu0 %v7440
    %7716 = vmatprep.subr.bf16.mxu0 %v7443
    %7717 = vmatpush1.bf16.msra.mxu0 %v7442
    %7718 = vmatprep.subr.bf16.mxu0 %v7445
    %7719 = vmatpush1.bf16.msra.mxu0 %v7444
    %7720 = vmatprep.subr.bf16.mxu0 %v7447
    %7721 = vmatpush1.bf16.msra.mxu0 %v7446
    %7722 = vmatprep.subr.bf16.mxu0 %v7449
    %7723 = vmatpush1.bf16.msra.mxu0 %v7448
    %7724 = vmatprep.subr.bf16.mxu0 %v7451
    %7725 = vmatpush1.bf16.msra.mxu0 %v7450
    %7726 = vmatprep.mubr.bf16.mxu0 %v3991
    %7727 = vmatmul.mubr.bf16.gmra.mrb[0].mxu0 %v3990
    %v7728 = vpop.f32.mrb[0].mxu0
    %v7729 = vadd.f32 %v7688, %v7728
    %v7730 = vpop.f32.mrb[0].mxu0
    %v7731 = vadd.f32 %v7690, %v7730
    %v7732 = vpop.f32.mrb[0].mxu0
    %v7733 = vpop.f32.mrb[0].mxu0
    %7734 = vdwg.mxu0
    %7735 = vmatprep.subr.bf16.mxu0 %v7453
    %7736 = vmatpush1.bf16.msra.mxu0 %v7452
    %7737 = vmatprep.subr.bf16.mxu0 %v7455
    %7738 = vmatpush1.bf16.msra.mxu0 %v7454
    %7739 = vmatprep.subr.bf16.mxu0 %v7457
    %7740 = vmatpush1.bf16.msra.mxu0 %v7456
    %7741 = vmatprep.subr.bf16.mxu0 %v7459
    %7742 = vmatpush1.bf16.msra.mxu0 %v7458
    %7743 = vmatprep.subr.bf16.mxu0 %v7461
    %7744 = vmatpush1.bf16.msra.mxu0 %v7460
    %7745 = vmatprep.subr.bf16.mxu0 %v7463
    %7746 = vmatpush1.bf16.msra.mxu0 %v7462
    %7747 = vmatprep.subr.bf16.mxu0 %v7465
    %7748 = vmatpush1.bf16.msra.mxu0 %v7464
    %7749 = vmatprep.subr.bf16.mxu0 %v7467
    %7750 = vmatpush1.bf16.msra.mxu0 %v7466
    %7751 = vmatprep.subr.bf16.mxu0 %v7469
    %7752 = vmatpush1.bf16.msra.mxu0 %v7468
    %7753 = vmatprep.subr.bf16.mxu0 %v7471
    %7754 = vmatpush1.bf16.msra.mxu0 %v7470
    %7755 = vmatprep.subr.bf16.mxu0 %v7473
    %7756 = vmatpush1.bf16.msra.mxu0 %v7472
    %7757 = vmatprep.subr.bf16.mxu0 %v7475
    %7758 = vmatpush1.bf16.msra.mxu0 %v7474
    %7759 = vmatprep.subr.bf16.mxu0 %v7477
    %7760 = vmatpush1.bf16.msra.mxu0 %v7476
    %7761 = vmatprep.subr.bf16.mxu0 %v7479
    %7762 = vmatpush1.bf16.msra.mxu0 %v7478
    %7763 = vmatprep.subr.bf16.mxu0 %v7481
    %7764 = vmatpush1.bf16.msra.mxu0 %v7480
    %7765 = vmatprep.subr.bf16.mxu0 %v7483
    %7766 = vmatpush1.bf16.msra.mxu0 %v7482
    %7767 = vmatprep.mubr.bf16.mxu0 %v3993
    %7768 = vmatmul.mubr.bf16.gmra.mrb[0].mxu0 %v3992
    %v7769 = vpop.f32.mrb[0].mxu0
    %v7770 = vadd.f32 %v7729, %v7769
    %v7771 = vpop.f32.mrb[0].mxu0
    %v7772 = vadd.f32 %v7731, %v7771
    %v7773 = vpop.f32.mrb[0].mxu0
    %v7774 = vpop.f32.mrb[0].mxu0
    %7775 = vdwg.mxu0
    %v7776 = vmax.f32 %v7770, 0.0
    %v7777 = vmax.f32 %v7772, 0.0
    %v7778 = vld [vmem:[%s5] sm:$0xff]
    %v7779 = vld [vmem:[%s5 + $0x8] sm:$0xff]
    %v7780 = vld [vmem:[%s5 + $0x10] sm:$0xff]
    %v7781 = vld [vmem:[%s5 + $0x18] sm:$0xff]
    %v7782 = vld [vmem:[%s5 + $0x20] sm:$0xff]
    %v7783 = vld [vmem:[%s5 + $0x28] sm:$0xff]
    %v7784 = vld [vmem:[%s5 + $0x30] sm:$0xff]
    %v7785 = vld [vmem:[%s5 + $0x38] sm:$0xff]
    %v7786 = vld [vmem:[%s5 + $0x40] sm:$0xff]
    %v7787 = vld [vmem:[%s5 + $0x48] sm:$0xff]
    %v7788 = vld [vmem:[%s5 + $0x50] sm:$0xff]
    %v7789 = vld [vmem:[%s5 + $0x58] sm:$0xff]
    %v7790 = vld [vmem:[%s5 + $0x60] sm:$0xff]
    %v7791 = vld [vmem:[%s5 + $0x68] sm:$0xff]
    %v7792 = vld [vmem:[%s5 + $0x70] sm:$0xff]
    %v7793 = vld [vmem:[%s5 + $0x78] sm:$0xff]
    %v7794 = vld [vmem:[%s5 + $0x80] sm:$0xff]
    %v7795 = vld [vmem:[%s5 + $0x88] sm:$0xff]
    %v7796 = vld [vmem:[%s5 + $0x90] sm:$0xff]
    %v7797 = vld [vmem:[%s5 + $0x98] sm:$0xff]
    %v7798 = vld [vmem:[%s5 + $0xa0] sm:$0xff]
    %v7799 = vld [vmem:[%s5 + $0xa8] sm:$0xff]
    %v7800 = vld [vmem:[%s5 + $0xb0] sm:$0xff]
    %v7801 = vld [vmem:[%s5 + $0xb8] sm:$0xff]
    %v7802 = vld [vmem:[%s5 + $0xc0] sm:$0xff]
    %v7803 = vld [vmem:[%s5 + $0xc8] sm:$0xff]
    %v7804 = vld [vmem:[%s5 + $0xd0] sm:$0xff]
    %v7805 = vld [vmem:[%s5 + $0xd8] sm:$0xff]
    %v7806 = vld [vmem:[%s5 + $0xe0] sm:$0xff]
    %v7807 = vld [vmem:[%s5 + $0xe8] sm:$0xff]
    %v7808 = vld [vmem:[%s5 + $0xf0] sm:$0xff]
    %v7809 = vld [vmem:[%s5 + $0xf8] sm:$0xff]
    %v7810 = vld [vmem:[%s5 + $0x100] sm:$0xff]
    %v7811 = vld [vmem:[%s5 + $0x108] sm:$0xff]
    %v7812 = vld [vmem:[%s5 + $0x110] sm:$0xff]
    %v7813 = vld [vmem:[%s5 + $0x118] sm:$0xff]
    %v7814 = vld [vmem:[%s5 + $0x120] sm:$0xff]
    %v7815 = vld [vmem:[%s5 + $0x128] sm:$0xff]
    %v7816 = vld [vmem:[%s5 + $0x130] sm:$0xff]
    %v7817 = vld [vmem:[%s5 + $0x138] sm:$0xff]
    %v7818 = vld [vmem:[%s5 + $0x140] sm:$0xff]
    %v7819 = vld [vmem:[%s5 + $0x148] sm:$0xff]
    %v7820 = vld [vmem:[%s5 + $0x150] sm:$0xff]
    %v7821 = vld [vmem:[%s5 + $0x158] sm:$0xff]
    %v7822 = vld [vmem:[%s5 + $0x160] sm:$0xff]
    %v7823 = vld [vmem:[%s5 + $0x168] sm:$0xff]
    %v7824 = vld [vmem:[%s5 + $0x170] sm:$0xff]
    %v7825 = vld [vmem:[%s5 + $0x178] sm:$0xff]
    %v7826 = vld [vmem:[%s5 + $0x180] sm:$0xff]
    %v7827 = vld [vmem:[%s5 + $0x188] sm:$0xff]
    %v7828 = vld [vmem:[%s5 + $0x190] sm:$0xff]
    %v7829 = vld [vmem:[%s5 + $0x198] sm:$0xff]
    %v7830 = vld [vmem:[%s5 + $0x1a0] sm:$0xff]
    %v7831 = vld [vmem:[%s5 + $0x1a8] sm:$0xff]
    %v7832 = vld [vmem:[%s5 + $0x1b0] sm:$0xff]
    %v7833 = vld [vmem:[%s5 + $0x1b8] sm:$0xff]
    %v7834 = vld [vmem:[%s5 + $0x1c0] sm:$0xff]
    %v7835 = vld [vmem:[%s5 + $0x1c8] sm:$0xff]
    %v7836 = vld [vmem:[%s5 + $0x1d0] sm:$0xff]
    %v7837 = vld [vmem:[%s5 + $0x1d8] sm:$0xff]
    %v7838 = vld [vmem:[%s5 + $0x1e0] sm:$0xff]
    %v7839 = vld [vmem:[%s5 + $0x1e8] sm:$0xff]
    %v7840 = vld [vmem:[%s5 + $0x1f0] sm:$0xff]
    %v7841 = vld [vmem:[%s5 + $0x1f8] sm:$0xff]
    %v7842 = vld [vmem:[%s5 + $0x200] sm:$0xff]
    %v7843 = vld [vmem:[%s5 + $0x208] sm:$0xff]
    %v7844 = vld [vmem:[%s5 + $0x210] sm:$0xff]
    %v7845 = vld [vmem:[%s5 + $0x218] sm:$0xff]
    %v7846 = vld [vmem:[%s5 + $0x220] sm:$0xff]
    %v7847 = vld [vmem:[%s5 + $0x228] sm:$0xff]
    %v7848 = vld [vmem:[%s5 + $0x230] sm:$0xff]
    %v7849 = vld [vmem:[%s5 + $0x238] sm:$0xff]
    %v7850 = vld [vmem:[%s5 + $0x240] sm:$0xff]
    %v7851 = vld [vmem:[%s5 + $0x248] sm:$0xff]
    %v7852 = vld [vmem:[%s5 + $0x250] sm:$0xff]
    %v7853 = vld [vmem:[%s5 + $0x258] sm:$0xff]
    %v7854 = vld [vmem:[%s5 + $0x260] sm:$0xff]
    %v7855 = vld [vmem:[%s5 + $0x268] sm:$0xff]
    %v7856 = vld [vmem:[%s5 + $0x270] sm:$0xff]
    %v7857 = vld [vmem:[%s5 + $0x278] sm:$0xff]
    %v7858 = vld [vmem:[%s5 + $0x280] sm:$0xff]
    %v7859 = vld [vmem:[%s5 + $0x288] sm:$0xff]
    %v7860 = vld [vmem:[%s5 + $0x290] sm:$0xff]
    %v7861 = vld [vmem:[%s5 + $0x298] sm:$0xff]
    %v7862 = vld [vmem:[%s5 + $0x2a0] sm:$0xff]
    %v7863 = vld [vmem:[%s5 + $0x2a8] sm:$0xff]
    %v7864 = vld [vmem:[%s5 + $0x2b0] sm:$0xff]
    %v7865 = vld [vmem:[%s5 + $0x2b8] sm:$0xff]
    %v7866 = vld [vmem:[%s5 + $0x2c0] sm:$0xff]
    %v7867 = vld [vmem:[%s5 + $0x2c8] sm:$0xff]
    %v7868 = vld [vmem:[%s5 + $0x2d0] sm:$0xff]
    %v7869 = vld [vmem:[%s5 + $0x2d8] sm:$0xff]
    %v7870 = vld [vmem:[%s5 + $0x2e0] sm:$0xff]
    %v7871 = vld [vmem:[%s5 + $0x2e8] sm:$0xff]
    %v7872 = vld [vmem:[%s5 + $0x2f0] sm:$0xff]
    %v7873 = vld [vmem:[%s5 + $0x2f8] sm:$0xff]
    %v7874 = vld [vmem:[%s5 + $0x300] sm:$0xff]
    %v7875 = vld [vmem:[%s5 + $0x308] sm:$0xff]
    %v7876 = vld [vmem:[%s5 + $0x310] sm:$0xff]
    %v7877 = vld [vmem:[%s5 + $0x318] sm:$0xff]
    %v7878 = vld [vmem:[%s5 + $0x320] sm:$0xff]
    %v7879 = vld [vmem:[%s5 + $0x328] sm:$0xff]
    %v7880 = vld [vmem:[%s5 + $0x330] sm:$0xff]
    %v7881 = vld [vmem:[%s5 + $0x338] sm:$0xff]
    %v7882 = vld [vmem:[%s5 + $0x340] sm:$0xff]
    %v7883 = vld [vmem:[%s5 + $0x348] sm:$0xff]
    %v7884 = vld [vmem:[%s5 + $0x350] sm:$0xff]
    %v7885 = vld [vmem:[%s5 + $0x358] sm:$0xff]
    %v7886 = vld [vmem:[%s5 + $0x360] sm:$0xff]
    %v7887 = vld [vmem:[%s5 + $0x368] sm:$0xff]
    %v7888 = vld [vmem:[%s5 + $0x370] sm:$0xff]
    %v7889 = vld [vmem:[%s5 + $0x378] sm:$0xff]
    %v7890 = vld [vmem:[%s5 + $0x380] sm:$0xff]
    %v7891 = vld [vmem:[%s5 + $0x388] sm:$0xff]
    %v7892 = vld [vmem:[%s5 + $0x390] sm:$0xff]
    %v7893 = vld [vmem:[%s5 + $0x398] sm:$0xff]
    %v7894 = vld [vmem:[%s5 + $0x3a0] sm:$0xff]
    %v7895 = vld [vmem:[%s5 + $0x3a8] sm:$0xff]
    %v7896 = vld [vmem:[%s5 + $0x3b0] sm:$0xff]
    %v7897 = vld [vmem:[%s5 + $0x3b8] sm:$0xff]
    %v7898 = vld [vmem:[%s5 + $0x3c0] sm:$0xff]
    %v7899 = vld [vmem:[%s5 + $0x3c8] sm:$0xff]
    %v7900 = vld [vmem:[%s5 + $0x3d0] sm:$0xff]
    %v7901 = vld [vmem:[%s5 + $0x3d8] sm:$0xff]
    %v7902 = vld [vmem:[%s5 + $0x3e0] sm:$0xff]
    %v7903 = vld [vmem:[%s5 + $0x3e8] sm:$0xff]
    %v7904 = vld [vmem:[%s5 + $0x3f0] sm:$0xff]
    %v7905 = vld [vmem:[%s5 + $0x3f8] sm:$0xff]
    %v7906 = vld [vmem:[#allocation10] sm:$0x1]
    %v7908 = vlaneseq
    %v7909 = vshrl.u32 %v7908, 7
    %v7910 = vsub.s32 0, %v7909
    %v7911 = vrot.slane %v7906, %v7910
    %7913 = vmatprep.subr.mxu0 0.0
    %7914 = vmatpush1.msra.mxu0 %v7778
    %7915 = vmatprep.subr.mxu0 0.0
    %7916 = vmatpush1.msra.mxu0 %v7779
    %7917 = vmatprep.subr.mxu0 0.0
    %7918 = vmatpush1.msra.mxu0 %v7780
    %7919 = vmatprep.subr.mxu0 0.0
    %7920 = vmatpush1.msra.mxu0 %v7781
    %7921 = vmatprep.subr.mxu0 0.0
    %7922 = vmatpush1.msra.mxu0 %v7782
    %7923 = vmatprep.subr.mxu0 0.0
    %7924 = vmatpush1.msra.mxu0 %v7783
    %7925 = vmatprep.subr.mxu0 0.0
    %7926 = vmatpush1.msra.mxu0 %v7784
    %7927 = vmatprep.subr.mxu0 0.0
    %7928 = vmatpush1.msra.mxu0 %v7785
    %7929 = vmatprep.subr.mxu0 0.0
    %7930 = vmatpush1.msra.mxu0 %v7786
    %7931 = vmatprep.subr.mxu0 0.0
    %7932 = vmatpush1.msra.mxu0 %v7787
    %7933 = vmatprep.subr.mxu0 0.0
    %7934 = vmatpush1.msra.mxu0 %v7788
    %7935 = vmatprep.subr.mxu0 0.0
    %7936 = vmatpush1.msra.mxu0 %v7789
    %7937 = vmatprep.subr.mxu0 0.0
    %7938 = vmatpush1.msra.mxu0 %v7790
    %7939 = vmatprep.subr.mxu0 0.0
    %7940 = vmatpush1.msra.mxu0 %v7791
    %7941 = vmatprep.subr.mxu0 0.0
    %7942 = vmatpush1.msra.mxu0 %v7792
    %7943 = vmatprep.subr.mxu0 0.0
    %7944 = vmatpush1.msra.mxu0 %v7793
    %7945 = vmatprep.subr.mxu0 0.0
    %7946 = vmatpush1.msra.mxu0 %v7794
    %7947 = vmatprep.subr.mxu0 0.0
    %7948 = vmatpush1.msra.mxu0 %v7795
    %7949 = vmatprep.subr.mxu0 0.0
    %7950 = vmatpush1.msra.mxu0 %v7796
    %7951 = vmatprep.subr.mxu0 0.0
    %7952 = vmatpush1.msra.mxu0 %v7797
    %7953 = vmatprep.subr.mxu0 0.0
    %7954 = vmatpush1.msra.mxu0 %v7798
    %7955 = vmatprep.subr.mxu0 0.0
    %7956 = vmatpush1.msra.mxu0 %v7799
    %7957 = vmatprep.subr.mxu0 0.0
    %7958 = vmatpush1.msra.mxu0 %v7800
    %7959 = vmatprep.subr.mxu0 0.0
    %7960 = vmatpush1.msra.mxu0 %v7801
    %7961 = vmatprep.subr.mxu0 0.0
    %7962 = vmatpush1.msra.mxu0 %v7802
    %7963 = vmatprep.subr.mxu0 0.0
    %7964 = vmatpush1.msra.mxu0 %v7803
    %7965 = vmatprep.subr.mxu0 0.0
    %7966 = vmatpush1.msra.mxu0 %v7804
    %7967 = vmatprep.subr.mxu0 0.0
    %7968 = vmatpush1.msra.mxu0 %v7805
    %7969 = vmatprep.subr.mxu0 0.0
    %7970 = vmatpush1.msra.mxu0 %v7806
    %7971 = vmatprep.subr.mxu0 0.0
    %7972 = vmatpush1.msra.mxu0 %v7807
    %7973 = vmatprep.subr.mxu0 0.0
    %7974 = vmatpush1.msra.mxu0 %v7808
    %7975 = vmatprep.subr.mxu0 0.0
    %7976 = vmatpush1.msra.mxu0 %v7809
    %7977 = vmatprep.mubr.f32.mxu0 %v4939
    %7978 = vmatmul.mubr.f32.gmra.mrb[0].mxu0 %v4938
    %v7979 = vpop.f32.mrb[0].mxu0
    %v7980 = vadd.f32 %v7911, %v7979
    %v7981 = vpop.f32.mrb[0].mxu0
    %7982 = vdwg.mxu0
    %7983 = vmatprep.subr.mxu0 0.0
    %7984 = vmatpush1.msra.mxu0 %v7810
    %7985 = vmatprep.subr.mxu0 0.0
    %7986 = vmatpush1.msra.mxu0 %v7811
    %7987 = vmatprep.subr.mxu0 0.0
    %7988 = vmatpush1.msra.mxu0 %v7812
    %7989 = vmatprep.subr.mxu0 0.0
    %7990 = vmatpush1.msra.mxu0 %v7813
    %7991 = vmatprep.subr.mxu0 0.0
    %7992 = vmatpush1.msra.mxu0 %v7814
    %7993 = vmatprep.subr.mxu0 0.0
    %7994 = vmatpush1.msra.mxu0 %v7815
    %7995 = vmatprep.subr.mxu0 0.0
    %7996 = vmatpush1.msra.mxu0 %v7816
    %7997 = vmatprep.subr.mxu0 0.0
    %7998 = vmatpush1.msra.mxu0 %v7817
    %7999 = vmatprep.subr.mxu0 0.0
    %8000 = vmatpush1.msra.mxu0 %v7818
    %8001 = vmatprep.subr.mxu0 0.0
    %8002 = vmatpush1.msra.mxu0 %v7819
    %8003 = vmatprep.subr.mxu0 0.0
    %8004 = vmatpush1.msra.mxu0 %v7820
    %8005 = vmatprep.subr.mxu0 0.0
    %8006 = vmatpush1.msra.mxu0 %v7821
    %8007 = vmatprep.subr.mxu0 0.0
    %8008 = vmatpush1.msra.mxu0 %v7822
    %8009 = vmatprep.subr.mxu0 0.0
    %8010 = vmatpush1.msra.mxu0 %v7823
    %8011 = vmatprep.subr.mxu0 0.0
    %8012 = vmatpush1.msra.mxu0 %v7824
    %8013 = vmatprep.subr.mxu0 0.0
    %8014 = vmatpush1.msra.mxu0 %v7825
    %8015 = vmatprep.subr.mxu0 0.0
    %8016 = vmatpush1.msra.mxu0 %v7826
    %8017 = vmatprep.subr.mxu0 0.0
    %8018 = vmatpush1.msra.mxu0 %v7827
    %8019 = vmatprep.subr.mxu0 0.0
    %8020 = vmatpush1.msra.mxu0 %v7828
    %8021 = vmatprep.subr.mxu0 0.0
    %8022 = vmatpush1.msra.mxu0 %v7829
    %8023 = vmatprep.subr.mxu0 0.0
    %8024 = vmatpush1.msra.mxu0 %v7830
    %8025 = vmatprep.subr.mxu0 0.0
    %8026 = vmatpush1.msra.mxu0 %v7831
    %8027 = vmatprep.subr.mxu0 0.0
    %8028 = vmatpush1.msra.mxu0 %v7832
    %8029 = vmatprep.subr.mxu0 0.0
    %8030 = vmatpush1.msra.mxu0 %v7833
    %8031 = vmatprep.subr.mxu0 0.0
    %8032 = vmatpush1.msra.mxu0 %v7834
    %8033 = vmatprep.subr.mxu0 0.0
    %8034 = vmatpush1.msra.mxu0 %v7835
    %8035 = vmatprep.subr.mxu0 0.0
    %8036 = vmatpush1.msra.mxu0 %v7836
    %8037 = vmatprep.subr.mxu0 0.0
    %8038 = vmatpush1.msra.mxu0 %v7837
    %8039 = vmatprep.subr.mxu0 0.0
    %8040 = vmatpush1.msra.mxu0 %v7838
    %8041 = vmatprep.subr.mxu0 0.0
    %8042 = vmatpush1.msra.mxu0 %v7839
    %8043 = vmatprep.subr.mxu0 0.0
    %8044 = vmatpush1.msra.mxu0 %v7840
    %8045 = vmatprep.subr.mxu0 0.0
    %8046 = vmatpush1.msra.mxu0 %v7841
    %8047 = vmatprep.mubr.f32.mxu0 %v5885
    %8048 = vmatmul.mubr.f32.gmra.mrb[0].mxu0 %v5884
    %v8049 = vpop.f32.mrb[0].mxu0
    %v8050 = vadd.f32 %v7980, %v8049
    %v8051 = vpop.f32.mrb[0].mxu0
    %8052 = vdwg.mxu0
    %8053 = vmatprep.subr.mxu0 0.0
    %8054 = vmatpush1.msra.mxu0 %v7842
    %8055 = vmatprep.subr.mxu0 0.0
    %8056 = vmatpush1.msra.mxu0 %v7843
    %8057 = vmatprep.subr.mxu0 0.0
    %8058 = vmatpush1.msra.mxu0 %v7844
    %8059 = vmatprep.subr.mxu0 0.0
    %8060 = vmatpush1.msra.mxu0 %v7845
    %8061 = vmatprep.subr.mxu0 0.0
    %8062 = vmatpush1.msra.mxu0 %v7846
    %8063 = vmatprep.subr.mxu0 0.0
    %8064 = vmatpush1.msra.mxu0 %v7847
    %8065 = vmatprep.subr.mxu0 0.0
    %8066 = vmatpush1.msra.mxu0 %v7848
    %8067 = vmatprep.subr.mxu0 0.0
    %8068 = vmatpush1.msra.mxu0 %v7849
    %8069 = vmatprep.subr.mxu0 0.0
    %8070 = vmatpush1.msra.mxu0 %v7850
    %8071 = vmatprep.subr.mxu0 0.0
    %8072 = vmatpush1.msra.mxu0 %v7851
    %8073 = vmatprep.subr.mxu0 0.0
    %8074 = vmatpush1.msra.mxu0 %v7852
    %8075 = vmatprep.subr.mxu0 0.0
    %8076 = vmatpush1.msra.mxu0 %v7853
    %8077 = vmatprep.subr.mxu0 0.0
    %8078 = vmatpush1.msra.mxu0 %v7854
    %8079 = vmatprep.subr.mxu0 0.0
    %8080 = vmatpush1.msra.mxu0 %v7855
    %8081 = vmatprep.subr.mxu0 0.0
    %8082 = vmatpush1.msra.mxu0 %v7856
    %8083 = vmatprep.subr.mxu0 0.0
    %8084 = vmatpush1.msra.mxu0 %v7857
    %8085 = vmatprep.subr.mxu0 0.0
    %8086 = vmatpush1.msra.mxu0 %v7858
    %8087 = vmatprep.subr.mxu0 0.0
    %8088 = vmatpush1.msra.mxu0 %v7859
    %8089 = vmatprep.subr.mxu0 0.0
    %8090 = vmatpush1.msra.mxu0 %v7860
    %8091 = vmatprep.subr.mxu0 0.0
    %8092 = vmatpush1.msra.mxu0 %v7861
    %8093 = vmatprep.subr.mxu0 0.0
    %8094 = vmatpush1.msra.mxu0 %v7862
    %8095 = vmatprep.subr.mxu0 0.0
    %8096 = vmatpush1.msra.mxu0 %v7863
    %8097 = vmatprep.subr.mxu0 0.0
    %8098 = vmatpush1.msra.mxu0 %v7864
    %8099 = vmatprep.subr.mxu0 0.0
    %8100 = vmatpush1.msra.mxu0 %v7865
    %8101 = vmatprep.subr.mxu0 0.0
    %8102 = vmatpush1.msra.mxu0 %v7866
    %8103 = vmatprep.subr.mxu0 0.0
    %8104 = vmatpush1.msra.mxu0 %v7867
    %8105 = vmatprep.subr.mxu0 0.0
    %8106 = vmatpush1.msra.mxu0 %v7868
    %8107 = vmatprep.subr.mxu0 0.0
    %8108 = vmatpush1.msra.mxu0 %v7869
    %8109 = vmatprep.subr.mxu0 0.0
    %8110 = vmatpush1.msra.mxu0 %v7870
    %8111 = vmatprep.subr.mxu0 0.0
    %8112 = vmatpush1.msra.mxu0 %v7871
    %8113 = vmatprep.subr.mxu0 0.0
    %8114 = vmatpush1.msra.mxu0 %v7872
    %8115 = vmatprep.subr.mxu0 0.0
    %8116 = vmatpush1.msra.mxu0 %v7873
    %8117 = vmatprep.mubr.f32.mxu0 %v6831
    %8118 = vmatmul.mubr.f32.gmra.mrb[0].mxu0 %v6830
    %v8119 = vpop.f32.mrb[0].mxu0
    %v8120 = vadd.f32 %v8050, %v8119
    %v8121 = vpop.f32.mrb[0].mxu0
    %8122 = vdwg.mxu0
    %8123 = vmatprep.subr.mxu0 0.0
    %8124 = vmatpush1.msra.mxu0 %v7874
    %8125 = vmatprep.subr.mxu0 0.0
    %8126 = vmatpush1.msra.mxu0 %v7875
    %8127 = vmatprep.subr.mxu0 0.0
    %8128 = vmatpush1.msra.mxu0 %v7876
    %8129 = vmatprep.subr.mxu0 0.0
    %8130 = vmatpush1.msra.mxu0 %v7877
    %8131 = vmatprep.subr.mxu0 0.0
    %8132 = vmatpush1.msra.mxu0 %v7878
    %8133 = vmatprep.subr.mxu0 0.0
    %8134 = vmatpush1.msra.mxu0 %v7879
    %8135 = vmatprep.subr.mxu0 0.0
    %8136 = vmatpush1.msra.mxu0 %v7880
    %8137 = vmatprep.subr.mxu0 0.0
    %8138 = vmatpush1.msra.mxu0 %v7881
    %8139 = vmatprep.subr.mxu0 0.0
    %8140 = vmatpush1.msra.mxu0 %v7882
    %8141 = vmatprep.subr.mxu0 0.0
    %8142 = vmatpush1.msra.mxu0 %v7883
    %8143 = vmatprep.subr.mxu0 0.0
    %8144 = vmatpush1.msra.mxu0 %v7884
    %8145 = vmatprep.subr.mxu0 0.0
    %8146 = vmatpush1.msra.mxu0 %v7885
    %8147 = vmatprep.subr.mxu0 0.0
    %8148 = vmatpush1.msra.mxu0 %v7886
    %8149 = vmatprep.subr.mxu0 0.0
    %8150 = vmatpush1.msra.mxu0 %v7887
    %8151 = vmatprep.subr.mxu0 0.0
    %8152 = vmatpush1.msra.mxu0 %v7888
    %8153 = vmatprep.subr.mxu0 0.0
    %8154 = vmatpush1.msra.mxu0 %v7889
    %8155 = vmatprep.subr.mxu0 0.0
    %8156 = vmatpush1.msra.mxu0 %v7890
    %8157 = vmatprep.subr.mxu0 0.0
    %8158 = vmatpush1.msra.mxu0 %v7891
    %8159 = vmatprep.subr.mxu0 0.0
    %8160 = vmatpush1.msra.mxu0 %v7892
    %8161 = vmatprep.subr.mxu0 0.0
    %8162 = vmatpush1.msra.mxu0 %v7893
    %8163 = vmatprep.subr.mxu0 0.0
    %8164 = vmatpush1.msra.mxu0 %v7894
    %8165 = vmatprep.subr.mxu0 0.0
    %8166 = vmatpush1.msra.mxu0 %v7895
    %8167 = vmatprep.subr.mxu0 0.0
    %8168 = vmatpush1.msra.mxu0 %v7896
    %8169 = vmatprep.subr.mxu0 0.0
    %8170 = vmatpush1.msra.mxu0 %v7897
    %8171 = vmatprep.subr.mxu0 0.0
    %8172 = vmatpush1.msra.mxu0 %v7898
    %8173 = vmatprep.subr.mxu0 0.0
    %8174 = vmatpush1.msra.mxu0 %v7899
    %8175 = vmatprep.subr.mxu0 0.0
    %8176 = vmatpush1.msra.mxu0 %v7900
    %8177 = vmatprep.subr.mxu0 0.0
    %8178 = vmatpush1.msra.mxu0 %v7901
    %8179 = vmatprep.subr.mxu0 0.0
    %8180 = vmatpush1.msra.mxu0 %v7902
    %8181 = vmatprep.subr.mxu0 0.0
    %8182 = vmatpush1.msra.mxu0 %v7903
    %8183 = vmatprep.subr.mxu0 0.0
    %8184 = vmatpush1.msra.mxu0 %v7904
    %8185 = vmatprep.subr.mxu0 0.0
    %8186 = vmatpush1.msra.mxu0 %v7905
    %8187 = vmatprep.mubr.f32.mxu0 %v7777
    %8188 = vmatmul.mubr.f32.gmra.mrb[0].mxu0 %v7776
    %v8189 = vpop.f32.mrb[0].mxu0
    %v8190 = vadd.f32 %v8120, %v8189
    %v8191 = vpop.f32.mrb[0].mxu0
    %8192 = vdwg.mxu0
    %v8193 = vmax.f32 %v8190, 0.0
    %v8194 = vld [vmem:[#allocation12] sm:$0xff]
    %v8195 = vld [vmem:[#allocation12 + $0x8] sm:$0xff]
    %v8196 = vld [vmem:[#allocation12 + $0x10] sm:$0xff]
    %v8197 = vld [vmem:[#allocation12 + $0x18] sm:$0xff]
    %v8198 = vld [vmem:[#allocation12 + $0x20] sm:$0xff]
    %v8199 = vld [vmem:[#allocation12 + $0x28] sm:$0xff]
    %v8200 = vld [vmem:[#allocation12 + $0x30] sm:$0xff]
    %v8201 = vld [vmem:[#allocation12 + $0x38] sm:$0xff]
    %v8202 = vld [vmem:[#allocation13] sm:$0x1]
    %v8204 = vlaneseq
    %v8205 = vshrl.u32 %v8204, 7
    %v8206 = vsub.s32 0, %v8205
    %v8207 = vrot.slane %v8202, %v8206
    %vm8209 = vcmask 523264
    %v8211 = vsel %vm8209, %v8193, 0
    %8213 = vmatprep.subr.mxu0 0.0
    %8214 = vmatpush1.msra.mxu0 %v8194
    %8215 = vmatprep.subr.mxu0 0.0
    %8216 = vmatpush1.msra.mxu0 %v8195
    %8217 = vmatprep.subr.mxu0 0.0
    %8218 = vmatpush1.msra.mxu0 %v8196
    %8219 = vmatprep.subr.mxu0 0.0
    %8220 = vmatpush1.msra.mxu0 %v8197
    %8221 = vmatprep.subr.mxu0 0.0
    %8222 = vmatpush1.msra.mxu0 %v8198
    %8223 = vmatprep.subr.mxu0 0.0
    %8224 = vmatpush1.msra.mxu0 %v8199
    %8225 = vmatprep.subr.mxu0 0.0
    %8226 = vmatpush1.msra.mxu0 %v8200
    %8227 = vmatprep.subr.mxu0 0.0
    %8228 = vmatpush1.msra.mxu0 %v8201
    %8229 = vmatprep.subr.mxu0 0.0
    %8230 = vmatpush1.msra.mxu0 0.0
    %8231 = vmatprep.subr.mxu0 0.0
    %8232 = vmatpush1.msra.mxu0 0.0
    %8233 = vmatprep.subr.mxu0 0.0
    %8234 = vmatpush1.msra.mxu0 0.0
    %8235 = vmatprep.subr.mxu0 0.0
    %8236 = vmatpush1.msra.mxu0 0.0
    %8237 = vmatprep.subr.mxu0 0.0
    %8238 = vmatpush1.msra.mxu0 0.0
    %8239 = vmatprep.subr.mxu0 0.0
    %8240 = vmatpush1.msra.mxu0 0.0
    %8241 = vmatprep.subr.mxu0 0.0
    %8242 = vmatpush1.msra.mxu0 0.0
    %8243 = vmatprep.subr.mxu0 0.0
    %8244 = vmatpush1.msra.mxu0 0.0
    %8245 = vmatprep.subr.mxu0 0.0
    %8246 = vmatpush1.msra.mxu0 0.0
    %8247 = vmatprep.subr.mxu0 0.0
    %8248 = vmatpush1.msra.mxu0 0.0
    %8249 = vmatprep.subr.mxu0 0.0
    %8250 = vmatpush1.msra.mxu0 0.0
    %8251 = vmatprep.subr.mxu0 0.0
    %8252 = vmatpush1.msra.mxu0 0.0
    %8253 = vmatprep.subr.mxu0 0.0
    %8254 = vmatpush1.msra.mxu0 0.0
    %8255 = vmatprep.subr.mxu0 0.0
    %8256 = vmatpush1.msra.mxu0 0.0
    %8257 = vmatprep.subr.mxu0 0.0
    %8258 = vmatpush1.msra.mxu0 0.0
    %8259 = vmatprep.subr.mxu0 0.0
    %8260 = vmatpush1.msra.mxu0 0.0
    %8261 = vmatprep.subr.mxu0 0.0
    %8262 = vmatpush1.msra.mxu0 0.0
    %8263 = vmatprep.subr.mxu0 0.0
    %8264 = vmatpush1.msra.mxu0 0.0
    %8265 = vmatprep.subr.mxu0 0.0
    %8266 = vmatpush1.msra.mxu0 0.0
    %8267 = vmatprep.subr.mxu0 0.0
    %8268 = vmatpush1.msra.mxu0 0.0
    %8269 = vmatprep.subr.mxu0 0.0
    %8270 = vmatpush1.msra.mxu0 0.0
    %8271 = vmatprep.subr.mxu0 0.0
    %8272 = vmatpush1.msra.mxu0 0.0
    %8273 = vmatprep.subr.mxu0 0.0
    %8274 = vmatpush1.msra.mxu0 0.0
    %8275 = vmatprep.subr.mxu0 0.0
    %8276 = vmatpush1.msra.mxu0 0.0
    %8277 = vmatprep.mubr.f32.mxu0 0.0
    %8278 = vmatmul.mubr.f32.gmra.mrb[0].mxu0 %v8211
    %v8279 = vpop.f32.mrb[0].mxu0
    %v8280 = vadd.f32 %v8207, %v8279
    %v8281 = vpop.f32.mrb[0].mxu0
    %8282 = vdwg.mxu0
    %v8283 = vmax.f32 %v8280, 0.0
    %v8284 = vld [vmem:[%s9] sm:$0xff]
    %v8285 = vld [vmem:[%s9 + $0x8] sm:$0xff]
    %v8286 = vld [vmem:[%s9 + $0x10] sm:$0xff]
    %v8287 = vld [vmem:[%s9 + $0x18] sm:$0xff]
    %v8288 = vld [vmem:[%s9 + $0x20] sm:$0xff]
    %v8289 = vld [vmem:[%s9 + $0x28] sm:$0xff]
    %v8290 = vld [vmem:[%s9 + $0x30] sm:$0xff]
    %v8291 = vld [vmem:[%s9 + $0x38] sm:$0xff]
    %v8292 = vld [vmem:[#allocation15] sm:$0x1]
    %v8294 = vlaneseq
    %v8295 = vshrl.u32 %v8294, 7
    %v8296 = vsub.s32 0, %v8295
    %v8297 = vrot.slane %v8292, %v8296
    %v8300 = vsel %vm8209, %v8283, 0
    %8302 = vmatprep.subr.mxu0 0.0
    %8303 = vmatpush1.msra.mxu0 %v8284
    %8304 = vmatprep.subr.mxu0 0.0
    %8305 = vmatpush1.msra.mxu0 %v8285
    %8306 = vmatprep.subr.mxu0 0.0
    %8307 = vmatpush1.msra.mxu0 %v8286
    %8308 = vmatprep.subr.mxu0 0.0
    %8309 = vmatpush1.msra.mxu0 %v8287
    %8310 = vmatprep.subr.mxu0 0.0
    %8311 = vmatpush1.msra.mxu0 %v8288
    %8312 = vmatprep.subr.mxu0 0.0
    %8313 = vmatpush1.msra.mxu0 %v8289
    %8314 = vmatprep.subr.mxu0 0.0
    %8315 = vmatpush1.msra.mxu0 %v8290
    %8316 = vmatprep.subr.mxu0 0.0
    %8317 = vmatpush1.msra.mxu0 %v8291
    %8318 = vmatprep.subr.mxu0 0.0
    %8319 = vmatpush1.msra.mxu0 0.0
    %8320 = vmatprep.subr.mxu0 0.0
    %8321 = vmatpush1.msra.mxu0 0.0
    %8322 = vmatprep.subr.mxu0 0.0
    %8323 = vmatpush1.msra.mxu0 0.0
    %8324 = vmatprep.subr.mxu0 0.0
    %8325 = vmatpush1.msra.mxu0 0.0
    %8326 = vmatprep.subr.mxu0 0.0
    %8327 = vmatpush1.msra.mxu0 0.0
    %8328 = vmatprep.subr.mxu0 0.0
    %8329 = vmatpush1.msra.mxu0 0.0
    %8330 = vmatprep.subr.mxu0 0.0
    %8331 = vmatpush1.msra.mxu0 0.0
    %8332 = vmatprep.subr.mxu0 0.0
    %8333 = vmatpush1.msra.mxu0 0.0
    %8334 = vmatprep.subr.mxu0 0.0
    %8335 = vmatpush1.msra.mxu0 0.0
    %8336 = vmatprep.subr.mxu0 0.0
    %8337 = vmatpush1.msra.mxu0 0.0
    %8338 = vmatprep.subr.mxu0 0.0
    %8339 = vmatpush1.msra.mxu0 0.0
    %8340 = vmatprep.subr.mxu0 0.0
    %8341 = vmatpush1.msra.mxu0 0.0
    %8342 = vmatprep.subr.mxu0 0.0
    %8343 = vmatpush1.msra.mxu0 0.0
    %8344 = vmatprep.subr.mxu0 0.0
    %8345 = vmatpush1.msra.mxu0 0.0
    %8346 = vmatprep.subr.mxu0 0.0
    %8347 = vmatpush1.msra.mxu0 0.0
    %8348 = vmatprep.subr.mxu0 0.0
    %8349 = vmatpush1.msra.mxu0 0.0
    %8350 = vmatprep.subr.mxu0 0.0
    %8351 = vmatpush1.msra.mxu0 0.0
    %8352 = vmatprep.subr.mxu0 0.0
    %8353 = vmatpush1.msra.mxu0 0.0
    %8354 = vmatprep.subr.mxu0 0.0
    %8355 = vmatpush1.msra.mxu0 0.0
    %8356 = vmatprep.subr.mxu0 0.0
    %8357 = vmatpush1.msra.mxu0 0.0
    %8358 = vmatprep.subr.mxu0 0.0
    %8359 = vmatpush1.msra.mxu0 0.0
    %8360 = vmatprep.subr.mxu0 0.0
    %8361 = vmatpush1.msra.mxu0 0.0
    %8362 = vmatprep.subr.mxu0 0.0
    %8363 = vmatpush1.msra.mxu0 0.0
    %8364 = vmatprep.subr.mxu0 0.0
    %8365 = vmatpush1.msra.mxu0 0.0
    %8366 = vmatprep.mubr.f32.mxu0 0.0
    %8367 = vmatmul.mubr.f32.gmra.mrb[0].mxu0 %v8300
    %v8368 = vpop.f32.mrb[0].mxu0
    %v8369 = vadd.f32 %v8297, %v8368
    %v8370 = vpop.f32.mrb[0].mxu0
    %8371 = vdwg.mxu0
    %v8372 = vmax.f32 %v8369, 0.0
    %v8373 = vand.u32 2147483647, %v8372
    %vm8374 = vcmask 123904
    %v8375 = vsel %vm8374, %v8373, -inf
    %8376 = vmax.xlane.f32.xlu0 %v8375
    %v8377 = vpop.xlane.xlu0 %8376
    %v8378 = vadd.f32 %v8377, 0.0
    %vm8379 = vcmask 1024
    %8380 = vst.msk [vmem:[%s11] sm:$0x3] %vm8379, %v8378
    // Predicated region
    $region82: #{tpu_custom_call.1} parent=1 // pred_check
      _
    $region83: #{tpu_custom_call.1} parent=1 // pred_check_branch
      %8382 = sbr.rel (0) target = $region85
    $region84: #{tpu_custom_call.1} parent=1 // pred_region
      _
    $region85: #{tpu_custom_call.1} parent=1 // pred_fallthru
      _
    // Predicated region
    $region86: #{tpu_custom_call.1} parent=1 // pred_check
      _
    $region87: #{tpu_custom_call.1} parent=1 // pred_check_branch
      %8384 = sbr.rel (0) target = $region89
    $region88: #{tpu_custom_call.1} parent=1 // pred_region
      _
    $region89: #{tpu_custom_call.1} parent=1 // pred_fallthru
      _
    %8385 = vsyncpa [#allocation3], 1
    %8386 = vsyncpa [#allocation5], 1
    %8387 = vsyncpa [#allocation8], 1
    %8388 = vsyncpa [#allocation11], 1
    %8389 = vsyncpa [#allocation14], 1

</llo_original>
